<compile_context>
chip_gen: v7x
topology: tpu7x:2x2x1
jax: 0.10.0
libtpu: 0.0.40
codegen_flags: <defaults>
</compile_context>

<pallas_src>
import functools
import math

import jax
import jax.numpy as jnp
from jax.experimental import pallas as pl
from jax.experimental.pallas import tpu as pltpu


# ---------------------------------------------------------------------------
# shared helpers
# ---------------------------------------------------------------------------

def _layernorm(x, g, b, eps=1e-5):
    mu = jnp.mean(x, axis=-1, keepdims=True)
    var = jnp.mean(jnp.square(x - mu), axis=-1, keepdims=True)
    return (x - mu) * jax.lax.rsqrt(var + eps) * g + b


def _choose_tile(n, target, quantum=8):
    """Largest multiple-of-`quantum` divisor of n that is <= target (or n itself)."""
    if n <= target:
        return n
    t = (target // quantum) * quantum
    while t >= quantum:
        if n % t == 0:
            return t
        t -= quantum
    return n


def _zero_index_map(grid_rank, block_rank):
    zero = (0,) * block_rank
    if grid_rank == 1:
        return lambda i: zero
    return lambda i, j: zero


def _const_spec(shape, grid_rank):
    """BlockSpec for a grid-invariant operand; single-buffered when supported."""
    idx = _zero_index_map(grid_rank, len(shape))
    if hasattr(pl, "Buffered"):
        try:
            return pl.BlockSpec(shape, idx, pipeline_mode=pl.Buffered(1))
        except (TypeError, ValueError):
            pass
    return pl.BlockSpec(shape, idx)


def _vmem_limit(est_bytes):
    """Explicit scoped-VMEM limit sized from block footprints (clamped to v7x VMEM)."""
    return int(min(64 << 20, max(8 << 20, 2 * int(est_bytes) + (4 << 20))))


def _nbytes(*arrs):
    return sum(int(a.size) * a.dtype.itemsize for a in arrs)


# ---------------------------------------------------------------------------
# fused attention sub-layer (projection + MHA + out-proj + residual + LayerNorm)
# ---------------------------------------------------------------------------

def _mha(xq, xkv, wq_ref, bq_ref, wkv_ref, bkv_ref, wo_ref, bo_ref,
         g_ref, be_ref, ao_sc, nhead, causal):
    Sq, D = xq.shape
    Sk = xkv.shape[0]
    dh = D // nhead
    scale = 1.0 / math.sqrt(dh)

    q = jnp.dot(xq.astype(jnp.bfloat16), wq_ref[...],
                preferred_element_type=jnp.float32) + bq_ref[...]
    kv = jnp.dot(xkv.astype(jnp.bfloat16), wkv_ref[...],
                 preferred_element_type=jnp.float32) + bkv_ref[...]
    qb = q.astype(jnp.bfloat16)
    kb = kv[:, :D].astype(jnp.bfloat16)
    vb = kv[:, D:].astype(jnp.bfloat16)

    if causal:
        rows = jax.lax.broadcasted_iota(jnp.int32, (Sq, Sk), 0)
        cols = jax.lax.broadcasted_iota(jnp.int32, (Sq, Sk), 1)
        neg = jnp.where(cols > rows, -1e9, 0.0).astype(jnp.float32)

    # Per-head scores/softmax/PV (dh-wide contraction is inherent to MHA); every head
    # output lands in a VMEM scratch so the output projection is ONE wide
    # (Sq,D)x(D,D) MXU matmul instead of nhead K=dh matmuls.
    # TODO(synk): for long sequences, tile Sq and loop Sk with an online (flash) softmax
    # instead of whole-sequence blocks.
    for h in range(nhead):
        sl = slice(h * dh, (h + 1) * dh)
        s = jax.lax.dot_general(qb[:, sl], kb[:, sl], (((1,), (1,)), ((), ())),
                                preferred_element_type=jnp.float32) * scale
        if causal:
            s = s + neg
        s = s - jnp.max(s, axis=-1, keepdims=True)
        p = jnp.exp(s)
        p = p * pl.reciprocal(jnp.sum(p, axis=-1, keepdims=True), approx=True)
        ao_sc[:, sl] = jnp.dot(p.astype(jnp.bfloat16), vb[:, sl],
                               preferred_element_type=jnp.float32)

    y = xq + bo_ref[...] + jnp.dot(ao_sc[...].astype(jnp.bfloat16), wo_ref[...],
                                   preferred_element_type=jnp.float32)
    return _layernorm(y, g_ref[...], be_ref[...])


def _self_attn_kernel(x_ref, wq_ref, bq_ref, wkv_ref, bkv_ref, wo_ref, bo_ref,
                      g_ref, be_ref, o_ref, ao_sc, *, nhead, causal):
    x = x_ref[0]
    o_ref[0] = _mha(x, x, wq_ref, bq_ref, wkv_ref, bkv_ref, wo_ref, bo_ref,
                    g_ref, be_ref, ao_sc, nhead, causal)


def _cross_attn_kernel(xq_ref, xkv_ref, wq_ref, bq_ref, wkv_ref, bkv_ref, wo_ref,
                       bo_ref, g_ref, be_ref, o_ref, ao_sc, *, nhead):
    o_ref[0] = _mha(xq_ref[0], xkv_ref[0], wq_ref, bq_ref, wkv_ref, bkv_ref,
                    wo_ref, bo_ref, g_ref, be_ref, ao_sc, nhead, False)


def _attn_weight_specs(D, grid_rank):
    return [
        _const_spec((D, D), grid_rank),          # wq
        _const_spec((1, D), grid_rank),          # bq
        _const_spec((D, 2 * D), grid_rank),      # wkv
        _const_spec((1, 2 * D), grid_rank),      # bkv
        _const_spec((D, D), grid_rank),          # wo
        _const_spec((1, D), grid_rank),          # bo
        _const_spec((1, D), grid_rank),          # ln_g
        _const_spec((1, D), grid_rank),          # ln_b
    ]


def self_attention_block(x, p, *, nhead, causal):
    B, S, D = x.shape
    wbytes = _nbytes(p["wq"], p["bq"], p["wkv"], p["bkv"], p["wo"], p["bo"],
                     p["ln_g"], p["ln_b"])
    abytes = 4 * (3 * S * D + 2 * S * D + S * S + S * D)
    return pl.pallas_call(
        functools.partial(_self_attn_kernel, nhead=nhead, causal=causal),
        out_shape=jax.ShapeDtypeStruct((B, S, D), jnp.float32),
        grid=(B,),
        in_specs=[pl.BlockSpec((1, S, D), lambda b: (b, 0, 0))] + _attn_weight_specs(D, 1),
        out_specs=pl.BlockSpec((1, S, D), lambda b: (b, 0, 0)),
        scratch_shapes=[pltpu.VMEM((S, D), jnp.float32)],
        compiler_params=pltpu.CompilerParams(
            dimension_semantics=("parallel",),
            vmem_limit_bytes=_vmem_limit(wbytes + abytes)),
    )(x, p["wq"], p["bq"], p["wkv"], p["bkv"], p["wo"], p["bo"],
      p["ln_g"], p["ln_b"])


def cross_attention_block(xq, xkv, p, *, nhead):
    B, Sq, D = xq.shape
    Sk = xkv.shape[1]
    wbytes = _nbytes(p["wq"], p["bq"], p["wkv"], p["bkv"], p["wo"], p["bo"],
                     p["ln_g"], p["ln_b"])
    abytes = 4 * (3 * Sq * D + 3 * Sk * D + Sq * Sk + Sq * D)
    return pl.pallas_call(
        functools.partial(_cross_attn_kernel, nhead=nhead),
        out_shape=jax.ShapeDtypeStruct((B, Sq, D), jnp.float32),
        grid=(B,),
        in_specs=[pl.BlockSpec((1, Sq, D), lambda b: (b, 0, 0)),
                  pl.BlockSpec((1, Sk, D), lambda b: (b, 0, 0))] + _attn_weight_specs(D, 1),
        out_specs=pl.BlockSpec((1, Sq, D), lambda b: (b, 0, 0)),
        scratch_shapes=[pltpu.VMEM((Sq, D), jnp.float32)],
        compiler_params=pltpu.CompilerParams(
            dimension_semantics=("parallel",),
            vmem_limit_bytes=_vmem_limit(wbytes + abytes)),
    )(xq, xkv, p["wq"], p["bq"], p["wkv"], p["bkv"], p["wo"], p["bo"],
      p["ln_g"], p["ln_b"])


# ---------------------------------------------------------------------------
# fused FFN sub-layer (linear1 + GELU + linear2 + residual + LN [+ final LN])
# ---------------------------------------------------------------------------

def _ffn_kernel(x_ref, w1_ref, b1_ref, w2_ref, b2_ref, g_ref, be_ref,
                fg_ref, fb_ref, o_ref, *, apply_final):
    x = x_ref[...]
    h = jnp.dot(x.astype(jnp.bfloat16), w1_ref[...],
                preferred_element_type=jnp.float32) + b1_ref[...]
    # TODO(synk): PyTorch F.gelu is erf-based; tanh approximation used for portable lowering.
    h = jax.nn.gelu(h, approximate=True)
    y = jnp.dot(h.astype(jnp.bfloat16), w2_ref[...],
                preferred_element_type=jnp.float32) + b2_ref[...]
    y = _layernorm(x + y, g_ref[...], be_ref[...])
    if apply_final:                      # fused encoder-final LayerNorm (one less HBM pass)
        y = _layernorm(y, fg_ref[...], fb_ref[...])
    o_ref[...] = y
    # TODO(synk): at very large dim_feedforward, tile F as an 'arbitrary' reduction grid
    # axis with a VMEM accumulator instead of holding the full (tr, F) activation.


def ffn_block(x, p, final_g, final_b, *, apply_final):
    B, S, D = x.shape
    N = B * S
    F = p["w1"].shape[1]
    tr = _choose_tile(N, 256)
    x2 = x.reshape(N, D)
    wbytes = _nbytes(p["w1"], p["b1"], p["w2"], p["b2"], p["ln_g"], p["ln_b"])
    abytes = 4 * (2 * tr * D + tr * F)
    out = pl.pallas_call(
        functools.partial(_ffn_kernel, apply_final=apply_final),
        out_shape=jax.ShapeDtypeStruct((N, D), jnp.float32),
        grid=(N // tr,),
        in_specs=[pl.BlockSpec((tr, D), lambda i: (i, 0)),
                  _const_spec((D, F), 1), _const_spec((1, F), 1),
                  _const_spec((F, D), 1), _const_spec((1, D), 1),
                  _const_spec((1, D), 1), _const_spec((1, D), 1),
                  _const_spec((1, D), 1), _const_spec((1, D), 1)],
        out_specs=pl.BlockSpec((tr, D), lambda i: (i, 0)),
        compiler_params=pltpu.CompilerParams(
            dimension_semantics=("parallel",),
            vmem_limit_bytes=_vmem_limit(wbytes + abytes)),
    )(x2, p["w1"], p["b1"], p["w2"], p["b2"], p["ln_g"], p["ln_b"],
      final_g, final_b)
    return out.reshape(B, S, D)


# ---------------------------------------------------------------------------
# LSTM kernels: hoisted input projection + fori_loop recurrence
# ---------------------------------------------------------------------------

def _lstm_gates(gates, c_prev, H):
    # PyTorch gate order (i, f, g, o) along the fused 4H axis.
    i = jax.nn.sigmoid(gates[:, 0 * H:1 * H])
    f = jax.nn.sigmoid(gates[:, 1 * H:2 * H])
    g = jnp.tanh(gates[:, 2 * H:3 * H])
    o = jax.nn.sigmoid(gates[:, 3 * H:4 * H])
    c = f * c_prev + i * g
    return o * jnp.tanh(c), c


def _lstm_kernel(x_ref, wih_ref, whh_ref, b_ref, o_ref, xp_sc, h_sc, c_sc,
                 *, L, B, H):
    # Hoisted input projection: ONE (L*B, E) x (E, 4H) matmul for all timesteps.
    xp_sc[...] = (jnp.dot(x_ref[...], wih_ref[...],
                          preferred_element_type=jnp.float32) + b_ref[...])
    h_sc[...] = jnp.zeros_like(h_sc)
    c_sc[...] = jnp.zeros_like(c_sc)
    whh = whh_ref[...]

    def step(t, carry):
        r = pl.multiple_of(t * B, B)
        gates = (xp_sc[pl.ds(r, B), :]
                 + jnp.dot(h_sc[...].astype(jnp.bfloat16), whh,
                           preferred_element_type=jnp.float32))
        h, c = _lstm_gates(gates, c_sc[...], H)
        h_sc[...] = h
        c_sc[...] = c
        # TODO(synk): on v5e, batch several timestep outputs into (8, H) chunks before
        # storing to reduce pressure on the single vector-store slot.
        o_ref[pl.ds(r, B), :] = h
        return carry

    jax.lax.fori_loop(0, L, step, 0)


def lstm(x2d, p, *, L, B):
    # x2d: (L*B, E) time-major rows; returns (L*B, H).
    H = p["whh"].shape[0]
    E = x2d.shape[1]
    est = _nbytes(p["wih"], p["whh"], p["b"]) + 4 * (L * B * (E + 5 * H) + 2 * B * H)
    return pl.pallas_call(
        functools.partial(_lstm_kernel, L=L, B=B, H=H),
        out_shape=jax.ShapeDtypeStruct((L * B, H), jnp.float32),
        scratch_shapes=[pltpu.VMEM((L * B, 4 * H), jnp.float32),
                        pltpu.VMEM((B, H), jnp.float32),
                        pltpu.VMEM((B, H), jnp.float32)],
        compiler_params=pltpu.CompilerParams(vmem_limit_bytes=_vmem_limit(est)),
    )(x2d, p["wih"], p["whh"], p["b"])


def _bilstm_kernel(x_ref, wih_ref, b_ref, whhf_ref, whhb_ref, o_ref,
                   xp_sc, hf_sc, cf_sc, hb_sc, cb_sc, *, L, B, H):
    # Fused fwd+bwd input projections: ONE (L*B, E) x (E, 8H) matmul for all timesteps.
    xp_sc[...] = (jnp.dot(x_ref[...], wih_ref[...],
                          preferred_element_type=jnp.float32) + b_ref[...])
    for sc in (hf_sc, cf_sc, hb_sc, cb_sc):
        sc[...] = jnp.zeros_like(sc)
    whhf = whhf_ref[...]
    whhb = whhb_ref[...]

    def step(t, carry):
        # forward direction at time t -> columns [0:H] of the fused output
        rf = pl.multiple_of(t * B, B)
        gf = (xp_sc[pl.ds(rf, B), pl.ds(0, 4 * H)]
              + jnp.dot(hf_sc[...].astype(jnp.bfloat16), whhf,
                        preferred_element_type=jnp.float32))
        hf, cf = _lstm_gates(gf, cf_sc[...], H)
        hf_sc[...] = hf
        cf_sc[...] = cf
        o_ref[pl.ds(rf, B), pl.ds(0, H)] = hf
        # backward direction at time L-1-t (reversal by indexing; no HBM flip)
        rb = pl.multiple_of((L - 1 - t) * B, B)
        gb = (xp_sc[pl.ds(rb, B), pl.ds(4 * H, 4 * H)]
              + jnp.dot(hb_sc[...].astype(jnp.bfloat16), whhb,
                        preferred_element_type=jnp.float32))
        hb, cb = _lstm_gates(gb, cb_sc[...], H)
        hb_sc[...] = hb
        cb_sc[...] = cb
        o_ref[pl.ds(rb, B), pl.ds(H, H)] = hb
        return carry

    jax.lax.fori_loop(0, L, step, 0)


def bilstm(x2d, p, *, L, B):
    # Returns (L*B, 2H) with fwd in [:, :H] and bwd in [:, H:] (no HBM concat).
    H = p["whh_f"].shape[0]
    E = x2d.shape[1]
    est = (_nbytes(p["wih"], p["b"], p["whh_f"], p["whh_b"])
           + 4 * (L * B * (E + 10 * H) + 4 * B * H))
    return pl.pallas_call(
        functools.partial(_bilstm_kernel, L=L, B=B, H=H),
        out_shape=jax.ShapeDtypeStruct((L * B, 2 * H), jnp.float32),
        scratch_shapes=[pltpu.VMEM((L * B, 8 * H), jnp.float32),
                        pltpu.VMEM((B, H), jnp.float32),
                        pltpu.VMEM((B, H), jnp.float32),
                        pltpu.VMEM((B, H), jnp.float32),
                        pltpu.VMEM((B, H), jnp.float32)],
        compiler_params=pltpu.CompilerParams(vmem_limit_bytes=_vmem_limit(est)),
    )(x2d, p["wih"], p["b"], p["whh_f"], p["whh_b"])


# ---------------------------------------------------------------------------
# fused decode head + tied projection + cross-entropy (vocab-tiled online LSE)
# ---------------------------------------------------------------------------

def _decode_ce_kernel(y_ref, lab_ref, ng_ref, nb_ref, w_ref, b_ref, g_ref, be_ref,
                      emb_ref, o_ref, h_sc, m_sc, s_sc, p_sc, *, vblk):
    v = pl.program_id(1)

    @pl.when(v == 0)
    def _():
        # decoder final norm -> Linear -> LeakyReLU -> LayerNorm, computed once per row
        # tile and cached in VMEM for all vocab tiles.
        y = _layernorm(y_ref[...], ng_ref[...], nb_ref[...])
        h = jnp.dot(y.astype(jnp.bfloat16), w_ref[...],
                    preferred_element_type=jnp.float32) + b_ref[...]
        h = jnp.where(h > 0, h, 0.01 * h)                       # LeakyReLU(0.01)
        h = _layernorm(h, g_ref[...], be_ref[...])
        h_sc[...] = h.astype(jnp.bfloat16)
        m_sc[...] = jnp.full_like(m_sc, -1e30)
        s_sc[...] = jnp.zeros_like(s_sc)
        p_sc[...] = jnp.zeros_like(p_sc)

    # tied output projection against this vocab tile of the embedding (no emb.T copy,
    # logits never touch HBM), followed by an online logsumexp update.
    logits = jax.lax.dot_general(h_sc[...], emb_ref[...], (((1,), (1,)), ((), ())),
                                 preferred_element_type=jnp.float32)     # (tr, vblk)
    m_prev = m_sc[...]
    m_new = jnp.maximum(m_prev, jnp.max(logits, axis=-1, keepdims=True))
    s_sc[...] = (s_sc[...] * jnp.exp(m_prev - m_new)
                 + jnp.sum(jnp.exp(logits - m_new), axis=-1, keepdims=True))
    m_sc[...] = m_new
    col = v * vblk + jax.lax.broadcasted_iota(jnp.int32, logits.shape, 1)
    p_sc[...] = p_sc[...] + jnp.sum(jnp.where(col == lab_ref[...], logits, 0.0),
                                    axis=-1, keepdims=True)

    @pl.when(v == pl.num_programs(1) - 1)
    def _():
        # NOTE: padded vocab columns stay in the denominator -- the PyTorch reference
        # also builds its tied Linear / cross-entropy over the padded vocabulary.
        o_ref[...] = (m_sc[...] + jnp.log(s_sc[...])) - p_sc[...]


def decode_cross_entropy(y2d, labels, params):
    N, D = y2d.shape
    V, E = params["emb_weight"].shape
    tr = _choose_tile(N, 256)
    tv = _choose_tile(V, 2048)
    nr, nv = N // tr, V // tv
    lab = labels.reshape(N, 1).astype(jnp.int32)

    idx_r = lambda r, v: (r, 0)
    idx_v = lambda r, v: (v, 0)
    wbytes = _nbytes(params["dec_norm_g"], params["dec_norm_b"], params["out_w"],
                     params["out_b"], params["out_ln_g"], params["out_ln_b"])
    abytes = 4 * (tr * D + tr * E + tr * tv + 4 * tr) + 2 * tv * E

    per_tok = pl.pallas_call(
        functools.partial(_decode_ce_kernel, vblk=tv),
        out_shape=jax.ShapeDtypeStruct((N, 1), jnp.float32),
        grid=(nr, nv),
        in_specs=[
            pl.BlockSpec((tr, D), idx_r),
            pl.BlockSpec((tr, 1), idx_r),
            _const_spec((1, D), 2), _const_spec((1, D), 2),
            _const_spec((D, E), 2), _const_spec((1, E), 2),
            _const_spec((1, E), 2), _const_spec((1, E), 2),
            pl.BlockSpec((tv, E), idx_v),          # embedding tile (double-buffered)
        ],
        out_specs=pl.BlockSpec((tr, 1), idx_r),
        scratch_shapes=[pltpu.VMEM((tr, E), jnp.bfloat16),
                        pltpu.VMEM((tr, 1), jnp.float32),
                        pltpu.VMEM((tr, 1), jnp.float32),
                        pltpu.VMEM((tr, 1), jnp.float32)],
        compiler_params=pltpu.CompilerParams(
            dimension_semantics=("parallel", "arbitrary"),
            vmem_limit_bytes=_vmem_limit(wbytes + abytes)),
    )(y2d, lab, params["dec_norm_g"], params["dec_norm_b"],
      params["out_w"], params["out_b"], params["out_ln_g"], params["out_ln_b"],
      params["emb_weight"])
    return jnp.mean(per_tok)


# ---------------------------------------------------------------------------
# model glue (plain JAX orchestration of the fused kernels)
# ---------------------------------------------------------------------------

def transformer_x_forward(params, source, target, *, nhead):
    # Mirrors TransformerX.forward([source, target], lang) with dropout in eval mode.
    emb = params["emb_weight"]                       # (V, E) bf16, tied weights
    B, S = source.shape
    T = target.shape[1]
    T1 = T - 1

    src_tm = source.T                                # (S, B) time-major for the LSTMs
    tgt_tm = target.T                                # (T, B)

    # Embedding.forward: word-emb -> fused bidirectional LSTM (hidden = nhid//2 per dir)
    src_x = emb[src_tm.reshape(-1)]                  # (S*B, E)
    src_h = bilstm(src_x, params["enc_lstm"], L=S, B=B)              # (S*B, nhid)
    x = src_h.reshape(S, B, -1).transpose(1, 0, 2)   # (B, S, D) batch-major

    # Embedding.encode: word-emb -> unidirectional LSTM (hidden = nhid)
    tgt_x = emb[tgt_tm[:-1].reshape(-1)]             # ((T-1)*B, E)
    tgt_h = lstm(tgt_x, params["dec_lstm"], L=T1, B=B)               # ((T-1)*B, nhid)
    y = tgt_h.reshape(T1, B, -1).transpose(1, 0, 2)  # (B, T-1, D)

    D = x.shape[-1]

    # nn.Transformer (post-norm layers + final norms), activation = GELU
    n_enc = len(params["enc_layers"])
    for li, lp in enumerate(params["enc_layers"]):
        x = self_attention_block(x, lp["self_attn"], nhead=nhead, causal=False)
        last = li == n_enc - 1
        x = ffn_block(x, lp["ffn"],
                      params["enc_norm_g"] if last else lp["ffn"]["ln_g"],
                      params["enc_norm_b"] if last else lp["ffn"]["ln_b"],
                      apply_final=last)              # encoder final LN fused in here
    memory = x

    for lp in params["dec_layers"]:
        y = self_attention_block(y, lp["self_attn"], nhead=nhead, causal=True)
        y = cross_attention_block(y, memory, lp["cross_attn"], nhead=nhead)
        y = ffn_block(y, lp["ffn"], lp["ffn"]["ln_g"], lp["ffn"]["ln_b"],
                      apply_final=False)

    # decoder final norm + Linear -> LeakyReLU -> LayerNorm -> tied projection -> CE
    labels = target[:, 1:].reshape(-1)               # (B*(T-1),) batch-major, matches y
    return decode_cross_entropy(y.reshape(B * T1, D), labels, params)


# ---------------------------------------------------------------------------
# deterministic parameter init (kernel-friendly fused layouts, bf16 matmul weights)
# ---------------------------------------------------------------------------

def init_params(key, vocab_size, nemb, nhid, nlayers):
    pad_vocab = (2 + vocab_size // 8) * 8
    ffn = nhid * 4
    hh = nhid // 2
    keys = iter(jax.random.split(key, 4096))

    def rnd(shape, scale=0.05, dtype=jnp.bfloat16):
        return (jax.random.normal(next(keys), shape, jnp.float32) * scale).astype(dtype)

    def zeros(shape):
        return jnp.zeros(shape, jnp.float32)

    def ones(shape):
        return jnp.ones(shape, jnp.float32)

    def attn_p(d):
        return dict(wq=rnd((d, d)), bq=zeros((1, d)),
                    wkv=rnd((d, 2 * d)), bkv=zeros((1, 2 * d)),
                    wo=rnd((d, d)), bo=zeros((1, d)),
                    ln_g=ones((1, d)), ln_b=zeros((1, d)))

    def ffn_p(d, f):
        return dict(w1=rnd((d, f)), b1=zeros((1, f)),
                    w2=rnd((f, d)), b2=zeros((1, d)),
                    ln_g=ones((1, d)), ln_b=zeros((1, d)))

    params = dict(
        emb_weight=rnd((pad_vocab, nemb), 0.1),
        # encoder-embedding BiLSTM: fused (E, 8H') input proj (fwd gates | bwd gates)
        enc_lstm=dict(wih=rnd((nemb, 8 * hh)), b=zeros((1, 8 * hh)),
                      whh_f=rnd((hh, 4 * hh)), whh_b=rnd((hh, 4 * hh))),
        # decoder-embedding LSTM: fused (E, 4H) input proj, (H, 4H) hidden proj
        dec_lstm=dict(wih=rnd((nemb, 4 * nhid)), b=zeros((1, 4 * nhid)),
                      whh=rnd((nhid, 4 * nhid))),
        out_w=rnd((nhid, nemb)), out_b=zeros((1, nemb)),
        out_ln_g=ones((1, nemb)), out_ln_b=zeros((1, nemb)),
        enc_layers=[dict(self_attn=attn_p(nhid), ffn=ffn_p(nhid, ffn))
                    for _ in range(nlayers)],
        dec_layers=[dict(self_attn=attn_p(nhid), cross_attn=attn_p(nhid),
                         ffn=ffn_p(nhid, ffn)) for _ in range(nlayers)],
        enc_norm_g=ones((1, nhid)), enc_norm_b=zeros((1, nhid)),
        dec_norm_g=ones((1, nhid)), dec_norm_b=zeros((1, nhid)),
    )
    return params, pad_vocab


if __name__ == "__main__":
    vocab_size = 60          # pad_vocab = (2 + 60 // 8) * 8 = 72
    nemb, nhid, nlayers, nhead = 16, 32, 2, 4
    B, S, T = 2, 8, 9

    params, pad_vocab = init_params(jax.random.PRNGKey(0), vocab_size, nemb, nhid, nlayers)

    k_src, k_tgt = jax.random.split(jax.random.PRNGKey(0))
    source = jax.random.randint(k_src, (B, S), 0, vocab_size, dtype=jnp.int32)
    target = jax.random.randint(k_tgt, (B, T), 0, vocab_size, dtype=jnp.int32)

    fwd = jax.jit(functools.partial(transformer_x_forward, nhead=nhead))
    loss = fwd(params, source, target)
    jax.block_until_ready(loss)
    assert jnp.isfinite(loss), "loss is not finite"
    print("KERNEL_OK")
</pallas_src>

<mosaic_0001>
module attributes {stable_mosaic.version = 11 : i64} {
  func.func @_self_attn_kernel(%arg0: i32, %arg1: memref<1x8x32xf32, #tpu.memory_space<vmem>>, %arg2: memref<32x32xbf16, #tpu.memory_space<vmem>>, %arg3: memref<1x32xf32, #tpu.memory_space<vmem>>, %arg4: memref<32x64xbf16, #tpu.memory_space<vmem>>, %arg5: memref<1x64xf32, #tpu.memory_space<vmem>>, %arg6: memref<32x32xbf16, #tpu.memory_space<vmem>>, %arg7: memref<1x32xf32, #tpu.memory_space<vmem>>, %arg8: memref<1x32xf32, #tpu.memory_space<vmem>>, %arg9: memref<1x32xf32, #tpu.memory_space<vmem>>, %arg10: memref<1x8x32xf32, #tpu.memory_space<vmem>>, %arg11: memref<8x32xf32, #tpu.memory_space<vmem>>) attributes {dimension_semantics = [#tpu.dimension_semantics<parallel>], iteration_bounds = array<i64: 2>, scalar_prefetch = 0 : i64, scratch_operands = 1 : i64, tpu.core_type = #tpu.core_type<tc>, window_params = [{transform_indices = @transform_0, window_bounds = array<i64: 1, 8, 32>}, {pipeline_mode = #tpu.pipeline_mode<synchronous>, transform_indices = @transform_1, window_bounds = array<i64: 32, 32>}, {pipeline_mode = #tpu.pipeline_mode<synchronous>, transform_indices = @transform_2, window_bounds = array<i64: 1, 32>}, {pipeline_mode = #tpu.pipeline_mode<synchronous>, transform_indices = @transform_3, window_bounds = array<i64: 32, 64>}, {pipeline_mode = #tpu.pipeline_mode<synchronous>, transform_indices = @transform_4, window_bounds = array<i64: 1, 64>}, {pipeline_mode = #tpu.pipeline_mode<synchronous>, transform_indices = @transform_5, window_bounds = array<i64: 32, 32>}, {pipeline_mode = #tpu.pipeline_mode<synchronous>, transform_indices = @transform_6, window_bounds = array<i64: 1, 32>}, {pipeline_mode = #tpu.pipeline_mode<synchronous>, transform_indices = @transform_7, window_bounds = array<i64: 1, 32>}, {pipeline_mode = #tpu.pipeline_mode<synchronous>, transform_indices = @transform_8, window_bounds = array<i64: 1, 32>}, {transform_indices = @transform_9, window_bounds = array<i64: 1, 8, 32>}]} {
    %c0 = arith.constant 0 : index
    %c0_0 = arith.constant 0 : index
    %c0_1 = arith.constant 0 : index
    %0 = vector.load %arg1[%c0, %c0_0, %c0_1] : memref<1x8x32xf32, #tpu.memory_space<vmem>>, vector<1x8x32xf32>
    %1 = vector.shape_cast %0 : vector<1x8x32xf32> to vector<8x32xf32>
    %2 = arith.truncf %1 : vector<8x32xf32> to vector<8x32xbf16>
    %c0_2 = arith.constant 0 : index
    %c0_3 = arith.constant 0 : index
    %3 = vector.load %arg2[%c0_2, %c0_3] : memref<32x32xbf16, #tpu.memory_space<vmem>>, vector<32x32xbf16>
    %cst = arith.constant dense<0.000000e+00> : vector<8x32xf32>
    %4 = tpu.matmul %2, %3, %cst {dimension_numbers = #tpu.dot_dimension_numbers<[1], [0], [0], [1], [0, 0, 1, 1], [], []>} : vector<8x32xbf16>, vector<32x32xbf16>, vector<8x32xf32> -> vector<8x32xf32>
    %c0_4 = arith.constant 0 : index
    %c0_5 = arith.constant 0 : index
    %5 = vector.load %arg3[%c0_4, %c0_5] : memref<1x32xf32, #tpu.memory_space<vmem>>, vector<1x32xf32>
    %6 = vector.broadcast %5 : vector<1x32xf32> to vector<8x32xf32>
    %7 = arith.addf %4, %6 : vector<8x32xf32>
    %8 = arith.truncf %1 : vector<8x32xf32> to vector<8x32xbf16>
    %c0_6 = arith.constant 0 : index
    %c0_7 = arith.constant 0 : index
    %9 = vector.load %arg4[%c0_6, %c0_7] : memref<32x64xbf16, #tpu.memory_space<vmem>>, vector<32x64xbf16>
    %cst_8 = arith.constant dense<0.000000e+00> : vector<8x64xf32>
    %10 = tpu.matmul %8, %9, %cst_8 {dimension_numbers = #tpu.dot_dimension_numbers<[1], [0], [0], [1], [0, 0, 1, 1], [], []>} : vector<8x32xbf16>, vector<32x64xbf16>, vector<8x64xf32> -> vector<8x64xf32>
    %c0_9 = arith.constant 0 : index
    %c0_10 = arith.constant 0 : index
    %11 = vector.load %arg5[%c0_9, %c0_10] : memref<1x64xf32, #tpu.memory_space<vmem>>, vector<1x64xf32>
    %12 = vector.broadcast %11 : vector<1x64xf32> to vector<8x64xf32>
    %13 = arith.addf %10, %12 : vector<8x64xf32>
    %14 = arith.truncf %7 : vector<8x32xf32> to vector<8x32xbf16>
    %15 = vector.extract_strided_slice %13 {offsets = [0, 0], sizes = [8, 32], strides = [1, 1]} : vector<8x64xf32> to vector<8x32xf32>
    %16 = arith.truncf %15 : vector<8x32xf32> to vector<8x32xbf16>
    %17 = vector.extract_strided_slice %13 {offsets = [0, 32], sizes = [8, 32], strides = [1, 1]} : vector<8x64xf32> to vector<8x32xf32>
    %18 = arith.truncf %17 : vector<8x32xf32> to vector<8x32xbf16>
    %19 = vector.extract_strided_slice %14 {offsets = [0, 0], sizes = [8, 8], strides = [1, 1]} : vector<8x32xbf16> to vector<8x8xbf16>
    %20 = vector.extract_strided_slice %16 {offsets = [0, 0], sizes = [8, 8], strides = [1, 1]} : vector<8x32xbf16> to vector<8x8xbf16>
    %cst_11 = arith.constant dense<0.000000e+00> : vector<8x8xf32>
    %21 = tpu.matmul %19, %20, %cst_11 {dimension_numbers = #tpu.dot_dimension_numbers<[1], [1], [0], [0], [0, 0, 1, 0], [], []>} : vector<8x8xbf16>, vector<8x8xbf16>, vector<8x8xf32> -> vector<8x8xf32>
    %cst_12 = arith.constant 0.353553385 : f32
    %22 = vector.broadcast %cst_12 : f32 to vector<8x8xf32>
    %23 = arith.mulf %21, %22 : vector<8x8xf32>
    %cst_13 = arith.constant dense<0xFF800000> : vector<8xf32>
    %24 = vector.multi_reduction <maximumf>, %23, %cst_13 [1] : vector<8x8xf32> to vector<8xf32>
    %25 = vector.shape_cast %24 : vector<8xf32> to vector<8x1xf32>
    %26 = vector.broadcast %25 : vector<8x1xf32> to vector<8x8xf32>
    %27 = arith.subf %23, %26 : vector<8x8xf32>
    %28 = math.exp %27 : vector<8x8xf32>
    %cst_14 = arith.constant dense<0.000000e+00> : vector<8xf32>
    %29 = vector.multi_reduction <add>, %28, %cst_14 [1] : vector<8x8xf32> to vector<8xf32>
    %30 = vector.shape_cast %29 : vector<8xf32> to vector<8x1xf32>
    %31 = tpu.reciprocal %30 {approx = true} : vector<8x1xf32> -> vector<8x1xf32>
    %32 = vector.broadcast %31 : vector<8x1xf32> to vector<8x8xf32>
    %33 = arith.mulf %28, %32 : vector<8x8xf32>
    %34 = arith.truncf %33 : vector<8x8xf32> to vector<8x8xbf16>
    %35 = vector.extract_strided_slice %18 {offsets = [0, 0], sizes = [8, 8], strides = [1, 1]} : vector<8x32xbf16> to vector<8x8xbf16>
    %cst_15 = arith.constant dense<0.000000e+00> : vector<8x8xf32>
    %36 = tpu.matmul %34, %35, %cst_15 {dimension_numbers = #tpu.dot_dimension_numbers<[1], [0], [0], [1], [0, 0, 1, 1], [], []>} : vector<8x8xbf16>, vector<8x8xbf16>, vector<8x8xf32> -> vector<8x8xf32>
    %c0_16 = arith.constant 0 : index
    %c0_17 = arith.constant 0 : index
    %37 = vector.load %arg11[%c0_16, %c0_17] : memref<8x32xf32, #tpu.memory_space<vmem>>, vector<8x8xf32>
    tpu.vector_store %arg11[%c0_16, %c0_17], %36 {strides = array<i32>} : memref<8x32xf32, #tpu.memory_space<vmem>>, vector<8x8xf32>,
    %38 = vector.extract_strided_slice %14 {offsets = [0, 8], sizes = [8, 8], strides = [1, 1]} : vector<8x32xbf16> to vector<8x8xbf16>
    %39 = vector.extract_strided_slice %16 {offsets = [0, 8], sizes = [8, 8], strides = [1, 1]} : vector<8x32xbf16> to vector<8x8xbf16>
    %cst_18 = arith.constant dense<0.000000e+00> : vector<8x8xf32>
    %40 = tpu.matmul %38, %39, %cst_18 {dimension_numbers = #tpu.dot_dimension_numbers<[1], [1], [0], [0], [0, 0, 1, 0], [], []>} : vector<8x8xbf16>, vector<8x8xbf16>, vector<8x8xf32> -> vector<8x8xf32>
    %cst_19 = arith.constant 0.353553385 : f32
    %41 = vector.broadcast %cst_19 : f32 to vector<8x8xf32>
    %42 = arith.mulf %40, %41 : vector<8x8xf32>
    %cst_20 = arith.constant dense<0xFF800000> : vector<8xf32>
    %43 = vector.multi_reduction <maximumf>, %42, %cst_20 [1] : vector<8x8xf32> to vector<8xf32>
    %44 = vector.shape_cast %43 : vector<8xf32> to vector<8x1xf32>
    %45 = vector.broadcast %44 : vector<8x1xf32> to vector<8x8xf32>
    %46 = arith.subf %42, %45 : vector<8x8xf32>
    %47 = math.exp %46 : vector<8x8xf32>
    %cst_21 = arith.constant dense<0.000000e+00> : vector<8xf32>
    %48 = vector.multi_reduction <add>, %47, %cst_21 [1] : vector<8x8xf32> to vector<8xf32>
    %49 = vector.shape_cast %48 : vector<8xf32> to vector<8x1xf32>
    %50 = tpu.reciprocal %49 {approx = true} : vector<8x1xf32> -> vector<8x1xf32>
    %51 = vector.broadcast %50 : vector<8x1xf32> to vector<8x8xf32>
    %52 = arith.mulf %47, %51 : vector<8x8xf32>
    %53 = arith.truncf %52 : vector<8x8xf32> to vector<8x8xbf16>
    %54 = vector.extract_strided_slice %18 {offsets = [0, 8], sizes = [8, 8], strides = [1, 1]} : vector<8x32xbf16> to vector<8x8xbf16>
    %cst_22 = arith.constant dense<0.000000e+00> : vector<8x8xf32>
    %55 = tpu.matmul %53, %54, %cst_22 {dimension_numbers = #tpu.dot_dimension_numbers<[1], [0], [0], [1], [0, 0, 1, 1], [], []>} : vector<8x8xbf16>, vector<8x8xbf16>, vector<8x8xf32> -> vector<8x8xf32>
    %c0_23 = arith.constant 0 : index
    %c8 = arith.constant 8 : index
    %56 = vector.load %arg11[%c0_23, %c8] : memref<8x32xf32, #tpu.memory_space<vmem>>, vector<8x8xf32>
    tpu.vector_store %arg11[%c0_23, %c8], %55 {strides = array<i32>} : memref<8x32xf32, #tpu.memory_space<vmem>>, vector<8x8xf32>,
    %57 = vector.extract_strided_slice %14 {offsets = [0, 16], sizes = [8, 8], strides = [1, 1]} : vector<8x32xbf16> to vector<8x8xbf16>
    %58 = vector.extract_strided_slice %16 {offsets = [0, 16], sizes = [8, 8], strides = [1, 1]} : vector<8x32xbf16> to vector<8x8xbf16>
    %cst_24 = arith.constant dense<0.000000e+00> : vector<8x8xf32>
    %59 = tpu.matmul %57, %58, %cst_24 {dimension_numbers = #tpu.dot_dimension_numbers<[1], [1], [0], [0], [0, 0, 1, 0], [], []>} : vector<8x8xbf16>, vector<8x8xbf16>, vector<8x8xf32> -> vector<8x8xf32>
    %cst_25 = arith.constant 0.353553385 : f32
    %60 = vector.broadcast %cst_25 : f32 to vector<8x8xf32>
    %61 = arith.mulf %59, %60 : vector<8x8xf32>
    %cst_26 = arith.constant dense<0xFF800000> : vector<8xf32>
    %62 = vector.multi_reduction <maximumf>, %61, %cst_26 [1] : vector<8x8xf32> to vector<8xf32>
    %63 = vector.shape_cast %62 : vector<8xf32> to vector<8x1xf32>
    %64 = vector.broadcast %63 : vector<8x1xf32> to vector<8x8xf32>
    %65 = arith.subf %61, %64 : vector<8x8xf32>
    %66 = math.exp %65 : vector<8x8xf32>
    %cst_27 = arith.constant dense<0.000000e+00> : vector<8xf32>
    %67 = vector.multi_reduction <add>, %66, %cst_27 [1] : vector<8x8xf32> to vector<8xf32>
    %68 = vector.shape_cast %67 : vector<8xf32> to vector<8x1xf32>
    %69 = tpu.reciprocal %68 {approx = true} : vector<8x1xf32> -> vector<8x1xf32>
    %70 = vector.broadcast %69 : vector<8x1xf32> to vector<8x8xf32>
    %71 = arith.mulf %66, %70 : vector<8x8xf32>
    %72 = arith.truncf %71 : vector<8x8xf32> to vector<8x8xbf16>
    %73 = vector.extract_strided_slice %18 {offsets = [0, 16], sizes = [8, 8], strides = [1, 1]} : vector<8x32xbf16> to vector<8x8xbf16>
    %cst_28 = arith.constant dense<0.000000e+00> : vector<8x8xf32>
    %74 = tpu.matmul %72, %73, %cst_28 {dimension_numbers = #tpu.dot_dimension_numbers<[1], [0], [0], [1], [0, 0, 1, 1], [], []>} : vector<8x8xbf16>, vector<8x8xbf16>, vector<8x8xf32> -> vector<8x8xf32>
    %c0_29 = arith.constant 0 : index
    %c16 = arith.constant 16 : index
    %75 = vector.load %arg11[%c0_29, %c16] : memref<8x32xf32, #tpu.memory_space<vmem>>, vector<8x8xf32>
    tpu.vector_store %arg11[%c0_29, %c16], %74 {strides = array<i32>} : memref<8x32xf32, #tpu.memory_space<vmem>>, vector<8x8xf32>,
    %76 = vector.extract_strided_slice %14 {offsets = [0, 24], sizes = [8, 8], strides = [1, 1]} : vector<8x32xbf16> to vector<8x8xbf16>
    %77 = vector.extract_strided_slice %16 {offsets = [0, 24], sizes = [8, 8], strides = [1, 1]} : vector<8x32xbf16> to vector<8x8xbf16>
    %cst_30 = arith.constant dense<0.000000e+00> : vector<8x8xf32>
    %78 = tpu.matmul %76, %77, %cst_30 {dimension_numbers = #tpu.dot_dimension_numbers<[1], [1], [0], [0], [0, 0, 1, 0], [], []>} : vector<8x8xbf16>, vector<8x8xbf16>, vector<8x8xf32> -> vector<8x8xf32>
    %cst_31 = arith.constant 0.353553385 : f32
    %79 = vector.broadcast %cst_31 : f32 to vector<8x8xf32>
    %80 = arith.mulf %78, %79 : vector<8x8xf32>
    %cst_32 = arith.constant dense<0xFF800000> : vector<8xf32>
    %81 = vector.multi_reduction <maximumf>, %80, %cst_32 [1] : vector<8x8xf32> to vector<8xf32>
    %82 = vector.shape_cast %81 : vector<8xf32> to vector<8x1xf32>
    %83 = vector.broadcast %82 : vector<8x1xf32> to vector<8x8xf32>
    %84 = arith.subf %80, %83 : vector<8x8xf32>
    %85 = math.exp %84 : vector<8x8xf32>
    %cst_33 = arith.constant dense<0.000000e+00> : vector<8xf32>
    %86 = vector.multi_reduction <add>, %85, %cst_33 [1] : vector<8x8xf32> to vector<8xf32>
    %87 = vector.shape_cast %86 : vector<8xf32> to vector<8x1xf32>
    %88 = tpu.reciprocal %87 {approx = true} : vector<8x1xf32> -> vector<8x1xf32>
    %89 = vector.broadcast %88 : vector<8x1xf32> to vector<8x8xf32>
    %90 = arith.mulf %85, %89 : vector<8x8xf32>
    %91 = arith.truncf %90 : vector<8x8xf32> to vector<8x8xbf16>
    %92 = vector.extract_strided_slice %18 {offsets = [0, 24], sizes = [8, 8], strides = [1, 1]} : vector<8x32xbf16> to vector<8x8xbf16>
    %cst_34 = arith.constant dense<0.000000e+00> : vector<8x8xf32>
    %93 = tpu.matmul %91, %92, %cst_34 {dimension_numbers = #tpu.dot_dimension_numbers<[1], [0], [0], [1], [0, 0, 1, 1], [], []>} : vector<8x8xbf16>, vector<8x8xbf16>, vector<8x8xf32> -> vector<8x8xf32>
    %c0_35 = arith.constant 0 : index
    %c24 = arith.constant 24 : index
    %94 = vector.load %arg11[%c0_35, %c24] : memref<8x32xf32, #tpu.memory_space<vmem>>, vector<8x8xf32>
    tpu.vector_store %arg11[%c0_35, %c24], %93 {strides = array<i32>} : memref<8x32xf32, #tpu.memory_space<vmem>>, vector<8x8xf32>,
    %c0_36 = arith.constant 0 : index
    %c0_37 = arith.constant 0 : index
    %95 = vector.load %arg7[%c0_36, %c0_37] : memref<1x32xf32, #tpu.memory_space<vmem>>, vector<1x32xf32>
    %96 = vector.broadcast %95 : vector<1x32xf32> to vector<8x32xf32>
    %97 = arith.addf %1, %96 : vector<8x32xf32>
    %c0_38 = arith.constant 0 : index
    %c0_39 = arith.constant 0 : index
    %98 = vector.load %arg11[%c0_38, %c0_39] : memref<8x32xf32, #tpu.memory_space<vmem>>, vector<8x32xf32>
    %99 = arith.truncf %98 : vector<8x32xf32> to vector<8x32xbf16>
    %c0_40 = arith.constant 0 : index
    %c0_41 = arith.constant 0 : index
    %100 = vector.load %arg6[%c0_40, %c0_41] : memref<32x32xbf16, #tpu.memory_space<vmem>>, vector<32x32xbf16>
    %cst_42 = arith.constant dense<0.000000e+00> : vector<8x32xf32>
    %101 = tpu.matmul %99, %100, %cst_42 {dimension_numbers = #tpu.dot_dimension_numbers<[1], [0], [0], [1], [0, 0, 1, 1], [], []>} : vector<8x32xbf16>, vector<32x32xbf16>, vector<8x32xf32> -> vector<8x32xf32>
    %102 = arith.addf %97, %101 : vector<8x32xf32>
    %c0_43 = arith.constant 0 : index
    %c0_44 = arith.constant 0 : index
    %103 = vector.load %arg8[%c0_43, %c0_44] : memref<1x32xf32, #tpu.memory_space<vmem>>, vector<1x32xf32>
    %c0_45 = arith.constant 0 : index
    %c0_46 = arith.constant 0 : index
    %104 = vector.load %arg9[%c0_45, %c0_46] : memref<1x32xf32, #tpu.memory_space<vmem>>, vector<1x32xf32>
    %cst_47 = arith.constant dense<0.000000e+00> : vector<8xf32>
    %105 = vector.multi_reduction <add>, %102, %cst_47 [1] : vector<8x32xf32> to vector<8xf32>
    %106 = vector.shape_cast %105 : vector<8xf32> to vector<8x1xf32>
    %cst_48 = arith.constant 3.200000e+01 : f32
    %107 = vector.broadcast %cst_48 : f32 to vector<8x1xf32>
    %108 = arith.divf %106, %107 : vector<8x1xf32>
    %109 = vector.broadcast %108 : vector<8x1xf32> to vector<8x32xf32>
    %110 = arith.subf %102, %109 : vector<8x32xf32>
    %111 = arith.mulf %110, %110 : vector<8x32xf32>
    %cst_49 = arith.constant dense<0.000000e+00> : vector<8xf32>
    %112 = vector.multi_reduction <add>, %111, %cst_49 [1] : vector<8x32xf32> to vector<8xf32>
    %113 = vector.shape_cast %112 : vector<8xf32> to vector<8x1xf32>
    %cst_50 = arith.constant 3.200000e+01 : f32
    %114 = vector.broadcast %cst_50 : f32 to vector<8x1xf32>
    %115 = arith.divf %113, %114 : vector<8x1xf32>
    %116 = vector.broadcast %108 : vector<8x1xf32> to vector<8x32xf32>
    %117 = arith.subf %102, %116 : vector<8x32xf32>
    %cst_51 = arith.constant 9.99999974E-6 : f32
    %118 = vector.broadcast %cst_51 : f32 to vector<8x1xf32>
    %119 = arith.addf %115, %118 : vector<8x1xf32>
    %120 = math.rsqrt %119 : vector<8x1xf32>
    %121 = vector.broadcast %120 : vector<8x1xf32> to vector<8x32xf32>
    %122 = arith.mulf %117, %121 : vector<8x32xf32>
    %123 = vector.broadcast %103 : vector<1x32xf32> to vector<8x32xf32>
    %124 = arith.mulf %122, %123 : vector<8x32xf32>
    %125 = vector.broadcast %104 : vector<1x32xf32> to vector<8x32xf32>
    %126 = arith.addf %124, %125 : vector<8x32xf32>
    %c0_52 = arith.constant 0 : index
    %c0_53 = arith.constant 0 : index
    %c0_54 = arith.constant 0 : index
    %127 = vector.load %arg10[%c0_52, %c0_53, %c0_54] : memref<1x8x32xf32, #tpu.memory_space<vmem>>, vector<1x8x32xf32>
    %128 = vector.shape_cast %127 : vector<1x8x32xf32> to vector<8x32xf32>
    %129 = vector.shape_cast %126 : vector<8x32xf32> to vector<1x8x32xf32>
    tpu.vector_store %arg10[%c0_52, %c0_53, %c0_54], %129 {strides = array<i32>} : memref<1x8x32xf32, #tpu.memory_space<vmem>>, vector<1x8x32xf32>,
    return
  }
  func.func @transform_0(%arg0: i32) -> (i32, i32, i32) {
    %c0_i32 = arith.constant 0 : i32
    %c0_i32_0 = arith.constant 0 : i32
    %c0_i32_1 = arith.constant 0 : i32
    return %arg0, %c0_i32, %c0_i32_0 : i32, i32, i32
  }
  func.func @transform_1(%arg0: i32) -> (i32, i32) {
    %c0_i32 = arith.constant 0 : i32
    %c0_i32_0 = arith.constant 0 : i32
    %c0_i32_1 = arith.constant 0 : i32
    return %c0_i32, %c0_i32_0 : i32, i32
  }
  func.func @transform_2(%arg0: i32) -> (i32, i32) {
    %c0_i32 = arith.constant 0 : i32
    %c0_i32_0 = arith.constant 0 : i32
    %c0_i32_1 = arith.constant 0 : i32
    return %c0_i32, %c0_i32_0 : i32, i32
  }
  func.func @transform_3(%arg0: i32) -> (i32, i32) {
    %c0_i32 = arith.constant 0 : i32
    %c0_i32_0 = arith.constant 0 : i32
    %c0_i32_1 = arith.constant 0 : i32
    return %c0_i32, %c0_i32_0 : i32, i32
  }
  func.func @transform_4(%arg0: i32) -> (i32, i32) {
    %c0_i32 = arith.constant 0 : i32
    %c0_i32_0 = arith.constant 0 : i32
    %c0_i32_1 = arith.constant 0 : i32
    return %c0_i32, %c0_i32_0 : i32, i32
  }
  func.func @transform_5(%arg0: i32) -> (i32, i32) {
    %c0_i32 = arith.constant 0 : i32
    %c0_i32_0 = arith.constant 0 : i32
    %c0_i32_1 = arith.constant 0 : i32
    return %c0_i32, %c0_i32_0 : i32, i32
  }
  func.func @transform_6(%arg0: i32) -> (i32, i32) {
    %c0_i32 = arith.constant 0 : i32
    %c0_i32_0 = arith.constant 0 : i32
    %c0_i32_1 = arith.constant 0 : i32
    return %c0_i32, %c0_i32_0 : i32, i32
  }
  func.func @transform_7(%arg0: i32) -> (i32, i32) {
    %c0_i32 = arith.constant 0 : i32
    %c0_i32_0 = arith.constant 0 : i32
    %c0_i32_1 = arith.constant 0 : i32
    return %c0_i32, %c0_i32_0 : i32, i32
  }
  func.func @transform_8(%arg0: i32) -> (i32, i32) {
    %c0_i32 = arith.constant 0 : i32
    %c0_i32_0 = arith.constant 0 : i32
    %c0_i32_1 = arith.constant 0 : i32
    return %c0_i32, %c0_i32_0 : i32, i32
  }
  func.func @transform_9(%arg0: i32) -> (i32, i32, i32) {
    %c0_i32 = arith.constant 0 : i32
    %c0_i32_0 = arith.constant 0 : i32
    %c0_i32_1 = arith.constant 0 : i32
    return %arg0, %c0_i32, %c0_i32_0 : i32, i32, i32
  }
}

module attributes {stable_mosaic.version = 11 : i64} {
  func.func @_bilstm_kernel(%arg0: memref<16x16xbf16, #tpu.memory_space<vmem>>, %arg1: memref<16x128xbf16, #tpu.memory_space<vmem>>, %arg2: memref<1x128xf32, #tpu.memory_space<vmem>>, %arg3: memref<16x64xbf16, #tpu.memory_space<vmem>>, %arg4: memref<16x64xbf16, #tpu.memory_space<vmem>>, %arg5: memref<16x32xf32, #tpu.memory_space<vmem>>, %arg6: memref<16x128xf32, #tpu.memory_space<vmem>>, %arg7: memref<2x16xf32, #tpu.memory_space<vmem>>, %arg8: memref<2x16xf32, #tpu.memory_space<vmem>>, %arg9: memref<2x16xf32, #tpu.memory_space<vmem>>, %arg10: memref<2x16xf32, #tpu.memory_space<vmem>>) attributes {dimension_semantics = [], scalar_prefetch = 0 : i64, scratch_operands = 5 : i64, tpu.core_type = #tpu.core_type<tc>} {
    %c0 = arith.constant 0 : index
    %c0_0 = arith.constant 0 : index
    %0 = vector.load %arg0[%c0, %c0_0] : memref<16x16xbf16, #tpu.memory_space<vmem>>, vector<16x16xbf16>
    %c0_1 = arith.constant 0 : index
    %c0_2 = arith.constant 0 : index
    %1 = vector.load %arg1[%c0_1, %c0_2] : memref<16x128xbf16, #tpu.memory_space<vmem>>, vector<16x128xbf16>
    %cst = arith.constant dense<0.000000e+00> : vector<16x128xf32>
    %2 = tpu.matmul %0, %1, %cst {dimension_numbers = #tpu.dot_dimension_numbers<[1], [0], [0], [1], [0, 0, 1, 1], [], []>} : vector<16x16xbf16>, vector<16x128xbf16>, vector<16x128xf32> -> vector<16x128xf32>
    %c0_3 = arith.constant 0 : index
    %c0_4 = arith.constant 0 : index
    %3 = vector.load %arg2[%c0_3, %c0_4] : memref<1x128xf32, #tpu.memory_space<vmem>>, vector<1x128xf32>
    %4 = vector.broadcast %3 : vector<1x128xf32> to vector<16x128xf32>
    %5 = arith.addf %2, %4 : vector<16x128xf32>
    %c0_5 = arith.constant 0 : index
    %c0_6 = arith.constant 0 : index
    %6 = vector.load %arg6[%c0_5, %c0_6] : memref<16x128xf32, #tpu.memory_space<vmem>>, vector<16x128xf32>
    tpu.vector_store %arg6[%c0_5, %c0_6], %5 {strides = array<i32>} : memref<16x128xf32, #tpu.memory_space<vmem>>, vector<16x128xf32>,
    %cst_7 = arith.constant 0.000000e+00 : f32
    %7 = vector.broadcast %cst_7 : f32 to vector<2x16xf32>
    %c0_8 = arith.constant 0 : index
    %c0_9 = arith.constant 0 : index
    %8 = vector.load %arg7[%c0_8, %c0_9] : memref<2x16xf32, #tpu.memory_space<vmem>>, vector<2x16xf32>
    tpu.vector_store %arg7[%c0_8, %c0_9], %7 {strides = array<i32>} : memref<2x16xf32, #tpu.memory_space<vmem>>, vector<2x16xf32>,
    %cst_10 = arith.constant 0.000000e+00 : f32
    %9 = vector.broadcast %cst_10 : f32 to vector<2x16xf32>
    %c0_11 = arith.constant 0 : index
    %c0_12 = arith.constant 0 : index
    %10 = vector.load %arg8[%c0_11, %c0_12] : memref<2x16xf32, #tpu.memory_space<vmem>>, vector<2x16xf32>
    tpu.vector_store %arg8[%c0_11, %c0_12], %9 {strides = array<i32>} : memref<2x16xf32, #tpu.memory_space<vmem>>, vector<2x16xf32>,
    %cst_13 = arith.constant 0.000000e+00 : f32
    %11 = vector.broadcast %cst_13 : f32 to vector<2x16xf32>
    %c0_14 = arith.constant 0 : index
    %c0_15 = arith.constant 0 : index
    %12 = vector.load %arg9[%c0_14, %c0_15] : memref<2x16xf32, #tpu.memory_space<vmem>>, vector<2x16xf32>
    tpu.vector_store %arg9[%c0_14, %c0_15], %11 {strides = array<i32>} : memref<2x16xf32, #tpu.memory_space<vmem>>, vector<2x16xf32>,
    %cst_16 = arith.constant 0.000000e+00 : f32
    %13 = vector.broadcast %cst_16 : f32 to vector<2x16xf32>
    %c0_17 = arith.constant 0 : index
    %c0_18 = arith.constant 0 : index
    %14 = vector.load %arg10[%c0_17, %c0_18] : memref<2x16xf32, #tpu.memory_space<vmem>>, vector<2x16xf32>
    tpu.vector_store %arg10[%c0_17, %c0_18], %13 {strides = array<i32>} : memref<2x16xf32, #tpu.memory_space<vmem>>, vector<2x16xf32>,
    %c0_19 = arith.constant 0 : index
    %c0_20 = arith.constant 0 : index
    %15 = vector.load %arg3[%c0_19, %c0_20] : memref<16x64xbf16, #tpu.memory_space<vmem>>, vector<16x64xbf16>
    %c0_21 = arith.constant 0 : index
    %c0_22 = arith.constant 0 : index
    %16 = vector.load %arg4[%c0_21, %c0_22] : memref<16x64xbf16, #tpu.memory_space<vmem>>, vector<16x64xbf16>
    %c0_i32 = arith.constant 0 : i32
    %c8_i32 = arith.constant 8 : i32
    %17 = arith.addi %c0_i32, %c8_i32 : i32
    %c1_i32 = arith.constant 1 : i32
    scf.for %arg11 = %c0_i32 to %17 step %c1_i32  : i32 {
      %c2_i32 = arith.constant 2 : i32
      %18 = arith.muli %arg11, %c2_i32 : i32
      %19 = tpu.assume_multiple %18, 2 : i32
      %20 = arith.index_cast %19 : i32 to index
      %c0_24 = arith.constant 0 : index
      %21 = vector.load %arg6[%20, %c0_24] : memref<16x128xf32, #tpu.memory_space<vmem>>, vector<2x64xf32>
      %c0_25 = arith.constant 0 : index
      %c0_26 = arith.constant 0 : index
      %22 = vector.load %arg7[%c0_25, %c0_26] : memref<2x16xf32, #tpu.memory_space<vmem>>, vector<2x16xf32>
      %23 = arith.truncf %22 : vector<2x16xf32> to vector<2x16xbf16>
      %cst_27 = arith.constant dense<0.000000e+00> : vector<2x64xf32>
      %24 = tpu.matmul %23, %15, %cst_27 {dimension_numbers = #tpu.dot_dimension_numbers<[1], [0], [0], [1], [0, 0, 1, 1], [], []>} : vector<2x16xbf16>, vector<16x64xbf16>, vector<2x64xf32> -> vector<2x64xf32>
      %25 = arith.addf %21, %24 : vector<2x64xf32>
      %c0_28 = arith.constant 0 : index
      %c0_29 = arith.constant 0 : index
      %26 = vector.load %arg8[%c0_28, %c0_29] : memref<2x16xf32, #tpu.memory_space<vmem>>, vector<2x16xf32>
      %27 = vector.extract_strided_slice %25 {offsets = [0, 0], sizes = [2, 16], strides = [1, 1]} : vector<2x64xf32> to vector<2x16xf32>
      %28 = arith.negf %27 : vector<2x16xf32>
      %29 = math.exp %28 : vector<2x16xf32>
      %cst_30 = arith.constant 1.000000e+00 : f32
      %30 = vector.broadcast %cst_30 : f32 to vector<2x16xf32>
      %31 = arith.addf %30, %29 : vector<2x16xf32>
      %32 = arith.divf %30, %31 : vector<2x16xf32>
      %33 = vector.extract_strided_slice %25 {offsets = [0, 16], sizes = [2, 16], strides = [1, 1]} : vector<2x64xf32> to vector<2x16xf32>
      %34 = arith.negf %33 : vector<2x16xf32>
      %35 = math.exp %34 : vector<2x16xf32>
      %cst_31 = arith.constant 1.000000e+00 : f32
      %36 = vector.broadcast %cst_31 : f32 to vector<2x16xf32>
      %37 = arith.addf %36, %35 : vector<2x16xf32>
      %38 = arith.divf %36, %37 : vector<2x16xf32>
      %39 = vector.extract_strided_slice %25 {offsets = [0, 32], sizes = [2, 16], strides = [1, 1]} : vector<2x64xf32> to vector<2x16xf32>
      %40 = math.tanh %39 : vector<2x16xf32>
      %41 = vector.extract_strided_slice %25 {offsets = [0, 48], sizes = [2, 16], strides = [1, 1]} : vector<2x64xf32> to vector<2x16xf32>
      %42 = arith.negf %41 : vector<2x16xf32>
      %43 = math.exp %42 : vector<2x16xf32>
      %cst_32 = arith.constant 1.000000e+00 : f32
      %44 = vector.broadcast %cst_32 : f32 to vector<2x16xf32>
      %45 = arith.addf %44, %43 : vector<2x16xf32>
      %46 = arith.divf %44, %45 : vector<2x16xf32>
      %47 = arith.mulf %38, %26 : vector<2x16xf32>
      %48 = arith.mulf %32, %40 : vector<2x16xf32>
      %49 = arith.addf %47, %48 : vector<2x16xf32>
      %50 = math.tanh %49 : vector<2x16xf32>
      %51 = arith.mulf %46, %50 : vector<2x16xf32>
      %c0_33 = arith.constant 0 : index
      %c0_34 = arith.constant 0 : index
      %52 = vector.load %arg7[%c0_33, %c0_34] : memref<2x16xf32, #tpu.memory_space<vmem>>, vector<2x16xf32>
      tpu.vector_store %arg7[%c0_33, %c0_34], %51 {strides = array<i32>} : memref<2x16xf32, #tpu.memory_space<vmem>>, vector<2x16xf32>,
      %c0_35 = arith.constant 0 : index
      %c0_36 = arith.constant 0 : index
      %53 = vector.load %arg8[%c0_35, %c0_36] : memref<2x16xf32, #tpu.memory_space<vmem>>, vector<2x16xf32>
      tpu.vector_store %arg8[%c0_35, %c0_36], %49 {strides = array<i32>} : memref<2x16xf32, #tpu.memory_space<vmem>>, vector<2x16xf32>,
      %54 = arith.index_cast %19 : i32 to index
      %c0_37 = arith.constant 0 : index
      %55 = vector.load %arg5[%54, %c0_37] : memref<16x32xf32, #tpu.memory_space<vmem>>, vector<2x16xf32>
      tpu.vector_store %arg5[%54, %c0_37], %51 {strides = array<i32>} : memref<16x32xf32, #tpu.memory_space<vmem>>, vector<2x16xf32>,
      %c7_i32 = arith.constant 7 : i32
      %56 = arith.subi %c7_i32, %arg11 : i32
      %c2_i32_38 = arith.constant 2 : i32
      %57 = arith.muli %56, %c2_i32_38 : i32
      %58 = tpu.assume_multiple %57, 2 : i32
      %59 = arith.index_cast %58 : i32 to index
      %c64 = arith.constant 64 : index
      %60 = vector.load %arg6[%59, %c64] : memref<16x128xf32, #tpu.memory_space<vmem>>, vector<2x64xf32>
      %c0_39 = arith.constant 0 : index
      %c0_40 = arith.constant 0 : index
      %61 = vector.load %arg9[%c0_39, %c0_40] : memref<2x16xf32, #tpu.memory_space<vmem>>, vector<2x16xf32>
      %62 = arith.truncf %61 : vector<2x16xf32> to vector<2x16xbf16>
      %cst_41 = arith.constant dense<0.000000e+00> : vector<2x64xf32>
      %63 = tpu.matmul %62, %16, %cst_41 {dimension_numbers = #tpu.dot_dimension_numbers<[1], [0], [0], [1], [0, 0, 1, 1], [], []>} : vector<2x16xbf16>, vector<16x64xbf16>, vector<2x64xf32> -> vector<2x64xf32>
      %64 = arith.addf %60, %63 : vector<2x64xf32>
      %c0_42 = arith.constant 0 : index
      %c0_43 = arith.constant 0 : index
      %65 = vector.load %arg10[%c0_42, %c0_43] : memref<2x16xf32, #tpu.memory_space<vmem>>, vector<2x16xf32>
      %66 = vector.extract_strided_slice %64 {offsets = [0, 0], sizes = [2, 16], strides = [1, 1]} : vector<2x64xf32> to vector<2x16xf32>
      %67 = arith.negf %66 : vector<2x16xf32>
      %68 = math.exp %67 : vector<2x16xf32>
      %cst_44 = arith.constant 1.000000e+00 : f32
      %69 = vector.broadcast %cst_44 : f32 to vector<2x16xf32>
      %70 = arith.addf %69, %68 : vector<2x16xf32>
      %71 = arith.divf %69, %70 : vector<2x16xf32>
      %72 = vector.extract_strided_slice %64 {offsets = [0, 16], sizes = [2, 16], strides = [1, 1]} : vector<2x64xf32> to vector<2x16xf32>
      %73 = arith.negf %72 : vector<2x16xf32>
      %74 = math.exp %73 : vector<2x16xf32>
      %cst_45 = arith.constant 1.000000e+00 : f32
      %75 = vector.broadcast %cst_45 : f32 to vector<2x16xf32>
      %76 = arith.addf %75, %74 : vector<2x16xf32>
      %77 = arith.divf %75, %76 : vector<2x16xf32>
      %78 = vector.extract_strided_slice %64 {offsets = [0, 32], sizes = [2, 16], strides = [1, 1]} : vector<2x64xf32> to vector<2x16xf32>
      %79 = math.tanh %78 : vector<2x16xf32>
      %80 = vector.extract_strided_slice %64 {offsets = [0, 48], sizes = [2, 16], strides = [1, 1]} : vector<2x64xf32> to vector<2x16xf32>
      %81 = arith.negf %80 : vector<2x16xf32>
      %82 = math.exp %81 : vector<2x16xf32>
      %cst_46 = arith.constant 1.000000e+00 : f32
      %83 = vector.broadcast %cst_46 : f32 to vector<2x16xf32>
      %84 = arith.addf %83, %82 : vector<2x16xf32>
      %85 = arith.divf %83, %84 : vector<2x16xf32>
      %86 = arith.mulf %77, %65 : vector<2x16xf32>
      %87 = arith.mulf %71, %79 : vector<2x16xf32>
      %88 = arith.addf %86, %87 : vector<2x16xf32>
      %89 = math.tanh %88 : vector<2x16xf32>
      %90 = arith.mulf %85, %89 : vector<2x16xf32>
      %c0_47 = arith.constant 0 : index
      %c0_48 = arith.constant 0 : index
      %91 = vector.load %arg9[%c0_47, %c0_48] : memref<2x16xf32, #tpu.memory_space<vmem>>, vector<2x16xf32>
      tpu.vector_store %arg9[%c0_47, %c0_48], %90 {strides = array<i32>} : memref<2x16xf32, #tpu.memory_space<vmem>>, vector<2x16xf32>,
      %c0_49 = arith.constant 0 : index
      %c0_50 = arith.constant 0 : index
      %92 = vector.load %arg10[%c0_49, %c0_50] : memref<2x16xf32, #tpu.memory_space<vmem>>, vector<2x16xf32>
      tpu.vector_store %arg10[%c0_49, %c0_50], %88 {strides = array<i32>} : memref<2x16xf32, #tpu.memory_space<vmem>>, vector<2x16xf32>,
      %93 = arith.index_cast %58 : i32 to index
      %c16 = arith.constant 16 : index
      %94 = vector.load %arg5[%93, %c16] : memref<16x32xf32, #tpu.memory_space<vmem>>, vector<2x16xf32>
      tpu.vector_store %arg5[%93, %c16], %90 {strides = array<i32>} : memref<16x32xf32, #tpu.memory_space<vmem>>, vector<2x16xf32>,
    }
    %c8_i32_23 = arith.constant 8 : i32
    return
  }
}

module attributes {stable_mosaic.version = 11 : i64} {
  func.func @_ffn_kernel(%arg0: i32, %arg1: memref<16x32xf32, #tpu.memory_space<vmem>>, %arg2: memref<32x128xbf16, #tpu.memory_space<vmem>>, %arg3: memref<1x128xf32, #tpu.memory_space<vmem>>, %arg4: memref<128x32xbf16, #tpu.memory_space<vmem>>, %arg5: memref<1x32xf32, #tpu.memory_space<vmem>>, %arg6: memref<1x32xf32, #tpu.memory_space<vmem>>, %arg7: memref<1x32xf32, #tpu.memory_space<vmem>>, %arg8: memref<1x32xf32, #tpu.memory_space<vmem>>, %arg9: memref<1x32xf32, #tpu.memory_space<vmem>>, %arg10: memref<16x32xf32, #tpu.memory_space<vmem>>) attributes {dimension_semantics = [#tpu.dimension_semantics<parallel>], iteration_bounds = array<i64: 1>, scalar_prefetch = 0 : i64, scratch_operands = 0 : i64, tpu.core_type = #tpu.core_type<tc>, window_params = [{transform_indices = @transform_0, window_bounds = array<i64: 16, 32>}, {pipeline_mode = #tpu.pipeline_mode<synchronous>, transform_indices = @transform_1, window_bounds = array<i64: 32, 128>}, {pipeline_mode = #tpu.pipeline_mode<synchronous>, transform_indices = @transform_2, window_bounds = array<i64: 1, 128>}, {pipeline_mode = #tpu.pipeline_mode<synchronous>, transform_indices = @transform_3, window_bounds = array<i64: 128, 32>}, {pipeline_mode = #tpu.pipeline_mode<synchronous>, transform_indices = @transform_4, window_bounds = array<i64: 1, 32>}, {pipeline_mode = #tpu.pipeline_mode<synchronous>, transform_indices = @transform_5, window_bounds = array<i64: 1, 32>}, {pipeline_mode = #tpu.pipeline_mode<synchronous>, transform_indices = @transform_6, window_bounds = array<i64: 1, 32>}, {pipeline_mode = #tpu.pipeline_mode<synchronous>, transform_indices = @transform_7, window_bounds = array<i64: 1, 32>}, {pipeline_mode = #tpu.pipeline_mode<synchronous>, transform_indices = @transform_8, window_bounds = array<i64: 1, 32>}, {transform_indices = @transform_9, window_bounds = array<i64: 16, 32>}]} {
    %c0 = arith.constant 0 : index
    %c0_0 = arith.constant 0 : index
    %0 = vector.load %arg1[%c0, %c0_0] : memref<16x32xf32, #tpu.memory_space<vmem>>, vector<16x32xf32>
    %1 = arith.truncf %0 : vector<16x32xf32> to vector<16x32xbf16>
    %c0_1 = arith.constant 0 : index
    %c0_2 = arith.constant 0 : index
    %2 = vector.load %arg2[%c0_1, %c0_2] : memref<32x128xbf16, #tpu.memory_space<vmem>>, vector<32x128xbf16>
    %cst = arith.constant dense<0.000000e+00> : vector<16x128xf32>
    %3 = tpu.matmul %1, %2, %cst {dimension_numbers = #tpu.dot_dimension_numbers<[1], [0], [0], [1], [0, 0, 1, 1], [], []>} : vector<16x32xbf16>, vector<32x128xbf16>, vector<16x128xf32> -> vector<16x128xf32>
    %c0_3 = arith.constant 0 : index
    %c0_4 = arith.constant 0 : index
    %4 = vector.load %arg3[%c0_3, %c0_4] : memref<1x128xf32, #tpu.memory_space<vmem>>, vector<1x128xf32>
    %5 = vector.broadcast %4 : vector<1x128xf32> to vector<16x128xf32>
    %6 = arith.addf %3, %5 : vector<16x128xf32>
    %7 = arith.mulf %6, %6 : vector<16x128xf32>
    %8 = arith.mulf %6, %7 : vector<16x128xf32>
    %cst_5 = arith.constant 4.471500e-02 : f32
    %9 = vector.broadcast %cst_5 : f32 to vector<16x128xf32>
    %10 = arith.mulf %9, %8 : vector<16x128xf32>
    %11 = arith.addf %6, %10 : vector<16x128xf32>
    %cst_6 = arith.constant 0.797884583 : f32
    %12 = vector.broadcast %cst_6 : f32 to vector<16x128xf32>
    %13 = arith.mulf %12, %11 : vector<16x128xf32>
    %14 = math.tanh %13 : vector<16x128xf32>
    %cst_7 = arith.constant 1.000000e+00 : f32
    %15 = vector.broadcast %cst_7 : f32 to vector<16x128xf32>
    %16 = arith.addf %15, %14 : vector<16x128xf32>
    %cst_8 = arith.constant 5.000000e-01 : f32
    %17 = vector.broadcast %cst_8 : f32 to vector<16x128xf32>
    %18 = arith.mulf %17, %16 : vector<16x128xf32>
    %19 = arith.mulf %6, %18 : vector<16x128xf32>
    %20 = arith.truncf %19 : vector<16x128xf32> to vector<16x128xbf16>
    %c0_9 = arith.constant 0 : index
    %c0_10 = arith.constant 0 : index
    %21 = vector.load %arg4[%c0_9, %c0_10] : memref<128x32xbf16, #tpu.memory_space<vmem>>, vector<128x32xbf16>
    %cst_11 = arith.constant dense<0.000000e+00> : vector<16x32xf32>
    %22 = tpu.matmul %20, %21, %cst_11 {dimension_numbers = #tpu.dot_dimension_numbers<[1], [0], [0], [1], [0, 0, 1, 1], [], []>} : vector<16x128xbf16>, vector<128x32xbf16>, vector<16x32xf32> -> vector<16x32xf32>
    %c0_12 = arith.constant 0 : index
    %c0_13 = arith.constant 0 : index
    %23 = vector.load %arg5[%c0_12, %c0_13] : memref<1x32xf32, #tpu.memory_space<vmem>>, vector<1x32xf32>
    %24 = vector.broadcast %23 : vector<1x32xf32> to vector<16x32xf32>
    %25 = arith.addf %22, %24 : vector<16x32xf32>
    %26 = arith.addf %0, %25 : vector<16x32xf32>
    %c0_14 = arith.constant 0 : index
    %c0_15 = arith.constant 0 : index
    %27 = vector.load %arg6[%c0_14, %c0_15] : memref<1x32xf32, #tpu.memory_space<vmem>>, vector<1x32xf32>
    %c0_16 = arith.constant 0 : index
    %c0_17 = arith.constant 0 : index
    %28 = vector.load %arg7[%c0_16, %c0_17] : memref<1x32xf32, #tpu.memory_space<vmem>>, vector<1x32xf32>
    %cst_18 = arith.constant dense<0.000000e+00> : vector<16xf32>
    %29 = vector.multi_reduction <add>, %26, %cst_18 [1] : vector<16x32xf32> to vector<16xf32>
    %30 = vector.shape_cast %29 : vector<16xf32> to vector<16x1xf32>
    %cst_19 = arith.constant 3.200000e+01 : f32
    %31 = vector.broadcast %cst_19 : f32 to vector<16x1xf32>
    %32 = arith.divf %30, %31 : vector<16x1xf32>
    %33 = vector.broadcast %32 : vector<16x1xf32> to vector<16x32xf32>
    %34 = arith.subf %26, %33 : vector<16x32xf32>
    %35 = arith.mulf %34, %34 : vector<16x32xf32>
    %cst_20 = arith.constant dense<0.000000e+00> : vector<16xf32>
    %36 = vector.multi_reduction <add>, %35, %cst_20 [1] : vector<16x32xf32> to vector<16xf32>
    %37 = vector.shape_cast %36 : vector<16xf32> to vector<16x1xf32>
    %cst_21 = arith.constant 3.200000e+01 : f32
    %38 = vector.broadcast %cst_21 : f32 to vector<16x1xf32>
    %39 = arith.divf %37, %38 : vector<16x1xf32>
    %40 = vector.broadcast %32 : vector<16x1xf32> to vector<16x32xf32>
    %41 = arith.subf %26, %40 : vector<16x32xf32>
    %cst_22 = arith.constant 9.99999974E-6 : f32
    %42 = vector.broadcast %cst_22 : f32 to vector<16x1xf32>
    %43 = arith.addf %39, %42 : vector<16x1xf32>
    %44 = math.rsqrt %43 : vector<16x1xf32>
    %45 = vector.broadcast %44 : vector<16x1xf32> to vector<16x32xf32>
    %46 = arith.mulf %41, %45 : vector<16x32xf32>
    %47 = vector.broadcast %27 : vector<1x32xf32> to vector<16x32xf32>
    %48 = arith.mulf %46, %47 : vector<16x32xf32>
    %49 = vector.broadcast %28 : vector<1x32xf32> to vector<16x32xf32>
    %50 = arith.addf %48, %49 : vector<16x32xf32>
    %c0_23 = arith.constant 0 : index
    %c0_24 = arith.constant 0 : index
    %51 = vector.load %arg10[%c0_23, %c0_24] : memref<16x32xf32, #tpu.memory_space<vmem>>, vector<16x32xf32>
    tpu.vector_store %arg10[%c0_23, %c0_24], %50 {strides = array<i32>} : memref<16x32xf32, #tpu.memory_space<vmem>>, vector<16x32xf32>,
    return
  }
  func.func @transform_0(%arg0: i32) -> (i32, i32) {
    %c0_i32 = arith.constant 0 : i32
    %c0_i32_0 = arith.constant 0 : i32
    return %arg0, %c0_i32 : i32, i32
  }
  func.func @transform_1(%arg0: i32) -> (i32, i32) {
    %c0_i32 = arith.constant 0 : i32
    %c0_i32_0 = arith.constant 0 : i32
    %c0_i32_1 = arith.constant 0 : i32
    return %c0_i32, %c0_i32_0 : i32, i32
  }
  func.func @transform_2(%arg0: i32) -> (i32, i32) {
    %c0_i32 = arith.constant 0 : i32
    %c0_i32_0 = arith.constant 0 : i32
    %c0_i32_1 = arith.constant 0 : i32
    return %c0_i32, %c0_i32_0 : i32, i32
  }
  func.func @transform_3(%arg0: i32) -> (i32, i32) {
    %c0_i32 = arith.constant 0 : i32
    %c0_i32_0 = arith.constant 0 : i32
    %c0_i32_1 = arith.constant 0 : i32
    return %c0_i32, %c0_i32_0 : i32, i32
  }
  func.func @transform_4(%arg0: i32) -> (i32, i32) {
    %c0_i32 = arith.constant 0 : i32
    %c0_i32_0 = arith.constant 0 : i32
    %c0_i32_1 = arith.constant 0 : i32
    return %c0_i32, %c0_i32_0 : i32, i32
  }
  func.func @transform_5(%arg0: i32) -> (i32, i32) {
    %c0_i32 = arith.constant 0 : i32
    %c0_i32_0 = arith.constant 0 : i32
    %c0_i32_1 = arith.constant 0 : i32
    return %c0_i32, %c0_i32_0 : i32, i32
  }
  func.func @transform_6(%arg0: i32) -> (i32, i32) {
    %c0_i32 = arith.constant 0 : i32
    %c0_i32_0 = arith.constant 0 : i32
    %c0_i32_1 = arith.constant 0 : i32
    return %c0_i32, %c0_i32_0 : i32, i32
  }
  func.func @transform_7(%arg0: i32) -> (i32, i32) {
    %c0_i32 = arith.constant 0 : i32
    %c0_i32_0 = arith.constant 0 : i32
    %c0_i32_1 = arith.constant 0 : i32
    return %c0_i32, %c0_i32_0 : i32, i32
  }
  func.func @transform_8(%arg0: i32) -> (i32, i32) {
    %c0_i32 = arith.constant 0 : i32
    %c0_i32_0 = arith.constant 0 : i32
    %c0_i32_1 = arith.constant 0 : i32
    return %c0_i32, %c0_i32_0 : i32, i32
  }
  func.func @transform_9(%arg0: i32) -> (i32, i32) {
    %c0_i32 = arith.constant 0 : i32
    %c0_i32_0 = arith.constant 0 : i32
    return %arg0, %c0_i32 : i32, i32
  }
}

module attributes {stable_mosaic.version = 11 : i64} {
  func.func @_ffn_kernel(%arg0: i32, %arg1: memref<16x32xf32, #tpu.memory_space<vmem>>, %arg2: memref<32x128xbf16, #tpu.memory_space<vmem>>, %arg3: memref<1x128xf32, #tpu.memory_space<vmem>>, %arg4: memref<128x32xbf16, #tpu.memory_space<vmem>>, %arg5: memref<1x32xf32, #tpu.memory_space<vmem>>, %arg6: memref<1x32xf32, #tpu.memory_space<vmem>>, %arg7: memref<1x32xf32, #tpu.memory_space<vmem>>, %arg8: memref<1x32xf32, #tpu.memory_space<vmem>>, %arg9: memref<1x32xf32, #tpu.memory_space<vmem>>, %arg10: memref<16x32xf32, #tpu.memory_space<vmem>>) attributes {dimension_semantics = [#tpu.dimension_semantics<parallel>], iteration_bounds = array<i64: 1>, scalar_prefetch = 0 : i64, scratch_operands = 0 : i64, tpu.core_type = #tpu.core_type<tc>, window_params = [{transform_indices = @transform_0, window_bounds = array<i64: 16, 32>}, {pipeline_mode = #tpu.pipeline_mode<synchronous>, transform_indices = @transform_1, window_bounds = array<i64: 32, 128>}, {pipeline_mode = #tpu.pipeline_mode<synchronous>, transform_indices = @transform_2, window_bounds = array<i64: 1, 128>}, {pipeline_mode = #tpu.pipeline_mode<synchronous>, transform_indices = @transform_3, window_bounds = array<i64: 128, 32>}, {pipeline_mode = #tpu.pipeline_mode<synchronous>, transform_indices = @transform_4, window_bounds = array<i64: 1, 32>}, {pipeline_mode = #tpu.pipeline_mode<synchronous>, transform_indices = @transform_5, window_bounds = array<i64: 1, 32>}, {pipeline_mode = #tpu.pipeline_mode<synchronous>, transform_indices = @transform_6, window_bounds = array<i64: 1, 32>}, {pipeline_mode = #tpu.pipeline_mode<synchronous>, transform_indices = @transform_7, window_bounds = array<i64: 1, 32>}, {pipeline_mode = #tpu.pipeline_mode<synchronous>, transform_indices = @transform_8, window_bounds = array<i64: 1, 32>}, {transform_indices = @transform_9, window_bounds = array<i64: 16, 32>}]} {
    %c0 = arith.constant 0 : index
    %c0_0 = arith.constant 0 : index
    %0 = vector.load %arg1[%c0, %c0_0] : memref<16x32xf32, #tpu.memory_space<vmem>>, vector<16x32xf32>
    %1 = arith.truncf %0 : vector<16x32xf32> to vector<16x32xbf16>
    %c0_1 = arith.constant 0 : index
    %c0_2 = arith.constant 0 : index
    %2 = vector.load %arg2[%c0_1, %c0_2] : memref<32x128xbf16, #tpu.memory_space<vmem>>, vector<32x128xbf16>
    %cst = arith.constant dense<0.000000e+00> : vector<16x128xf32>
    %3 = tpu.matmul %1, %2, %cst {dimension_numbers = #tpu.dot_dimension_numbers<[1], [0], [0], [1], [0, 0, 1, 1], [], []>} : vector<16x32xbf16>, vector<32x128xbf16>, vector<16x128xf32> -> vector<16x128xf32>
    %c0_3 = arith.constant 0 : index
    %c0_4 = arith.constant 0 : index
    %4 = vector.load %arg3[%c0_3, %c0_4] : memref<1x128xf32, #tpu.memory_space<vmem>>, vector<1x128xf32>
    %5 = vector.broadcast %4 : vector<1x128xf32> to vector<16x128xf32>
    %6 = arith.addf %3, %5 : vector<16x128xf32>
    %7 = arith.mulf %6, %6 : vector<16x128xf32>
    %8 = arith.mulf %6, %7 : vector<16x128xf32>
    %cst_5 = arith.constant 4.471500e-02 : f32
    %9 = vector.broadcast %cst_5 : f32 to vector<16x128xf32>
    %10 = arith.mulf %9, %8 : vector<16x128xf32>
    %11 = arith.addf %6, %10 : vector<16x128xf32>
    %cst_6 = arith.constant 0.797884583 : f32
    %12 = vector.broadcast %cst_6 : f32 to vector<16x128xf32>
    %13 = arith.mulf %12, %11 : vector<16x128xf32>
    %14 = math.tanh %13 : vector<16x128xf32>
    %cst_7 = arith.constant 1.000000e+00 : f32
    %15 = vector.broadcast %cst_7 : f32 to vector<16x128xf32>
    %16 = arith.addf %15, %14 : vector<16x128xf32>
    %cst_8 = arith.constant 5.000000e-01 : f32
    %17 = vector.broadcast %cst_8 : f32 to vector<16x128xf32>
    %18 = arith.mulf %17, %16 : vector<16x128xf32>
    %19 = arith.mulf %6, %18 : vector<16x128xf32>
    %20 = arith.truncf %19 : vector<16x128xf32> to vector<16x128xbf16>
    %c0_9 = arith.constant 0 : index
    %c0_10 = arith.constant 0 : index
    %21 = vector.load %arg4[%c0_9, %c0_10] : memref<128x32xbf16, #tpu.memory_space<vmem>>, vector<128x32xbf16>
    %cst_11 = arith.constant dense<0.000000e+00> : vector<16x32xf32>
    %22 = tpu.matmul %20, %21, %cst_11 {dimension_numbers = #tpu.dot_dimension_numbers<[1], [0], [0], [1], [0, 0, 1, 1], [], []>} : vector<16x128xbf16>, vector<128x32xbf16>, vector<16x32xf32> -> vector<16x32xf32>
    %c0_12 = arith.constant 0 : index
    %c0_13 = arith.constant 0 : index
    %23 = vector.load %arg5[%c0_12, %c0_13] : memref<1x32xf32, #tpu.memory_space<vmem>>, vector<1x32xf32>
    %24 = vector.broadcast %23 : vector<1x32xf32> to vector<16x32xf32>
    %25 = arith.addf %22, %24 : vector<16x32xf32>
    %26 = arith.addf %0, %25 : vector<16x32xf32>
    %c0_14 = arith.constant 0 : index
    %c0_15 = arith.constant 0 : index
    %27 = vector.load %arg6[%c0_14, %c0_15] : memref<1x32xf32, #tpu.memory_space<vmem>>, vector<1x32xf32>
    %c0_16 = arith.constant 0 : index
    %c0_17 = arith.constant 0 : index
    %28 = vector.load %arg7[%c0_16, %c0_17] : memref<1x32xf32, #tpu.memory_space<vmem>>, vector<1x32xf32>
    %cst_18 = arith.constant dense<0.000000e+00> : vector<16xf32>
    %29 = vector.multi_reduction <add>, %26, %cst_18 [1] : vector<16x32xf32> to vector<16xf32>
    %30 = vector.shape_cast %29 : vector<16xf32> to vector<16x1xf32>
    %cst_19 = arith.constant 3.200000e+01 : f32
    %31 = vector.broadcast %cst_19 : f32 to vector<16x1xf32>
    %32 = arith.divf %30, %31 : vector<16x1xf32>
    %33 = vector.broadcast %32 : vector<16x1xf32> to vector<16x32xf32>
    %34 = arith.subf %26, %33 : vector<16x32xf32>
    %35 = arith.mulf %34, %34 : vector<16x32xf32>
    %cst_20 = arith.constant dense<0.000000e+00> : vector<16xf32>
    %36 = vector.multi_reduction <add>, %35, %cst_20 [1] : vector<16x32xf32> to vector<16xf32>
    %37 = vector.shape_cast %36 : vector<16xf32> to vector<16x1xf32>
    %cst_21 = arith.constant 3.200000e+01 : f32
    %38 = vector.broadcast %cst_21 : f32 to vector<16x1xf32>
    %39 = arith.divf %37, %38 : vector<16x1xf32>
    %40 = vector.broadcast %32 : vector<16x1xf32> to vector<16x32xf32>
    %41 = arith.subf %26, %40 : vector<16x32xf32>
    %cst_22 = arith.constant 9.99999974E-6 : f32
    %42 = vector.broadcast %cst_22 : f32 to vector<16x1xf32>
    %43 = arith.addf %39, %42 : vector<16x1xf32>
    %44 = math.rsqrt %43 : vector<16x1xf32>
    %45 = vector.broadcast %44 : vector<16x1xf32> to vector<16x32xf32>
    %46 = arith.mulf %41, %45 : vector<16x32xf32>
    %47 = vector.broadcast %27 : vector<1x32xf32> to vector<16x32xf32>
    %48 = arith.mulf %46, %47 : vector<16x32xf32>
    %49 = vector.broadcast %28 : vector<1x32xf32> to vector<16x32xf32>
    %50 = arith.addf %48, %49 : vector<16x32xf32>
    %c0_23 = arith.constant 0 : index
    %c0_24 = arith.constant 0 : index
    %51 = vector.load %arg8[%c0_23, %c0_24] : memref<1x32xf32, #tpu.memory_space<vmem>>, vector<1x32xf32>
    %c0_25 = arith.constant 0 : index
    %c0_26 = arith.constant 0 : index
    %52 = vector.load %arg9[%c0_25, %c0_26] : memref<1x32xf32, #tpu.memory_space<vmem>>, vector<1x32xf32>
    %cst_27 = arith.constant dense<0.000000e+00> : vector<16xf32>
    %53 = vector.multi_reduction <add>, %50, %cst_27 [1] : vector<16x32xf32> to vector<16xf32>
    %54 = vector.shape_cast %53 : vector<16xf32> to vector<16x1xf32>
    %cst_28 = arith.constant 3.200000e+01 : f32
    %55 = vector.broadcast %cst_28 : f32 to vector<16x1xf32>
    %56 = arith.divf %54, %55 : vector<16x1xf32>
    %57 = vector.broadcast %56 : vector<16x1xf32> to vector<16x32xf32>
    %58 = arith.subf %50, %57 : vector<16x32xf32>
    %59 = arith.mulf %58, %58 : vector<16x32xf32>
    %cst_29 = arith.constant dense<0.000000e+00> : vector<16xf32>
    %60 = vector.multi_reduction <add>, %59, %cst_29 [1] : vector<16x32xf32> to vector<16xf32>
    %61 = vector.shape_cast %60 : vector<16xf32> to vector<16x1xf32>
    %cst_30 = arith.constant 3.200000e+01 : f32
    %62 = vector.broadcast %cst_30 : f32 to vector<16x1xf32>
    %63 = arith.divf %61, %62 : vector<16x1xf32>
    %64 = vector.broadcast %56 : vector<16x1xf32> to vector<16x32xf32>
    %65 = arith.subf %50, %64 : vector<16x32xf32>
    %cst_31 = arith.constant 9.99999974E-6 : f32
    %66 = vector.broadcast %cst_31 : f32 to vector<16x1xf32>
    %67 = arith.addf %63, %66 : vector<16x1xf32>
    %68 = math.rsqrt %67 : vector<16x1xf32>
    %69 = vector.broadcast %68 : vector<16x1xf32> to vector<16x32xf32>
    %70 = arith.mulf %65, %69 : vector<16x32xf32>
    %71 = vector.broadcast %51 : vector<1x32xf32> to vector<16x32xf32>
    %72 = arith.mulf %70, %71 : vector<16x32xf32>
    %73 = vector.broadcast %52 : vector<1x32xf32> to vector<16x32xf32>
    %74 = arith.addf %72, %73 : vector<16x32xf32>
    %c0_32 = arith.constant 0 : index
    %c0_33 = arith.constant 0 : index
    %75 = vector.load %arg10[%c0_32, %c0_33] : memref<16x32xf32, #tpu.memory_space<vmem>>, vector<16x32xf32>
    tpu.vector_store %arg10[%c0_32, %c0_33], %74 {strides = array<i32>} : memref<16x32xf32, #tpu.memory_space<vmem>>, vector<16x32xf32>,
    return
  }
  func.func @transform_0(%arg0: i32) -> (i32, i32) {
    %c0_i32 = arith.constant 0 : i32
    %c0_i32_0 = arith.constant 0 : i32
    return %arg0, %c0_i32 : i32, i32
  }
  func.func @transform_1(%arg0: i32) -> (i32, i32) {
    %c0_i32 = arith.constant 0 : i32
    %c0_i32_0 = arith.constant 0 : i32
    %c0_i32_1 = arith.constant 0 : i32
    return %c0_i32, %c0_i32_0 : i32, i32
  }
  func.func @transform_2(%arg0: i32) -> (i32, i32) {
    %c0_i32 = arith.constant 0 : i32
    %c0_i32_0 = arith.constant 0 : i32
    %c0_i32_1 = arith.constant 0 : i32
    return %c0_i32, %c0_i32_0 : i32, i32
  }
  func.func @transform_3(%arg0: i32) -> (i32, i32) {
    %c0_i32 = arith.constant 0 : i32
    %c0_i32_0 = arith.constant 0 : i32
    %c0_i32_1 = arith.constant 0 : i32
    return %c0_i32, %c0_i32_0 : i32, i32
  }
  func.func @transform_4(%arg0: i32) -> (i32, i32) {
    %c0_i32 = arith.constant 0 : i32
    %c0_i32_0 = arith.constant 0 : i32
    %c0_i32_1 = arith.constant 0 : i32
    return %c0_i32, %c0_i32_0 : i32, i32
  }
  func.func @transform_5(%arg0: i32) -> (i32, i32) {
    %c0_i32 = arith.constant 0 : i32
    %c0_i32_0 = arith.constant 0 : i32
    %c0_i32_1 = arith.constant 0 : i32
    return %c0_i32, %c0_i32_0 : i32, i32
  }
  func.func @transform_6(%arg0: i32) -> (i32, i32) {
    %c0_i32 = arith.constant 0 : i32
    %c0_i32_0 = arith.constant 0 : i32
    %c0_i32_1 = arith.constant 0 : i32
    return %c0_i32, %c0_i32_0 : i32, i32
  }
  func.func @transform_7(%arg0: i32) -> (i32, i32) {
    %c0_i32 = arith.constant 0 : i32
    %c0_i32_0 = arith.constant 0 : i32
    %c0_i32_1 = arith.constant 0 : i32
    return %c0_i32, %c0_i32_0 : i32, i32
  }
  func.func @transform_8(%arg0: i32) -> (i32, i32) {
    %c0_i32 = arith.constant 0 : i32
    %c0_i32_0 = arith.constant 0 : i32
    %c0_i32_1 = arith.constant 0 : i32
    return %c0_i32, %c0_i32_0 : i32, i32
  }
  func.func @transform_9(%arg0: i32) -> (i32, i32) {
    %c0_i32 = arith.constant 0 : i32
    %c0_i32_0 = arith.constant 0 : i32
    return %arg0, %c0_i32 : i32, i32
  }
}

module attributes {stable_mosaic.version = 11 : i64} {
  func.func @_lstm_kernel(%arg0: memref<16x16xbf16, #tpu.memory_space<vmem>>, %arg1: memref<16x128xbf16, #tpu.memory_space<vmem>>, %arg2: memref<32x128xbf16, #tpu.memory_space<vmem>>, %arg3: memref<1x128xf32, #tpu.memory_space<vmem>>, %arg4: memref<16x32xf32, #tpu.memory_space<vmem>>, %arg5: memref<16x128xf32, #tpu.memory_space<vmem>>, %arg6: memref<2x32xf32, #tpu.memory_space<vmem>>, %arg7: memref<2x32xf32, #tpu.memory_space<vmem>>) attributes {dimension_semantics = [], scalar_prefetch = 0 : i64, scratch_operands = 3 : i64, tpu.core_type = #tpu.core_type<tc>} {
    %c0 = arith.constant 0 : index
    %c0_0 = arith.constant 0 : index
    %0 = vector.load %arg0[%c0, %c0_0] : memref<16x16xbf16, #tpu.memory_space<vmem>>, vector<16x16xbf16>
    %c0_1 = arith.constant 0 : index
    %c0_2 = arith.constant 0 : index
    %1 = vector.load %arg1[%c0_1, %c0_2] : memref<16x128xbf16, #tpu.memory_space<vmem>>, vector<16x128xbf16>
    %cst = arith.constant dense<0.000000e+00> : vector<16x128xf32>
    %2 = tpu.matmul %0, %1, %cst {dimension_numbers = #tpu.dot_dimension_numbers<[1], [0], [0], [1], [0, 0, 1, 1], [], []>} : vector<16x16xbf16>, vector<16x128xbf16>, vector<16x128xf32> -> vector<16x128xf32>
    %c0_3 = arith.constant 0 : index
    %c0_4 = arith.constant 0 : index
    %3 = vector.load %arg3[%c0_3, %c0_4] : memref<1x128xf32, #tpu.memory_space<vmem>>, vector<1x128xf32>
    %4 = vector.broadcast %3 : vector<1x128xf32> to vector<16x128xf32>
    %5 = arith.addf %2, %4 : vector<16x128xf32>
    %c0_5 = arith.constant 0 : index
    %c0_6 = arith.constant 0 : index
    %6 = vector.load %arg5[%c0_5, %c0_6] : memref<16x128xf32, #tpu.memory_space<vmem>>, vector<16x128xf32>
    tpu.vector_store %arg5[%c0_5, %c0_6], %5 {strides = array<i32>} : memref<16x128xf32, #tpu.memory_space<vmem>>, vector<16x128xf32>,
    %cst_7 = arith.constant 0.000000e+00 : f32
    %7 = vector.broadcast %cst_7 : f32 to vector<2x32xf32>
    %c0_8 = arith.constant 0 : index
    %c0_9 = arith.constant 0 : index
    %8 = vector.load %arg6[%c0_8, %c0_9] : memref<2x32xf32, #tpu.memory_space<vmem>>, vector<2x32xf32>
    tpu.vector_store %arg6[%c0_8, %c0_9], %7 {strides = array<i32>} : memref<2x32xf32, #tpu.memory_space<vmem>>, vector<2x32xf32>,
    %cst_10 = arith.constant 0.000000e+00 : f32
    %9 = vector.broadcast %cst_10 : f32 to vector<2x32xf32>
    %c0_11 = arith.constant 0 : index
    %c0_12 = arith.constant 0 : index
    %10 = vector.load %arg7[%c0_11, %c0_12] : memref<2x32xf32, #tpu.memory_space<vmem>>, vector<2x32xf32>
    tpu.vector_store %arg7[%c0_11, %c0_12], %9 {strides = array<i32>} : memref<2x32xf32, #tpu.memory_space<vmem>>, vector<2x32xf32>,
    %c0_13 = arith.constant 0 : index
    %c0_14 = arith.constant 0 : index
    %11 = vector.load %arg2[%c0_13, %c0_14] : memref<32x128xbf16, #tpu.memory_space<vmem>>, vector<32x128xbf16>
    %c0_i32 = arith.constant 0 : i32
    %c8_i32 = arith.constant 8 : i32
    %12 = arith.addi %c0_i32, %c8_i32 : i32
    %c1_i32 = arith.constant 1 : i32
    scf.for %arg8 = %c0_i32 to %12 step %c1_i32  : i32 {
      %c2_i32 = arith.constant 2 : i32
      %13 = arith.muli %arg8, %c2_i32 : i32
      %14 = tpu.assume_multiple %13, 2 : i32
      %15 = arith.index_cast %14 : i32 to index
      %c0_16 = arith.constant 0 : index
      %16 = vector.load %arg5[%15, %c0_16] : memref<16x128xf32, #tpu.memory_space<vmem>>, vector<2x128xf32>
      %c0_17 = arith.constant 0 : index
      %c0_18 = arith.constant 0 : index
      %17 = vector.load %arg6[%c0_17, %c0_18] : memref<2x32xf32, #tpu.memory_space<vmem>>, vector<2x32xf32>
      %18 = arith.truncf %17 : vector<2x32xf32> to vector<2x32xbf16>
      %cst_19 = arith.constant dense<0.000000e+00> : vector<2x128xf32>
      %19 = tpu.matmul %18, %11, %cst_19 {dimension_numbers = #tpu.dot_dimension_numbers<[1], [0], [0], [1], [0, 0, 1, 1], [], []>} : vector<2x32xbf16>, vector<32x128xbf16>, vector<2x128xf32> -> vector<2x128xf32>
      %20 = arith.addf %16, %19 : vector<2x128xf32>
      %c0_20 = arith.constant 0 : index
      %c0_21 = arith.constant 0 : index
      %21 = vector.load %arg7[%c0_20, %c0_21] : memref<2x32xf32, #tpu.memory_space<vmem>>, vector<2x32xf32>
      %22 = vector.extract_strided_slice %20 {offsets = [0, 0], sizes = [2, 32], strides = [1, 1]} : vector<2x128xf32> to vector<2x32xf32>
      %23 = arith.negf %22 : vector<2x32xf32>
      %24 = math.exp %23 : vector<2x32xf32>
      %cst_22 = arith.constant 1.000000e+00 : f32
      %25 = vector.broadcast %cst_22 : f32 to vector<2x32xf32>
      %26 = arith.addf %25, %24 : vector<2x32xf32>
      %27 = arith.divf %25, %26 : vector<2x32xf32>
      %28 = vector.extract_strided_slice %20 {offsets = [0, 32], sizes = [2, 32], strides = [1, 1]} : vector<2x128xf32> to vector<2x32xf32>
      %29 = arith.negf %28 : vector<2x32xf32>
      %30 = math.exp %29 : vector<2x32xf32>
      %cst_23 = arith.constant 1.000000e+00 : f32
      %31 = vector.broadcast %cst_23 : f32 to vector<2x32xf32>
      %32 = arith.addf %31, %30 : vector<2x32xf32>
      %33 = arith.divf %31, %32 : vector<2x32xf32>
      %34 = vector.extract_strided_slice %20 {offsets = [0, 64], sizes = [2, 32], strides = [1, 1]} : vector<2x128xf32> to vector<2x32xf32>
      %35 = math.tanh %34 : vector<2x32xf32>
      %36 = vector.extract_strided_slice %20 {offsets = [0, 96], sizes = [2, 32], strides = [1, 1]} : vector<2x128xf32> to vector<2x32xf32>
      %37 = arith.negf %36 : vector<2x32xf32>
      %38 = math.exp %37 : vector<2x32xf32>
      %cst_24 = arith.constant 1.000000e+00 : f32
      %39 = vector.broadcast %cst_24 : f32 to vector<2x32xf32>
      %40 = arith.addf %39, %38 : vector<2x32xf32>
      %41 = arith.divf %39, %40 : vector<2x32xf32>
      %42 = arith.mulf %33, %21 : vector<2x32xf32>
      %43 = arith.mulf %27, %35 : vector<2x32xf32>
      %44 = arith.addf %42, %43 : vector<2x32xf32>
      %45 = math.tanh %44 : vector<2x32xf32>
      %46 = arith.mulf %41, %45 : vector<2x32xf32>
      %c0_25 = arith.constant 0 : index
      %c0_26 = arith.constant 0 : index
      %47 = vector.load %arg6[%c0_25, %c0_26] : memref<2x32xf32, #tpu.memory_space<vmem>>, vector<2x32xf32>
      tpu.vector_store %arg6[%c0_25, %c0_26], %46 {strides = array<i32>} : memref<2x32xf32, #tpu.memory_space<vmem>>, vector<2x32xf32>,
      %c0_27 = arith.constant 0 : index
      %c0_28 = arith.constant 0 : index
      %48 = vector.load %arg7[%c0_27, %c0_28] : memref<2x32xf32, #tpu.memory_space<vmem>>, vector<2x32xf32>
      tpu.vector_store %arg7[%c0_27, %c0_28], %44 {strides = array<i32>} : memref<2x32xf32, #tpu.memory_space<vmem>>, vector<2x32xf32>,
      %49 = arith.index_cast %14 : i32 to index
      %c0_29 = arith.constant 0 : index
      %50 = vector.load %arg4[%49, %c0_29] : memref<16x32xf32, #tpu.memory_space<vmem>>, vector<2x32xf32>
      tpu.vector_store %arg4[%49, %c0_29], %46 {strides = array<i32>} : memref<16x32xf32, #tpu.memory_space<vmem>>, vector<2x32xf32>,
    }
    %c8_i32_15 = arith.constant 8 : i32
    return
  }
}

module attributes {stable_mosaic.version = 11 : i64} {
  func.func @_self_attn_kernel(%arg0: i32, %arg1: memref<1x8x32xf32, #tpu.memory_space<vmem>>, %arg2: memref<32x32xbf16, #tpu.memory_space<vmem>>, %arg3: memref<1x32xf32, #tpu.memory_space<vmem>>, %arg4: memref<32x64xbf16, #tpu.memory_space<vmem>>, %arg5: memref<1x64xf32, #tpu.memory_space<vmem>>, %arg6: memref<32x32xbf16, #tpu.memory_space<vmem>>, %arg7: memref<1x32xf32, #tpu.memory_space<vmem>>, %arg8: memref<1x32xf32, #tpu.memory_space<vmem>>, %arg9: memref<1x32xf32, #tpu.memory_space<vmem>>, %arg10: memref<1x8x32xf32, #tpu.memory_space<vmem>>, %arg11: memref<8x32xf32, #tpu.memory_space<vmem>>) attributes {dimension_semantics = [#tpu.dimension_semantics<parallel>], iteration_bounds = array<i64: 2>, scalar_prefetch = 0 : i64, scratch_operands = 1 : i64, tpu.core_type = #tpu.core_type<tc>, window_params = [{transform_indices = @transform_0, window_bounds = array<i64: 1, 8, 32>}, {pipeline_mode = #tpu.pipeline_mode<synchronous>, transform_indices = @transform_1, window_bounds = array<i64: 32, 32>}, {pipeline_mode = #tpu.pipeline_mode<synchronous>, transform_indices = @transform_2, window_bounds = array<i64: 1, 32>}, {pipeline_mode = #tpu.pipeline_mode<synchronous>, transform_indices = @transform_3, window_bounds = array<i64: 32, 64>}, {pipeline_mode = #tpu.pipeline_mode<synchronous>, transform_indices = @transform_4, window_bounds = array<i64: 1, 64>}, {pipeline_mode = #tpu.pipeline_mode<synchronous>, transform_indices = @transform_5, window_bounds = array<i64: 32, 32>}, {pipeline_mode = #tpu.pipeline_mode<synchronous>, transform_indices = @transform_6, window_bounds = array<i64: 1, 32>}, {pipeline_mode = #tpu.pipeline_mode<synchronous>, transform_indices = @transform_7, window_bounds = array<i64: 1, 32>}, {pipeline_mode = #tpu.pipeline_mode<synchronous>, transform_indices = @transform_8, window_bounds = array<i64: 1, 32>}, {transform_indices = @transform_9, window_bounds = array<i64: 1, 8, 32>}]} {
    %c0 = arith.constant 0 : index
    %c0_0 = arith.constant 0 : index
    %c0_1 = arith.constant 0 : index
    %0 = vector.load %arg1[%c0, %c0_0, %c0_1] : memref<1x8x32xf32, #tpu.memory_space<vmem>>, vector<1x8x32xf32>
    %1 = vector.shape_cast %0 : vector<1x8x32xf32> to vector<8x32xf32>
    %2 = arith.truncf %1 : vector<8x32xf32> to vector<8x32xbf16>
    %c0_2 = arith.constant 0 : index
    %c0_3 = arith.constant 0 : index
    %3 = vector.load %arg2[%c0_2, %c0_3] : memref<32x32xbf16, #tpu.memory_space<vmem>>, vector<32x32xbf16>
    %cst = arith.constant dense<0.000000e+00> : vector<8x32xf32>
    %4 = tpu.matmul %2, %3, %cst {dimension_numbers = #tpu.dot_dimension_numbers<[1], [0], [0], [1], [0, 0, 1, 1], [], []>} : vector<8x32xbf16>, vector<32x32xbf16>, vector<8x32xf32> -> vector<8x32xf32>
    %c0_4 = arith.constant 0 : index
    %c0_5 = arith.constant 0 : index
    %5 = vector.load %arg3[%c0_4, %c0_5] : memref<1x32xf32, #tpu.memory_space<vmem>>, vector<1x32xf32>
    %6 = vector.broadcast %5 : vector<1x32xf32> to vector<8x32xf32>
    %7 = arith.addf %4, %6 : vector<8x32xf32>
    %8 = arith.truncf %1 : vector<8x32xf32> to vector<8x32xbf16>
    %c0_6 = arith.constant 0 : index
    %c0_7 = arith.constant 0 : index
    %9 = vector.load %arg4[%c0_6, %c0_7] : memref<32x64xbf16, #tpu.memory_space<vmem>>, vector<32x64xbf16>
    %cst_8 = arith.constant dense<0.000000e+00> : vector<8x64xf32>
    %10 = tpu.matmul %8, %9, %cst_8 {dimension_numbers = #tpu.dot_dimension_numbers<[1], [0], [0], [1], [0, 0, 1, 1], [], []>} : vector<8x32xbf16>, vector<32x64xbf16>, vector<8x64xf32> -> vector<8x64xf32>
    %c0_9 = arith.constant 0 : index
    %c0_10 = arith.constant 0 : index
    %11 = vector.load %arg5[%c0_9, %c0_10] : memref<1x64xf32, #tpu.memory_space<vmem>>, vector<1x64xf32>
    %12 = vector.broadcast %11 : vector<1x64xf32> to vector<8x64xf32>
    %13 = arith.addf %10, %12 : vector<8x64xf32>
    %14 = arith.truncf %7 : vector<8x32xf32> to vector<8x32xbf16>
    %15 = vector.extract_strided_slice %13 {offsets = [0, 0], sizes = [8, 32], strides = [1, 1]} : vector<8x64xf32> to vector<8x32xf32>
    %16 = arith.truncf %15 : vector<8x32xf32> to vector<8x32xbf16>
    %17 = vector.extract_strided_slice %13 {offsets = [0, 32], sizes = [8, 32], strides = [1, 1]} : vector<8x64xf32> to vector<8x32xf32>
    %18 = arith.truncf %17 : vector<8x32xf32> to vector<8x32xbf16>
    %19 = tpu.iota {dimensions = array<i32: 0>} : vector<8x8xi32>
    %20 = tpu.iota {dimensions = array<i32: 1>} : vector<8x8xi32>
    %21 = arith.cmpi sgt, %20, %19 : vector<8x8xi32>
    %cst_11 = arith.constant -1.000000e+09 : f32
    %cst_12 = arith.constant 0.000000e+00 : f32
    %22 = vector.broadcast %cst_11 : f32 to vector<8x8xf32>
    %23 = vector.broadcast %cst_12 : f32 to vector<8x8xf32>
    %24 = arith.select %21, %22, %23 : vector<8x8xi1>, vector<8x8xf32>
    %25 = vector.extract_strided_slice %14 {offsets = [0, 0], sizes = [8, 8], strides = [1, 1]} : vector<8x32xbf16> to vector<8x8xbf16>
    %26 = vector.extract_strided_slice %16 {offsets = [0, 0], sizes = [8, 8], strides = [1, 1]} : vector<8x32xbf16> to vector<8x8xbf16>
    %cst_13 = arith.constant dense<0.000000e+00> : vector<8x8xf32>
    %27 = tpu.matmul %25, %26, %cst_13 {dimension_numbers = #tpu.dot_dimension_numbers<[1], [1], [0], [0], [0, 0, 1, 0], [], []>} : vector<8x8xbf16>, vector<8x8xbf16>, vector<8x8xf32> -> vector<8x8xf32>
    %cst_14 = arith.constant 0.353553385 : f32
    %28 = vector.broadcast %cst_14 : f32 to vector<8x8xf32>
    %29 = arith.mulf %27, %28 : vector<8x8xf32>
    %30 = arith.addf %29, %24 : vector<8x8xf32>
    %cst_15 = arith.constant dense<0xFF800000> : vector<8xf32>
    %31 = vector.multi_reduction <maximumf>, %30, %cst_15 [1] : vector<8x8xf32> to vector<8xf32>
    %32 = vector.shape_cast %31 : vector<8xf32> to vector<8x1xf32>
    %33 = vector.broadcast %32 : vector<8x1xf32> to vector<8x8xf32>
    %34 = arith.subf %30, %33 : vector<8x8xf32>
    %35 = math.exp %34 : vector<8x8xf32>
    %cst_16 = arith.constant dense<0.000000e+00> : vector<8xf32>
    %36 = vector.multi_reduction <add>, %35, %cst_16 [1] : vector<8x8xf32> to vector<8xf32>
    %37 = vector.shape_cast %36 : vector<8xf32> to vector<8x1xf32>
    %38 = tpu.reciprocal %37 {approx = true} : vector<8x1xf32> -> vector<8x1xf32>
    %39 = vector.broadcast %38 : vector<8x1xf32> to vector<8x8xf32>
    %40 = arith.mulf %35, %39 : vector<8x8xf32>
    %41 = arith.truncf %40 : vector<8x8xf32> to vector<8x8xbf16>
    %42 = vector.extract_strided_slice %18 {offsets = [0, 0], sizes = [8, 8], strides = [1, 1]} : vector<8x32xbf16> to vector<8x8xbf16>
    %cst_17 = arith.constant dense<0.000000e+00> : vector<8x8xf32>
    %43 = tpu.matmul %41, %42, %cst_17 {dimension_numbers = #tpu.dot_dimension_numbers<[1], [0], [0], [1], [0, 0, 1, 1], [], []>} : vector<8x8xbf16>, vector<8x8xbf16>, vector<8x8xf32> -> vector<8x8xf32>
    %c0_18 = arith.constant 0 : index
    %c0_19 = arith.constant 0 : index
    %44 = vector.load %arg11[%c0_18, %c0_19] : memref<8x32xf32, #tpu.memory_space<vmem>>, vector<8x8xf32>
    tpu.vector_store %arg11[%c0_18, %c0_19], %43 {strides = array<i32>} : memref<8x32xf32, #tpu.memory_space<vmem>>, vector<8x8xf32>,
    %45 = vector.extract_strided_slice %14 {offsets = [0, 8], sizes = [8, 8], strides = [1, 1]} : vector<8x32xbf16> to vector<8x8xbf16>
    %46 = vector.extract_strided_slice %16 {offsets = [0, 8], sizes = [8, 8], strides = [1, 1]} : vector<8x32xbf16> to vector<8x8xbf16>
    %cst_20 = arith.constant dense<0.000000e+00> : vector<8x8xf32>
    %47 = tpu.matmul %45, %46, %cst_20 {dimension_numbers = #tpu.dot_dimension_numbers<[1], [1], [0], [0], [0, 0, 1, 0], [], []>} : vector<8x8xbf16>, vector<8x8xbf16>, vector<8x8xf32> -> vector<8x8xf32>
    %cst_21 = arith.constant 0.353553385 : f32
    %48 = vector.broadcast %cst_21 : f32 to vector<8x8xf32>
    %49 = arith.mulf %47, %48 : vector<8x8xf32>
    %50 = arith.addf %49, %24 : vector<8x8xf32>
    %cst_22 = arith.constant dense<0xFF800000> : vector<8xf32>
    %51 = vector.multi_reduction <maximumf>, %50, %cst_22 [1] : vector<8x8xf32> to vector<8xf32>
    %52 = vector.shape_cast %51 : vector<8xf32> to vector<8x1xf32>
    %53 = vector.broadcast %52 : vector<8x1xf32> to vector<8x8xf32>
    %54 = arith.subf %50, %53 : vector<8x8xf32>
    %55 = math.exp %54 : vector<8x8xf32>
    %cst_23 = arith.constant dense<0.000000e+00> : vector<8xf32>
    %56 = vector.multi_reduction <add>, %55, %cst_23 [1] : vector<8x8xf32> to vector<8xf32>
    %57 = vector.shape_cast %56 : vector<8xf32> to vector<8x1xf32>
    %58 = tpu.reciprocal %57 {approx = true} : vector<8x1xf32> -> vector<8x1xf32>
    %59 = vector.broadcast %58 : vector<8x1xf32> to vector<8x8xf32>
    %60 = arith.mulf %55, %59 : vector<8x8xf32>
    %61 = arith.truncf %60 : vector<8x8xf32> to vector<8x8xbf16>
    %62 = vector.extract_strided_slice %18 {offsets = [0, 8], sizes = [8, 8], strides = [1, 1]} : vector<8x32xbf16> to vector<8x8xbf16>
    %cst_24 = arith.constant dense<0.000000e+00> : vector<8x8xf32>
    %63 = tpu.matmul %61, %62, %cst_24 {dimension_numbers = #tpu.dot_dimension_numbers<[1], [0], [0], [1], [0, 0, 1, 1], [], []>} : vector<8x8xbf16>, vector<8x8xbf16>, vector<8x8xf32> -> vector<8x8xf32>
    %c0_25 = arith.constant 0 : index
    %c8 = arith.constant 8 : index
    %64 = vector.load %arg11[%c0_25, %c8] : memref<8x32xf32, #tpu.memory_space<vmem>>, vector<8x8xf32>
    tpu.vector_store %arg11[%c0_25, %c8], %63 {strides = array<i32>} : memref<8x32xf32, #tpu.memory_space<vmem>>, vector<8x8xf32>,
    %65 = vector.extract_strided_slice %14 {offsets = [0, 16], sizes = [8, 8], strides = [1, 1]} : vector<8x32xbf16> to vector<8x8xbf16>
    %66 = vector.extract_strided_slice %16 {offsets = [0, 16], sizes = [8, 8], strides = [1, 1]} : vector<8x32xbf16> to vector<8x8xbf16>
    %cst_26 = arith.constant dense<0.000000e+00> : vector<8x8xf32>
    %67 = tpu.matmul %65, %66, %cst_26 {dimension_numbers = #tpu.dot_dimension_numbers<[1], [1], [0], [0], [0, 0, 1, 0], [], []>} : vector<8x8xbf16>, vector<8x8xbf16>, vector<8x8xf32> -> vector<8x8xf32>
    %cst_27 = arith.constant 0.353553385 : f32
    %68 = vector.broadcast %cst_27 : f32 to vector<8x8xf32>
    %69 = arith.mulf %67, %68 : vector<8x8xf32>
    %70 = arith.addf %69, %24 : vector<8x8xf32>
    %cst_28 = arith.constant dense<0xFF800000> : vector<8xf32>
    %71 = vector.multi_reduction <maximumf>, %70, %cst_28 [1] : vector<8x8xf32> to vector<8xf32>
    %72 = vector.shape_cast %71 : vector<8xf32> to vector<8x1xf32>
    %73 = vector.broadcast %72 : vector<8x1xf32> to vector<8x8xf32>
    %74 = arith.subf %70, %73 : vector<8x8xf32>
    %75 = math.exp %74 : vector<8x8xf32>
    %cst_29 = arith.constant dense<0.000000e+00> : vector<8xf32>
    %76 = vector.multi_reduction <add>, %75, %cst_29 [1] : vector<8x8xf32> to vector<8xf32>
    %77 = vector.shape_cast %76 : vector<8xf32> to vector<8x1xf32>
    %78 = tpu.reciprocal %77 {approx = true} : vector<8x1xf32> -> vector<8x1xf32>
    %79 = vector.broadcast %78 : vector<8x1xf32> to vector<8x8xf32>
    %80 = arith.mulf %75, %79 : vector<8x8xf32>
    %81 = arith.truncf %80 : vector<8x8xf32> to vector<8x8xbf16>
    %82 = vector.extract_strided_slice %18 {offsets = [0, 16], sizes = [8, 8], strides = [1, 1]} : vector<8x32xbf16> to vector<8x8xbf16>
    %cst_30 = arith.constant dense<0.000000e+00> : vector<8x8xf32>
    %83 = tpu.matmul %81, %82, %cst_30 {dimension_numbers = #tpu.dot_dimension_numbers<[1], [0], [0], [1], [0, 0, 1, 1], [], []>} : vector<8x8xbf16>, vector<8x8xbf16>, vector<8x8xf32> -> vector<8x8xf32>
    %c0_31 = arith.constant 0 : index
    %c16 = arith.constant 16 : index
    %84 = vector.load %arg11[%c0_31, %c16] : memref<8x32xf32, #tpu.memory_space<vmem>>, vector<8x8xf32>
    tpu.vector_store %arg11[%c0_31, %c16], %83 {strides = array<i32>} : memref<8x32xf32, #tpu.memory_space<vmem>>, vector<8x8xf32>,
    %85 = vector.extract_strided_slice %14 {offsets = [0, 24], sizes = [8, 8], strides = [1, 1]} : vector<8x32xbf16> to vector<8x8xbf16>
    %86 = vector.extract_strided_slice %16 {offsets = [0, 24], sizes = [8, 8], strides = [1, 1]} : vector<8x32xbf16> to vector<8x8xbf16>
    %cst_32 = arith.constant dense<0.000000e+00> : vector<8x8xf32>
    %87 = tpu.matmul %85, %86, %cst_32 {dimension_numbers = #tpu.dot_dimension_numbers<[1], [1], [0], [0], [0, 0, 1, 0], [], []>} : vector<8x8xbf16>, vector<8x8xbf16>, vector<8x8xf32> -> vector<8x8xf32>
    %cst_33 = arith.constant 0.353553385 : f32
    %88 = vector.broadcast %cst_33 : f32 to vector<8x8xf32>
    %89 = arith.mulf %87, %88 : vector<8x8xf32>
    %90 = arith.addf %89, %24 : vector<8x8xf32>
    %cst_34 = arith.constant dense<0xFF800000> : vector<8xf32>
    %91 = vector.multi_reduction <maximumf>, %90, %cst_34 [1] : vector<8x8xf32> to vector<8xf32>
    %92 = vector.shape_cast %91 : vector<8xf32> to vector<8x1xf32>
    %93 = vector.broadcast %92 : vector<8x1xf32> to vector<8x8xf32>
    %94 = arith.subf %90, %93 : vector<8x8xf32>
    %95 = math.exp %94 : vector<8x8xf32>
    %cst_35 = arith.constant dense<0.000000e+00> : vector<8xf32>
    %96 = vector.multi_reduction <add>, %95, %cst_35 [1] : vector<8x8xf32> to vector<8xf32>
    %97 = vector.shape_cast %96 : vector<8xf32> to vector<8x1xf32>
    %98 = tpu.reciprocal %97 {approx = true} : vector<8x1xf32> -> vector<8x1xf32>
    %99 = vector.broadcast %98 : vector<8x1xf32> to vector<8x8xf32>
    %100 = arith.mulf %95, %99 : vector<8x8xf32>
    %101 = arith.truncf %100 : vector<8x8xf32> to vector<8x8xbf16>
    %102 = vector.extract_strided_slice %18 {offsets = [0, 24], sizes = [8, 8], strides = [1, 1]} : vector<8x32xbf16> to vector<8x8xbf16>
    %cst_36 = arith.constant dense<0.000000e+00> : vector<8x8xf32>
    %103 = tpu.matmul %101, %102, %cst_36 {dimension_numbers = #tpu.dot_dimension_numbers<[1], [0], [0], [1], [0, 0, 1, 1], [], []>} : vector<8x8xbf16>, vector<8x8xbf16>, vector<8x8xf32> -> vector<8x8xf32>
    %c0_37 = arith.constant 0 : index
    %c24 = arith.constant 24 : index
    %104 = vector.load %arg11[%c0_37, %c24] : memref<8x32xf32, #tpu.memory_space<vmem>>, vector<8x8xf32>
    tpu.vector_store %arg11[%c0_37, %c24], %103 {strides = array<i32>} : memref<8x32xf32, #tpu.memory_space<vmem>>, vector<8x8xf32>,
    %c0_38 = arith.constant 0 : index
    %c0_39 = arith.constant 0 : index
    %105 = vector.load %arg7[%c0_38, %c0_39] : memref<1x32xf32, #tpu.memory_space<vmem>>, vector<1x32xf32>
    %106 = vector.broadcast %105 : vector<1x32xf32> to vector<8x32xf32>
    %107 = arith.addf %1, %106 : vector<8x32xf32>
    %c0_40 = arith.constant 0 : index
    %c0_41 = arith.constant 0 : index
    %108 = vector.load %arg11[%c0_40, %c0_41] : memref<8x32xf32, #tpu.memory_space<vmem>>, vector<8x32xf32>
    %109 = arith.truncf %108 : vector<8x32xf32> to vector<8x32xbf16>
    %c0_42 = arith.constant 0 : index
    %c0_43 = arith.constant 0 : index
    %110 = vector.load %arg6[%c0_42, %c0_43] : memref<32x32xbf16, #tpu.memory_space<vmem>>, vector<32x32xbf16>
    %cst_44 = arith.constant dense<0.000000e+00> : vector<8x32xf32>
    %111 = tpu.matmul %109, %110, %cst_44 {dimension_numbers = #tpu.dot_dimension_numbers<[1], [0], [0], [1], [0, 0, 1, 1], [], []>} : vector<8x32xbf16>, vector<32x32xbf16>, vector<8x32xf32> -> vector<8x32xf32>
    %112 = arith.addf %107, %111 : vector<8x32xf32>
    %c0_45 = arith.constant 0 : index
    %c0_46 = arith.constant 0 : index
    %113 = vector.load %arg8[%c0_45, %c0_46] : memref<1x32xf32, #tpu.memory_space<vmem>>, vector<1x32xf32>
    %c0_47 = arith.constant 0 : index
    %c0_48 = arith.constant 0 : index
    %114 = vector.load %arg9[%c0_47, %c0_48] : memref<1x32xf32, #tpu.memory_space<vmem>>, vector<1x32xf32>
    %cst_49 = arith.constant dense<0.000000e+00> : vector<8xf32>
    %115 = vector.multi_reduction <add>, %112, %cst_49 [1] : vector<8x32xf32> to vector<8xf32>
    %116 = vector.shape_cast %115 : vector<8xf32> to vector<8x1xf32>
    %cst_50 = arith.constant 3.200000e+01 : f32
    %117 = vector.broadcast %cst_50 : f32 to vector<8x1xf32>
    %118 = arith.divf %116, %117 : vector<8x1xf32>
    %119 = vector.broadcast %118 : vector<8x1xf32> to vector<8x32xf32>
    %120 = arith.subf %112, %119 : vector<8x32xf32>
    %121 = arith.mulf %120, %120 : vector<8x32xf32>
    %cst_51 = arith.constant dense<0.000000e+00> : vector<8xf32>
    %122 = vector.multi_reduction <add>, %121, %cst_51 [1] : vector<8x32xf32> to vector<8xf32>
    %123 = vector.shape_cast %122 : vector<8xf32> to vector<8x1xf32>
    %cst_52 = arith.constant 3.200000e+01 : f32
    %124 = vector.broadcast %cst_52 : f32 to vector<8x1xf32>
    %125 = arith.divf %123, %124 : vector<8x1xf32>
    %126 = vector.broadcast %118 : vector<8x1xf32> to vector<8x32xf32>
    %127 = arith.subf %112, %126 : vector<8x32xf32>
    %cst_53 = arith.constant 9.99999974E-6 : f32
    %128 = vector.broadcast %cst_53 : f32 to vector<8x1xf32>
    %129 = arith.addf %125, %128 : vector<8x1xf32>
    %130 = math.rsqrt %129 : vector<8x1xf32>
    %131 = vector.broadcast %130 : vector<8x1xf32> to vector<8x32xf32>
    %132 = arith.mulf %127, %131 : vector<8x32xf32>
    %133 = vector.broadcast %113 : vector<1x32xf32> to vector<8x32xf32>
    %134 = arith.mulf %132, %133 : vector<8x32xf32>
    %135 = vector.broadcast %114 : vector<1x32xf32> to vector<8x32xf32>
    %136 = arith.addf %134, %135 : vector<8x32xf32>
    %c0_54 = arith.constant 0 : index
    %c0_55 = arith.constant 0 : index
    %c0_56 = arith.constant 0 : index
    %137 = vector.load %arg10[%c0_54, %c0_55, %c0_56] : memref<1x8x32xf32, #tpu.memory_space<vmem>>, vector<1x8x32xf32>
    %138 = vector.shape_cast %137 : vector<1x8x32xf32> to vector<8x32xf32>
    %139 = vector.shape_cast %136 : vector<8x32xf32> to vector<1x8x32xf32>
    tpu.vector_store %arg10[%c0_54, %c0_55, %c0_56], %139 {strides = array<i32>} : memref<1x8x32xf32, #tpu.memory_space<vmem>>, vector<1x8x32xf32>,
    return
  }
  func.func @transform_0(%arg0: i32) -> (i32, i32, i32) {
    %c0_i32 = arith.constant 0 : i32
    %c0_i32_0 = arith.constant 0 : i32
    %c0_i32_1 = arith.constant 0 : i32
    return %arg0, %c0_i32, %c0_i32_0 : i32, i32, i32
  }
  func.func @transform_1(%arg0: i32) -> (i32, i32) {
    %c0_i32 = arith.constant 0 : i32
    %c0_i32_0 = arith.constant 0 : i32
    %c0_i32_1 = arith.constant 0 : i32
    return %c0_i32, %c0_i32_0 : i32, i32
  }
  func.func @transform_2(%arg0: i32) -> (i32, i32) {
    %c0_i32 = arith.constant 0 : i32
    %c0_i32_0 = arith.constant 0 : i32
    %c0_i32_1 = arith.constant 0 : i32
    return %c0_i32, %c0_i32_0 : i32, i32
  }
  func.func @transform_3(%arg0: i32) -> (i32, i32) {
    %c0_i32 = arith.constant 0 : i32
    %c0_i32_0 = arith.constant 0 : i32
    %c0_i32_1 = arith.constant 0 : i32
    return %c0_i32, %c0_i32_0 : i32, i32
  }
  func.func @transform_4(%arg0: i32) -> (i32, i32) {
    %c0_i32 = arith.constant 0 : i32
    %c0_i32_0 = arith.constant 0 : i32
    %c0_i32_1 = arith.constant 0 : i32
    return %c0_i32, %c0_i32_0 : i32, i32
  }
  func.func @transform_5(%arg0: i32) -> (i32, i32) {
    %c0_i32 = arith.constant 0 : i32
    %c0_i32_0 = arith.constant 0 : i32
    %c0_i32_1 = arith.constant 0 : i32
    return %c0_i32, %c0_i32_0 : i32, i32
  }
  func.func @transform_6(%arg0: i32) -> (i32, i32) {
    %c0_i32 = arith.constant 0 : i32
    %c0_i32_0 = arith.constant 0 : i32
    %c0_i32_1 = arith.constant 0 : i32
    return %c0_i32, %c0_i32_0 : i32, i32
  }
  func.func @transform_7(%arg0: i32) -> (i32, i32) {
    %c0_i32 = arith.constant 0 : i32
    %c0_i32_0 = arith.constant 0 : i32
    %c0_i32_1 = arith.constant 0 : i32
    return %c0_i32, %c0_i32_0 : i32, i32
  }
  func.func @transform_8(%arg0: i32) -> (i32, i32) {
    %c0_i32 = arith.constant 0 : i32
    %c0_i32_0 = arith.constant 0 : i32
    %c0_i32_1 = arith.constant 0 : i32
    return %c0_i32, %c0_i32_0 : i32, i32
  }
  func.func @transform_9(%arg0: i32) -> (i32, i32, i32) {
    %c0_i32 = arith.constant 0 : i32
    %c0_i32_0 = arith.constant 0 : i32
    %c0_i32_1 = arith.constant 0 : i32
    return %arg0, %c0_i32, %c0_i32_0 : i32, i32, i32
  }
}

module attributes {stable_mosaic.version = 11 : i64} {
  func.func @_cross_attn_kernel(%arg0: i32, %arg1: memref<1x8x32xf32, #tpu.memory_space<vmem>>, %arg2: memref<1x8x32xf32, #tpu.memory_space<vmem>>, %arg3: memref<32x32xbf16, #tpu.memory_space<vmem>>, %arg4: memref<1x32xf32, #tpu.memory_space<vmem>>, %arg5: memref<32x64xbf16, #tpu.memory_space<vmem>>, %arg6: memref<1x64xf32, #tpu.memory_space<vmem>>, %arg7: memref<32x32xbf16, #tpu.memory_space<vmem>>, %arg8: memref<1x32xf32, #tpu.memory_space<vmem>>, %arg9: memref<1x32xf32, #tpu.memory_space<vmem>>, %arg10: memref<1x32xf32, #tpu.memory_space<vmem>>, %arg11: memref<1x8x32xf32, #tpu.memory_space<vmem>>, %arg12: memref<8x32xf32, #tpu.memory_space<vmem>>) attributes {dimension_semantics = [#tpu.dimension_semantics<parallel>], iteration_bounds = array<i64: 2>, scalar_prefetch = 0 : i64, scratch_operands = 1 : i64, tpu.core_type = #tpu.core_type<tc>, window_params = [{transform_indices = @transform_0, window_bounds = array<i64: 1, 8, 32>}, {transform_indices = @transform_1, window_bounds = array<i64: 1, 8, 32>}, {pipeline_mode = #tpu.pipeline_mode<synchronous>, transform_indices = @transform_2, window_bounds = array<i64: 32, 32>}, {pipeline_mode = #tpu.pipeline_mode<synchronous>, transform_indices = @transform_3, window_bounds = array<i64: 1, 32>}, {pipeline_mode = #tpu.pipeline_mode<synchronous>, transform_indices = @transform_4, window_bounds = array<i64: 32, 64>}, {pipeline_mode = #tpu.pipeline_mode<synchronous>, transform_indices = @transform_5, window_bounds = array<i64: 1, 64>}, {pipeline_mode = #tpu.pipeline_mode<synchronous>, transform_indices = @transform_6, window_bounds = array<i64: 32, 32>}, {pipeline_mode = #tpu.pipeline_mode<synchronous>, transform_indices = @transform_7, window_bounds = array<i64: 1, 32>}, {pipeline_mode = #tpu.pipeline_mode<synchronous>, transform_indices = @transform_8, window_bounds = array<i64: 1, 32>}, {pipeline_mode = #tpu.pipeline_mode<synchronous>, transform_indices = @transform_9, window_bounds = array<i64: 1, 32>}, {transform_indices = @transform_10, window_bounds = array<i64: 1, 8, 32>}]} {
    %c0 = arith.constant 0 : index
    %c0_0 = arith.constant 0 : index
    %c0_1 = arith.constant 0 : index
    %0 = vector.load %arg1[%c0, %c0_0, %c0_1] : memref<1x8x32xf32, #tpu.memory_space<vmem>>, vector<1x8x32xf32>
    %1 = vector.shape_cast %0 : vector<1x8x32xf32> to vector<8x32xf32>
    %c0_2 = arith.constant 0 : index
    %c0_3 = arith.constant 0 : index
    %c0_4 = arith.constant 0 : index
    %2 = vector.load %arg2[%c0_2, %c0_3, %c0_4] : memref<1x8x32xf32, #tpu.memory_space<vmem>>, vector<1x8x32xf32>
    %3 = vector.shape_cast %2 : vector<1x8x32xf32> to vector<8x32xf32>
    %4 = arith.truncf %1 : vector<8x32xf32> to vector<8x32xbf16>
    %c0_5 = arith.constant 0 : index
    %c0_6 = arith.constant 0 : index
    %5 = vector.load %arg3[%c0_5, %c0_6] : memref<32x32xbf16, #tpu.memory_space<vmem>>, vector<32x32xbf16>
    %cst = arith.constant dense<0.000000e+00> : vector<8x32xf32>
    %6 = tpu.matmul %4, %5, %cst {dimension_numbers = #tpu.dot_dimension_numbers<[1], [0], [0], [1], [0, 0, 1, 1], [], []>} : vector<8x32xbf16>, vector<32x32xbf16>, vector<8x32xf32> -> vector<8x32xf32>
    %c0_7 = arith.constant 0 : index
    %c0_8 = arith.constant 0 : index
    %7 = vector.load %arg4[%c0_7, %c0_8] : memref<1x32xf32, #tpu.memory_space<vmem>>, vector<1x32xf32>
    %8 = vector.broadcast %7 : vector<1x32xf32> to vector<8x32xf32>
    %9 = arith.addf %6, %8 : vector<8x32xf32>
    %10 = arith.truncf %3 : vector<8x32xf32> to vector<8x32xbf16>
    %c0_9 = arith.constant 0 : index
    %c0_10 = arith.constant 0 : index
    %11 = vector.load %arg5[%c0_9, %c0_10] : memref<32x64xbf16, #tpu.memory_space<vmem>>, vector<32x64xbf16>
    %cst_11 = arith.constant dense<0.000000e+00> : vector<8x64xf32>
    %12 = tpu.matmul %10, %11, %cst_11 {dimension_numbers = #tpu.dot_dimension_numbers<[1], [0], [0], [1], [0, 0, 1, 1], [], []>} : vector<8x32xbf16>, vector<32x64xbf16>, vector<8x64xf32> -> vector<8x64xf32>
    %c0_12 = arith.constant 0 : index
    %c0_13 = arith.constant 0 : index
    %13 = vector.load %arg6[%c0_12, %c0_13] : memref<1x64xf32, #tpu.memory_space<vmem>>, vector<1x64xf32>
    %14 = vector.broadcast %13 : vector<1x64xf32> to vector<8x64xf32>
    %15 = arith.addf %12, %14 : vector<8x64xf32>
    %16 = arith.truncf %9 : vector<8x32xf32> to vector<8x32xbf16>
    %17 = vector.extract_strided_slice %15 {offsets = [0, 0], sizes = [8, 32], strides = [1, 1]} : vector<8x64xf32> to vector<8x32xf32>
    %18 = arith.truncf %17 : vector<8x32xf32> to vector<8x32xbf16>
    %19 = vector.extract_strided_slice %15 {offsets = [0, 32], sizes = [8, 32], strides = [1, 1]} : vector<8x64xf32> to vector<8x32xf32>
    %20 = arith.truncf %19 : vector<8x32xf32> to vector<8x32xbf16>
    %21 = vector.extract_strided_slice %16 {offsets = [0, 0], sizes = [8, 8], strides = [1, 1]} : vector<8x32xbf16> to vector<8x8xbf16>
    %22 = vector.extract_strided_slice %18 {offsets = [0, 0], sizes = [8, 8], strides = [1, 1]} : vector<8x32xbf16> to vector<8x8xbf16>
    %cst_14 = arith.constant dense<0.000000e+00> : vector<8x8xf32>
    %23 = tpu.matmul %21, %22, %cst_14 {dimension_numbers = #tpu.dot_dimension_numbers<[1], [1], [0], [0], [0, 0, 1, 0], [], []>} : vector<8x8xbf16>, vector<8x8xbf16>, vector<8x8xf32> -> vector<8x8xf32>
    %cst_15 = arith.constant 0.353553385 : f32
    %24 = vector.broadcast %cst_15 : f32 to vector<8x8xf32>
    %25 = arith.mulf %23, %24 : vector<8x8xf32>
    %cst_16 = arith.constant dense<0xFF800000> : vector<8xf32>
    %26 = vector.multi_reduction <maximumf>, %25, %cst_16 [1] : vector<8x8xf32> to vector<8xf32>
    %27 = vector.shape_cast %26 : vector<8xf32> to vector<8x1xf32>
    %28 = vector.broadcast %27 : vector<8x1xf32> to vector<8x8xf32>
    %29 = arith.subf %25, %28 : vector<8x8xf32>
    %30 = math.exp %29 : vector<8x8xf32>
    %cst_17 = arith.constant dense<0.000000e+00> : vector<8xf32>
    %31 = vector.multi_reduction <add>, %30, %cst_17 [1] : vector<8x8xf32> to vector<8xf32>
    %32 = vector.shape_cast %31 : vector<8xf32> to vector<8x1xf32>
    %33 = tpu.reciprocal %32 {approx = true} : vector<8x1xf32> -> vector<8x1xf32>
    %34 = vector.broadcast %33 : vector<8x1xf32> to vector<8x8xf32>
    %35 = arith.mulf %30, %34 : vector<8x8xf32>
    %36 = arith.truncf %35 : vector<8x8xf32> to vector<8x8xbf16>
    %37 = vector.extract_strided_slice %20 {offsets = [0, 0], sizes = [8, 8], strides = [1, 1]} : vector<8x32xbf16> to vector<8x8xbf16>
    %cst_18 = arith.constant dense<0.000000e+00> : vector<8x8xf32>
    %38 = tpu.matmul %36, %37, %cst_18 {dimension_numbers = #tpu.dot_dimension_numbers<[1], [0], [0], [1], [0, 0, 1, 1], [], []>} : vector<8x8xbf16>, vector<8x8xbf16>, vector<8x8xf32> -> vector<8x8xf32>
    %c0_19 = arith.constant 0 : index
    %c0_20 = arith.constant 0 : index
    %39 = vector.load %arg12[%c0_19, %c0_20] : memref<8x32xf32, #tpu.memory_space<vmem>>, vector<8x8xf32>
    tpu.vector_store %arg12[%c0_19, %c0_20], %38 {strides = array<i32>} : memref<8x32xf32, #tpu.memory_space<vmem>>, vector<8x8xf32>,
    %40 = vector.extract_strided_slice %16 {offsets = [0, 8], sizes = [8, 8], strides = [1, 1]} : vector<8x32xbf16> to vector<8x8xbf16>
    %41 = vector.extract_strided_slice %18 {offsets = [0, 8], sizes = [8, 8], strides = [1, 1]} : vector<8x32xbf16> to vector<8x8xbf16>
    %cst_21 = arith.constant dense<0.000000e+00> : vector<8x8xf32>
    %42 = tpu.matmul %40, %41, %cst_21 {dimension_numbers = #tpu.dot_dimension_numbers<[1], [1], [0], [0], [0, 0, 1, 0], [], []>} : vector<8x8xbf16>, vector<8x8xbf16>, vector<8x8xf32> -> vector<8x8xf32>
    %cst_22 = arith.constant 0.353553385 : f32
    %43 = vector.broadcast %cst_22 : f32 to vector<8x8xf32>
    %44 = arith.mulf %42, %43 : vector<8x8xf32>
    %cst_23 = arith.constant dense<0xFF800000> : vector<8xf32>
    %45 = vector.multi_reduction <maximumf>, %44, %cst_23 [1] : vector<8x8xf32> to vector<8xf32>
    %46 = vector.shape_cast %45 : vector<8xf32> to vector<8x1xf32>
    %47 = vector.broadcast %46 : vector<8x1xf32> to vector<8x8xf32>
    %48 = arith.subf %44, %47 : vector<8x8xf32>
    %49 = math.exp %48 : vector<8x8xf32>
    %cst_24 = arith.constant dense<0.000000e+00> : vector<8xf32>
    %50 = vector.multi_reduction <add>, %49, %cst_24 [1] : vector<8x8xf32> to vector<8xf32>
    %51 = vector.shape_cast %50 : vector<8xf32> to vector<8x1xf32>
    %52 = tpu.reciprocal %51 {approx = true} : vector<8x1xf32> -> vector<8x1xf32>
    %53 = vector.broadcast %52 : vector<8x1xf32> to vector<8x8xf32>
    %54 = arith.mulf %49, %53 : vector<8x8xf32>
    %55 = arith.truncf %54 : vector<8x8xf32> to vector<8x8xbf16>
    %56 = vector.extract_strided_slice %20 {offsets = [0, 8], sizes = [8, 8], strides = [1, 1]} : vector<8x32xbf16> to vector<8x8xbf16>
    %cst_25 = arith.constant dense<0.000000e+00> : vector<8x8xf32>
    %57 = tpu.matmul %55, %56, %cst_25 {dimension_numbers = #tpu.dot_dimension_numbers<[1], [0], [0], [1], [0, 0, 1, 1], [], []>} : vector<8x8xbf16>, vector<8x8xbf16>, vector<8x8xf32> -> vector<8x8xf32>
    %c0_26 = arith.constant 0 : index
    %c8 = arith.constant 8 : index
    %58 = vector.load %arg12[%c0_26, %c8] : memref<8x32xf32, #tpu.memory_space<vmem>>, vector<8x8xf32>
    tpu.vector_store %arg12[%c0_26, %c8], %57 {strides = array<i32>} : memref<8x32xf32, #tpu.memory_space<vmem>>, vector<8x8xf32>,
    %59 = vector.extract_strided_slice %16 {offsets = [0, 16], sizes = [8, 8], strides = [1, 1]} : vector<8x32xbf16> to vector<8x8xbf16>
    %60 = vector.extract_strided_slice %18 {offsets = [0, 16], sizes = [8, 8], strides = [1, 1]} : vector<8x32xbf16> to vector<8x8xbf16>
    %cst_27 = arith.constant dense<0.000000e+00> : vector<8x8xf32>
    %61 = tpu.matmul %59, %60, %cst_27 {dimension_numbers = #tpu.dot_dimension_numbers<[1], [1], [0], [0], [0, 0, 1, 0], [], []>} : vector<8x8xbf16>, vector<8x8xbf16>, vector<8x8xf32> -> vector<8x8xf32>
    %cst_28 = arith.constant 0.353553385 : f32
    %62 = vector.broadcast %cst_28 : f32 to vector<8x8xf32>
    %63 = arith.mulf %61, %62 : vector<8x8xf32>
    %cst_29 = arith.constant dense<0xFF800000> : vector<8xf32>
    %64 = vector.multi_reduction <maximumf>, %63, %cst_29 [1] : vector<8x8xf32> to vector<8xf32>
    %65 = vector.shape_cast %64 : vector<8xf32> to vector<8x1xf32>
    %66 = vector.broadcast %65 : vector<8x1xf32> to vector<8x8xf32>
    %67 = arith.subf %63, %66 : vector<8x8xf32>
    %68 = math.exp %67 : vector<8x8xf32>
    %cst_30 = arith.constant dense<0.000000e+00> : vector<8xf32>
    %69 = vector.multi_reduction <add>, %68, %cst_30 [1] : vector<8x8xf32> to vector<8xf32>
    %70 = vector.shape_cast %69 : vector<8xf32> to vector<8x1xf32>
    %71 = tpu.reciprocal %70 {approx = true} : vector<8x1xf32> -> vector<8x1xf32>
    %72 = vector.broadcast %71 : vector<8x1xf32> to vector<8x8xf32>
    %73 = arith.mulf %68, %72 : vector<8x8xf32>
    %74 = arith.truncf %73 : vector<8x8xf32> to vector<8x8xbf16>
    %75 = vector.extract_strided_slice %20 {offsets = [0, 16], sizes = [8, 8], strides = [1, 1]} : vector<8x32xbf16> to vector<8x8xbf16>
    %cst_31 = arith.constant dense<0.000000e+00> : vector<8x8xf32>
    %76 = tpu.matmul %74, %75, %cst_31 {dimension_numbers = #tpu.dot_dimension_numbers<[1], [0], [0], [1], [0, 0, 1, 1], [], []>} : vector<8x8xbf16>, vector<8x8xbf16>, vector<8x8xf32> -> vector<8x8xf32>
    %c0_32 = arith.constant 0 : index
    %c16 = arith.constant 16 : index
    %77 = vector.load %arg12[%c0_32, %c16] : memref<8x32xf32, #tpu.memory_space<vmem>>, vector<8x8xf32>
    tpu.vector_store %arg12[%c0_32, %c16], %76 {strides = array<i32>} : memref<8x32xf32, #tpu.memory_space<vmem>>, vector<8x8xf32>,
    %78 = vector.extract_strided_slice %16 {offsets = [0, 24], sizes = [8, 8], strides = [1, 1]} : vector<8x32xbf16> to vector<8x8xbf16>
    %79 = vector.extract_strided_slice %18 {offsets = [0, 24], sizes = [8, 8], strides = [1, 1]} : vector<8x32xbf16> to vector<8x8xbf16>
    %cst_33 = arith.constant dense<0.000000e+00> : vector<8x8xf32>
    %80 = tpu.matmul %78, %79, %cst_33 {dimension_numbers = #tpu.dot_dimension_numbers<[1], [1], [0], [0], [0, 0, 1, 0], [], []>} : vector<8x8xbf16>, vector<8x8xbf16>, vector<8x8xf32> -> vector<8x8xf32>
    %cst_34 = arith.constant 0.353553385 : f32
    %81 = vector.broadcast %cst_34 : f32 to vector<8x8xf32>
    %82 = arith.mulf %80, %81 : vector<8x8xf32>
    %cst_35 = arith.constant dense<0xFF800000> : vector<8xf32>
    %83 = vector.multi_reduction <maximumf>, %82, %cst_35 [1] : vector<8x8xf32> to vector<8xf32>
    %84 = vector.shape_cast %83 : vector<8xf32> to vector<8x1xf32>
    %85 = vector.broadcast %84 : vector<8x1xf32> to vector<8x8xf32>
    %86 = arith.subf %82, %85 : vector<8x8xf32>
    %87 = math.exp %86 : vector<8x8xf32>
    %cst_36 = arith.constant dense<0.000000e+00> : vector<8xf32>
    %88 = vector.multi_reduction <add>, %87, %cst_36 [1] : vector<8x8xf32> to vector<8xf32>
    %89 = vector.shape_cast %88 : vector<8xf32> to vector<8x1xf32>
    %90 = tpu.reciprocal %89 {approx = true} : vector<8x1xf32> -> vector<8x1xf32>
    %91 = vector.broadcast %90 : vector<8x1xf32> to vector<8x8xf32>
    %92 = arith.mulf %87, %91 : vector<8x8xf32>
    %93 = arith.truncf %92 : vector<8x8xf32> to vector<8x8xbf16>
    %94 = vector.extract_strided_slice %20 {offsets = [0, 24], sizes = [8, 8], strides = [1, 1]} : vector<8x32xbf16> to vector<8x8xbf16>
    %cst_37 = arith.constant dense<0.000000e+00> : vector<8x8xf32>
    %95 = tpu.matmul %93, %94, %cst_37 {dimension_numbers = #tpu.dot_dimension_numbers<[1], [0], [0], [1], [0, 0, 1, 1], [], []>} : vector<8x8xbf16>, vector<8x8xbf16>, vector<8x8xf32> -> vector<8x8xf32>
    %c0_38 = arith.constant 0 : index
    %c24 = arith.constant 24 : index
    %96 = vector.load %arg12[%c0_38, %c24] : memref<8x32xf32, #tpu.memory_space<vmem>>, vector<8x8xf32>
    tpu.vector_store %arg12[%c0_38, %c24], %95 {strides = array<i32>} : memref<8x32xf32, #tpu.memory_space<vmem>>, vector<8x8xf32>,
    %c0_39 = arith.constant 0 : index
    %c0_40 = arith.constant 0 : index
    %97 = vector.load %arg8[%c0_39, %c0_40] : memref<1x32xf32, #tpu.memory_space<vmem>>, vector<1x32xf32>
    %98 = vector.broadcast %97 : vector<1x32xf32> to vector<8x32xf32>
    %99 = arith.addf %1, %98 : vector<8x32xf32>
    %c0_41 = arith.constant 0 : index
    %c0_42 = arith.constant 0 : index
    %100 = vector.load %arg12[%c0_41, %c0_42] : memref<8x32xf32, #tpu.memory_space<vmem>>, vector<8x32xf32>
    %101 = arith.truncf %100 : vector<8x32xf32> to vector<8x32xbf16>
    %c0_43 = arith.constant 0 : index
    %c0_44 = arith.constant 0 : index
    %102 = vector.load %arg7[%c0_43, %c0_44] : memref<32x32xbf16, #tpu.memory_space<vmem>>, vector<32x32xbf16>
    %cst_45 = arith.constant dense<0.000000e+00> : vector<8x32xf32>
    %103 = tpu.matmul %101, %102, %cst_45 {dimension_numbers = #tpu.dot_dimension_numbers<[1], [0], [0], [1], [0, 0, 1, 1], [], []>} : vector<8x32xbf16>, vector<32x32xbf16>, vector<8x32xf32> -> vector<8x32xf32>
    %104 = arith.addf %99, %103 : vector<8x32xf32>
    %c0_46 = arith.constant 0 : index
    %c0_47 = arith.constant 0 : index
    %105 = vector.load %arg9[%c0_46, %c0_47] : memref<1x32xf32, #tpu.memory_space<vmem>>, vector<1x32xf32>
    %c0_48 = arith.constant 0 : index
    %c0_49 = arith.constant 0 : index
    %106 = vector.load %arg10[%c0_48, %c0_49] : memref<1x32xf32, #tpu.memory_space<vmem>>, vector<1x32xf32>
    %cst_50 = arith.constant dense<0.000000e+00> : vector<8xf32>
    %107 = vector.multi_reduction <add>, %104, %cst_50 [1] : vector<8x32xf32> to vector<8xf32>
    %108 = vector.shape_cast %107 : vector<8xf32> to vector<8x1xf32>
    %cst_51 = arith.constant 3.200000e+01 : f32
    %109 = vector.broadcast %cst_51 : f32 to vector<8x1xf32>
    %110 = arith.divf %108, %109 : vector<8x1xf32>
    %111 = vector.broadcast %110 : vector<8x1xf32> to vector<8x32xf32>
    %112 = arith.subf %104, %111 : vector<8x32xf32>
    %113 = arith.mulf %112, %112 : vector<8x32xf32>
    %cst_52 = arith.constant dense<0.000000e+00> : vector<8xf32>
    %114 = vector.multi_reduction <add>, %113, %cst_52 [1] : vector<8x32xf32> to vector<8xf32>
    %115 = vector.shape_cast %114 : vector<8xf32> to vector<8x1xf32>
    %cst_53 = arith.constant 3.200000e+01 : f32
    %116 = vector.broadcast %cst_53 : f32 to vector<8x1xf32>
    %117 = arith.divf %115, %116 : vector<8x1xf32>
    %118 = vector.broadcast %110 : vector<8x1xf32> to vector<8x32xf32>
    %119 = arith.subf %104, %118 : vector<8x32xf32>
    %cst_54 = arith.constant 9.99999974E-6 : f32
    %120 = vector.broadcast %cst_54 : f32 to vector<8x1xf32>
    %121 = arith.addf %117, %120 : vector<8x1xf32>
    %122 = math.rsqrt %121 : vector<8x1xf32>
    %123 = vector.broadcast %122 : vector<8x1xf32> to vector<8x32xf32>
    %124 = arith.mulf %119, %123 : vector<8x32xf32>
    %125 = vector.broadcast %105 : vector<1x32xf32> to vector<8x32xf32>
    %126 = arith.mulf %124, %125 : vector<8x32xf32>
    %127 = vector.broadcast %106 : vector<1x32xf32> to vector<8x32xf32>
    %128 = arith.addf %126, %127 : vector<8x32xf32>
    %c0_55 = arith.constant 0 : index
    %c0_56 = arith.constant 0 : index
    %c0_57 = arith.constant 0 : index
    %129 = vector.load %arg11[%c0_55, %c0_56, %c0_57] : memref<1x8x32xf32, #tpu.memory_space<vmem>>, vector<1x8x32xf32>
    %130 = vector.shape_cast %129 : vector<1x8x32xf32> to vector<8x32xf32>
    %131 = vector.shape_cast %128 : vector<8x32xf32> to vector<1x8x32xf32>
    tpu.vector_store %arg11[%c0_55, %c0_56, %c0_57], %131 {strides = array<i32>} : memref<1x8x32xf32, #tpu.memory_space<vmem>>, vector<1x8x32xf32>,
    return
  }
  func.func @transform_0(%arg0: i32) -> (i32, i32, i32) {
    %c0_i32 = arith.constant 0 : i32
    %c0_i32_0 = arith.constant 0 : i32
    %c0_i32_1 = arith.constant 0 : i32
    return %arg0, %c0_i32, %c0_i32_0 : i32, i32, i32
  }
  func.func @transform_1(%arg0: i32) -> (i32, i32, i32) {
    %c0_i32 = arith.constant 0 : i32
    %c0_i32_0 = arith.constant 0 : i32
    %c0_i32_1 = arith.constant 0 : i32
    return %arg0, %c0_i32, %c0_i32_0 : i32, i32, i32
  }
  func.func @transform_2(%arg0: i32) -> (i32, i32) {
    %c0_i32 = arith.constant 0 : i32
    %c0_i32_0 = arith.constant 0 : i32
    %c0_i32_1 = arith.constant 0 : i32
    return %c0_i32, %c0_i32_0 : i32, i32
  }
  func.func @transform_3(%arg0: i32) -> (i32, i32) {
    %c0_i32 = arith.constant 0 : i32
    %c0_i32_0 = arith.constant 0 : i32
    %c0_i32_1 = arith.constant 0 : i32
    return %c0_i32, %c0_i32_0 : i32, i32
  }
  func.func @transform_4(%arg0: i32) -> (i32, i32) {
    %c0_i32 = arith.constant 0 : i32
    %c0_i32_0 = arith.constant 0 : i32
    %c0_i32_1 = arith.constant 0 : i32
    return %c0_i32, %c0_i32_0 : i32, i32
  }
  func.func @transform_5(%arg0: i32) -> (i32, i32) {
    %c0_i32 = arith.constant 0 : i32
    %c0_i32_0 = arith.constant 0 : i32
    %c0_i32_1 = arith.constant 0 : i32
    return %c0_i32, %c0_i32_0 : i32, i32
  }
  func.func @transform_6(%arg0: i32) -> (i32, i32) {
    %c0_i32 = arith.constant 0 : i32
    %c0_i32_0 = arith.constant 0 : i32
    %c0_i32_1 = arith.constant 0 : i32
    return %c0_i32, %c0_i32_0 : i32, i32
  }
  func.func @transform_7(%arg0: i32) -> (i32, i32) {
    %c0_i32 = arith.constant 0 : i32
    %c0_i32_0 = arith.constant 0 : i32
    %c0_i32_1 = arith.constant 0 : i32
    return %c0_i32, %c0_i32_0 : i32, i32
  }
  func.func @transform_8(%arg0: i32) -> (i32, i32) {
    %c0_i32 = arith.constant 0 : i32
    %c0_i32_0 = arith.constant 0 : i32
    %c0_i32_1 = arith.constant 0 : i32
    return %c0_i32, %c0_i32_0 : i32, i32
  }
  func.func @transform_9(%arg0: i32) -> (i32, i32) {
    %c0_i32 = arith.constant 0 : i32
    %c0_i32_0 = arith.constant 0 : i32
    %c0_i32_1 = arith.constant 0 : i32
    return %c0_i32, %c0_i32_0 : i32, i32
  }
  func.func @transform_10(%arg0: i32) -> (i32, i32, i32) {
    %c0_i32 = arith.constant 0 : i32
    %c0_i32_0 = arith.constant 0 : i32
    %c0_i32_1 = arith.constant 0 : i32
    return %arg0, %c0_i32, %c0_i32_0 : i32, i32, i32
  }
}

module attributes {stable_mosaic.version = 11 : i64} {
  func.func @_decode_ce_kernel(%arg0: i32, %arg1: i32, %arg2: memref<16x32xf32, #tpu.memory_space<vmem>>, %arg3: memref<16x1xi32, #tpu.memory_space<vmem>>, %arg4: memref<1x32xf32, #tpu.memory_space<vmem>>, %arg5: memref<1x32xf32, #tpu.memory_space<vmem>>, %arg6: memref<32x16xbf16, #tpu.memory_space<vmem>>, %arg7: memref<1x16xf32, #tpu.memory_space<vmem>>, %arg8: memref<1x16xf32, #tpu.memory_space<vmem>>, %arg9: memref<1x16xf32, #tpu.memory_space<vmem>>, %arg10: memref<72x16xbf16, #tpu.memory_space<vmem>>, %arg11: memref<16x1xf32, #tpu.memory_space<vmem>>, %arg12: memref<16x16xbf16, #tpu.memory_space<vmem>>, %arg13: memref<16x1xf32, #tpu.memory_space<vmem>>, %arg14: memref<16x1xf32, #tpu.memory_space<vmem>>, %arg15: memref<16x1xf32, #tpu.memory_space<vmem>>) attributes {dimension_semantics = [#tpu.dimension_semantics<parallel>, #tpu.dimension_semantics<arbitrary>], iteration_bounds = array<i64: 1, 1>, scalar_prefetch = 0 : i64, scratch_operands = 4 : i64, tpu.core_type = #tpu.core_type<tc>, window_params = [{transform_indices = @transform_0, window_bounds = array<i64: 16, 32>}, {transform_indices = @transform_1, window_bounds = array<i64: 16, 1>}, {pipeline_mode = #tpu.pipeline_mode<synchronous>, transform_indices = @transform_2, window_bounds = array<i64: 1, 32>}, {pipeline_mode = #tpu.pipeline_mode<synchronous>, transform_indices = @transform_3, window_bounds = array<i64: 1, 32>}, {pipeline_mode = #tpu.pipeline_mode<synchronous>, transform_indices = @transform_4, window_bounds = array<i64: 32, 16>}, {pipeline_mode = #tpu.pipeline_mode<synchronous>, transform_indices = @transform_5, window_bounds = array<i64: 1, 16>}, {pipeline_mode = #tpu.pipeline_mode<synchronous>, transform_indices = @transform_6, window_bounds = array<i64: 1, 16>}, {pipeline_mode = #tpu.pipeline_mode<synchronous>, transform_indices = @transform_7, window_bounds = array<i64: 1, 16>}, {transform_indices = @transform_8, window_bounds = array<i64: 72, 16>}, {transform_indices = @transform_9, window_bounds = array<i64: 16, 1>}]} {
    %c0_i32 = arith.constant 0 : i32
    %0 = arith.cmpi eq, %arg1, %c0_i32 : i32
    %1 = arith.extui %0 : i1 to i32
    %c0_i32_0 = arith.constant 0 : i32
    %2 = arith.cmpi ne, %1, %c0_i32_0 : i32
    scf.if %2 {
      %c0_24 = arith.constant 0 : index
      %c0_25 = arith.constant 0 : index
      %39 = vector.load %arg2[%c0_24, %c0_25] : memref<16x32xf32, #tpu.memory_space<vmem>>, vector<16x32xf32>
      %c0_26 = arith.constant 0 : index
      %c0_27 = arith.constant 0 : index
      %40 = vector.load %arg4[%c0_26, %c0_27] : memref<1x32xf32, #tpu.memory_space<vmem>>, vector<1x32xf32>
      %c0_28 = arith.constant 0 : index
      %c0_29 = arith.constant 0 : index
      %41 = vector.load %arg5[%c0_28, %c0_29] : memref<1x32xf32, #tpu.memory_space<vmem>>, vector<1x32xf32>
      %cst_30 = arith.constant dense<0.000000e+00> : vector<16xf32>
      %42 = vector.multi_reduction <add>, %39, %cst_30 [1] : vector<16x32xf32> to vector<16xf32>
      %43 = vector.shape_cast %42 : vector<16xf32> to vector<16x1xf32>
      %cst_31 = arith.constant 3.200000e+01 : f32
      %44 = vector.broadcast %cst_31 : f32 to vector<16x1xf32>
      %45 = arith.divf %43, %44 : vector<16x1xf32>
      %46 = vector.broadcast %45 : vector<16x1xf32> to vector<16x32xf32>
      %47 = arith.subf %39, %46 : vector<16x32xf32>
      %48 = arith.mulf %47, %47 : vector<16x32xf32>
      %cst_32 = arith.constant dense<0.000000e+00> : vector<16xf32>
      %49 = vector.multi_reduction <add>, %48, %cst_32 [1] : vector<16x32xf32> to vector<16xf32>
      %50 = vector.shape_cast %49 : vector<16xf32> to vector<16x1xf32>
      %cst_33 = arith.constant 3.200000e+01 : f32
      %51 = vector.broadcast %cst_33 : f32 to vector<16x1xf32>
      %52 = arith.divf %50, %51 : vector<16x1xf32>
      %53 = vector.broadcast %45 : vector<16x1xf32> to vector<16x32xf32>
      %54 = arith.subf %39, %53 : vector<16x32xf32>
      %cst_34 = arith.constant 9.99999974E-6 : f32
      %55 = vector.broadcast %cst_34 : f32 to vector<16x1xf32>
      %56 = arith.addf %52, %55 : vector<16x1xf32>
      %57 = math.rsqrt %56 : vector<16x1xf32>
      %58 = vector.broadcast %57 : vector<16x1xf32> to vector<16x32xf32>
      %59 = arith.mulf %54, %58 : vector<16x32xf32>
      %60 = vector.broadcast %40 : vector<1x32xf32> to vector<16x32xf32>
      %61 = arith.mulf %59, %60 : vector<16x32xf32>
      %62 = vector.broadcast %41 : vector<1x32xf32> to vector<16x32xf32>
      %63 = arith.addf %61, %62 : vector<16x32xf32>
      %64 = arith.truncf %63 : vector<16x32xf32> to vector<16x32xbf16>
      %c0_35 = arith.constant 0 : index
      %c0_36 = arith.constant 0 : index
      %65 = vector.load %arg6[%c0_35, %c0_36] : memref<32x16xbf16, #tpu.memory_space<vmem>>, vector<32x16xbf16>
      %cst_37 = arith.constant dense<0.000000e+00> : vector<16x16xf32>
      %66 = tpu.matmul %64, %65, %cst_37 {dimension_numbers = #tpu.dot_dimension_numbers<[1], [0], [0], [1], [0, 0, 1, 1], [], []>} : vector<16x32xbf16>, vector<32x16xbf16>, vector<16x16xf32> -> vector<16x16xf32>
      %c0_38 = arith.constant 0 : index
      %c0_39 = arith.constant 0 : index
      %67 = vector.load %arg7[%c0_38, %c0_39] : memref<1x16xf32, #tpu.memory_space<vmem>>, vector<1x16xf32>
      %68 = vector.broadcast %67 : vector<1x16xf32> to vector<16x16xf32>
      %69 = arith.addf %66, %68 : vector<16x16xf32>
      %cst_40 = arith.constant 0.000000e+00 : f32
      %70 = vector.broadcast %cst_40 : f32 to vector<16x16xf32>
      %71 = arith.cmpf ogt, %69, %70 : vector<16x16xf32>
      %cst_41 = arith.constant 0.00999999977 : f32
      %72 = vector.broadcast %cst_41 : f32 to vector<16x16xf32>
      %73 = arith.mulf %72, %69 : vector<16x16xf32>
      %74 = arith.select %71, %69, %73 : vector<16x16xi1>, vector<16x16xf32>
      %c0_42 = arith.constant 0 : index
      %c0_43 = arith.constant 0 : index
      %75 = vector.load %arg8[%c0_42, %c0_43] : memref<1x16xf32, #tpu.memory_space<vmem>>, vector<1x16xf32>
      %c0_44 = arith.constant 0 : index
      %c0_45 = arith.constant 0 : index
      %76 = vector.load %arg9[%c0_44, %c0_45] : memref<1x16xf32, #tpu.memory_space<vmem>>, vector<1x16xf32>
      %cst_46 = arith.constant dense<0.000000e+00> : vector<16xf32>
      %77 = vector.multi_reduction <add>, %74, %cst_46 [1] : vector<16x16xf32> to vector<16xf32>
      %78 = vector.shape_cast %77 : vector<16xf32> to vector<16x1xf32>
      %cst_47 = arith.constant 1.600000e+01 : f32
      %79 = vector.broadcast %cst_47 : f32 to vector<16x1xf32>
      %80 = arith.divf %78, %79 : vector<16x1xf32>
      %81 = vector.broadcast %80 : vector<16x1xf32> to vector<16x16xf32>
      %82 = arith.subf %74, %81 : vector<16x16xf32>
      %83 = arith.mulf %82, %82 : vector<16x16xf32>
      %cst_48 = arith.constant dense<0.000000e+00> : vector<16xf32>
      %84 = vector.multi_reduction <add>, %83, %cst_48 [1] : vector<16x16xf32> to vector<16xf32>
      %85 = vector.shape_cast %84 : vector<16xf32> to vector<16x1xf32>
      %cst_49 = arith.constant 1.600000e+01 : f32
      %86 = vector.broadcast %cst_49 : f32 to vector<16x1xf32>
      %87 = arith.divf %85, %86 : vector<16x1xf32>
      %88 = vector.broadcast %80 : vector<16x1xf32> to vector<16x16xf32>
      %89 = arith.subf %74, %88 : vector<16x16xf32>
      %cst_50 = arith.constant 9.99999974E-6 : f32
      %90 = vector.broadcast %cst_50 : f32 to vector<16x1xf32>
      %91 = arith.addf %87, %90 : vector<16x1xf32>
      %92 = math.rsqrt %91 : vector<16x1xf32>
      %93 = vector.broadcast %92 : vector<16x1xf32> to vector<16x16xf32>
      %94 = arith.mulf %89, %93 : vector<16x16xf32>
      %95 = vector.broadcast %75 : vector<1x16xf32> to vector<16x16xf32>
      %96 = arith.mulf %94, %95 : vector<16x16xf32>
      %97 = vector.broadcast %76 : vector<1x16xf32> to vector<16x16xf32>
      %98 = arith.addf %96, %97 : vector<16x16xf32>
      %99 = arith.truncf %98 : vector<16x16xf32> to vector<16x16xbf16>
      %c0_51 = arith.constant 0 : index
      %c0_52 = arith.constant 0 : index
      %100 = vector.load %arg12[%c0_51, %c0_52] : memref<16x16xbf16, #tpu.memory_space<vmem>>, vector<16x16xbf16>
      tpu.vector_store %arg12[%c0_51, %c0_52], %99 {strides = array<i32>} : memref<16x16xbf16, #tpu.memory_space<vmem>>, vector<16x16xbf16>,
      %cst_53 = arith.constant -1.000000e+30 : f32
      %101 = vector.broadcast %cst_53 : f32 to vector<16x1xf32>
      %c0_54 = arith.constant 0 : index
      %c0_55 = arith.constant 0 : index
      %102 = vector.load %arg13[%c0_54, %c0_55] : memref<16x1xf32, #tpu.memory_space<vmem>>, vector<16x1xf32>
      tpu.vector_store %arg13[%c0_54, %c0_55], %101 {strides = array<i32>} : memref<16x1xf32, #tpu.memory_space<vmem>>, vector<16x1xf32>,
      %cst_56 = arith.constant 0.000000e+00 : f32
      %103 = vector.broadcast %cst_56 : f32 to vector<16x1xf32>
      %c0_57 = arith.constant 0 : index
      %c0_58 = arith.constant 0 : index
      %104 = vector.load %arg14[%c0_57, %c0_58] : memref<16x1xf32, #tpu.memory_space<vmem>>, vector<16x1xf32>
      tpu.vector_store %arg14[%c0_57, %c0_58], %103 {strides = array<i32>} : memref<16x1xf32, #tpu.memory_space<vmem>>, vector<16x1xf32>,
      %cst_59 = arith.constant 0.000000e+00 : f32
      %105 = vector.broadcast %cst_59 : f32 to vector<16x1xf32>
      %c0_60 = arith.constant 0 : index
      %c0_61 = arith.constant 0 : index
      %106 = vector.load %arg15[%c0_60, %c0_61] : memref<16x1xf32, #tpu.memory_space<vmem>>, vector<16x1xf32>
      tpu.vector_store %arg15[%c0_60, %c0_61], %105 {strides = array<i32>} : memref<16x1xf32, #tpu.memory_space<vmem>>, vector<16x1xf32>,
    } else {
    }
    %c0 = arith.constant 0 : index
    %c0_1 = arith.constant 0 : index
    %3 = vector.load %arg12[%c0, %c0_1] : memref<16x16xbf16, #tpu.memory_space<vmem>>, vector<16x16xbf16>
    %c0_2 = arith.constant 0 : index
    %c0_3 = arith.constant 0 : index
    %4 = vector.load %arg10[%c0_2, %c0_3] : memref<72x16xbf16, #tpu.memory_space<vmem>>, vector<72x16xbf16>
    %cst = arith.constant dense<0.000000e+00> : vector<16x72xf32>
    %5 = tpu.matmul %3, %4, %cst {dimension_numbers = #tpu.dot_dimension_numbers<[1], [1], [0], [0], [0, 0, 1, 0], [], []>} : vector<16x16xbf16>, vector<72x16xbf16>, vector<16x72xf32> -> vector<16x72xf32>
    %c0_4 = arith.constant 0 : index
    %c0_5 = arith.constant 0 : index
    %6 = vector.load %arg13[%c0_4, %c0_5] : memref<16x1xf32, #tpu.memory_space<vmem>>, vector<16x1xf32>
    %cst_6 = arith.constant dense<0xFF800000> : vector<16xf32>
    %7 = vector.multi_reduction <maximumf>, %5, %cst_6 [1] : vector<16x72xf32> to vector<16xf32>
    %8 = vector.shape_cast %7 : vector<16xf32> to vector<16x1xf32>
    %9 = arith.maximumf %6, %8 : vector<16x1xf32>
    %c0_7 = arith.constant 0 : index
    %c0_8 = arith.constant 0 : index
    %10 = vector.load %arg14[%c0_7, %c0_8] : memref<16x1xf32, #tpu.memory_space<vmem>>, vector<16x1xf32>
    %11 = arith.subf %6, %9 : vector<16x1xf32>
    %12 = math.exp %11 : vector<16x1xf32>
    %13 = arith.mulf %10, %12 : vector<16x1xf32>
    %14 = vector.broadcast %9 : vector<16x1xf32> to vector<16x72xf32>
    %15 = arith.subf %5, %14 : vector<16x72xf32>
    %16 = math.exp %15 : vector<16x72xf32>
    %cst_9 = arith.constant dense<0.000000e+00> : vector<16xf32>
    %17 = vector.multi_reduction <add>, %16, %cst_9 [1] : vector<16x72xf32> to vector<16xf32>
    %18 = vector.shape_cast %17 : vector<16xf32> to vector<16x1xf32>
    %19 = arith.addf %13, %18 : vector<16x1xf32>
    %c0_10 = arith.constant 0 : index
    %c0_11 = arith.constant 0 : index
    %20 = vector.load %arg14[%c0_10, %c0_11] : memref<16x1xf32, #tpu.memory_space<vmem>>, vector<16x1xf32>
    tpu.vector_store %arg14[%c0_10, %c0_11], %19 {strides = array<i32>} : memref<16x1xf32, #tpu.memory_space<vmem>>, vector<16x1xf32>,
    %c0_12 = arith.constant 0 : index
    %c0_13 = arith.constant 0 : index
    %21 = vector.load %arg13[%c0_12, %c0_13] : memref<16x1xf32, #tpu.memory_space<vmem>>, vector<16x1xf32>
    tpu.vector_store %arg13[%c0_12, %c0_13], %9 {strides = array<i32>} : memref<16x1xf32, #tpu.memory_space<vmem>>, vector<16x1xf32>,
    %c72_i32 = arith.constant 72 : i32
    %22 = arith.muli %arg1, %c72_i32 : i32
    %23 = tpu.iota {dimensions = array<i32: 1>} : vector<16x72xi32>
    %24 = vector.broadcast %22 : i32 to vector<16x72xi32>
    %25 = arith.addi %24, %23 : vector<16x72xi32>
    %c0_14 = arith.constant 0 : index
    %c0_15 = arith.constant 0 : index
    %26 = vector.load %arg15[%c0_14, %c0_15] : memref<16x1xf32, #tpu.memory_space<vmem>>, vector<16x1xf32>
    %c0_16 = arith.constant 0 : index
    %c0_17 = arith.constant 0 : index
    %27 = vector.load %arg3[%c0_16, %c0_17] : memref<16x1xi32, #tpu.memory_space<vmem>>, vector<16x1xi32>
    %28 = vector.broadcast %27 : vector<16x1xi32> to vector<16x72xi32>
    %29 = arith.cmpi eq, %25, %28 : vector<16x72xi32>
    %cst_18 = arith.constant 0.000000e+00 : f32
    %30 = vector.broadcast %cst_18 : f32 to vector<16x72xf32>
    %31 = arith.select %29, %5, %30 : vector<16x72xi1>, vector<16x72xf32>
    %cst_19 = arith.constant dense<0.000000e+00> : vector<16xf32>
    %32 = vector.multi_reduction <add>, %31, %cst_19 [1] : vector<16x72xf32> to vector<16xf32>
    %33 = vector.shape_cast %32 : vector<16xf32> to vector<16x1xf32>
    %34 = arith.addf %26, %33 : vector<16x1xf32>
    %c0_20 = arith.constant 0 : index
    %c0_21 = arith.constant 0 : index
    %35 = vector.load %arg15[%c0_20, %c0_21] : memref<16x1xf32, #tpu.memory_space<vmem>>, vector<16x1xf32>
    tpu.vector_store %arg15[%c0_20, %c0_21], %34 {strides = array<i32>} : memref<16x1xf32, #tpu.memory_space<vmem>>, vector<16x1xf32>,
    %c0_i32_22 = arith.constant 0 : i32
    %36 = arith.cmpi eq, %arg1, %c0_i32_22 : i32
    %37 = arith.extui %36 : i1 to i32
    %c0_i32_23 = arith.constant 0 : i32
    %38 = arith.cmpi ne, %37, %c0_i32_23 : i32
    scf.if %38 {
      %c0_24 = arith.constant 0 : index
      %c0_25 = arith.constant 0 : index
      %39 = vector.load %arg13[%c0_24, %c0_25] : memref<16x1xf32, #tpu.memory_space<vmem>>, vector<16x1xf32>
      %c0_26 = arith.constant 0 : index
      %c0_27 = arith.constant 0 : index
      %40 = vector.load %arg14[%c0_26, %c0_27] : memref<16x1xf32, #tpu.memory_space<vmem>>, vector<16x1xf32>
      %41 = math.log %40 : vector<16x1xf32>
      %42 = arith.addf %39, %41 : vector<16x1xf32>
      %c0_28 = arith.constant 0 : index
      %c0_29 = arith.constant 0 : index
      %43 = vector.load %arg15[%c0_28, %c0_29] : memref<16x1xf32, #tpu.memory_space<vmem>>, vector<16x1xf32>
      %44 = arith.subf %42, %43 : vector<16x1xf32>
      %c0_30 = arith.constant 0 : index
      %c0_31 = arith.constant 0 : index
      %45 = vector.load %arg11[%c0_30, %c0_31] : memref<16x1xf32, #tpu.memory_space<vmem>>, vector<16x1xf32>
      tpu.vector_store %arg11[%c0_30, %c0_31], %44 {strides = array<i32>} : memref<16x1xf32, #tpu.memory_space<vmem>>, vector<16x1xf32>,
    } else {
    }
    return
  }
  func.func @transform_0(%arg0: i32, %arg1: i32) -> (i32, i32) {
    %c0_i32 = arith.constant 0 : i32
    %c0_i32_0 = arith.constant 0 : i32
    return %arg0, %c0_i32 : i32, i32
  }
  func.func @transform_1(%arg0: i32, %arg1: i32) -> (i32, i32) {
    %c0_i32 = arith.constant 0 : i32
    %c0_i32_0 = arith.constant 0 : i32
    return %arg0, %c0_i32 : i32, i32
  }
  func.func @transform_2(%arg0: i32, %arg1: i32) -> (i32, i32) {
    %c0_i32 = arith.constant 0 : i32
    %c0_i32_0 = arith.constant 0 : i32
    %c0_i32_1 = arith.constant 0 : i32
    return %c0_i32, %c0_i32_0 : i32, i32
  }
  func.func @transform_3(%arg0: i32, %arg1: i32) -> (i32, i32) {
    %c0_i32 = arith.constant 0 : i32
    %c0_i32_0 = arith.constant 0 : i32
    %c0_i32_1 = arith.constant 0 : i32
    return %c0_i32, %c0_i32_0 : i32, i32
  }
  func.func @transform_4(%arg0: i32, %arg1: i32) -> (i32, i32) {
    %c0_i32 = arith.constant 0 : i32
    %c0_i32_0 = arith.constant 0 : i32
    %c0_i32_1 = arith.constant 0 : i32
    return %c0_i32, %c0_i32_0 : i32, i32
  }
  func.func @transform_5(%arg0: i32, %arg1: i32) -> (i32, i32) {
    %c0_i32 = arith.constant 0 : i32
    %c0_i32_0 = arith.constant 0 : i32
    %c0_i32_1 = arith.constant 0 : i32
    return %c0_i32, %c0_i32_0 : i32, i32
  }
  func.func @transform_6(%arg0: i32, %arg1: i32) -> (i32, i32) {
    %c0_i32 = arith.constant 0 : i32
    %c0_i32_0 = arith.constant 0 : i32
    %c0_i32_1 = arith.constant 0 : i32
    return %c0_i32, %c0_i32_0 : i32, i32
  }
  func.func @transform_7(%arg0: i32, %arg1: i32) -> (i32, i32) {
    %c0_i32 = arith.constant 0 : i32
    %c0_i32_0 = arith.constant 0 : i32
    %c0_i32_1 = arith.constant 0 : i32
    return %c0_i32, %c0_i32_0 : i32, i32
  }
  func.func @transform_8(%arg0: i32, %arg1: i32) -> (i32, i32) {
    %c0_i32 = arith.constant 0 : i32
    %c0_i32_0 = arith.constant 0 : i32
    return %arg1, %c0_i32 : i32, i32
  }
  func.func @transform_9(%arg0: i32, %arg1: i32) -> (i32, i32) {
    %c0_i32 = arith.constant 0 : i32
    %c0_i32_0 = arith.constant 0 : i32
    return %arg0, %c0_i32 : i32, i32
  }
}

</mosaic_0001>

<llo_original>
// kernel: transformer_x_forward.18
$region0: #{transformer_x_forward.18}
  #allocation0 [shape = 'u32[]', space=smem, size = 0x4, offset = 0x4, fixed_abs, tag = 'smem constant byte address 0x4 - core index']
  #allocation1 [shape = 'u32[144,128]{1,0:T(1,128)}', space=vmem, size = 0x12000, scoped, tag = 'internal scratch']
  %s0 = inlined_call_operand.vmem [shape: f32[16,32], index: 0, kind: input, shape index: {}]
  %s1 = inlined_call_operand.vmem [shape: bf16[32,128], index: 1, kind: input, shape index: {}]
  %s2 = inlined_call_operand.vmem [shape: f32[1,128], index: 2, kind: input, shape index: {}]
  %s3 = inlined_call_operand.vmem [shape: bf16[128,32], index: 3, kind: input, shape index: {}]
  %s4 = inlined_call_operand.vmem [shape: f32[1,32], index: 4, kind: input, shape index: {}]
  %s5 = inlined_call_operand.vmem [shape: f32[1,32], index: 5, kind: input, shape index: {}]
  %s6 = inlined_call_operand.vmem [shape: f32[1,32], index: 6, kind: input, shape index: {}]
  %s7 = inlined_call_operand.vmem [shape: f32[1,32], index: 7, kind: input, shape index: {}]
  %s8 = inlined_call_operand.vmem [shape: f32[1,32], index: 8, kind: input, shape index: {}]
  %s9 = inlined_call_operand.vmem [shape: f32[16,32], index: 9, kind: output, shape index: {}]
  %s10 = sld [smem:[#allocation0]]
  $region46: #{transformer_x_forward.18} parent=0
    _
  %s12 = ssub.s32 1, %s10
  %s13 = scalar_select 0, %s12, %s10
  // Predicated region
  $region2: #{transformer_x_forward.18} parent=0 // pred_check
    _
  $region3: #{transformer_x_forward.18} parent=0 // pred_check_branch
    %15 = sbr.rel (0) target = $region5
  $region4: #{transformer_x_forward.18} parent=0 // pred_region
    _
  $region5: #{transformer_x_forward.18} parent=0 // pred_fallthru
    _
  // Predicated region
  $region6: #{transformer_x_forward.18} parent=0 // pred_check
    _
  $region7: #{transformer_x_forward.18} parent=0 // pred_check_branch
    %17 = sbr.rel (0) target = $region9
  $region8: #{transformer_x_forward.18} parent=0 // pred_region
    _
  $region9: #{transformer_x_forward.18} parent=0 // pred_fallthru
    _
  // Predicated region
  $region10: #{transformer_x_forward.18} parent=0 // pred_check
    _
  $region11: #{transformer_x_forward.18} parent=0 // pred_check_branch
    %19 = sbr.rel (0) target = $region13
  $region12: #{transformer_x_forward.18} parent=0 // pred_region
    _
  $region13: #{transformer_x_forward.18} parent=0 // pred_fallthru
    _
  // Predicated region
  $region14: #{transformer_x_forward.18} parent=0 // pred_check
    _
  $region15: #{transformer_x_forward.18} parent=0 // pred_check_branch
    %21 = sbr.rel (0) target = $region17
  $region16: #{transformer_x_forward.18} parent=0 // pred_region
    _
  $region17: #{transformer_x_forward.18} parent=0 // pred_fallthru
    _
  // Predicated region
  $region18: #{transformer_x_forward.18} parent=0 // pred_check
    _
  $region19: #{transformer_x_forward.18} parent=0 // pred_check_branch
    %23 = sbr.rel (0) target = $region21
  $region20: #{transformer_x_forward.18} parent=0 // pred_region
    _
  $region21: #{transformer_x_forward.18} parent=0 // pred_fallthru
    _
  // Predicated region
  $region22: #{transformer_x_forward.18} parent=0 // pred_check
    _
  $region23: #{transformer_x_forward.18} parent=0 // pred_check_branch
    %25 = sbr.rel (0) target = $region25
  $region24: #{transformer_x_forward.18} parent=0 // pred_region
    _
  $region25: #{transformer_x_forward.18} parent=0 // pred_fallthru
    _
  // Predicated region
  $region26: #{transformer_x_forward.18} parent=0 // pred_check
    _
  $region27: #{transformer_x_forward.18} parent=0 // pred_check_branch
    %27 = sbr.rel (0) target = $region29
  $region28: #{transformer_x_forward.18} parent=0 // pred_region
    _
  $region29: #{transformer_x_forward.18} parent=0 // pred_fallthru
    _
  // Predicated region
  $region30: #{transformer_x_forward.18} parent=0 // pred_check
    _
  $region31: #{transformer_x_forward.18} parent=0 // pred_check_branch
    %29 = sbr.rel (0) target = $region33
  $region32: #{transformer_x_forward.18} parent=0 // pred_region
    _
  $region33: #{transformer_x_forward.18} parent=0 // pred_fallthru
    _
  // Predicated region
  $region34: #{transformer_x_forward.18} parent=0 // pred_check
    _
  $region35: #{transformer_x_forward.18} parent=0 // pred_check_branch
    %31 = sbr.rel (0) target = $region37
  $region36: #{transformer_x_forward.18} parent=0 // pred_region
    _
  $region37: #{transformer_x_forward.18} parent=0 // pred_fallthru
    _
  %v33 = vld [vmem:[%s0] sm:$0xff]
  %v34 = vld [vmem:[%s0 + $0x8] sm:$0xff]
  %v35 = vpack.c.bf16 %v34, %v33
  %v36 = vld [vmem:[%s1] sm:$0xf]
  %v37 = vld [vmem:[%s1 + $0x4] sm:$0xf]
  %v38 = vld [vmem:[%s1 + $0x8] sm:$0xf]
  %v39 = vld [vmem:[%s1 + $0xc] sm:$0xf]
  %v40 = vld [vmem:[%s2] sm:$0x1]
  %v42 = vlaneseq
  %v43 = vshrl.u32 %v42, 7
  %v44 = vsub.s32 0, %v43
  %v45 = vrot.slane %v40, %v44
  %v51 = vunpack.c.l.b16 %v36
  %v52 = vunpack.c.l.b16 %v37
  %v53 = vunpack.c.l.b16 %v38
  %v54 = vunpack.c.l.b16 %v39
  %v55 = vpack.c.b16 %v52, %v51
  %v56 = vpack.c.b16 %v54, %v53
  %vm59 = vcmask 261120
  %v61 = vsel %vm59, %v35, 0
  %63 = vmatprep.subr.bf16.mxu0 0
  %64 = vmatpush1.bf16.msra.mxu0 %v55
  %65 = vmatprep.subr.bf16.mxu0 0
  %66 = vmatpush1.bf16.msra.mxu0 %v56
  %67 = vmatprep.subr.bf16.mxu0 0
  %68 = vmatpush1.bf16.msra.mxu0 0
  %69 = vmatprep.subr.bf16.mxu0 0
  %70 = vmatpush1.bf16.msra.mxu0 0
  %71 = vmatprep.subr.bf16.mxu0 0
  %72 = vmatpush1.bf16.msra.mxu0 0
  %73 = vmatprep.subr.bf16.mxu0 0
  %74 = vmatpush1.bf16.msra.mxu0 0
  %75 = vmatprep.subr.bf16.mxu0 0
  %76 = vmatpush1.bf16.msra.mxu0 0
  %77 = vmatprep.subr.bf16.mxu0 0
  %78 = vmatpush1.bf16.msra.mxu0 0
  %79 = vmatprep.subr.bf16.mxu0 0
  %80 = vmatpush1.bf16.msra.mxu0 0
  %81 = vmatprep.subr.bf16.mxu0 0
  %82 = vmatpush1.bf16.msra.mxu0 0
  %83 = vmatprep.subr.bf16.mxu0 0
  %84 = vmatpush1.bf16.msra.mxu0 0
  %85 = vmatprep.subr.bf16.mxu0 0
  %86 = vmatpush1.bf16.msra.mxu0 0
  %87 = vmatprep.subr.bf16.mxu0 0
  %88 = vmatpush1.bf16.msra.mxu0 0
  %89 = vmatprep.subr.bf16.mxu0 0
  %90 = vmatpush1.bf16.msra.mxu0 0
  %91 = vmatprep.subr.bf16.mxu0 0
  %92 = vmatpush1.bf16.msra.mxu0 0
  %93 = vmatprep.subr.bf16.mxu0 0
  %94 = vmatpush1.bf16.msra.mxu0 0
  %95 = vmatprep.mubr.bf16.mxu0 0
  %96 = vmatmul.mubr.bf16.gmra.mrb[0].mxu0 %v61
  %v97 = vpop.f32.mrb[0].mxu0
  %v98 = vadd.f32 %v45, %v97
  %v99 = vpop.f32.mrb[0].mxu0
  %v100 = vpop.f32.mrb[0].mxu0
  %v101 = vadd.f32 %v45, %v100
  %v102 = vpop.f32.mrb[0].mxu0
  %103 = vdwg.mxu0
  %v104 = vmul.f32 %v98, %v98
  %v105 = vmul.f32 %v101, %v101
  %v106 = vmul.f32 %v98, %v104
  %v107 = vmul.f32 %v101, %v105
  %v108 = vmul.f32 %v106, 0.044715
  %v109 = vmul.f32 %v107, 0.044715
  %v110 = vadd.f32 %v98, %v108
  %v111 = vadd.f32 %v101, %v109
  %v112 = vmul.f32 %v110, 0.7978846
  %v113 = vmul.f32 %v111, 0.7978846
  %v114 = vtanh.pop %v112
  %v115 = vtanh.pop %v113
  %v116 = vadd.f32 %v114, 1.0
  %v117 = vadd.f32 %v115, 1.0
  %v118 = vmul.f32 %v116, 0.5
  %v119 = vmul.f32 %v117, 0.5
  %v120 = vmul.f32 %v98, %v118
  %v121 = vmul.f32 %v101, %v119
  %v122 = vpack.c.bf16 %v121, %v120
  %v123 = vld [vmem:[%s3] sm:$0xf]
  %v124 = vld [vmem:[%s3 + $0x4] sm:$0xf]
  %v125 = vld [vmem:[%s3 + $0x8] sm:$0xf]
  %v126 = vld [vmem:[%s3 + $0xc] sm:$0xf]
  %v127 = vld [vmem:[%s3 + $0x10] sm:$0xf]
  %v128 = vld [vmem:[%s3 + $0x14] sm:$0xf]
  %v129 = vld [vmem:[%s3 + $0x18] sm:$0xf]
  %v130 = vld [vmem:[%s3 + $0x1c] sm:$0xf]
  %v131 = vld [vmem:[%s3 + $0x20] sm:$0xf]
  %v132 = vld [vmem:[%s3 + $0x24] sm:$0xf]
  %v133 = vld [vmem:[%s3 + $0x28] sm:$0xf]
  %v134 = vld [vmem:[%s3 + $0x2c] sm:$0xf]
  %v135 = vld [vmem:[%s3 + $0x30] sm:$0xf]
  %v136 = vld [vmem:[%s3 + $0x34] sm:$0xf]
  %v137 = vld [vmem:[%s3 + $0x38] sm:$0xf]
  %v138 = vld [vmem:[%s3 + $0x3c] sm:$0xf]
  %v139 = vld [vmem:[%s4] sm:$0x1]
  %v141 = vlaneseq
  %v142 = vshrl.u32 %v141, 7
  %v143 = vsub.s32 0, %v142
  %v144 = vrot.slane %v139, %v143
  %v162 = vunpack.c.l.b16 %v123
  %v163 = vunpack.c.l.b16 %v124
  %v164 = vunpack.c.l.b16 %v125
  %v165 = vunpack.c.l.b16 %v126
  %v166 = vunpack.c.l.b16 %v127
  %v167 = vunpack.c.l.b16 %v128
  %v168 = vunpack.c.l.b16 %v129
  %v169 = vunpack.c.l.b16 %v130
  %v170 = vunpack.c.l.b16 %v131
  %v171 = vunpack.c.l.b16 %v132
  %v172 = vunpack.c.l.b16 %v133
  %v173 = vunpack.c.l.b16 %v134
  %v174 = vunpack.c.l.b16 %v135
  %v175 = vunpack.c.l.b16 %v136
  %v176 = vunpack.c.l.b16 %v137
  %v177 = vunpack.c.l.b16 %v138
  %v178 = vpack.c.b16 %v163, %v162
  %v179 = vpack.c.b16 %v165, %v164
  %v180 = vpack.c.b16 %v167, %v166
  %v181 = vpack.c.b16 %v169, %v168
  %v182 = vpack.c.b16 %v171, %v170
  %v183 = vpack.c.b16 %v173, %v172
  %v184 = vpack.c.b16 %v175, %v174
  %v185 = vpack.c.b16 %v177, %v176
  %194 = vmatprep.subr.bf16.mxu0 0
  %195 = vmatpush1.bf16.msra.mxu0 %v178
  %196 = vmatprep.subr.bf16.mxu0 0
  %197 = vmatpush1.bf16.msra.mxu0 %v179
  %198 = vmatprep.subr.bf16.mxu0 0
  %199 = vmatpush1.bf16.msra.mxu0 %v180
  %200 = vmatprep.subr.bf16.mxu0 0
  %201 = vmatpush1.bf16.msra.mxu0 %v181
  %202 = vmatprep.subr.bf16.mxu0 0
  %203 = vmatpush1.bf16.msra.mxu0 %v182
  %204 = vmatprep.subr.bf16.mxu0 0
  %205 = vmatpush1.bf16.msra.mxu0 %v183
  %206 = vmatprep.subr.bf16.mxu0 0
  %207 = vmatpush1.bf16.msra.mxu0 %v184
  %208 = vmatprep.subr.bf16.mxu0 0
  %209 = vmatpush1.bf16.msra.mxu0 %v185
  %210 = vmatprep.subr.bf16.mxu0 0
  %211 = vmatpush1.bf16.msra.mxu0 0
  %212 = vmatprep.subr.bf16.mxu0 0
  %213 = vmatpush1.bf16.msra.mxu0 0
  %214 = vmatprep.subr.bf16.mxu0 0
  %215 = vmatpush1.bf16.msra.mxu0 0
  %216 = vmatprep.subr.bf16.mxu0 0
  %217 = vmatpush1.bf16.msra.mxu0 0
  %218 = vmatprep.subr.bf16.mxu0 0
  %219 = vmatpush1.bf16.msra.mxu0 0
  %220 = vmatprep.subr.bf16.mxu0 0
  %221 = vmatpush1.bf16.msra.mxu0 0
  %222 = vmatprep.subr.bf16.mxu0 0
  %223 = vmatpush1.bf16.msra.mxu0 0
  %224 = vmatprep.subr.bf16.mxu0 0
  %225 = vmatpush1.bf16.msra.mxu0 0
  %226 = vmatprep.mubr.bf16.mxu0 0
  %227 = vmatmul.mubr.bf16.gmra.mrb[0].mxu0 %v122
  %v228 = vpop.f32.mrb[0].mxu0
  %v229 = vadd.f32 %v144, %v228
  %v230 = vpop.f32.mrb[0].mxu0
  %v231 = vpop.f32.mrb[0].mxu0
  %v232 = vadd.f32 %v144, %v231
  %v233 = vpop.f32.mrb[0].mxu0
  %234 = vdwg.mxu0
  %v235 = vadd.f32 %v33, %v229
  %v236 = vadd.f32 %v34, %v232
  %v237 = vld [vmem:[%s5] sm:$0x1]
  %v238 = vld [vmem:[%s6] sm:$0x1]
  %v239 = vsel %vm59, %v235, 0.0
  %240 = vadd.xlane.f32.xlu0 %v239
  %v241 = vpop.xlane.xlu0 %240
  %v242 = vsel %vm59, %v236, 0.0
  %243 = vadd.xlane.f32.xlu0 %v242
  %v244 = vpop.xlane.xlu0 %243
  %v245 = vrcp.pop 32.0
  %v246 = vmul.f32 %v241, %v245
  %v247 = vmul.f32 %v244, %v245
  %v248 = vsub.f32 %v235, %v246
  %v249 = vsub.f32 %v236, %v247
  %v250 = vmul.f32 %v248, %v248
  %v251 = vmul.f32 %v249, %v249
  %v252 = vsel %vm59, %v250, 0.0
  %253 = vadd.xlane.f32.xlu0 %v252
  %v254 = vpop.xlane.xlu0 %253
  %v255 = vsel %vm59, %v251, 0.0
  %256 = vadd.xlane.f32.xlu0 %v255
  %v257 = vpop.xlane.xlu0 %256
  %v258 = vmul.f32 %v254, %v245
  %v259 = vmul.f32 %v257, %v245
  %v260 = vadd.f32 %v258, 1e-05
  %v261 = vadd.f32 %v259, 1e-05
  %v262 = vrsqrt.pop %v260
  %v263 = vrsqrt.pop %v261
  %v264 = vmul.f32 %v248, %v262
  %v265 = vmul.f32 %v249, %v263
  %v267 = vlaneseq
  %v268 = vshrl.u32 %v267, 7
  %v269 = vsub.s32 0, %v268
  %v270 = vrot.slane %v237, %v269
  %v272 = vmul.f32 %v264, %v270
  %v273 = vmul.f32 %v265, %v270
  %v275 = vlaneseq
  %v276 = vshrl.u32 %v275, 7
  %v277 = vsub.s32 0, %v276
  %v278 = vrot.slane %v238, %v277
  %v280 = vadd.f32 %v272, %v278
  %v281 = vadd.f32 %v273, %v278
  %v282 = vld [vmem:[%s7] sm:$0x1]
  %v283 = vld [vmem:[%s8] sm:$0x1]
  %v284 = vsel %vm59, %v280, 0.0
  %285 = vadd.xlane.f32.xlu0 %v284
  %v286 = vpop.xlane.xlu0 %285
  %v287 = vsel %vm59, %v281, 0.0
  %288 = vadd.xlane.f32.xlu0 %v287
  %v289 = vpop.xlane.xlu0 %288
  %v290 = vmul.f32 %v286, %v245
  %v291 = vmul.f32 %v289, %v245
  %v292 = vsub.f32 %v280, %v290
  %v293 = vsub.f32 %v281, %v291
  %v294 = vmul.f32 %v292, %v292
  %v295 = vmul.f32 %v293, %v293
  %v296 = vsel %vm59, %v294, 0.0
  %297 = vadd.xlane.f32.xlu0 %v296
  %v298 = vpop.xlane.xlu0 %297
  %v299 = vsel %vm59, %v295, 0.0
  %300 = vadd.xlane.f32.xlu0 %v299
  %v301 = vpop.xlane.xlu0 %300
  %v302 = vmul.f32 %v298, %v245
  %v303 = vmul.f32 %v301, %v245
  %v304 = vadd.f32 %v302, 1e-05
  %v305 = vadd.f32 %v303, 1e-05
  %v306 = vrsqrt.pop %v304
  %v307 = vrsqrt.pop %v305
  %v308 = vmul.f32 %v292, %v306
  %v309 = vmul.f32 %v293, %v307
  %v311 = vlaneseq
  %v312 = vshrl.u32 %v311, 7
  %v313 = vsub.s32 0, %v312
  %v314 = vrot.slane %v282, %v313
  %v316 = vmul.f32 %v308, %v314
  %v317 = vmul.f32 %v309, %v314
  %v319 = vlaneseq
  %v320 = vshrl.u32 %v319, 7
  %v321 = vsub.s32 0, %v320
  %v322 = vrot.slane %v283, %v321
  %v324 = vadd.f32 %v316, %v322
  %v325 = vadd.f32 %v317, %v322
  %326 = vst.msk [vmem:[%s9] sm:$0xff] %vm59, %v324
  %327 = vst.msk [vmem:[%s9 + $0x8] sm:$0xff] %vm59, %v325
  // Predicated region
  $region38: #{transformer_x_forward.18} parent=0 // pred_check
    _
  $region39: #{transformer_x_forward.18} parent=0 // pred_check_branch
    %329 = sbr.rel (0) target = $region41
  $region40: #{transformer_x_forward.18} parent=0 // pred_region
    _
  $region41: #{transformer_x_forward.18} parent=0 // pred_fallthru
    _
  // Predicated region
  $region42: #{transformer_x_forward.18} parent=0 // pred_check
    _
  $region43: #{transformer_x_forward.18} parent=0 // pred_check_branch
    %331 = sbr.rel (0) target = $region45
  $region44: #{transformer_x_forward.18} parent=0 // pred_region
    _
  $region45: #{transformer_x_forward.18} parent=0 // pred_fallthru
    _

// kernel: transformer_x_forward.16
$region0: #{transformer_x_forward.16}
  #allocation0 [shape = 'u32[]', space=smem, size = 0x4, offset = 0x4, fixed_abs, tag = 'smem constant byte address 0x4 - core index']
  #allocation1 [shape = 'u32[144,128]{1,0:T(1,128)}', space=vmem, size = 0x12000, scoped, tag = 'internal scratch']
  %s0 = inlined_call_operand.vmem [shape: f32[16,32], index: 0, kind: input, shape index: {}]
  %s1 = inlined_call_operand.vmem [shape: bf16[32,128], index: 1, kind: input, shape index: {}]
  %s2 = inlined_call_operand.vmem [shape: f32[1,128], index: 2, kind: input, shape index: {}]
  %s3 = inlined_call_operand.vmem [shape: bf16[128,32], index: 3, kind: input, shape index: {}]
  %s4 = inlined_call_operand.vmem [shape: f32[1,32], index: 4, kind: input, shape index: {}]
  %s5 = inlined_call_operand.vmem [shape: f32[1,32], index: 5, kind: input, shape index: {}, may-alias: {5,7}]
  %s6 = inlined_call_operand.vmem [shape: f32[1,32], index: 6, kind: input, shape index: {}, may-alias: {6,8}]
  %s7 = inlined_call_operand.vmem [shape: f32[1,32], index: 7, kind: input, shape index: {}, may-alias: {5,7}]
  %s8 = inlined_call_operand.vmem [shape: f32[1,32], index: 8, kind: input, shape index: {}, may-alias: {6,8}]
  %s9 = inlined_call_operand.vmem [shape: f32[16,32], index: 9, kind: output, shape index: {}]
  %s10 = sld [smem:[#allocation0]]
  $region46: #{transformer_x_forward.16} parent=0
    _
  %s12 = ssub.s32 1, %s10
  %s13 = scalar_select 0, %s12, %s10
  // Predicated region
  $region2: #{transformer_x_forward.16} parent=0 // pred_check
    _
  $region3: #{transformer_x_forward.16} parent=0 // pred_check_branch
    %15 = sbr.rel (0) target = $region5
  $region4: #{transformer_x_forward.16} parent=0 // pred_region
    _
  $region5: #{transformer_x_forward.16} parent=0 // pred_fallthru
    _
  // Predicated region
  $region6: #{transformer_x_forward.16} parent=0 // pred_check
    _
  $region7: #{transformer_x_forward.16} parent=0 // pred_check_branch
    %17 = sbr.rel (0) target = $region9
  $region8: #{transformer_x_forward.16} parent=0 // pred_region
    _
  $region9: #{transformer_x_forward.16} parent=0 // pred_fallthru
    _
  // Predicated region
  $region10: #{transformer_x_forward.16} parent=0 // pred_check
    _
  $region11: #{transformer_x_forward.16} parent=0 // pred_check_branch
    %19 = sbr.rel (0) target = $region13
  $region12: #{transformer_x_forward.16} parent=0 // pred_region
    _
  $region13: #{transformer_x_forward.16} parent=0 // pred_fallthru
    _
  // Predicated region
  $region14: #{transformer_x_forward.16} parent=0 // pred_check
    _
  $region15: #{transformer_x_forward.16} parent=0 // pred_check_branch
    %21 = sbr.rel (0) target = $region17
  $region16: #{transformer_x_forward.16} parent=0 // pred_region
    _
  $region17: #{transformer_x_forward.16} parent=0 // pred_fallthru
    _
  // Predicated region
  $region18: #{transformer_x_forward.16} parent=0 // pred_check
    _
  $region19: #{transformer_x_forward.16} parent=0 // pred_check_branch
    %23 = sbr.rel (0) target = $region21
  $region20: #{transformer_x_forward.16} parent=0 // pred_region
    _
  $region21: #{transformer_x_forward.16} parent=0 // pred_fallthru
    _
  // Predicated region
  $region22: #{transformer_x_forward.16} parent=0 // pred_check
    _
  $region23: #{transformer_x_forward.16} parent=0 // pred_check_branch
    %25 = sbr.rel (0) target = $region25
  $region24: #{transformer_x_forward.16} parent=0 // pred_region
    _
  $region25: #{transformer_x_forward.16} parent=0 // pred_fallthru
    _
  // Predicated region
  $region26: #{transformer_x_forward.16} parent=0 // pred_check
    _
  $region27: #{transformer_x_forward.16} parent=0 // pred_check_branch
    %27 = sbr.rel (0) target = $region29
  $region28: #{transformer_x_forward.16} parent=0 // pred_region
    _
  $region29: #{transformer_x_forward.16} parent=0 // pred_fallthru
    _
  // Predicated region
  $region30: #{transformer_x_forward.16} parent=0 // pred_check
    _
  $region31: #{transformer_x_forward.16} parent=0 // pred_check_branch
    %29 = sbr.rel (0) target = $region33
  $region32: #{transformer_x_forward.16} parent=0 // pred_region
    _
  $region33: #{transformer_x_forward.16} parent=0 // pred_fallthru
    _
  // Predicated region
  $region34: #{transformer_x_forward.16} parent=0 // pred_check
    _
  $region35: #{transformer_x_forward.16} parent=0 // pred_check_branch
    %31 = sbr.rel (0) target = $region37
  $region36: #{transformer_x_forward.16} parent=0 // pred_region
    _
  $region37: #{transformer_x_forward.16} parent=0 // pred_fallthru
    _
  %v33 = vld [vmem:[%s0] sm:$0xff]
  %v34 = vld [vmem:[%s0 + $0x8] sm:$0xff]
  %v35 = vpack.c.bf16 %v34, %v33
  %v36 = vld [vmem:[%s1] sm:$0xf]
  %v37 = vld [vmem:[%s1 + $0x4] sm:$0xf]
  %v38 = vld [vmem:[%s1 + $0x8] sm:$0xf]
  %v39 = vld [vmem:[%s1 + $0xc] sm:$0xf]
  %v40 = vld [vmem:[%s2] sm:$0x1]
  %v42 = vlaneseq
  %v43 = vshrl.u32 %v42, 7
  %v44 = vsub.s32 0, %v43
  %v45 = vrot.slane %v40, %v44
  %v51 = vunpack.c.l.b16 %v36
  %v52 = vunpack.c.l.b16 %v37
  %v53 = vunpack.c.l.b16 %v38
  %v54 = vunpack.c.l.b16 %v39
  %v55 = vpack.c.b16 %v52, %v51
  %v56 = vpack.c.b16 %v54, %v53
  %vm59 = vcmask 261120
  %v61 = vsel %vm59, %v35, 0
  %63 = vmatprep.subr.bf16.mxu0 0
  %64 = vmatpush1.bf16.msra.mxu0 %v55
  %65 = vmatprep.subr.bf16.mxu0 0
  %66 = vmatpush1.bf16.msra.mxu0 %v56
  %67 = vmatprep.subr.bf16.mxu0 0
  %68 = vmatpush1.bf16.msra.mxu0 0
  %69 = vmatprep.subr.bf16.mxu0 0
  %70 = vmatpush1.bf16.msra.mxu0 0
  %71 = vmatprep.subr.bf16.mxu0 0
  %72 = vmatpush1.bf16.msra.mxu0 0
  %73 = vmatprep.subr.bf16.mxu0 0
  %74 = vmatpush1.bf16.msra.mxu0 0
  %75 = vmatprep.subr.bf16.mxu0 0
  %76 = vmatpush1.bf16.msra.mxu0 0
  %77 = vmatprep.subr.bf16.mxu0 0
  %78 = vmatpush1.bf16.msra.mxu0 0
  %79 = vmatprep.subr.bf16.mxu0 0
  %80 = vmatpush1.bf16.msra.mxu0 0
  %81 = vmatprep.subr.bf16.mxu0 0
  %82 = vmatpush1.bf16.msra.mxu0 0
  %83 = vmatprep.subr.bf16.mxu0 0
  %84 = vmatpush1.bf16.msra.mxu0 0
  %85 = vmatprep.subr.bf16.mxu0 0
  %86 = vmatpush1.bf16.msra.mxu0 0
  %87 = vmatprep.subr.bf16.mxu0 0
  %88 = vmatpush1.bf16.msra.mxu0 0
  %89 = vmatprep.subr.bf16.mxu0 0
  %90 = vmatpush1.bf16.msra.mxu0 0
  %91 = vmatprep.subr.bf16.mxu0 0
  %92 = vmatpush1.bf16.msra.mxu0 0
  %93 = vmatprep.subr.bf16.mxu0 0
  %94 = vmatpush1.bf16.msra.mxu0 0
  %95 = vmatprep.mubr.bf16.mxu0 0
  %96 = vmatmul.mubr.bf16.gmra.mrb[0].mxu0 %v61
  %v97 = vpop.f32.mrb[0].mxu0
  %v98 = vadd.f32 %v45, %v97
  %v99 = vpop.f32.mrb[0].mxu0
  %v100 = vpop.f32.mrb[0].mxu0
  %v101 = vadd.f32 %v45, %v100
  %v102 = vpop.f32.mrb[0].mxu0
  %103 = vdwg.mxu0
  %v104 = vmul.f32 %v98, %v98
  %v105 = vmul.f32 %v101, %v101
  %v106 = vmul.f32 %v98, %v104
  %v107 = vmul.f32 %v101, %v105
  %v108 = vmul.f32 %v106, 0.044715
  %v109 = vmul.f32 %v107, 0.044715
  %v110 = vadd.f32 %v98, %v108
  %v111 = vadd.f32 %v101, %v109
  %v112 = vmul.f32 %v110, 0.7978846
  %v113 = vmul.f32 %v111, 0.7978846
  %v114 = vtanh.pop %v112
  %v115 = vtanh.pop %v113
  %v116 = vadd.f32 %v114, 1.0
  %v117 = vadd.f32 %v115, 1.0
  %v118 = vmul.f32 %v116, 0.5
  %v119 = vmul.f32 %v117, 0.5
  %v120 = vmul.f32 %v98, %v118
  %v121 = vmul.f32 %v101, %v119
  %v122 = vpack.c.bf16 %v121, %v120
  %v123 = vld [vmem:[%s3] sm:$0xf]
  %v124 = vld [vmem:[%s3 + $0x4] sm:$0xf]
  %v125 = vld [vmem:[%s3 + $0x8] sm:$0xf]
  %v126 = vld [vmem:[%s3 + $0xc] sm:$0xf]
  %v127 = vld [vmem:[%s3 + $0x10] sm:$0xf]
  %v128 = vld [vmem:[%s3 + $0x14] sm:$0xf]
  %v129 = vld [vmem:[%s3 + $0x18] sm:$0xf]
  %v130 = vld [vmem:[%s3 + $0x1c] sm:$0xf]
  %v131 = vld [vmem:[%s3 + $0x20] sm:$0xf]
  %v132 = vld [vmem:[%s3 + $0x24] sm:$0xf]
  %v133 = vld [vmem:[%s3 + $0x28] sm:$0xf]
  %v134 = vld [vmem:[%s3 + $0x2c] sm:$0xf]
  %v135 = vld [vmem:[%s3 + $0x30] sm:$0xf]
  %v136 = vld [vmem:[%s3 + $0x34] sm:$0xf]
  %v137 = vld [vmem:[%s3 + $0x38] sm:$0xf]
  %v138 = vld [vmem:[%s3 + $0x3c] sm:$0xf]
  %v139 = vld [vmem:[%s4] sm:$0x1]
  %v141 = vlaneseq
  %v142 = vshrl.u32 %v141, 7
  %v143 = vsub.s32 0, %v142
  %v144 = vrot.slane %v139, %v143
  %v162 = vunpack.c.l.b16 %v123
  %v163 = vunpack.c.l.b16 %v124
  %v164 = vunpack.c.l.b16 %v125
  %v165 = vunpack.c.l.b16 %v126
  %v166 = vunpack.c.l.b16 %v127
  %v167 = vunpack.c.l.b16 %v128
  %v168 = vunpack.c.l.b16 %v129
  %v169 = vunpack.c.l.b16 %v130
  %v170 = vunpack.c.l.b16 %v131
  %v171 = vunpack.c.l.b16 %v132
  %v172 = vunpack.c.l.b16 %v133
  %v173 = vunpack.c.l.b16 %v134
  %v174 = vunpack.c.l.b16 %v135
  %v175 = vunpack.c.l.b16 %v136
  %v176 = vunpack.c.l.b16 %v137
  %v177 = vunpack.c.l.b16 %v138
  %v178 = vpack.c.b16 %v163, %v162
  %v179 = vpack.c.b16 %v165, %v164
  %v180 = vpack.c.b16 %v167, %v166
  %v181 = vpack.c.b16 %v169, %v168
  %v182 = vpack.c.b16 %v171, %v170
  %v183 = vpack.c.b16 %v173, %v172
  %v184 = vpack.c.b16 %v175, %v174
  %v185 = vpack.c.b16 %v177, %v176
  %194 = vmatprep.subr.bf16.mxu0 0
  %195 = vmatpush1.bf16.msra.mxu0 %v178
  %196 = vmatprep.subr.bf16.mxu0 0
  %197 = vmatpush1.bf16.msra.mxu0 %v179
  %198 = vmatprep.subr.bf16.mxu0 0
  %199 = vmatpush1.bf16.msra.mxu0 %v180
  %200 = vmatprep.subr.bf16.mxu0 0
  %201 = vmatpush1.bf16.msra.mxu0 %v181
  %202 = vmatprep.subr.bf16.mxu0 0
  %203 = vmatpush1.bf16.msra.mxu0 %v182
  %204 = vmatprep.subr.bf16.mxu0 0
  %205 = vmatpush1.bf16.msra.mxu0 %v183
  %206 = vmatprep.subr.bf16.mxu0 0
  %207 = vmatpush1.bf16.msra.mxu0 %v184
  %208 = vmatprep.subr.bf16.mxu0 0
  %209 = vmatpush1.bf16.msra.mxu0 %v185
  %210 = vmatprep.subr.bf16.mxu0 0
  %211 = vmatpush1.bf16.msra.mxu0 0
  %212 = vmatprep.subr.bf16.mxu0 0
  %213 = vmatpush1.bf16.msra.mxu0 0
  %214 = vmatprep.subr.bf16.mxu0 0
  %215 = vmatpush1.bf16.msra.mxu0 0
  %216 = vmatprep.subr.bf16.mxu0 0
  %217 = vmatpush1.bf16.msra.mxu0 0
  %218 = vmatprep.subr.bf16.mxu0 0
  %219 = vmatpush1.bf16.msra.mxu0 0
  %220 = vmatprep.subr.bf16.mxu0 0
  %221 = vmatpush1.bf16.msra.mxu0 0
  %222 = vmatprep.subr.bf16.mxu0 0
  %223 = vmatpush1.bf16.msra.mxu0 0
  %224 = vmatprep.subr.bf16.mxu0 0
  %225 = vmatpush1.bf16.msra.mxu0 0
  %226 = vmatprep.mubr.bf16.mxu0 0
  %227 = vmatmul.mubr.bf16.gmra.mrb[0].mxu0 %v122
  %v228 = vpop.f32.mrb[0].mxu0
  %v229 = vadd.f32 %v144, %v228
  %v230 = vpop.f32.mrb[0].mxu0
  %v231 = vpop.f32.mrb[0].mxu0
  %v232 = vadd.f32 %v144, %v231
  %v233 = vpop.f32.mrb[0].mxu0
  %234 = vdwg.mxu0
  %v235 = vadd.f32 %v33, %v229
  %v236 = vadd.f32 %v34, %v232
  %v237 = vld [vmem:[%s5] sm:$0x1]
  %v238 = vld [vmem:[%s6] sm:$0x1]
  %v239 = vsel %vm59, %v235, 0.0
  %240 = vadd.xlane.f32.xlu0 %v239
  %v241 = vpop.xlane.xlu0 %240
  %v242 = vsel %vm59, %v236, 0.0
  %243 = vadd.xlane.f32.xlu0 %v242
  %v244 = vpop.xlane.xlu0 %243
  %v245 = vrcp.pop 32.0
  %v246 = vmul.f32 %v241, %v245
  %v247 = vmul.f32 %v244, %v245
  %v248 = vsub.f32 %v235, %v246
  %v249 = vsub.f32 %v236, %v247
  %v250 = vmul.f32 %v248, %v248
  %v251 = vmul.f32 %v249, %v249
  %v252 = vsel %vm59, %v250, 0.0
  %253 = vadd.xlane.f32.xlu0 %v252
  %v254 = vpop.xlane.xlu0 %253
  %v255 = vsel %vm59, %v251, 0.0
  %256 = vadd.xlane.f32.xlu0 %v255
  %v257 = vpop.xlane.xlu0 %256
  %v258 = vmul.f32 %v254, %v245
  %v259 = vmul.f32 %v257, %v245
  %v260 = vadd.f32 %v258, 1e-05
  %v261 = vadd.f32 %v259, 1e-05
  %v262 = vrsqrt.pop %v260
  %v263 = vrsqrt.pop %v261
  %v264 = vmul.f32 %v248, %v262
  %v265 = vmul.f32 %v249, %v263
  %v267 = vlaneseq
  %v268 = vshrl.u32 %v267, 7
  %v269 = vsub.s32 0, %v268
  %v270 = vrot.slane %v237, %v269
  %v272 = vmul.f32 %v264, %v270
  %v273 = vmul.f32 %v265, %v270
  %v275 = vlaneseq
  %v276 = vshrl.u32 %v275, 7
  %v277 = vsub.s32 0, %v276
  %v278 = vrot.slane %v238, %v277
  %v280 = vadd.f32 %v272, %v278
  %v281 = vadd.f32 %v273, %v278
  %282 = vst.msk [vmem:[%s9] sm:$0xff] %vm59, %v280
  %283 = vst.msk [vmem:[%s9 + $0x8] sm:$0xff] %vm59, %v281
  // Predicated region
  $region38: #{transformer_x_forward.16} parent=0 // pred_check
    _
  $region39: #{transformer_x_forward.16} parent=0 // pred_check_branch
    %285 = sbr.rel (0) target = $region41
  $region40: #{transformer_x_forward.16} parent=0 // pred_region
    _
  $region41: #{transformer_x_forward.16} parent=0 // pred_fallthru
    _
  // Predicated region
  $region42: #{transformer_x_forward.16} parent=0 // pred_check
    _
  $region43: #{transformer_x_forward.16} parent=0 // pred_check_branch
    %287 = sbr.rel (0) target = $region45
  $region44: #{transformer_x_forward.16} parent=0 // pred_region
    _
  $region45: #{transformer_x_forward.16} parent=0 // pred_fallthru
    _

// kernel: transformer_x_forward.13
$region0: #{transformer_x_forward.13}
  #allocation0 [shape = 'u32[]', space=smem, size = 0x4, offset = 0x4, fixed_abs, tag = 'smem constant byte address 0x4 - core index']
  #allocation1 [shape = 'u32[144,128]{1,0:T(1,128)}', space=vmem, size = 0x12000, scoped, tag = 'internal scratch']
  #allocation2 [shape = 'f32[16,128]{1,0:T(8,128)}', space=vmem, size = 0x2000, scoped, tag = 'scratch operand']
  #allocation3 [shape = 'f32[2,16]{1,0:T(2,128)}', space=vmem, size = 0x400, scoped, tag = 'scratch operand']
  #allocation4 [shape = 'f32[2,16]{1,0:T(2,128)}', space=vmem, size = 0x400, scoped, tag = 'scratch operand']
  #allocation5 [shape = 'f32[2,16]{1,0:T(2,128)}', space=vmem, size = 0x400, scoped, tag = 'scratch operand']
  #allocation6 [shape = 'f32[2,16]{1,0:T(2,128)}', space=vmem, size = 0x400, scoped, tag = 'scratch operand']
  %s0 = inlined_call_operand.vmem [shape: bf16[16,16], index: 0, kind: input, shape index: {}]
  %s1 = inlined_call_operand.vmem [shape: bf16[16,128], index: 1, kind: input, shape index: {}]
  %s2 = inlined_call_operand.vmem [shape: f32[1,128], index: 2, kind: input, shape index: {}]
  %s3 = inlined_call_operand.vmem [shape: bf16[16,64], index: 3, kind: input, shape index: {}]
  %s4 = inlined_call_operand.vmem [shape: bf16[16,64], index: 4, kind: input, shape index: {}]
  %s5 = inlined_call_operand.vmem [shape: f32[16,32], index: 5, kind: output, shape index: {}]
  %s6 = sld [smem:[#allocation0]]
  $region37: #{transformer_x_forward.13} parent=0
    _
  %s8 = ssub.s32 1, %s6
  %s9 = scalar_select 0, %s8, %s6
  // Predicated region
  $region2: #{transformer_x_forward.13} parent=0 // pred_check
    _
  $region3: #{transformer_x_forward.13} parent=0 // pred_check_branch
    %11 = sbr.rel (0) target = $region5
  $region4: #{transformer_x_forward.13} parent=0 // pred_region
    _
  $region5: #{transformer_x_forward.13} parent=0 // pred_fallthru
    _
  // Predicated region
  $region6: #{transformer_x_forward.13} parent=0 // pred_check
    _
  $region7: #{transformer_x_forward.13} parent=0 // pred_check_branch
    %13 = sbr.rel (0) target = $region9
  $region8: #{transformer_x_forward.13} parent=0 // pred_region
    _
  $region9: #{transformer_x_forward.13} parent=0 // pred_fallthru
    _
  // Predicated region
  $region10: #{transformer_x_forward.13} parent=0 // pred_check
    _
  $region11: #{transformer_x_forward.13} parent=0 // pred_check_branch
    %15 = sbr.rel (0) target = $region13
  $region12: #{transformer_x_forward.13} parent=0 // pred_region
    _
  $region13: #{transformer_x_forward.13} parent=0 // pred_fallthru
    _
  // Predicated region
  $region14: #{transformer_x_forward.13} parent=0 // pred_check
    _
  $region15: #{transformer_x_forward.13} parent=0 // pred_check_branch
    %17 = sbr.rel (0) target = $region17
  $region16: #{transformer_x_forward.13} parent=0 // pred_region
    _
  $region17: #{transformer_x_forward.13} parent=0 // pred_fallthru
    _
  // Predicated region
  $region18: #{transformer_x_forward.13} parent=0 // pred_check
    _
  $region19: #{transformer_x_forward.13} parent=0 // pred_check_branch
    %19 = sbr.rel (0) target = $region21
  $region20: #{transformer_x_forward.13} parent=0 // pred_region
    _
  $region21: #{transformer_x_forward.13} parent=0 // pred_fallthru
    _
  %v21 = vld [vmem:[%s0] sm:$0xf]
  %v22 = vld [vmem:[%s0 + $0x4] sm:$0xf]
  %v23 = vld [vmem:[%s1] sm:$0xf]
  %v24 = vld [vmem:[%s1 + $0x4] sm:$0xf]
  %v25 = vld [vmem:[%s2] sm:$0x1]
  %v27 = vlaneseq
  %v28 = vshrl.u32 %v27, 7
  %v29 = vsub.s32 0, %v28
  %v30 = vrot.slane %v25, %v29
  %v34 = vunpack.c.l.b16 %v21
  %v35 = vunpack.c.l.b16 %v22
  %v36 = vpack.c.b16 %v35, %v34
  %v39 = vunpack.c.l.b16 %v23
  %v40 = vunpack.c.l.b16 %v24
  %v41 = vpack.c.b16 %v40, %v39
  %vm43 = vcmask 130048
  %v45 = vsel %vm43, %v36, 0
  %47 = vmatprep.subr.bf16.mxu0 0
  %48 = vmatpush1.bf16.msra.mxu0 %v41
  %49 = vmatprep.subr.bf16.mxu0 0
  %50 = vmatpush1.bf16.msra.mxu0 0
  %51 = vmatprep.subr.bf16.mxu0 0
  %52 = vmatpush1.bf16.msra.mxu0 0
  %53 = vmatprep.subr.bf16.mxu0 0
  %54 = vmatpush1.bf16.msra.mxu0 0
  %55 = vmatprep.subr.bf16.mxu0 0
  %56 = vmatpush1.bf16.msra.mxu0 0
  %57 = vmatprep.subr.bf16.mxu0 0
  %58 = vmatpush1.bf16.msra.mxu0 0
  %59 = vmatprep.subr.bf16.mxu0 0
  %60 = vmatpush1.bf16.msra.mxu0 0
  %61 = vmatprep.subr.bf16.mxu0 0
  %62 = vmatpush1.bf16.msra.mxu0 0
  %63 = vmatprep.subr.bf16.mxu0 0
  %64 = vmatpush1.bf16.msra.mxu0 0
  %65 = vmatprep.subr.bf16.mxu0 0
  %66 = vmatpush1.bf16.msra.mxu0 0
  %67 = vmatprep.subr.bf16.mxu0 0
  %68 = vmatpush1.bf16.msra.mxu0 0
  %69 = vmatprep.subr.bf16.mxu0 0
  %70 = vmatpush1.bf16.msra.mxu0 0
  %71 = vmatprep.subr.bf16.mxu0 0
  %72 = vmatpush1.bf16.msra.mxu0 0
  %73 = vmatprep.subr.bf16.mxu0 0
  %74 = vmatpush1.bf16.msra.mxu0 0
  %75 = vmatprep.subr.bf16.mxu0 0
  %76 = vmatpush1.bf16.msra.mxu0 0
  %77 = vmatprep.subr.bf16.mxu0 0
  %78 = vmatpush1.bf16.msra.mxu0 0
  %79 = vmatprep.mubr.bf16.mxu0 0
  %80 = vmatmul.mubr.bf16.gmra.mrb[0].mxu0 %v45
  %v81 = vpop.f32.mrb[0].mxu0
  %v82 = vadd.f32 %v30, %v81
  %v83 = vpop.f32.mrb[0].mxu0
  %v84 = vpop.f32.mrb[0].mxu0
  %v85 = vadd.f32 %v30, %v84
  %v86 = vpop.f32.mrb[0].mxu0
  %87 = vdwg.mxu0
  %88 = vst [vmem:[#allocation2] sm:$0xff] %v82
  %89 = vst [vmem:[#allocation2 + $0x8] sm:$0xff] %v85
  %vm90 = vcmask 123904
  %91 = vst.msk [vmem:[#allocation3] sm:$0x3] %vm90, 0.0
  %92 = vst.msk [vmem:[#allocation4] sm:$0x3] %vm90, 0.0
  %93 = vst.msk [vmem:[#allocation5] sm:$0x3] %vm90, 0.0
  %94 = vst.msk [vmem:[#allocation6] sm:$0x3] %vm90, 0.0
  %v95 = vld [vmem:[%s3] sm:$0xf]
  %v96 = vld [vmem:[%s3 + $0x4] sm:$0xf]
  %v97 = vld [vmem:[%s4] sm:$0xf]
  %v98 = vld [vmem:[%s4 + $0x4] sm:$0xf]
  loop: start=0, step=1, limit=8
  $region22: #{transformer_x_forward.13} parent=0 // loop_pre_header
    _
  $region23: #{transformer_x_forward.13} parent=0 // loop_header
    %s100 = sphi 0, %s104
    %p101 = scmp.ge.s32.totalorder %s100, 8
  $region24: #{transformer_x_forward.13} parent=0 // loop_header_branch
    %103 = sbr.rel (%p101) target = $region28
  $region25: #{transformer_x_forward.13} parent=0 // loop_body
    %s105 = smul.u32 %s100, 2
    %s106 = scalar_lea.vmem [#allocation2], %s105
    %v107 = vld [vmem:[%s106] sm:$0x3]
    %v108 = vld [vmem:[#allocation3] sm:$0x3]
    %v109 = vpack.c.bf16 %v108, %v108
    %v112 = vunpack.c.l.b16 %v95
    %v113 = vunpack.c.l.b16 %v96
    %v114 = vpack.c.b16 %v113, %v112
    %v117 = vsel %vm43, %v109, 0
    %119 = vmatprep.subr.bf16.mxu0 0
    %120 = vmatpush1.bf16.msra.mxu0 %v114
    %121 = vmatprep.subr.bf16.mxu0 0
    %122 = vmatpush1.bf16.msra.mxu0 0
    %123 = vmatprep.subr.bf16.mxu0 0
    %124 = vmatpush1.bf16.msra.mxu0 0
    %125 = vmatprep.subr.bf16.mxu0 0
    %126 = vmatpush1.bf16.msra.mxu0 0
    %127 = vmatprep.subr.bf16.mxu0 0
    %128 = vmatpush1.bf16.msra.mxu0 0
    %129 = vmatprep.subr.bf16.mxu0 0
    %130 = vmatpush1.bf16.msra.mxu0 0
    %131 = vmatprep.subr.bf16.mxu0 0
    %132 = vmatpush1.bf16.msra.mxu0 0
    %133 = vmatprep.subr.bf16.mxu0 0
    %134 = vmatpush1.bf16.msra.mxu0 0
    %135 = vmatprep.subr.bf16.mxu0 0
    %136 = vmatpush1.bf16.msra.mxu0 0
    %137 = vmatprep.subr.bf16.mxu0 0
    %138 = vmatpush1.bf16.msra.mxu0 0
    %139 = vmatprep.subr.bf16.mxu0 0
    %140 = vmatpush1.bf16.msra.mxu0 0
    %141 = vmatprep.subr.bf16.mxu0 0
    %142 = vmatpush1.bf16.msra.mxu0 0
    %143 = vmatprep.subr.bf16.mxu0 0
    %144 = vmatpush1.bf16.msra.mxu0 0
    %145 = vmatprep.subr.bf16.mxu0 0
    %146 = vmatpush1.bf16.msra.mxu0 0
    %147 = vmatprep.subr.bf16.mxu0 0
    %148 = vmatpush1.bf16.msra.mxu0 0
    %149 = vmatprep.subr.bf16.mxu0 0
    %150 = vmatpush1.bf16.msra.mxu0 0
    %151 = vmatprep.mubr.bf16.mxu0 0
    %152 = vmatmul.mubr.bf16.gmra.mrb[0].mxu0 %v117
    %v153 = vpop.f32.mrb[0].mxu0
    %v154 = vadd.f32 0.0, %v153
    %v155 = vpop.f32.mrb[0].mxu0
    %v156 = vpop.f32.mrb[0].mxu0
    %v157 = vpop.f32.mrb[0].mxu0
    %158 = vdwg.mxu0
    %v159 = vadd.f32 %v107, %v154
    %v160 = vld [vmem:[#allocation4] sm:$0x3]
    %v161 = vxor.u32 %v159, 2147483648
    %v162 = vmul.f32 %v161, 1.442695
    %v163 = vpow.pop %v162
    %v164 = vadd.f32 %v163, 1.0
    %v165 = vrcp.pop %v164
    %v166 = vmul.f32 1.0, %v165
    %v167 = vtanh.pop %v159
    %169 = vrot.lane.b32.xlu0 %v160, 16
    %v170 = vpop.permute.xlu0 %169
    %v172 = vmul.f32 %v166, %v170
    %174 = vrot.lane.b32.xlu0 %v167, 96
    %v175 = vpop.permute.xlu0 %174
    %v177 = vmul.f32 %v166, %v175
    %179 = vrot.lane.b32.xlu0 %v177, 16
    %v180 = vpop.permute.xlu0 %179
    %v182 = vadd.f32 %v172, %v180
    %v183 = vtanh.pop %v182
    %185 = vrot.lane.b32.xlu0 %v183, 32
    %v186 = vpop.permute.xlu0 %185
    %v188 = vmul.f32 %v166, %v186
    %190 = vrot.lane.b32.xlu0 %v188, 80
    %v191 = vpop.permute.xlu0 %190
    %193 = vst.msk [vmem:[#allocation3] sm:$0x3] %vm90, %v191
    %195 = vrot.lane.b32.xlu0 %v182, 112
    %v196 = vpop.permute.xlu0 %195
    %198 = vst.msk [vmem:[#allocation4] sm:$0x3] %vm90, %v196
    %s199 = scalar_lea.vmem %s5, %s105
    %200 = vst.msk [vmem:[%s199] sm:$0x3] %vm90, %v191
    %s201 = ssub.s32 7, %s100
    %s202 = smul.u32 %s201, 2
    %s203 = scalar_lea.vmem [#allocation2], %s202
    %v204 = vld [vmem:[%s203] sm:$0x3]
    %v205 = vld [vmem:[#allocation5] sm:$0x3]
    %v206 = vpack.c.bf16 %v205, %v205
    %v209 = vunpack.c.l.b16 %v97
    %v210 = vunpack.c.l.b16 %v98
    %v211 = vpack.c.b16 %v210, %v209
    %v214 = vsel %vm43, %v206, 0
    %216 = vmatprep.subr.bf16.mxu0 0
    %217 = vmatpush1.bf16.msra.mxu0 %v211
    %218 = vmatprep.subr.bf16.mxu0 0
    %219 = vmatpush1.bf16.msra.mxu0 0
    %220 = vmatprep.subr.bf16.mxu0 0
    %221 = vmatpush1.bf16.msra.mxu0 0
    %222 = vmatprep.subr.bf16.mxu0 0
    %223 = vmatpush1.bf16.msra.mxu0 0
    %224 = vmatprep.subr.bf16.mxu0 0
    %225 = vmatpush1.bf16.msra.mxu0 0
    %226 = vmatprep.subr.bf16.mxu0 0
    %227 = vmatpush1.bf16.msra.mxu0 0
    %228 = vmatprep.subr.bf16.mxu0 0
    %229 = vmatpush1.bf16.msra.mxu0 0
    %230 = vmatprep.subr.bf16.mxu0 0
    %231 = vmatpush1.bf16.msra.mxu0 0
    %232 = vmatprep.subr.bf16.mxu0 0
    %233 = vmatpush1.bf16.msra.mxu0 0
    %234 = vmatprep.subr.bf16.mxu0 0
    %235 = vmatpush1.bf16.msra.mxu0 0
    %236 = vmatprep.subr.bf16.mxu0 0
    %237 = vmatpush1.bf16.msra.mxu0 0
    %238 = vmatprep.subr.bf16.mxu0 0
    %239 = vmatpush1.bf16.msra.mxu0 0
    %240 = vmatprep.subr.bf16.mxu0 0
    %241 = vmatpush1.bf16.msra.mxu0 0
    %242 = vmatprep.subr.bf16.mxu0 0
    %243 = vmatpush1.bf16.msra.mxu0 0
    %244 = vmatprep.subr.bf16.mxu0 0
    %245 = vmatpush1.bf16.msra.mxu0 0
    %246 = vmatprep.subr.bf16.mxu0 0
    %247 = vmatpush1.bf16.msra.mxu0 0
    %248 = vmatprep.mubr.bf16.mxu0 0
    %249 = vmatmul.mubr.bf16.gmra.mrb[0].mxu0 %v214
    %v250 = vpop.f32.mrb[0].mxu0
    %v251 = vadd.f32 0.0, %v250
    %v252 = vpop.f32.mrb[0].mxu0
    %v253 = vpop.f32.mrb[0].mxu0
    %v254 = vpop.f32.mrb[0].mxu0
    %255 = vdwg.mxu0
    %257 = vrot.lane.b32.xlu0 %v251, 64
    %v258 = vpop.permute.xlu0 %257
    %v260 = vadd.f32 %v204, %v258
    %v261 = vld [vmem:[#allocation6] sm:$0x3]
    %v262 = vxor.u32 %v260, 2147483648
    %v263 = vmul.f32 %v262, 1.442695
    %v264 = vpow.pop %v263
    %v265 = vadd.f32 %v264, 1.0
    %v266 = vrcp.pop %v265
    %v267 = vmul.f32 1.0, %v266
    %v268 = vtanh.pop %v260
    %270 = vrot.lane.b32.xlu0 %v261, 80
    %v271 = vpop.permute.xlu0 %270
    %v273 = vmul.f32 %v267, %v271
    %275 = vrot.lane.b32.xlu0 %v268, 96
    %v276 = vpop.permute.xlu0 %275
    %v278 = vmul.f32 %v267, %v276
    %280 = vrot.lane.b32.xlu0 %v278, 16
    %v281 = vpop.permute.xlu0 %280
    %v283 = vadd.f32 %v273, %v281
    %v284 = vtanh.pop %v283
    %286 = vrot.lane.b32.xlu0 %v284, 32
    %v287 = vpop.permute.xlu0 %286
    %v289 = vmul.f32 %v267, %v287
    %291 = vrot.lane.b32.xlu0 %v289, 16
    %v292 = vpop.permute.xlu0 %291
    %294 = vst.msk [vmem:[#allocation5] sm:$0x3] %vm90, %v292
    %296 = vrot.lane.b32.xlu0 %v283, 48
    %v297 = vpop.permute.xlu0 %296
    %299 = vst.msk [vmem:[#allocation6] sm:$0x3] %vm90, %v297
    %300 = vrot.lane.b32.xlu0 %v289, 32
    %v301 = vpop.permute.xlu0 %300
    %s303 = scalar_lea.vmem %s5, %s202
    %vm304 = vcmask 255104
    %305 = vst.msk [vmem:[%s303] sm:$0x3] %vm304, %v301
  $region26: #{transformer_x_forward.13} parent=0 // loop_footer
    %s104 = sadd.s32 1, %s100
  $region27: #{transformer_x_forward.13} parent=0 // loop_footer_branch
    %99 = sbr.rel target = $region23
  $region28: #{transformer_x_forward.13} parent=0 // loop_exit
    _
  // Predicated region
  $region29: #{transformer_x_forward.13} parent=0 // pred_check
    _
  $region30: #{transformer_x_forward.13} parent=0 // pred_check_branch
    %307 = sbr.rel (0) target = $region32
  $region31: #{transformer_x_forward.13} parent=0 // pred_region
    _
  $region32: #{transformer_x_forward.13} parent=0 // pred_fallthru
    _
  // Predicated region
  $region33: #{transformer_x_forward.13} parent=0 // pred_check
    _
  $region34: #{transformer_x_forward.13} parent=0 // pred_check_branch
    %309 = sbr.rel (0) target = $region36
  $region35: #{transformer_x_forward.13} parent=0 // pred_region
    _
  $region36: #{transformer_x_forward.13} parent=0 // pred_fallthru
    _

// kernel: transformer_x_forward.15
$region0: #{transformer_x_forward.15}
  #allocation0 [shape = 'u32[]', space=smem, size = 0x4, offset = 0x4, fixed_abs, tag = 'smem constant byte address 0x4 - core index']
  #allocation1 [shape = 'u32[144,128]{1,0:T(1,128)}', space=vmem, size = 0x12000, scoped, tag = 'internal scratch']
  #allocation2 [shape = 'f32[8,32]{1,0:T(8,128)}', space=vmem, size = 0x1000, scoped, tag = 'scratch operand']
  %s0 = inlined_call_operand.vmem [shape: f32[2,8,32], index: 0, kind: input, shape index: {}]
  %s1 = inlined_call_operand.vmem [shape: bf16[32,32], index: 1, kind: input, shape index: {}]
  %s2 = inlined_call_operand.vmem [shape: f32[1,32], index: 2, kind: input, shape index: {}]
  %s3 = inlined_call_operand.vmem [shape: bf16[32,64], index: 3, kind: input, shape index: {}]
  %s4 = inlined_call_operand.vmem [shape: f32[1,64], index: 4, kind: input, shape index: {}]
  %s5 = inlined_call_operand.vmem [shape: bf16[32,32], index: 5, kind: input, shape index: {}]
  %s6 = inlined_call_operand.vmem [shape: f32[1,32], index: 6, kind: input, shape index: {}]
  %s7 = inlined_call_operand.vmem [shape: f32[1,32], index: 7, kind: input, shape index: {}]
  %s8 = inlined_call_operand.vmem [shape: f32[1,32], index: 8, kind: input, shape index: {}]
  %s9 = inlined_call_operand.vmem [shape: f32[2,8,32], index: 9, kind: output, shape index: {}]
  %s10 = sld [smem:[#allocation0]]
  $region69: #{transformer_x_forward.15} parent=0
    _
  %s12 = ssub.s32 1, %s10
  %s13 = scalar_select 0, %s12, %s10
  loop: start=0, step=1, limit=4
  $region2: #{transformer_x_forward.15} parent=0 // loop_pre_header
    _
  $region3: #{transformer_x_forward.15} parent=0 // loop_header
    %s15 = sphi 0, %s19
    %p16 = scmp.ge.s32.totalorder %s15, 4
    %s25 = sphi 0, %s27
    %s28 = sphi 0, %s25
    %s29 = sphi 0, %s28
    %s45 = sphi 0, %s29
    %s49 = sphi 0, %s49
    %s51 = sphi 0, %s49
    %s52 = sphi 0, %s51
    %s66 = sphi 0, %s52
    %s70 = sphi 0, %s70
    %s72 = sphi 0, %s70
    %s73 = sphi 0, %s72
    %s87 = sphi 0, %s73
    %s91 = sphi 0, %s91
    %s93 = sphi 0, %s91
    %s94 = sphi 0, %s93
    %s108 = sphi 0, %s94
    %s112 = sphi 0, %s112
    %s114 = sphi 0, %s112
    %s115 = sphi 0, %s114
    %s129 = sphi 0, %s115
    %s133 = sphi 0, %s133
    %s135 = sphi 0, %s133
    %s136 = sphi 0, %s135
    %s150 = sphi 0, %s136
    %s154 = sphi 0, %s154
    %s156 = sphi 0, %s154
    %s157 = sphi 0, %s156
    %s171 = sphi 0, %s157
    %s175 = sphi 0, %s175
    %s177 = sphi 0, %s175
    %s178 = sphi 0, %s177
    %s192 = sphi 0, %s178
    %s196 = sphi 0, %s196
    %s198 = sphi 0, %s196
    %s199 = sphi 0, %s198
    %s213 = sphi 0, %s199
    %s219 = sphi 0, %s221
    %s222 = sphi 0, %s219
    %s223 = sphi 0, %s222
    %s239 = sphi 0, %s223
  $region4: #{transformer_x_forward.15} parent=0 // loop_header_branch
    %18 = sbr.rel (%p16) target = $region8
  $region5: #{transformer_x_forward.15} parent=0 // loop_body
    %s20 = ssub.s32 %s15, 1
    %s21 = ssub.s32 %s15, 2
    %s22 = sadd.s32 %s15, 1
    %s23 = ssub.s32 %s15, %s22
    %p24 = scmp.eq.s32.totalorder %s23, 0
    %s26 = sadd.s32 %s25, 1
    %s27 = scalar_select %p24, %s25, %s26
    %p30 = pneg %p24
    %p31 = scmp.eq.s32.totalorder %s15, 1
    %p32 = por %p30, %p31
    %p33 = scmp.ne.s32.totalorder %s25, %s28
    %p34 = scmp.eq.s32.totalorder %s15, 0
    %p35 = por %p33, %p34
    %p36 = scmp.ne.s32.totalorder %s25, %s28
    %p37 = scmp.eq.s32.totalorder %s20, 1
    %p38 = por %p36, %p37
    %p39 = scmp.ne.s32.totalorder %s28, %s29
    %p40 = scmp.eq.s32.totalorder %s20, 0
    %p41 = por %p39, %p40
    %p42 = scmp.ne.s32.totalorder %s28, %s29
    %p43 = scmp.eq.s32.totalorder %s21, 1
    %p44 = por %p42, %p43
    %p46 = scmp.ne.s32.totalorder %s29, %s45
    %p47 = scmp.eq.s32.totalorder %s21, 0
    %p48 = por %p46, %p47
    %s50 = sadd.s32 %s49, 1
    %p53 = scmp.eq.s32.totalorder %s15, 1
    %p54 = scmp.ne.s32.totalorder %s49, %s51
    %p55 = scmp.eq.s32.totalorder %s15, 0
    %p56 = por %p54, %p55
    %p57 = scmp.ne.s32.totalorder %s49, %s51
    %p58 = scmp.eq.s32.totalorder %s20, 1
    %p59 = por %p57, %p58
    %p60 = scmp.ne.s32.totalorder %s51, %s52
    %p61 = scmp.eq.s32.totalorder %s20, 0
    %p62 = por %p60, %p61
    %p63 = scmp.ne.s32.totalorder %s51, %s52
    %p64 = scmp.eq.s32.totalorder %s21, 1
    %p65 = por %p63, %p64
    %p67 = scmp.ne.s32.totalorder %s52, %s66
    %p68 = scmp.eq.s32.totalorder %s21, 0
    %p69 = por %p67, %p68
    %s71 = sadd.s32 %s70, 1
    %p74 = scmp.eq.s32.totalorder %s15, 1
    %p75 = scmp.ne.s32.totalorder %s70, %s72
    %p76 = scmp.eq.s32.totalorder %s15, 0
    %p77 = por %p75, %p76
    %p78 = scmp.ne.s32.totalorder %s70, %s72
    %p79 = scmp.eq.s32.totalorder %s20, 1
    %p80 = por %p78, %p79
    %p81 = scmp.ne.s32.totalorder %s72, %s73
    %p82 = scmp.eq.s32.totalorder %s20, 0
    %p83 = por %p81, %p82
    %p84 = scmp.ne.s32.totalorder %s72, %s73
    %p85 = scmp.eq.s32.totalorder %s21, 1
    %p86 = por %p84, %p85
    %p88 = scmp.ne.s32.totalorder %s73, %s87
    %p89 = scmp.eq.s32.totalorder %s21, 0
    %p90 = por %p88, %p89
    %s92 = sadd.s32 %s91, 1
    %p95 = scmp.eq.s32.totalorder %s15, 1
    %p96 = scmp.ne.s32.totalorder %s91, %s93
    %p97 = scmp.eq.s32.totalorder %s15, 0
    %p98 = por %p96, %p97
    %p99 = scmp.ne.s32.totalorder %s91, %s93
    %p100 = scmp.eq.s32.totalorder %s20, 1
    %p101 = por %p99, %p100
    %p102 = scmp.ne.s32.totalorder %s93, %s94
    %p103 = scmp.eq.s32.totalorder %s20, 0
    %p104 = por %p102, %p103
    %p105 = scmp.ne.s32.totalorder %s93, %s94
    %p106 = scmp.eq.s32.totalorder %s21, 1
    %p107 = por %p105, %p106
    %p109 = scmp.ne.s32.totalorder %s94, %s108
    %p110 = scmp.eq.s32.totalorder %s21, 0
    %p111 = por %p109, %p110
    %s113 = sadd.s32 %s112, 1
    %p116 = scmp.eq.s32.totalorder %s15, 1
    %p117 = scmp.ne.s32.totalorder %s112, %s114
    %p118 = scmp.eq.s32.totalorder %s15, 0
    %p119 = por %p117, %p118
    %p120 = scmp.ne.s32.totalorder %s112, %s114
    %p121 = scmp.eq.s32.totalorder %s20, 1
    %p122 = por %p120, %p121
    %p123 = scmp.ne.s32.totalorder %s114, %s115
    %p124 = scmp.eq.s32.totalorder %s20, 0
    %p125 = por %p123, %p124
    %p126 = scmp.ne.s32.totalorder %s114, %s115
    %p127 = scmp.eq.s32.totalorder %s21, 1
    %p128 = por %p126, %p127
    %p130 = scmp.ne.s32.totalorder %s115, %s129
    %p131 = scmp.eq.s32.totalorder %s21, 0
    %p132 = por %p130, %p131
    %s134 = sadd.s32 %s133, 1
    %p137 = scmp.eq.s32.totalorder %s15, 1
    %p138 = scmp.ne.s32.totalorder %s133, %s135
    %p139 = scmp.eq.s32.totalorder %s15, 0
    %p140 = por %p138, %p139
    %p141 = scmp.ne.s32.totalorder %s133, %s135
    %p142 = scmp.eq.s32.totalorder %s20, 1
    %p143 = por %p141, %p142
    %p144 = scmp.ne.s32.totalorder %s135, %s136
    %p145 = scmp.eq.s32.totalorder %s20, 0
    %p146 = por %p144, %p145
    %p147 = scmp.ne.s32.totalorder %s135, %s136
    %p148 = scmp.eq.s32.totalorder %s21, 1
    %p149 = por %p147, %p148
    %p151 = scmp.ne.s32.totalorder %s136, %s150
    %p152 = scmp.eq.s32.totalorder %s21, 0
    %p153 = por %p151, %p152
    %s155 = sadd.s32 %s154, 1
    %p158 = scmp.eq.s32.totalorder %s15, 1
    %p159 = scmp.ne.s32.totalorder %s154, %s156
    %p160 = scmp.eq.s32.totalorder %s15, 0
    %p161 = por %p159, %p160
    %p162 = scmp.ne.s32.totalorder %s154, %s156
    %p163 = scmp.eq.s32.totalorder %s20, 1
    %p164 = por %p162, %p163
    %p165 = scmp.ne.s32.totalorder %s156, %s157
    %p166 = scmp.eq.s32.totalorder %s20, 0
    %p167 = por %p165, %p166
    %p168 = scmp.ne.s32.totalorder %s156, %s157
    %p169 = scmp.eq.s32.totalorder %s21, 1
    %p170 = por %p168, %p169
    %p172 = scmp.ne.s32.totalorder %s157, %s171
    %p173 = scmp.eq.s32.totalorder %s21, 0
    %p174 = por %p172, %p173
    %s176 = sadd.s32 %s175, 1
    %p179 = scmp.eq.s32.totalorder %s15, 1
    %p180 = scmp.ne.s32.totalorder %s175, %s177
    %p181 = scmp.eq.s32.totalorder %s15, 0
    %p182 = por %p180, %p181
    %p183 = scmp.ne.s32.totalorder %s175, %s177
    %p184 = scmp.eq.s32.totalorder %s20, 1
    %p185 = por %p183, %p184
    %p186 = scmp.ne.s32.totalorder %s177, %s178
    %p187 = scmp.eq.s32.totalorder %s20, 0
    %p188 = por %p186, %p187
    %p189 = scmp.ne.s32.totalorder %s177, %s178
    %p190 = scmp.eq.s32.totalorder %s21, 1
    %p191 = por %p189, %p190
    %p193 = scmp.ne.s32.totalorder %s178, %s192
    %p194 = scmp.eq.s32.totalorder %s21, 0
    %p195 = por %p193, %p194
    %s197 = sadd.s32 %s196, 1
    %p200 = scmp.eq.s32.totalorder %s15, 1
    %p201 = scmp.ne.s32.totalorder %s196, %s198
    %p202 = scmp.eq.s32.totalorder %s15, 0
    %p203 = por %p201, %p202
    %p204 = scmp.ne.s32.totalorder %s196, %s198
    %p205 = scmp.eq.s32.totalorder %s20, 1
    %p206 = por %p204, %p205
    %p207 = scmp.ne.s32.totalorder %s198, %s199
    %p208 = scmp.eq.s32.totalorder %s20, 0
    %p209 = por %p207, %p208
    %p210 = scmp.ne.s32.totalorder %s198, %s199
    %p211 = scmp.eq.s32.totalorder %s21, 1
    %p212 = por %p210, %p211
    %p214 = scmp.ne.s32.totalorder %s199, %s213
    %p215 = scmp.eq.s32.totalorder %s21, 0
    %p216 = por %p214, %p215
    %s217 = ssub.s32 %s15, %s22
    %p218 = scmp.eq.s32.totalorder %s217, 0
    %s220 = sadd.s32 %s219, 1
    %s221 = scalar_select %p218, %s219, %s220
    %p224 = pneg %p218
    %p225 = scmp.eq.s32.totalorder %s15, 1
    %p226 = por %p224, %p225
    %p227 = scmp.ne.s32.totalorder %s219, %s222
    %p228 = scmp.eq.s32.totalorder %s15, 0
    %p229 = por %p227, %p228
    %p230 = scmp.ne.s32.totalorder %s219, %s222
    %p231 = scmp.eq.s32.totalorder %s20, 1
    %p232 = por %p230, %p231
    %p233 = scmp.ne.s32.totalorder %s222, %s223
    %p234 = scmp.eq.s32.totalorder %s20, 0
    %p235 = por %p233, %p234
    %p236 = scmp.ne.s32.totalorder %s222, %s223
    %p237 = scmp.eq.s32.totalorder %s21, 1
    %p238 = por %p236, %p237
    %p240 = scmp.ne.s32.totalorder %s223, %s239
    %p241 = scmp.eq.s32.totalorder %s21, 0
    %p242 = por %p240, %p241
    %p243 = scmp.le.s32.totalorder 1, %s15
    %p244 = scmp.lt.s32.totalorder %s15, 3
    %p245 = pnand %p243, %p244
    %p246 = pneg %p245
    // Predicated region
    $region9: #{transformer_x_forward.15} parent=5 // pred_check
      _
    $region10: #{transformer_x_forward.15} parent=5 // pred_check_branch
      %248 = sbr.rel (%p245) target = $region12
    $region11: #{transformer_x_forward.15} parent=5 // pred_region
      %s249 = ssub.s32 %s15, 1
      // Predicated region
      $region13: #{transformer_x_forward.15} parent=11 // pred_check
        %p250 = pneg %p62
      $region14: #{transformer_x_forward.15} parent=11 // pred_check_branch
        %252 = sbr.rel (%p250) target = $region16
      $region15: #{transformer_x_forward.15} parent=11 // pred_region
        _
      $region16: #{transformer_x_forward.15} parent=11 // pred_fallthru
        _
      // Predicated region
      $region17: #{transformer_x_forward.15} parent=11 // pred_check
        %p253 = pneg %p83
      $region18: #{transformer_x_forward.15} parent=11 // pred_check_branch
        %255 = sbr.rel (%p253) target = $region20
      $region19: #{transformer_x_forward.15} parent=11 // pred_region
        _
      $region20: #{transformer_x_forward.15} parent=11 // pred_fallthru
        _
      // Predicated region
      $region21: #{transformer_x_forward.15} parent=11 // pred_check
        %p256 = pneg %p104
      $region22: #{transformer_x_forward.15} parent=11 // pred_check_branch
        %258 = sbr.rel (%p256) target = $region24
      $region23: #{transformer_x_forward.15} parent=11 // pred_region
        _
      $region24: #{transformer_x_forward.15} parent=11 // pred_fallthru
        _
      // Predicated region
      $region25: #{transformer_x_forward.15} parent=11 // pred_check
        %p259 = pneg %p125
      $region26: #{transformer_x_forward.15} parent=11 // pred_check_branch
        %261 = sbr.rel (%p259) target = $region28
      $region27: #{transformer_x_forward.15} parent=11 // pred_region
        _
      $region28: #{transformer_x_forward.15} parent=11 // pred_fallthru
        _
      // Predicated region
      $region29: #{transformer_x_forward.15} parent=11 // pred_check
        %p262 = pneg %p146
      $region30: #{transformer_x_forward.15} parent=11 // pred_check_branch
        %264 = sbr.rel (%p262) target = $region32
      $region31: #{transformer_x_forward.15} parent=11 // pred_region
        _
      $region32: #{transformer_x_forward.15} parent=11 // pred_fallthru
        _
      // Predicated region
      $region33: #{transformer_x_forward.15} parent=11 // pred_check
        %p265 = pneg %p167
      $region34: #{transformer_x_forward.15} parent=11 // pred_check_branch
        %267 = sbr.rel (%p265) target = $region36
      $region35: #{transformer_x_forward.15} parent=11 // pred_region
        _
      $region36: #{transformer_x_forward.15} parent=11 // pred_fallthru
        _
      // Predicated region
      $region37: #{transformer_x_forward.15} parent=11 // pred_check
        %p268 = pneg %p188
      $region38: #{transformer_x_forward.15} parent=11 // pred_check_branch
        %270 = sbr.rel (%p268) target = $region40
      $region39: #{transformer_x_forward.15} parent=11 // pred_region
        _
      $region40: #{transformer_x_forward.15} parent=11 // pred_fallthru
        _
      // Predicated region
      $region41: #{transformer_x_forward.15} parent=11 // pred_check
        %p271 = pneg %p209
      $region42: #{transformer_x_forward.15} parent=11 // pred_check_branch
        %273 = sbr.rel (%p271) target = $region44
      $region43: #{transformer_x_forward.15} parent=11 // pred_region
        _
      $region44: #{transformer_x_forward.15} parent=11 // pred_fallthru
        _
    $region12: #{transformer_x_forward.15} parent=5 // pred_fallthru
      _
    %p274 = scmp.lt.s32.totalorder %s15, 2
    // Predicated region
    $region45: #{transformer_x_forward.15} parent=5 // pred_check
      %p275 = pneg %p274
    $region46: #{transformer_x_forward.15} parent=5 // pred_check_branch
      %277 = sbr.rel (%p275) target = $region48
    $region47: #{transformer_x_forward.15} parent=5 // pred_region
      // Predicated region
      $region49: #{transformer_x_forward.15} parent=47 // pred_check
        %p278 = pneg %p35
      $region50: #{transformer_x_forward.15} parent=47 // pred_check_branch
        %280 = sbr.rel (%p278) target = $region52
      $region51: #{transformer_x_forward.15} parent=47 // pred_region
        %p281 = scmp.lt.s32.totalorder %s15, 1
        %s282 = scalar_select %p281, %s15, 1
        %s283 = smul.addr %s282, 8
        %s284 = scalar_lea.vmem %s0, %s283
      $region52: #{transformer_x_forward.15} parent=47 // pred_fallthru
        _
    $region48: #{transformer_x_forward.15} parent=5 // pred_fallthru
      _
    %p285 = scmp.le.s32.totalorder 1, %s15
    %p286 = scmp.lt.s32.totalorder %s15, 3
    %p287 = pnand %p285, %p286
    %p288 = pneg %p287
    // Predicated region
    $region53: #{transformer_x_forward.15} parent=5 // pred_check
      _
    $region54: #{transformer_x_forward.15} parent=5 // pred_check_branch
      %290 = sbr.rel (%p287) target = $region56
    $region55: #{transformer_x_forward.15} parent=5 // pred_region
      %s291 = ssub.s32 %s15, 1
      %p292 = scmp.lt.s32.totalorder %s20, 1
      %s293 = scalar_select %p292, %s20, 1
      %s294 = smul.addr %s293, 8
      %s295 = scalar_lea.vmem %s0, %s294
      %p296 = pneg %p41
      %p297 = pneg %p38
      %p298 = pneg %p62
      %p299 = pneg %p59
      %p300 = pneg %p83
      %p301 = pneg %p80
      %p302 = pneg %p104
      %p303 = pneg %p101
      %p304 = pneg %p125
      %p305 = pneg %p122
      %p306 = pneg %p146
      %p307 = pneg %p143
      %p308 = pneg %p167
      %p309 = pneg %p164
      %p310 = pneg %p188
      %p311 = pneg %p185
      %p312 = pneg %p209
      %p313 = pneg %p206
      %p314 = pneg %p235
      %p315 = pneg %p232
      %p316 = scmp.lt.s32.totalorder %s20, 1
      %s317 = scalar_select %p316, %s20, 1
      %s318 = smul.addr %s317, 8
      %s319 = scalar_lea.vmem %s9, %s318
      %p320 = scmp.lt.s32.totalorder %s20, 1
      %s321 = scalar_select %p320, %s20, 1
      %s322 = smul.addr %s321, 8
      %s323 = scalar_lea.vmem %s0, %s322
      %p324 = scmp.lt.s32.totalorder %s20, 1
      %s325 = scalar_select %p324, %s20, 1
      %s326 = smul.addr %s325, 8
      %s327 = scalar_lea.vmem %s9, %s326
      %v329 = vld [vmem:[%s323] sm:$0xff]
      %v330 = vpack.c.bf16 %v329, %v329
      %v331 = vld [vmem:[%s1] sm:$0xf]
      %v332 = vld [vmem:[%s1 + $0x4] sm:$0xf]
      %v333 = vld [vmem:[%s1 + $0x8] sm:$0xf]
      %v334 = vld [vmem:[%s1 + $0xc] sm:$0xf]
      %v335 = vld [vmem:[%s2] sm:$0x1]
      %v337 = vlaneseq
      %v338 = vshrl.u32 %v337, 7
      %v339 = vsub.s32 0, %v338
      %v340 = vrot.slane %v335, %v339
      %v346 = vunpack.c.l.b16 %v331
      %v347 = vunpack.c.l.b16 %v332
      %v348 = vunpack.c.l.b16 %v333
      %v349 = vunpack.c.l.b16 %v334
      %v350 = vpack.c.b16 %v347, %v346
      %v351 = vpack.c.b16 %v349, %v348
      %vm354 = vcmask 261120
      %v356 = vsel %vm354, %v330, 0
      %358 = vmatprep.subr.bf16.mxu0 0
      %359 = vmatpush1.bf16.msra.mxu0 %v350
      %360 = vmatprep.subr.bf16.mxu0 0
      %361 = vmatpush1.bf16.msra.mxu0 %v351
      %362 = vmatprep.subr.bf16.mxu0 0
      %363 = vmatpush1.bf16.msra.mxu0 0
      %364 = vmatprep.subr.bf16.mxu0 0
      %365 = vmatpush1.bf16.msra.mxu0 0
      %366 = vmatprep.subr.bf16.mxu0 0
      %367 = vmatpush1.bf16.msra.mxu0 0
      %368 = vmatprep.subr.bf16.mxu0 0
      %369 = vmatpush1.bf16.msra.mxu0 0
      %370 = vmatprep.subr.bf16.mxu0 0
      %371 = vmatpush1.bf16.msra.mxu0 0
      %372 = vmatprep.subr.bf16.mxu0 0
      %373 = vmatpush1.bf16.msra.mxu0 0
      %374 = vmatprep.subr.bf16.mxu0 0
      %375 = vmatpush1.bf16.msra.mxu0 0
      %376 = vmatprep.subr.bf16.mxu0 0
      %377 = vmatpush1.bf16.msra.mxu0 0
      %378 = vmatprep.subr.bf16.mxu0 0
      %379 = vmatpush1.bf16.msra.mxu0 0
      %380 = vmatprep.subr.bf16.mxu0 0
      %381 = vmatpush1.bf16.msra.mxu0 0
      %382 = vmatprep.subr.bf16.mxu0 0
      %383 = vmatpush1.bf16.msra.mxu0 0
      %384 = vmatprep.subr.bf16.mxu0 0
      %385 = vmatpush1.bf16.msra.mxu0 0
      %386 = vmatprep.subr.bf16.mxu0 0
      %387 = vmatpush1.bf16.msra.mxu0 0
      %388 = vmatprep.subr.bf16.mxu0 0
      %389 = vmatpush1.bf16.msra.mxu0 0
      %390 = vmatprep.mubr.bf16.mxu0 0
      %391 = vmatmul.mubr.bf16.gmra.mrb[0].mxu0 %v356
      %v392 = vpop.f32.mrb[0].mxu0
      %v393 = vadd.f32 %v340, %v392
      %v394 = vpop.f32.mrb[0].mxu0
      %v395 = vpop.f32.mrb[0].mxu0
      %v396 = vpop.f32.mrb[0].mxu0
      %397 = vdwg.mxu0
      %v398 = vld [vmem:[%s3] sm:$0xf]
      %v399 = vld [vmem:[%s3 + $0x4] sm:$0xf]
      %v400 = vld [vmem:[%s3 + $0x8] sm:$0xf]
      %v401 = vld [vmem:[%s3 + $0xc] sm:$0xf]
      %v402 = vld [vmem:[%s4] sm:$0x1]
      %v404 = vlaneseq
      %v405 = vshrl.u32 %v404, 7
      %v406 = vsub.s32 0, %v405
      %v407 = vrot.slane %v402, %v406
      %v413 = vunpack.c.l.b16 %v398
      %v414 = vunpack.c.l.b16 %v399
      %v415 = vunpack.c.l.b16 %v400
      %v416 = vunpack.c.l.b16 %v401
      %v417 = vpack.c.b16 %v414, %v413
      %v418 = vpack.c.b16 %v416, %v415
      %421 = vmatprep.subr.bf16.mxu0 0
      %422 = vmatpush1.bf16.msra.mxu0 %v417
      %423 = vmatprep.subr.bf16.mxu0 0
      %424 = vmatpush1.bf16.msra.mxu0 %v418
      %425 = vmatprep.subr.bf16.mxu0 0
      %426 = vmatpush1.bf16.msra.mxu0 0
      %427 = vmatprep.subr.bf16.mxu0 0
      %428 = vmatpush1.bf16.msra.mxu0 0
      %429 = vmatprep.subr.bf16.mxu0 0
      %430 = vmatpush1.bf16.msra.mxu0 0
      %431 = vmatprep.subr.bf16.mxu0 0
      %432 = vmatpush1.bf16.msra.mxu0 0
      %433 = vmatprep.subr.bf16.mxu0 0
      %434 = vmatpush1.bf16.msra.mxu0 0
      %435 = vmatprep.subr.bf16.mxu0 0
      %436 = vmatpush1.bf16.msra.mxu0 0
      %437 = vmatprep.subr.bf16.mxu0 0
      %438 = vmatpush1.bf16.msra.mxu0 0
      %439 = vmatprep.subr.bf16.mxu0 0
      %440 = vmatpush1.bf16.msra.mxu0 0
      %441 = vmatprep.subr.bf16.mxu0 0
      %442 = vmatpush1.bf16.msra.mxu0 0
      %443 = vmatprep.subr.bf16.mxu0 0
      %444 = vmatpush1.bf16.msra.mxu0 0
      %445 = vmatprep.subr.bf16.mxu0 0
      %446 = vmatpush1.bf16.msra.mxu0 0
      %447 = vmatprep.subr.bf16.mxu0 0
      %448 = vmatpush1.bf16.msra.mxu0 0
      %449 = vmatprep.subr.bf16.mxu0 0
      %450 = vmatpush1.bf16.msra.mxu0 0
      %451 = vmatprep.subr.bf16.mxu0 0
      %452 = vmatpush1.bf16.msra.mxu0 0
      %453 = vmatprep.mubr.bf16.mxu0 0
      %454 = vmatmul.mubr.bf16.gmra.mrb[0].mxu0 %v356
      %v455 = vpop.f32.mrb[0].mxu0
      %v456 = vadd.f32 %v407, %v455
      %v457 = vpop.f32.mrb[0].mxu0
      %v458 = vpop.f32.mrb[0].mxu0
      %v459 = vpop.f32.mrb[0].mxu0
      %460 = vdwg.mxu0
      %v461 = vpack.c.bf16 %v393, %v393
      %v462 = vpack.c.bf16 %v456, %v456
      %vm463 = vcmask 64512
      %v465 = vsel %vm463, %v461, 0
      %v468 = vsel %vm463, %v462, 0
      %470 = vmatprep.subr.bf16.mxu0 0
      %471 = vmatpush1.bf16.xpose.msra.mxu0 %v468
      %472 = vmatprep.subr.bf16.mxu0 0
      %473 = vmatpush1.bf16.xpose.msra.mxu0 0
      %474 = vmatprep.subr.bf16.mxu0 0
      %475 = vmatpush1.bf16.xpose.msra.mxu0 0
      %476 = vmatprep.subr.bf16.mxu0 0
      %477 = vmatpush1.bf16.xpose.msra.mxu0 0
      %478 = vmatprep.subr.bf16.mxu0 0
      %479 = vmatpush1.bf16.xpose.msra.mxu0 0
      %480 = vmatprep.subr.bf16.mxu0 0
      %481 = vmatpush1.bf16.xpose.msra.mxu0 0
      %482 = vmatprep.subr.bf16.mxu0 0
      %483 = vmatpush1.bf16.xpose.msra.mxu0 0
      %484 = vmatprep.subr.bf16.mxu0 0
      %485 = vmatpush1.bf16.xpose.msra.mxu0 0
      %486 = vmatprep.subr.bf16.mxu0 0
      %487 = vmatpush1.bf16.xpose.msra.mxu0 0
      %488 = vmatprep.subr.bf16.mxu0 0
      %489 = vmatpush1.bf16.xpose.msra.mxu0 0
      %490 = vmatprep.subr.bf16.mxu0 0
      %491 = vmatpush1.bf16.xpose.msra.mxu0 0
      %492 = vmatprep.subr.bf16.mxu0 0
      %493 = vmatpush1.bf16.xpose.msra.mxu0 0
      %494 = vmatprep.subr.bf16.mxu0 0
      %495 = vmatpush1.bf16.xpose.msra.mxu0 0
      %496 = vmatprep.subr.bf16.mxu0 0
      %497 = vmatpush1.bf16.xpose.msra.mxu0 0
      %498 = vmatprep.subr.bf16.mxu0 0
      %499 = vmatpush1.bf16.xpose.msra.mxu0 0
      %500 = vmatprep.subr.bf16.mxu0 0
      %501 = vmatpush1.bf16.xpose.msra.mxu0 0
      %502 = vmatprep.mubr.bf16.mxu0 0
      %503 = vmatmul.mubr.bf16.gmra.mrb[0].mxu0 %v465
      %v504 = vpop.f32.mrb[0].mxu0
      %v505 = vadd.f32 0.0, %v504
      %v506 = vpop.f32.mrb[0].mxu0
      %v507 = vpop.f32.mrb[0].mxu0
      %v508 = vpop.f32.mrb[0].mxu0
      %509 = vdwg.mxu0
      %v510 = vmul.f32 %v505, 0.35355338
      %v511 = vsel %vm463, %v510, -inf
      %512 = vmax.xlane.f32.xlu0 %v511
      %v513 = vpop.xlane.xlu0 %512
      %v514 = vsub.f32 %v510, %v513
      %v515 = vmul.f32 %v514, 1.442695
      %v516 = vpow.pop %v515
      %v517 = vsel %vm463, %v516, 0.0
      %518 = vadd.xlane.f32.xlu0 %v517
      %v519 = vpop.xlane.xlu0 %518
      %v520 = vrcp.pop %v519
      %v521 = vmul.f32 %v516, %v520
      %v522 = vpack.c.bf16 %v521, %v521
      %524 = vrot.lane.b32.xlu0 %v462, 96
      %v525 = vpop.permute.xlu0 %524
      %v527 = vsel %vm463, %v522, 0
      %vm529 = vcmask 1043456
      %v531 = vsel %vm529, %v525, 0
      %533 = vmatprep.subr.bf16.mxu0 0
      %534 = vmatpush1.bf16.msra.mxu0 %v531
      %535 = vmatprep.subr.bf16.mxu0 0
      %536 = vmatpush1.bf16.msra.mxu0 0
      %537 = vmatprep.subr.bf16.mxu0 0
      %538 = vmatpush1.bf16.msra.mxu0 0
      %539 = vmatprep.subr.bf16.mxu0 0
      %540 = vmatpush1.bf16.msra.mxu0 0
      %541 = vmatprep.subr.bf16.mxu0 0
      %542 = vmatpush1.bf16.msra.mxu0 0
      %543 = vmatprep.subr.bf16.mxu0 0
      %544 = vmatpush1.bf16.msra.mxu0 0
      %545 = vmatprep.subr.bf16.mxu0 0
      %546 = vmatpush1.bf16.msra.mxu0 0
      %547 = vmatprep.subr.bf16.mxu0 0
      %548 = vmatpush1.bf16.msra.mxu0 0
      %549 = vmatprep.subr.bf16.mxu0 0
      %550 = vmatpush1.bf16.msra.mxu0 0
      %551 = vmatprep.subr.bf16.mxu0 0
      %552 = vmatpush1.bf16.msra.mxu0 0
      %553 = vmatprep.subr.bf16.mxu0 0
      %554 = vmatpush1.bf16.msra.mxu0 0
      %555 = vmatprep.subr.bf16.mxu0 0
      %556 = vmatpush1.bf16.msra.mxu0 0
      %557 = vmatprep.subr.bf16.mxu0 0
      %558 = vmatpush1.bf16.msra.mxu0 0
      %559 = vmatprep.subr.bf16.mxu0 0
      %560 = vmatpush1.bf16.msra.mxu0 0
      %561 = vmatprep.subr.bf16.mxu0 0
      %562 = vmatpush1.bf16.msra.mxu0 0
      %563 = vmatprep.subr.bf16.mxu0 0
      %564 = vmatpush1.bf16.msra.mxu0 0
      %565 = vmatprep.mubr.bf16.mxu0 0
      %566 = vmatmul.mubr.bf16.gmra.mrb[0].mxu0 %v527
      %v567 = vpop.f32.mrb[0].mxu0
      %v568 = vadd.f32 0.0, %v567
      %v569 = vpop.f32.mrb[0].mxu0
      %v570 = vpop.f32.mrb[0].mxu0
      %v571 = vpop.f32.mrb[0].mxu0
      %572 = vdwg.mxu0
      %573 = vst.msk [vmem:[#allocation2] sm:$0xff] %vm463, %v568
      %575 = vrot.lane.b32.xlu0 %v461, 120
      %v576 = vpop.permute.xlu0 %575
      %577 = vrot.lane.b32.xlu0 %v462, 120
      %v578 = vpop.permute.xlu0 %577
      %v580 = vsel %vm463, %v576, 0
      %v583 = vsel %vm463, %v578, 0
      %585 = vmatprep.subr.bf16.mxu0 0
      %586 = vmatpush1.bf16.xpose.msra.mxu0 %v583
      %587 = vmatprep.subr.bf16.mxu0 0
      %588 = vmatpush1.bf16.xpose.msra.mxu0 0
      %589 = vmatprep.subr.bf16.mxu0 0
      %590 = vmatpush1.bf16.xpose.msra.mxu0 0
      %591 = vmatprep.subr.bf16.mxu0 0
      %592 = vmatpush1.bf16.xpose.msra.mxu0 0
      %593 = vmatprep.subr.bf16.mxu0 0
      %594 = vmatpush1.bf16.xpose.msra.mxu0 0
      %595 = vmatprep.subr.bf16.mxu0 0
      %596 = vmatpush1.bf16.xpose.msra.mxu0 0
      %597 = vmatprep.subr.bf16.mxu0 0
      %598 = vmatpush1.bf16.xpose.msra.mxu0 0
      %599 = vmatprep.subr.bf16.mxu0 0
      %600 = vmatpush1.bf16.xpose.msra.mxu0 0
      %601 = vmatprep.subr.bf16.mxu0 0
      %602 = vmatpush1.bf16.xpose.msra.mxu0 0
      %603 = vmatprep.subr.bf16.mxu0 0
      %604 = vmatpush1.bf16.xpose.msra.mxu0 0
      %605 = vmatprep.subr.bf16.mxu0 0
      %606 = vmatpush1.bf16.xpose.msra.mxu0 0
      %607 = vmatprep.subr.bf16.mxu0 0
      %608 = vmatpush1.bf16.xpose.msra.mxu0 0
      %609 = vmatprep.subr.bf16.mxu0 0
      %610 = vmatpush1.bf16.xpose.msra.mxu0 0
      %611 = vmatprep.subr.bf16.mxu0 0
      %612 = vmatpush1.bf16.xpose.msra.mxu0 0
      %613 = vmatprep.subr.bf16.mxu0 0
      %614 = vmatpush1.bf16.xpose.msra.mxu0 0
      %615 = vmatprep.subr.bf16.mxu0 0
      %616 = vmatpush1.bf16.xpose.msra.mxu0 0
      %617 = vmatprep.mubr.bf16.mxu0 0
      %618 = vmatmul.mubr.bf16.gmra.mrb[0].mxu0 %v580
      %v619 = vpop.f32.mrb[0].mxu0
      %v620 = vadd.f32 0.0, %v619
      %v621 = vpop.f32.mrb[0].mxu0
      %v622 = vpop.f32.mrb[0].mxu0
      %v623 = vpop.f32.mrb[0].mxu0
      %624 = vdwg.mxu0
      %v625 = vmul.f32 %v620, 0.35355338
      %v626 = vsel %vm463, %v625, -inf
      %627 = vmax.xlane.f32.xlu0 %v626
      %v628 = vpop.xlane.xlu0 %627
      %v629 = vsub.f32 %v625, %v628
      %v630 = vmul.f32 %v629, 1.442695
      %v631 = vpow.pop %v630
      %v632 = vsel %vm463, %v631, 0.0
      %633 = vadd.xlane.f32.xlu0 %v632
      %v634 = vpop.xlane.xlu0 %633
      %v635 = vrcp.pop %v634
      %v636 = vmul.f32 %v631, %v635
      %v637 = vpack.c.bf16 %v636, %v636
      %638 = vrot.lane.b32.xlu0 %v462, 88
      %v639 = vpop.permute.xlu0 %638
      %v641 = vsel %vm463, %v637, 0
      %v644 = vsel %vm529, %v639, 0
      %646 = vmatprep.subr.bf16.mxu0 0
      %647 = vmatpush1.bf16.msra.mxu0 %v644
      %648 = vmatprep.subr.bf16.mxu0 0
      %649 = vmatpush1.bf16.msra.mxu0 0
      %650 = vmatprep.subr.bf16.mxu0 0
      %651 = vmatpush1.bf16.msra.mxu0 0
      %652 = vmatprep.subr.bf16.mxu0 0
      %653 = vmatpush1.bf16.msra.mxu0 0
      %654 = vmatprep.subr.bf16.mxu0 0
      %655 = vmatpush1.bf16.msra.mxu0 0
      %656 = vmatprep.subr.bf16.mxu0 0
      %657 = vmatpush1.bf16.msra.mxu0 0
      %658 = vmatprep.subr.bf16.mxu0 0
      %659 = vmatpush1.bf16.msra.mxu0 0
      %660 = vmatprep.subr.bf16.mxu0 0
      %661 = vmatpush1.bf16.msra.mxu0 0
      %662 = vmatprep.subr.bf16.mxu0 0
      %663 = vmatpush1.bf16.msra.mxu0 0
      %664 = vmatprep.subr.bf16.mxu0 0
      %665 = vmatpush1.bf16.msra.mxu0 0
      %666 = vmatprep.subr.bf16.mxu0 0
      %667 = vmatpush1.bf16.msra.mxu0 0
      %668 = vmatprep.subr.bf16.mxu0 0
      %669 = vmatpush1.bf16.msra.mxu0 0
      %670 = vmatprep.subr.bf16.mxu0 0
      %671 = vmatpush1.bf16.msra.mxu0 0
      %672 = vmatprep.subr.bf16.mxu0 0
      %673 = vmatpush1.bf16.msra.mxu0 0
      %674 = vmatprep.subr.bf16.mxu0 0
      %675 = vmatpush1.bf16.msra.mxu0 0
      %676 = vmatprep.subr.bf16.mxu0 0
      %677 = vmatpush1.bf16.msra.mxu0 0
      %678 = vmatprep.mubr.bf16.mxu0 0
      %679 = vmatmul.mubr.bf16.gmra.mrb[0].mxu0 %v641
      %v680 = vpop.f32.mrb[0].mxu0
      %v681 = vadd.f32 0.0, %v680
      %v682 = vpop.f32.mrb[0].mxu0
      %v683 = vpop.f32.mrb[0].mxu0
      %v684 = vpop.f32.mrb[0].mxu0
      %685 = vdwg.mxu0
      %687 = vrot.lane.b32.xlu0 %v681, 8
      %v688 = vpop.permute.xlu0 %687
      %vm690 = vcmask 130112
      %691 = vst.msk [vmem:[#allocation2] sm:$0xff] %vm690, %v688
      %692 = vrot.lane.b32.xlu0 %v461, 112
      %v693 = vpop.permute.xlu0 %692
      %694 = vrot.lane.b32.xlu0 %v462, 112
      %v695 = vpop.permute.xlu0 %694
      %v697 = vsel %vm463, %v693, 0
      %v700 = vsel %vm463, %v695, 0
      %702 = vmatprep.subr.bf16.mxu0 0
      %703 = vmatpush1.bf16.xpose.msra.mxu0 %v700
      %704 = vmatprep.subr.bf16.mxu0 0
      %705 = vmatpush1.bf16.xpose.msra.mxu0 0
      %706 = vmatprep.subr.bf16.mxu0 0
      %707 = vmatpush1.bf16.xpose.msra.mxu0 0
      %708 = vmatprep.subr.bf16.mxu0 0
      %709 = vmatpush1.bf16.xpose.msra.mxu0 0
      %710 = vmatprep.subr.bf16.mxu0 0
      %711 = vmatpush1.bf16.xpose.msra.mxu0 0
      %712 = vmatprep.subr.bf16.mxu0 0
      %713 = vmatpush1.bf16.xpose.msra.mxu0 0
      %714 = vmatprep.subr.bf16.mxu0 0
      %715 = vmatpush1.bf16.xpose.msra.mxu0 0
      %716 = vmatprep.subr.bf16.mxu0 0
      %717 = vmatpush1.bf16.xpose.msra.mxu0 0
      %718 = vmatprep.subr.bf16.mxu0 0
      %719 = vmatpush1.bf16.xpose.msra.mxu0 0
      %720 = vmatprep.subr.bf16.mxu0 0
      %721 = vmatpush1.bf16.xpose.msra.mxu0 0
      %722 = vmatprep.subr.bf16.mxu0 0
      %723 = vmatpush1.bf16.xpose.msra.mxu0 0
      %724 = vmatprep.subr.bf16.mxu0 0
      %725 = vmatpush1.bf16.xpose.msra.mxu0 0
      %726 = vmatprep.subr.bf16.mxu0 0
      %727 = vmatpush1.bf16.xpose.msra.mxu0 0
      %728 = vmatprep.subr.bf16.mxu0 0
      %729 = vmatpush1.bf16.xpose.msra.mxu0 0
      %730 = vmatprep.subr.bf16.mxu0 0
      %731 = vmatpush1.bf16.xpose.msra.mxu0 0
      %732 = vmatprep.subr.bf16.mxu0 0
      %733 = vmatpush1.bf16.xpose.msra.mxu0 0
      %734 = vmatprep.mubr.bf16.mxu0 0
      %735 = vmatmul.mubr.bf16.gmra.mrb[0].mxu0 %v697
      %v736 = vpop.f32.mrb[0].mxu0
      %v737 = vadd.f32 0.0, %v736
      %v738 = vpop.f32.mrb[0].mxu0
      %v739 = vpop.f32.mrb[0].mxu0
      %v740 = vpop.f32.mrb[0].mxu0
      %741 = vdwg.mxu0
      %v742 = vmul.f32 %v737, 0.35355338
      %v743 = vsel %vm463, %v742, -inf
      %744 = vmax.xlane.f32.xlu0 %v743
      %v745 = vpop.xlane.xlu0 %744
      %v746 = vsub.f32 %v742, %v745
      %v747 = vmul.f32 %v746, 1.442695
      %v748 = vpow.pop %v747
      %v749 = vsel %vm463, %v748, 0.0
      %750 = vadd.xlane.f32.xlu0 %v749
      %v751 = vpop.xlane.xlu0 %750
      %v752 = vrcp.pop %v751
      %v753 = vmul.f32 %v748, %v752
      %v754 = vpack.c.bf16 %v753, %v753
      %755 = vrot.lane.b32.xlu0 %v462, 80
      %v756 = vpop.permute.xlu0 %755
      %v758 = vsel %vm463, %v754, 0
      %v761 = vsel %vm529, %v756, 0
      %763 = vmatprep.subr.bf16.mxu0 0
      %764 = vmatpush1.bf16.msra.mxu0 %v761
      %765 = vmatprep.subr.bf16.mxu0 0
      %766 = vmatpush1.bf16.msra.mxu0 0
      %767 = vmatprep.subr.bf16.mxu0 0
      %768 = vmatpush1.bf16.msra.mxu0 0
      %769 = vmatprep.subr.bf16.mxu0 0
      %770 = vmatpush1.bf16.msra.mxu0 0
      %771 = vmatprep.subr.bf16.mxu0 0
      %772 = vmatpush1.bf16.msra.mxu0 0
      %773 = vmatprep.subr.bf16.mxu0 0
      %774 = vmatpush1.bf16.msra.mxu0 0
      %775 = vmatprep.subr.bf16.mxu0 0
      %776 = vmatpush1.bf16.msra.mxu0 0
      %777 = vmatprep.subr.bf16.mxu0 0
      %778 = vmatpush1.bf16.msra.mxu0 0
      %779 = vmatprep.subr.bf16.mxu0 0
      %780 = vmatpush1.bf16.msra.mxu0 0
      %781 = vmatprep.subr.bf16.mxu0 0
      %782 = vmatpush1.bf16.msra.mxu0 0
      %783 = vmatprep.subr.bf16.mxu0 0
      %784 = vmatpush1.bf16.msra.mxu0 0
      %785 = vmatprep.subr.bf16.mxu0 0
      %786 = vmatpush1.bf16.msra.mxu0 0
      %787 = vmatprep.subr.bf16.mxu0 0
      %788 = vmatpush1.bf16.msra.mxu0 0
      %789 = vmatprep.subr.bf16.mxu0 0
      %790 = vmatpush1.bf16.msra.mxu0 0
      %791 = vmatprep.subr.bf16.mxu0 0
      %792 = vmatpush1.bf16.msra.mxu0 0
      %793 = vmatprep.subr.bf16.mxu0 0
      %794 = vmatpush1.bf16.msra.mxu0 0
      %795 = vmatprep.mubr.bf16.mxu0 0
      %796 = vmatmul.mubr.bf16.gmra.mrb[0].mxu0 %v758
      %v797 = vpop.f32.mrb[0].mxu0
      %v798 = vadd.f32 0.0, %v797
      %v799 = vpop.f32.mrb[0].mxu0
      %v800 = vpop.f32.mrb[0].mxu0
      %v801 = vpop.f32.mrb[0].mxu0
      %802 = vdwg.mxu0
      %804 = vrot.lane.b32.xlu0 %v798, 16
      %v805 = vpop.permute.xlu0 %804
      %vm807 = vcmask 195712
      %808 = vst.msk [vmem:[#allocation2] sm:$0xff] %vm807, %v805
      %809 = vrot.lane.b32.xlu0 %v461, 104
      %v810 = vpop.permute.xlu0 %809
      %811 = vrot.lane.b32.xlu0 %v462, 104
      %v812 = vpop.permute.xlu0 %811
      %v814 = vsel %vm463, %v810, 0
      %v817 = vsel %vm463, %v812, 0
      %819 = vmatprep.subr.bf16.mxu0 0
      %820 = vmatpush1.bf16.xpose.msra.mxu0 %v817
      %821 = vmatprep.subr.bf16.mxu0 0
      %822 = vmatpush1.bf16.xpose.msra.mxu0 0
      %823 = vmatprep.subr.bf16.mxu0 0
      %824 = vmatpush1.bf16.xpose.msra.mxu0 0
      %825 = vmatprep.subr.bf16.mxu0 0
      %826 = vmatpush1.bf16.xpose.msra.mxu0 0
      %827 = vmatprep.subr.bf16.mxu0 0
      %828 = vmatpush1.bf16.xpose.msra.mxu0 0
      %829 = vmatprep.subr.bf16.mxu0 0
      %830 = vmatpush1.bf16.xpose.msra.mxu0 0
      %831 = vmatprep.subr.bf16.mxu0 0
      %832 = vmatpush1.bf16.xpose.msra.mxu0 0
      %833 = vmatprep.subr.bf16.mxu0 0
      %834 = vmatpush1.bf16.xpose.msra.mxu0 0
      %835 = vmatprep.subr.bf16.mxu0 0
      %836 = vmatpush1.bf16.xpose.msra.mxu0 0
      %837 = vmatprep.subr.bf16.mxu0 0
      %838 = vmatpush1.bf16.xpose.msra.mxu0 0
      %839 = vmatprep.subr.bf16.mxu0 0
      %840 = vmatpush1.bf16.xpose.msra.mxu0 0
      %841 = vmatprep.subr.bf16.mxu0 0
      %842 = vmatpush1.bf16.xpose.msra.mxu0 0
      %843 = vmatprep.subr.bf16.mxu0 0
      %844 = vmatpush1.bf16.xpose.msra.mxu0 0
      %845 = vmatprep.subr.bf16.mxu0 0
      %846 = vmatpush1.bf16.xpose.msra.mxu0 0
      %847 = vmatprep.subr.bf16.mxu0 0
      %848 = vmatpush1.bf16.xpose.msra.mxu0 0
      %849 = vmatprep.subr.bf16.mxu0 0
      %850 = vmatpush1.bf16.xpose.msra.mxu0 0
      %851 = vmatprep.mubr.bf16.mxu0 0
      %852 = vmatmul.mubr.bf16.gmra.mrb[0].mxu0 %v814
      %v853 = vpop.f32.mrb[0].mxu0
      %v854 = vadd.f32 0.0, %v853
      %v855 = vpop.f32.mrb[0].mxu0
      %v856 = vpop.f32.mrb[0].mxu0
      %v857 = vpop.f32.mrb[0].mxu0
      %858 = vdwg.mxu0
      %v859 = vmul.f32 %v854, 0.35355338
      %v860 = vsel %vm463, %v859, -inf
      %861 = vmax.xlane.f32.xlu0 %v860
      %v862 = vpop.xlane.xlu0 %861
      %v863 = vsub.f32 %v859, %v862
      %v864 = vmul.f32 %v863, 1.442695
      %v865 = vpow.pop %v864
      %v866 = vsel %vm463, %v865, 0.0
      %867 = vadd.xlane.f32.xlu0 %v866
      %v868 = vpop.xlane.xlu0 %867
      %v869 = vrcp.pop %v868
      %v870 = vmul.f32 %v865, %v869
      %v871 = vpack.c.bf16 %v870, %v870
      %872 = vrot.lane.b32.xlu0 %v462, 72
      %v873 = vpop.permute.xlu0 %872
      %v875 = vsel %vm463, %v871, 0
      %v878 = vsel %vm529, %v873, 0
      %880 = vmatprep.subr.bf16.mxu0 0
      %881 = vmatpush1.bf16.msra.mxu0 %v878
      %882 = vmatprep.subr.bf16.mxu0 0
      %883 = vmatpush1.bf16.msra.mxu0 0
      %884 = vmatprep.subr.bf16.mxu0 0
      %885 = vmatpush1.bf16.msra.mxu0 0
      %886 = vmatprep.subr.bf16.mxu0 0
      %887 = vmatpush1.bf16.msra.mxu0 0
      %888 = vmatprep.subr.bf16.mxu0 0
      %889 = vmatpush1.bf16.msra.mxu0 0
      %890 = vmatprep.subr.bf16.mxu0 0
      %891 = vmatpush1.bf16.msra.mxu0 0
      %892 = vmatprep.subr.bf16.mxu0 0
      %893 = vmatpush1.bf16.msra.mxu0 0
      %894 = vmatprep.subr.bf16.mxu0 0
      %895 = vmatpush1.bf16.msra.mxu0 0
      %896 = vmatprep.subr.bf16.mxu0 0
      %897 = vmatpush1.bf16.msra.mxu0 0
      %898 = vmatprep.subr.bf16.mxu0 0
      %899 = vmatpush1.bf16.msra.mxu0 0
      %900 = vmatprep.subr.bf16.mxu0 0
      %901 = vmatpush1.bf16.msra.mxu0 0
      %902 = vmatprep.subr.bf16.mxu0 0
      %903 = vmatpush1.bf16.msra.mxu0 0
      %904 = vmatprep.subr.bf16.mxu0 0
      %905 = vmatpush1.bf16.msra.mxu0 0
      %906 = vmatprep.subr.bf16.mxu0 0
      %907 = vmatpush1.bf16.msra.mxu0 0
      %908 = vmatprep.subr.bf16.mxu0 0
      %909 = vmatpush1.bf16.msra.mxu0 0
      %910 = vmatprep.subr.bf16.mxu0 0
      %911 = vmatpush1.bf16.msra.mxu0 0
      %912 = vmatprep.mubr.bf16.mxu0 0
      %913 = vmatmul.mubr.bf16.gmra.mrb[0].mxu0 %v875
      %v914 = vpop.f32.mrb[0].mxu0
      %v915 = vadd.f32 0.0, %v914
      %v916 = vpop.f32.mrb[0].mxu0
      %v917 = vpop.f32.mrb[0].mxu0
      %v918 = vpop.f32.mrb[0].mxu0
      %919 = vdwg.mxu0
      %921 = vrot.lane.b32.xlu0 %v915, 24
      %v922 = vpop.permute.xlu0 %921
      %vm924 = vcmask 261312
      %925 = vst.msk [vmem:[#allocation2] sm:$0xff] %vm924, %v922
      %v926 = vld [vmem:[%s6] sm:$0x1]
      %v928 = vlaneseq
      %v929 = vshrl.u32 %v928, 7
      %v930 = vsub.s32 0, %v929
      %v931 = vrot.slane %v926, %v930
      %v933 = vadd.f32 %v329, %v931
      %v934 = vld [vmem:[#allocation2] sm:$0xff]
      %v935 = vpack.c.bf16 %v934, %v934
      %v936 = vld [vmem:[%s5] sm:$0xf]
      %v937 = vld [vmem:[%s5 + $0x4] sm:$0xf]
      %v938 = vld [vmem:[%s5 + $0x8] sm:$0xf]
      %v939 = vld [vmem:[%s5 + $0xc] sm:$0xf]
      %v944 = vunpack.c.l.b16 %v936
      %v945 = vunpack.c.l.b16 %v937
      %v946 = vunpack.c.l.b16 %v938
      %v947 = vunpack.c.l.b16 %v939
      %v948 = vpack.c.b16 %v945, %v944
      %v949 = vpack.c.b16 %v947, %v946
      %v953 = vsel %vm354, %v935, 0
      %955 = vmatprep.subr.bf16.mxu0 0
      %956 = vmatpush1.bf16.msra.mxu0 %v948
      %957 = vmatprep.subr.bf16.mxu0 0
      %958 = vmatpush1.bf16.msra.mxu0 %v949
      %959 = vmatprep.subr.bf16.mxu0 0
      %960 = vmatpush1.bf16.msra.mxu0 0
      %961 = vmatprep.subr.bf16.mxu0 0
      %962 = vmatpush1.bf16.msra.mxu0 0
      %963 = vmatprep.subr.bf16.mxu0 0
      %964 = vmatpush1.bf16.msra.mxu0 0
      %965 = vmatprep.subr.bf16.mxu0 0
      %966 = vmatpush1.bf16.msra.mxu0 0
      %967 = vmatprep.subr.bf16.mxu0 0
      %968 = vmatpush1.bf16.msra.mxu0 0
      %969 = vmatprep.subr.bf16.mxu0 0
      %970 = vmatpush1.bf16.msra.mxu0 0
      %971 = vmatprep.subr.bf16.mxu0 0
      %972 = vmatpush1.bf16.msra.mxu0 0
      %973 = vmatprep.subr.bf16.mxu0 0
      %974 = vmatpush1.bf16.msra.mxu0 0
      %975 = vmatprep.subr.bf16.mxu0 0
      %976 = vmatpush1.bf16.msra.mxu0 0
      %977 = vmatprep.subr.bf16.mxu0 0
      %978 = vmatpush1.bf16.msra.mxu0 0
      %979 = vmatprep.subr.bf16.mxu0 0
      %980 = vmatpush1.bf16.msra.mxu0 0
      %981 = vmatprep.subr.bf16.mxu0 0
      %982 = vmatpush1.bf16.msra.mxu0 0
      %983 = vmatprep.subr.bf16.mxu0 0
      %984 = vmatpush1.bf16.msra.mxu0 0
      %985 = vmatprep.subr.bf16.mxu0 0
      %986 = vmatpush1.bf16.msra.mxu0 0
      %987 = vmatprep.mubr.bf16.mxu0 0
      %988 = vmatmul.mubr.bf16.gmra.mrb[0].mxu0 %v953
      %v989 = vpop.f32.mrb[0].mxu0
      %v990 = vadd.f32 0.0, %v989
      %v991 = vpop.f32.mrb[0].mxu0
      %v992 = vpop.f32.mrb[0].mxu0
      %v993 = vpop.f32.mrb[0].mxu0
      %994 = vdwg.mxu0
      %v995 = vadd.f32 %v933, %v990
      %v996 = vld [vmem:[%s7] sm:$0x1]
      %v997 = vld [vmem:[%s8] sm:$0x1]
      %v998 = vsel %vm354, %v995, 0.0
      %999 = vadd.xlane.f32.xlu0 %v998
      %v1000 = vpop.xlane.xlu0 %999
      %v1001 = vrcp.pop 32.0
      %v1002 = vmul.f32 %v1000, %v1001
      %v1003 = vsub.f32 %v995, %v1002
      %v1004 = vmul.f32 %v1003, %v1003
      %v1005 = vsel %vm354, %v1004, 0.0
      %1006 = vadd.xlane.f32.xlu0 %v1005
      %v1007 = vpop.xlane.xlu0 %1006
      %v1008 = vmul.f32 %v1007, %v1001
      %v1009 = vadd.f32 %v1008, 1e-05
      %v1010 = vrsqrt.pop %v1009
      %v1011 = vmul.f32 %v1003, %v1010
      %v1013 = vlaneseq
      %v1014 = vshrl.u32 %v1013, 7
      %v1015 = vsub.s32 0, %v1014
      %v1016 = vrot.slane %v996, %v1015
      %v1018 = vmul.f32 %v1011, %v1016
      %v1020 = vlaneseq
      %v1021 = vshrl.u32 %v1020, 7
      %v1022 = vsub.s32 0, %v1021
      %v1023 = vrot.slane %v997, %v1022
      %v1025 = vadd.f32 %v1018, %v1023
      %1026 = vst.msk [vmem:[%s327] sm:$0xff] %vm354, %v1025
      %p1027 = scmp.lt.s32.totalorder %s20, 1
      %s1028 = scalar_select %p1027, %s20, 1
      %s1029 = smul.addr %s1028, 8
      %s1030 = scalar_lea.vmem %s9, %s1029
      // Predicated region
      $region57: #{transformer_x_forward.15} parent=55 // pred_check
        %p1031 = pneg %p232
      $region58: #{transformer_x_forward.15} parent=55 // pred_check_branch
        %1033 = sbr.rel (%p1031) target = $region60
      $region59: #{transformer_x_forward.15} parent=55 // pred_region
        _
      $region60: #{transformer_x_forward.15} parent=55 // pred_fallthru
        _
    $region56: #{transformer_x_forward.15} parent=5 // pred_fallthru
      _
    %p1034 = scmp.le.s32.totalorder 2, %s15
    // Predicated region
    $region61: #{transformer_x_forward.15} parent=5 // pred_check
      %p1035 = pneg %p1034
    $region62: #{transformer_x_forward.15} parent=5 // pred_check_branch
      %1037 = sbr.rel (%p1035) target = $region64
    $region63: #{transformer_x_forward.15} parent=5 // pred_region
      %s1038 = ssub.s32 %s15, 2
      // Predicated region
      $region65: #{transformer_x_forward.15} parent=63 // pred_check
        %p1039 = pneg %p238
      $region66: #{transformer_x_forward.15} parent=63 // pred_check_branch
        %1041 = sbr.rel (%p1039) target = $region68
      $region67: #{transformer_x_forward.15} parent=63 // pred_region
        %p1042 = scmp.lt.s32.totalorder %s21, 1
        %s1043 = scalar_select %p1042, %s21, 1
        %s1044 = smul.addr %s1043, 8
        %s1045 = scalar_lea.vmem %s9, %s1044
      $region68: #{transformer_x_forward.15} parent=63 // pred_fallthru
        _
    $region64: #{transformer_x_forward.15} parent=5 // pred_fallthru
      _
  $region6: #{transformer_x_forward.15} parent=0 // loop_footer
    %s19 = sadd.s32 1, %s15
  $region7: #{transformer_x_forward.15} parent=0 // loop_footer_branch
    %14 = sbr.rel target = $region3
  $region8: #{transformer_x_forward.15} parent=0 // loop_exit
    _

// kernel: transformer_x_forward.14
$region0: #{transformer_x_forward.14}
  #allocation0 [shape = 'u32[]', space=smem, size = 0x4, offset = 0x4, fixed_abs, tag = 'smem constant byte address 0x4 - core index']
  #allocation1 [shape = 'u32[144,128]{1,0:T(1,128)}', space=vmem, size = 0x12000, scoped, tag = 'internal scratch']
  #allocation2 [shape = 'f32[16,128]{1,0:T(8,128)}', space=vmem, size = 0x2000, scoped, tag = 'scratch operand']
  #allocation3 [shape = 'f32[2,32]{1,0:T(2,128)}', space=vmem, size = 0x400, scoped, tag = 'scratch operand']
  #allocation4 [shape = 'f32[2,32]{1,0:T(2,128)}', space=vmem, size = 0x400, scoped, tag = 'scratch operand']
  %s0 = inlined_call_operand.vmem [shape: bf16[16,16], index: 0, kind: input, shape index: {}]
  %s1 = inlined_call_operand.vmem [shape: bf16[16,128], index: 1, kind: input, shape index: {}]
  %s2 = inlined_call_operand.vmem [shape: bf16[32,128], index: 2, kind: input, shape index: {}]
  %s3 = inlined_call_operand.vmem [shape: f32[1,128], index: 3, kind: input, shape index: {}]
  %s4 = inlined_call_operand.vmem [shape: f32[16,32], index: 4, kind: output, shape index: {}]
  %s5 = sld [smem:[#allocation0]]
  $region33: #{transformer_x_forward.14} parent=0
    _
  %s7 = ssub.s32 1, %s5
  %s8 = scalar_select 0, %s7, %s5
  // Predicated region
  $region2: #{transformer_x_forward.14} parent=0 // pred_check
    _
  $region3: #{transformer_x_forward.14} parent=0 // pred_check_branch
    %10 = sbr.rel (0) target = $region5
  $region4: #{transformer_x_forward.14} parent=0 // pred_region
    _
  $region5: #{transformer_x_forward.14} parent=0 // pred_fallthru
    _
  // Predicated region
  $region6: #{transformer_x_forward.14} parent=0 // pred_check
    _
  $region7: #{transformer_x_forward.14} parent=0 // pred_check_branch
    %12 = sbr.rel (0) target = $region9
  $region8: #{transformer_x_forward.14} parent=0 // pred_region
    _
  $region9: #{transformer_x_forward.14} parent=0 // pred_fallthru
    _
  // Predicated region
  $region10: #{transformer_x_forward.14} parent=0 // pred_check
    _
  $region11: #{transformer_x_forward.14} parent=0 // pred_check_branch
    %14 = sbr.rel (0) target = $region13
  $region12: #{transformer_x_forward.14} parent=0 // pred_region
    _
  $region13: #{transformer_x_forward.14} parent=0 // pred_fallthru
    _
  // Predicated region
  $region14: #{transformer_x_forward.14} parent=0 // pred_check
    _
  $region15: #{transformer_x_forward.14} parent=0 // pred_check_branch
    %16 = sbr.rel (0) target = $region17
  $region16: #{transformer_x_forward.14} parent=0 // pred_region
    _
  $region17: #{transformer_x_forward.14} parent=0 // pred_fallthru
    _
  %v18 = vld [vmem:[%s0] sm:$0xf]
  %v19 = vld [vmem:[%s0 + $0x4] sm:$0xf]
  %v20 = vld [vmem:[%s1] sm:$0xf]
  %v21 = vld [vmem:[%s1 + $0x4] sm:$0xf]
  %v22 = vld [vmem:[%s3] sm:$0x1]
  %v24 = vlaneseq
  %v25 = vshrl.u32 %v24, 7
  %v26 = vsub.s32 0, %v25
  %v27 = vrot.slane %v22, %v26
  %v31 = vunpack.c.l.b16 %v18
  %v32 = vunpack.c.l.b16 %v19
  %v33 = vpack.c.b16 %v32, %v31
  %v36 = vunpack.c.l.b16 %v20
  %v37 = vunpack.c.l.b16 %v21
  %v38 = vpack.c.b16 %v37, %v36
  %vm40 = vcmask 130048
  %v42 = vsel %vm40, %v33, 0
  %44 = vmatprep.subr.bf16.mxu0 0
  %45 = vmatpush1.bf16.msra.mxu0 %v38
  %46 = vmatprep.subr.bf16.mxu0 0
  %47 = vmatpush1.bf16.msra.mxu0 0
  %48 = vmatprep.subr.bf16.mxu0 0
  %49 = vmatpush1.bf16.msra.mxu0 0
  %50 = vmatprep.subr.bf16.mxu0 0
  %51 = vmatpush1.bf16.msra.mxu0 0
  %52 = vmatprep.subr.bf16.mxu0 0
  %53 = vmatpush1.bf16.msra.mxu0 0
  %54 = vmatprep.subr.bf16.mxu0 0
  %55 = vmatpush1.bf16.msra.mxu0 0
  %56 = vmatprep.subr.bf16.mxu0 0
  %57 = vmatpush1.bf16.msra.mxu0 0
  %58 = vmatprep.subr.bf16.mxu0 0
  %59 = vmatpush1.bf16.msra.mxu0 0
  %60 = vmatprep.subr.bf16.mxu0 0
  %61 = vmatpush1.bf16.msra.mxu0 0
  %62 = vmatprep.subr.bf16.mxu0 0
  %63 = vmatpush1.bf16.msra.mxu0 0
  %64 = vmatprep.subr.bf16.mxu0 0
  %65 = vmatpush1.bf16.msra.mxu0 0
  %66 = vmatprep.subr.bf16.mxu0 0
  %67 = vmatpush1.bf16.msra.mxu0 0
  %68 = vmatprep.subr.bf16.mxu0 0
  %69 = vmatpush1.bf16.msra.mxu0 0
  %70 = vmatprep.subr.bf16.mxu0 0
  %71 = vmatpush1.bf16.msra.mxu0 0
  %72 = vmatprep.subr.bf16.mxu0 0
  %73 = vmatpush1.bf16.msra.mxu0 0
  %74 = vmatprep.subr.bf16.mxu0 0
  %75 = vmatpush1.bf16.msra.mxu0 0
  %76 = vmatprep.mubr.bf16.mxu0 0
  %77 = vmatmul.mubr.bf16.gmra.mrb[0].mxu0 %v42
  %v78 = vpop.f32.mrb[0].mxu0
  %v79 = vadd.f32 %v27, %v78
  %v80 = vpop.f32.mrb[0].mxu0
  %v81 = vpop.f32.mrb[0].mxu0
  %v82 = vadd.f32 %v27, %v81
  %v83 = vpop.f32.mrb[0].mxu0
  %84 = vdwg.mxu0
  %85 = vst [vmem:[#allocation2] sm:$0xff] %v79
  %86 = vst [vmem:[#allocation2 + $0x8] sm:$0xff] %v82
  %vm87 = vcmask 254976
  %88 = vst.msk [vmem:[#allocation3] sm:$0x3] %vm87, 0.0
  %89 = vst.msk [vmem:[#allocation4] sm:$0x3] %vm87, 0.0
  %v90 = vld [vmem:[%s2] sm:$0xf]
  %v91 = vld [vmem:[%s2 + $0x4] sm:$0xf]
  %v92 = vld [vmem:[%s2 + $0x8] sm:$0xf]
  %v93 = vld [vmem:[%s2 + $0xc] sm:$0xf]
  loop: start=0, step=1, limit=8
  $region18: #{transformer_x_forward.14} parent=0 // loop_pre_header
    _
  $region19: #{transformer_x_forward.14} parent=0 // loop_header
    %s95 = sphi 0, %s99
    %p96 = scmp.ge.s32.totalorder %s95, 8
  $region20: #{transformer_x_forward.14} parent=0 // loop_header_branch
    %98 = sbr.rel (%p96) target = $region24
  $region21: #{transformer_x_forward.14} parent=0 // loop_body
    %s100 = smul.u32 %s95, 2
    %s101 = scalar_lea.vmem [#allocation2], %s100
    %v102 = vld [vmem:[%s101] sm:$0x3]
    %v103 = vld [vmem:[#allocation3] sm:$0x3]
    %v104 = vpack.c.bf16 %v103, %v103
    %v109 = vunpack.c.l.b16 %v90
    %v110 = vunpack.c.l.b16 %v91
    %v111 = vunpack.c.l.b16 %v92
    %v112 = vunpack.c.l.b16 %v93
    %v113 = vpack.c.b16 %v110, %v109
    %v114 = vpack.c.b16 %v112, %v111
    %vm117 = vcmask 261120
    %v119 = vsel %vm117, %v104, 0
    %121 = vmatprep.subr.bf16.mxu0 0
    %122 = vmatpush1.bf16.msra.mxu0 %v113
    %123 = vmatprep.subr.bf16.mxu0 0
    %124 = vmatpush1.bf16.msra.mxu0 %v114
    %125 = vmatprep.subr.bf16.mxu0 0
    %126 = vmatpush1.bf16.msra.mxu0 0
    %127 = vmatprep.subr.bf16.mxu0 0
    %128 = vmatpush1.bf16.msra.mxu0 0
    %129 = vmatprep.subr.bf16.mxu0 0
    %130 = vmatpush1.bf16.msra.mxu0 0
    %131 = vmatprep.subr.bf16.mxu0 0
    %132 = vmatpush1.bf16.msra.mxu0 0
    %133 = vmatprep.subr.bf16.mxu0 0
    %134 = vmatpush1.bf16.msra.mxu0 0
    %135 = vmatprep.subr.bf16.mxu0 0
    %136 = vmatpush1.bf16.msra.mxu0 0
    %137 = vmatprep.subr.bf16.mxu0 0
    %138 = vmatpush1.bf16.msra.mxu0 0
    %139 = vmatprep.subr.bf16.mxu0 0
    %140 = vmatpush1.bf16.msra.mxu0 0
    %141 = vmatprep.subr.bf16.mxu0 0
    %142 = vmatpush1.bf16.msra.mxu0 0
    %143 = vmatprep.subr.bf16.mxu0 0
    %144 = vmatpush1.bf16.msra.mxu0 0
    %145 = vmatprep.subr.bf16.mxu0 0
    %146 = vmatpush1.bf16.msra.mxu0 0
    %147 = vmatprep.subr.bf16.mxu0 0
    %148 = vmatpush1.bf16.msra.mxu0 0
    %149 = vmatprep.subr.bf16.mxu0 0
    %150 = vmatpush1.bf16.msra.mxu0 0
    %151 = vmatprep.subr.bf16.mxu0 0
    %152 = vmatpush1.bf16.msra.mxu0 0
    %153 = vmatprep.mubr.bf16.mxu0 0
    %154 = vmatmul.mubr.bf16.gmra.mrb[0].mxu0 %v119
    %v155 = vpop.f32.mrb[0].mxu0
    %v156 = vadd.f32 0.0, %v155
    %v157 = vpop.f32.mrb[0].mxu0
    %v158 = vpop.f32.mrb[0].mxu0
    %v159 = vpop.f32.mrb[0].mxu0
    %160 = vdwg.mxu0
    %v161 = vadd.f32 %v102, %v156
    %v162 = vld [vmem:[#allocation4] sm:$0x3]
    %v163 = vxor.u32 %v161, 2147483648
    %v164 = vmul.f32 %v163, 1.442695
    %v165 = vpow.pop %v164
    %v166 = vadd.f32 %v165, 1.0
    %v167 = vrcp.pop %v166
    %v168 = vmul.f32 1.0, %v167
    %v169 = vtanh.pop %v161
    %171 = vrot.lane.b32.xlu0 %v162, 32
    %v172 = vpop.permute.xlu0 %171
    %v174 = vmul.f32 %v168, %v172
    %176 = vrot.lane.b32.xlu0 %v169, 64
    %v177 = vpop.permute.xlu0 %176
    %v179 = vmul.f32 %v168, %v177
    %181 = vrot.lane.b32.xlu0 %v179, 32
    %v182 = vpop.permute.xlu0 %181
    %v184 = vadd.f32 %v174, %v182
    %v185 = vtanh.pop %v184
    %187 = vrot.lane.b32.xlu0 %v185, 64
    %v188 = vpop.permute.xlu0 %187
    %v190 = vmul.f32 %v168, %v188
    %192 = vrot.lane.b32.xlu0 %v190, 32
    %v193 = vpop.permute.xlu0 %192
    %195 = vst.msk [vmem:[#allocation3] sm:$0x3] %vm87, %v193
    %197 = vrot.lane.b32.xlu0 %v184, 96
    %v198 = vpop.permute.xlu0 %197
    %200 = vst.msk [vmem:[#allocation4] sm:$0x3] %vm87, %v198
    %s201 = scalar_lea.vmem %s4, %s100
    %202 = vst.msk [vmem:[%s201] sm:$0x3] %vm87, %v193
  $region22: #{transformer_x_forward.14} parent=0 // loop_footer
    %s99 = sadd.s32 1, %s95
  $region23: #{transformer_x_forward.14} parent=0 // loop_footer_branch
    %94 = sbr.rel target = $region19
  $region24: #{transformer_x_forward.14} parent=0 // loop_exit
    _
  // Predicated region
  $region25: #{transformer_x_forward.14} parent=0 // pred_check
    _
  $region26: #{transformer_x_forward.14} parent=0 // pred_check_branch
    %204 = sbr.rel (0) target = $region28
  $region27: #{transformer_x_forward.14} parent=0 // pred_region
    _
  $region28: #{transformer_x_forward.14} parent=0 // pred_fallthru
    _
  // Predicated region
  $region29: #{transformer_x_forward.14} parent=0 // pred_check
    _
  $region30: #{transformer_x_forward.14} parent=0 // pred_check_branch
    %206 = sbr.rel (0) target = $region32
  $region31: #{transformer_x_forward.14} parent=0 // pred_region
    _
  $region32: #{transformer_x_forward.14} parent=0 // pred_fallthru
    _

// kernel: transformer_x_forward.19
$region0: #{transformer_x_forward.19}
  #allocation0 [shape = 'u32[]', space=smem, size = 0x4, offset = 0x4, fixed_abs, tag = 'smem constant byte address 0x4 - core index']
  #allocation1 [shape = 'u32[144,128]{1,0:T(1,128)}', space=vmem, size = 0x12000, scoped, tag = 'internal scratch']
  #allocation2 [shape = 'f32[8,32]{1,0:T(8,128)}', space=vmem, size = 0x1000, scoped, tag = 'scratch operand']
  %s0 = inlined_call_operand.vmem [shape: f32[2,8,32], index: 0, kind: input, shape index: {}]
  %s1 = inlined_call_operand.vmem [shape: bf16[32,32], index: 1, kind: input, shape index: {}]
  %s2 = inlined_call_operand.vmem [shape: f32[1,32], index: 2, kind: input, shape index: {}]
  %s3 = inlined_call_operand.vmem [shape: bf16[32,64], index: 3, kind: input, shape index: {}]
  %s4 = inlined_call_operand.vmem [shape: f32[1,64], index: 4, kind: input, shape index: {}]
  %s5 = inlined_call_operand.vmem [shape: bf16[32,32], index: 5, kind: input, shape index: {}]
  %s6 = inlined_call_operand.vmem [shape: f32[1,32], index: 6, kind: input, shape index: {}]
  %s7 = inlined_call_operand.vmem [shape: f32[1,32], index: 7, kind: input, shape index: {}]
  %s8 = inlined_call_operand.vmem [shape: f32[1,32], index: 8, kind: input, shape index: {}]
  %s9 = inlined_call_operand.vmem [shape: f32[2,8,32], index: 9, kind: output, shape index: {}]
  %s10 = sld [smem:[#allocation0]]
  $region69: #{transformer_x_forward.19} parent=0
    _
  %s12 = ssub.s32 1, %s10
  %s13 = scalar_select 0, %s12, %s10
  loop: start=0, step=1, limit=4
  $region2: #{transformer_x_forward.19} parent=0 // loop_pre_header
    _
  $region3: #{transformer_x_forward.19} parent=0 // loop_header
    %s15 = sphi 0, %s19
    %p16 = scmp.ge.s32.totalorder %s15, 4
    %s25 = sphi 0, %s27
    %s28 = sphi 0, %s25
    %s29 = sphi 0, %s28
    %s45 = sphi 0, %s29
    %s49 = sphi 0, %s49
    %s51 = sphi 0, %s49
    %s52 = sphi 0, %s51
    %s66 = sphi 0, %s52
    %s70 = sphi 0, %s70
    %s72 = sphi 0, %s70
    %s73 = sphi 0, %s72
    %s87 = sphi 0, %s73
    %s91 = sphi 0, %s91
    %s93 = sphi 0, %s91
    %s94 = sphi 0, %s93
    %s108 = sphi 0, %s94
    %s112 = sphi 0, %s112
    %s114 = sphi 0, %s112
    %s115 = sphi 0, %s114
    %s129 = sphi 0, %s115
    %s133 = sphi 0, %s133
    %s135 = sphi 0, %s133
    %s136 = sphi 0, %s135
    %s150 = sphi 0, %s136
    %s154 = sphi 0, %s154
    %s156 = sphi 0, %s154
    %s157 = sphi 0, %s156
    %s171 = sphi 0, %s157
    %s175 = sphi 0, %s175
    %s177 = sphi 0, %s175
    %s178 = sphi 0, %s177
    %s192 = sphi 0, %s178
    %s196 = sphi 0, %s196
    %s198 = sphi 0, %s196
    %s199 = sphi 0, %s198
    %s213 = sphi 0, %s199
    %s219 = sphi 0, %s221
    %s222 = sphi 0, %s219
    %s223 = sphi 0, %s222
    %s239 = sphi 0, %s223
  $region4: #{transformer_x_forward.19} parent=0 // loop_header_branch
    %18 = sbr.rel (%p16) target = $region8
  $region5: #{transformer_x_forward.19} parent=0 // loop_body
    %s20 = ssub.s32 %s15, 1
    %s21 = ssub.s32 %s15, 2
    %s22 = sadd.s32 %s15, 1
    %s23 = ssub.s32 %s15, %s22
    %p24 = scmp.eq.s32.totalorder %s23, 0
    %s26 = sadd.s32 %s25, 1
    %s27 = scalar_select %p24, %s25, %s26
    %p30 = pneg %p24
    %p31 = scmp.eq.s32.totalorder %s15, 1
    %p32 = por %p30, %p31
    %p33 = scmp.ne.s32.totalorder %s25, %s28
    %p34 = scmp.eq.s32.totalorder %s15, 0
    %p35 = por %p33, %p34
    %p36 = scmp.ne.s32.totalorder %s25, %s28
    %p37 = scmp.eq.s32.totalorder %s20, 1
    %p38 = por %p36, %p37
    %p39 = scmp.ne.s32.totalorder %s28, %s29
    %p40 = scmp.eq.s32.totalorder %s20, 0
    %p41 = por %p39, %p40
    %p42 = scmp.ne.s32.totalorder %s28, %s29
    %p43 = scmp.eq.s32.totalorder %s21, 1
    %p44 = por %p42, %p43
    %p46 = scmp.ne.s32.totalorder %s29, %s45
    %p47 = scmp.eq.s32.totalorder %s21, 0
    %p48 = por %p46, %p47
    %s50 = sadd.s32 %s49, 1
    %p53 = scmp.eq.s32.totalorder %s15, 1
    %p54 = scmp.ne.s32.totalorder %s49, %s51
    %p55 = scmp.eq.s32.totalorder %s15, 0
    %p56 = por %p54, %p55
    %p57 = scmp.ne.s32.totalorder %s49, %s51
    %p58 = scmp.eq.s32.totalorder %s20, 1
    %p59 = por %p57, %p58
    %p60 = scmp.ne.s32.totalorder %s51, %s52
    %p61 = scmp.eq.s32.totalorder %s20, 0
    %p62 = por %p60, %p61
    %p63 = scmp.ne.s32.totalorder %s51, %s52
    %p64 = scmp.eq.s32.totalorder %s21, 1
    %p65 = por %p63, %p64
    %p67 = scmp.ne.s32.totalorder %s52, %s66
    %p68 = scmp.eq.s32.totalorder %s21, 0
    %p69 = por %p67, %p68
    %s71 = sadd.s32 %s70, 1
    %p74 = scmp.eq.s32.totalorder %s15, 1
    %p75 = scmp.ne.s32.totalorder %s70, %s72
    %p76 = scmp.eq.s32.totalorder %s15, 0
    %p77 = por %p75, %p76
    %p78 = scmp.ne.s32.totalorder %s70, %s72
    %p79 = scmp.eq.s32.totalorder %s20, 1
    %p80 = por %p78, %p79
    %p81 = scmp.ne.s32.totalorder %s72, %s73
    %p82 = scmp.eq.s32.totalorder %s20, 0
    %p83 = por %p81, %p82
    %p84 = scmp.ne.s32.totalorder %s72, %s73
    %p85 = scmp.eq.s32.totalorder %s21, 1
    %p86 = por %p84, %p85
    %p88 = scmp.ne.s32.totalorder %s73, %s87
    %p89 = scmp.eq.s32.totalorder %s21, 0
    %p90 = por %p88, %p89
    %s92 = sadd.s32 %s91, 1
    %p95 = scmp.eq.s32.totalorder %s15, 1
    %p96 = scmp.ne.s32.totalorder %s91, %s93
    %p97 = scmp.eq.s32.totalorder %s15, 0
    %p98 = por %p96, %p97
    %p99 = scmp.ne.s32.totalorder %s91, %s93
    %p100 = scmp.eq.s32.totalorder %s20, 1
    %p101 = por %p99, %p100
    %p102 = scmp.ne.s32.totalorder %s93, %s94
    %p103 = scmp.eq.s32.totalorder %s20, 0
    %p104 = por %p102, %p103
    %p105 = scmp.ne.s32.totalorder %s93, %s94
    %p106 = scmp.eq.s32.totalorder %s21, 1
    %p107 = por %p105, %p106
    %p109 = scmp.ne.s32.totalorder %s94, %s108
    %p110 = scmp.eq.s32.totalorder %s21, 0
    %p111 = por %p109, %p110
    %s113 = sadd.s32 %s112, 1
    %p116 = scmp.eq.s32.totalorder %s15, 1
    %p117 = scmp.ne.s32.totalorder %s112, %s114
    %p118 = scmp.eq.s32.totalorder %s15, 0
    %p119 = por %p117, %p118
    %p120 = scmp.ne.s32.totalorder %s112, %s114
    %p121 = scmp.eq.s32.totalorder %s20, 1
    %p122 = por %p120, %p121
    %p123 = scmp.ne.s32.totalorder %s114, %s115
    %p124 = scmp.eq.s32.totalorder %s20, 0
    %p125 = por %p123, %p124
    %p126 = scmp.ne.s32.totalorder %s114, %s115
    %p127 = scmp.eq.s32.totalorder %s21, 1
    %p128 = por %p126, %p127
    %p130 = scmp.ne.s32.totalorder %s115, %s129
    %p131 = scmp.eq.s32.totalorder %s21, 0
    %p132 = por %p130, %p131
    %s134 = sadd.s32 %s133, 1
    %p137 = scmp.eq.s32.totalorder %s15, 1
    %p138 = scmp.ne.s32.totalorder %s133, %s135
    %p139 = scmp.eq.s32.totalorder %s15, 0
    %p140 = por %p138, %p139
    %p141 = scmp.ne.s32.totalorder %s133, %s135
    %p142 = scmp.eq.s32.totalorder %s20, 1
    %p143 = por %p141, %p142
    %p144 = scmp.ne.s32.totalorder %s135, %s136
    %p145 = scmp.eq.s32.totalorder %s20, 0
    %p146 = por %p144, %p145
    %p147 = scmp.ne.s32.totalorder %s135, %s136
    %p148 = scmp.eq.s32.totalorder %s21, 1
    %p149 = por %p147, %p148
    %p151 = scmp.ne.s32.totalorder %s136, %s150
    %p152 = scmp.eq.s32.totalorder %s21, 0
    %p153 = por %p151, %p152
    %s155 = sadd.s32 %s154, 1
    %p158 = scmp.eq.s32.totalorder %s15, 1
    %p159 = scmp.ne.s32.totalorder %s154, %s156
    %p160 = scmp.eq.s32.totalorder %s15, 0
    %p161 = por %p159, %p160
    %p162 = scmp.ne.s32.totalorder %s154, %s156
    %p163 = scmp.eq.s32.totalorder %s20, 1
    %p164 = por %p162, %p163
    %p165 = scmp.ne.s32.totalorder %s156, %s157
    %p166 = scmp.eq.s32.totalorder %s20, 0
    %p167 = por %p165, %p166
    %p168 = scmp.ne.s32.totalorder %s156, %s157
    %p169 = scmp.eq.s32.totalorder %s21, 1
    %p170 = por %p168, %p169
    %p172 = scmp.ne.s32.totalorder %s157, %s171
    %p173 = scmp.eq.s32.totalorder %s21, 0
    %p174 = por %p172, %p173
    %s176 = sadd.s32 %s175, 1
    %p179 = scmp.eq.s32.totalorder %s15, 1
    %p180 = scmp.ne.s32.totalorder %s175, %s177
    %p181 = scmp.eq.s32.totalorder %s15, 0
    %p182 = por %p180, %p181
    %p183 = scmp.ne.s32.totalorder %s175, %s177
    %p184 = scmp.eq.s32.totalorder %s20, 1
    %p185 = por %p183, %p184
    %p186 = scmp.ne.s32.totalorder %s177, %s178
    %p187 = scmp.eq.s32.totalorder %s20, 0
    %p188 = por %p186, %p187
    %p189 = scmp.ne.s32.totalorder %s177, %s178
    %p190 = scmp.eq.s32.totalorder %s21, 1
    %p191 = por %p189, %p190
    %p193 = scmp.ne.s32.totalorder %s178, %s192
    %p194 = scmp.eq.s32.totalorder %s21, 0
    %p195 = por %p193, %p194
    %s197 = sadd.s32 %s196, 1
    %p200 = scmp.eq.s32.totalorder %s15, 1
    %p201 = scmp.ne.s32.totalorder %s196, %s198
    %p202 = scmp.eq.s32.totalorder %s15, 0
    %p203 = por %p201, %p202
    %p204 = scmp.ne.s32.totalorder %s196, %s198
    %p205 = scmp.eq.s32.totalorder %s20, 1
    %p206 = por %p204, %p205
    %p207 = scmp.ne.s32.totalorder %s198, %s199
    %p208 = scmp.eq.s32.totalorder %s20, 0
    %p209 = por %p207, %p208
    %p210 = scmp.ne.s32.totalorder %s198, %s199
    %p211 = scmp.eq.s32.totalorder %s21, 1
    %p212 = por %p210, %p211
    %p214 = scmp.ne.s32.totalorder %s199, %s213
    %p215 = scmp.eq.s32.totalorder %s21, 0
    %p216 = por %p214, %p215
    %s217 = ssub.s32 %s15, %s22
    %p218 = scmp.eq.s32.totalorder %s217, 0
    %s220 = sadd.s32 %s219, 1
    %s221 = scalar_select %p218, %s219, %s220
    %p224 = pneg %p218
    %p225 = scmp.eq.s32.totalorder %s15, 1
    %p226 = por %p224, %p225
    %p227 = scmp.ne.s32.totalorder %s219, %s222
    %p228 = scmp.eq.s32.totalorder %s15, 0
    %p229 = por %p227, %p228
    %p230 = scmp.ne.s32.totalorder %s219, %s222
    %p231 = scmp.eq.s32.totalorder %s20, 1
    %p232 = por %p230, %p231
    %p233 = scmp.ne.s32.totalorder %s222, %s223
    %p234 = scmp.eq.s32.totalorder %s20, 0
    %p235 = por %p233, %p234
    %p236 = scmp.ne.s32.totalorder %s222, %s223
    %p237 = scmp.eq.s32.totalorder %s21, 1
    %p238 = por %p236, %p237
    %p240 = scmp.ne.s32.totalorder %s223, %s239
    %p241 = scmp.eq.s32.totalorder %s21, 0
    %p242 = por %p240, %p241
    %p243 = scmp.le.s32.totalorder 1, %s15
    %p244 = scmp.lt.s32.totalorder %s15, 3
    %p245 = pnand %p243, %p244
    %p246 = pneg %p245
    // Predicated region
    $region9: #{transformer_x_forward.19} parent=5 // pred_check
      _
    $region10: #{transformer_x_forward.19} parent=5 // pred_check_branch
      %248 = sbr.rel (%p245) target = $region12
    $region11: #{transformer_x_forward.19} parent=5 // pred_region
      %s249 = ssub.s32 %s15, 1
      // Predicated region
      $region13: #{transformer_x_forward.19} parent=11 // pred_check
        %p250 = pneg %p62
      $region14: #{transformer_x_forward.19} parent=11 // pred_check_branch
        %252 = sbr.rel (%p250) target = $region16
      $region15: #{transformer_x_forward.19} parent=11 // pred_region
        _
      $region16: #{transformer_x_forward.19} parent=11 // pred_fallthru
        _
      // Predicated region
      $region17: #{transformer_x_forward.19} parent=11 // pred_check
        %p253 = pneg %p83
      $region18: #{transformer_x_forward.19} parent=11 // pred_check_branch
        %255 = sbr.rel (%p253) target = $region20
      $region19: #{transformer_x_forward.19} parent=11 // pred_region
        _
      $region20: #{transformer_x_forward.19} parent=11 // pred_fallthru
        _
      // Predicated region
      $region21: #{transformer_x_forward.19} parent=11 // pred_check
        %p256 = pneg %p104
      $region22: #{transformer_x_forward.19} parent=11 // pred_check_branch
        %258 = sbr.rel (%p256) target = $region24
      $region23: #{transformer_x_forward.19} parent=11 // pred_region
        _
      $region24: #{transformer_x_forward.19} parent=11 // pred_fallthru
        _
      // Predicated region
      $region25: #{transformer_x_forward.19} parent=11 // pred_check
        %p259 = pneg %p125
      $region26: #{transformer_x_forward.19} parent=11 // pred_check_branch
        %261 = sbr.rel (%p259) target = $region28
      $region27: #{transformer_x_forward.19} parent=11 // pred_region
        _
      $region28: #{transformer_x_forward.19} parent=11 // pred_fallthru
        _
      // Predicated region
      $region29: #{transformer_x_forward.19} parent=11 // pred_check
        %p262 = pneg %p146
      $region30: #{transformer_x_forward.19} parent=11 // pred_check_branch
        %264 = sbr.rel (%p262) target = $region32
      $region31: #{transformer_x_forward.19} parent=11 // pred_region
        _
      $region32: #{transformer_x_forward.19} parent=11 // pred_fallthru
        _
      // Predicated region
      $region33: #{transformer_x_forward.19} parent=11 // pred_check
        %p265 = pneg %p167
      $region34: #{transformer_x_forward.19} parent=11 // pred_check_branch
        %267 = sbr.rel (%p265) target = $region36
      $region35: #{transformer_x_forward.19} parent=11 // pred_region
        _
      $region36: #{transformer_x_forward.19} parent=11 // pred_fallthru
        _
      // Predicated region
      $region37: #{transformer_x_forward.19} parent=11 // pred_check
        %p268 = pneg %p188
      $region38: #{transformer_x_forward.19} parent=11 // pred_check_branch
        %270 = sbr.rel (%p268) target = $region40
      $region39: #{transformer_x_forward.19} parent=11 // pred_region
        _
      $region40: #{transformer_x_forward.19} parent=11 // pred_fallthru
        _
      // Predicated region
      $region41: #{transformer_x_forward.19} parent=11 // pred_check
        %p271 = pneg %p209
      $region42: #{transformer_x_forward.19} parent=11 // pred_check_branch
        %273 = sbr.rel (%p271) target = $region44
      $region43: #{transformer_x_forward.19} parent=11 // pred_region
        _
      $region44: #{transformer_x_forward.19} parent=11 // pred_fallthru
        _
    $region12: #{transformer_x_forward.19} parent=5 // pred_fallthru
      _
    %p274 = scmp.lt.s32.totalorder %s15, 2
    // Predicated region
    $region45: #{transformer_x_forward.19} parent=5 // pred_check
      %p275 = pneg %p274
    $region46: #{transformer_x_forward.19} parent=5 // pred_check_branch
      %277 = sbr.rel (%p275) target = $region48
    $region47: #{transformer_x_forward.19} parent=5 // pred_region
      // Predicated region
      $region49: #{transformer_x_forward.19} parent=47 // pred_check
        %p278 = pneg %p35
      $region50: #{transformer_x_forward.19} parent=47 // pred_check_branch
        %280 = sbr.rel (%p278) target = $region52
      $region51: #{transformer_x_forward.19} parent=47 // pred_region
        %p281 = scmp.lt.s32.totalorder %s15, 1
        %s282 = scalar_select %p281, %s15, 1
        %s283 = smul.addr %s282, 8
        %s284 = scalar_lea.vmem %s0, %s283
      $region52: #{transformer_x_forward.19} parent=47 // pred_fallthru
        _
    $region48: #{transformer_x_forward.19} parent=5 // pred_fallthru
      _
    %p285 = scmp.le.s32.totalorder 1, %s15
    %p286 = scmp.lt.s32.totalorder %s15, 3
    %p287 = pnand %p285, %p286
    %p288 = pneg %p287
    // Predicated region
    $region53: #{transformer_x_forward.19} parent=5 // pred_check
      _
    $region54: #{transformer_x_forward.19} parent=5 // pred_check_branch
      %290 = sbr.rel (%p287) target = $region56
    $region55: #{transformer_x_forward.19} parent=5 // pred_region
      %s291 = ssub.s32 %s15, 1
      %p292 = scmp.lt.s32.totalorder %s20, 1
      %s293 = scalar_select %p292, %s20, 1
      %s294 = smul.addr %s293, 8
      %s295 = scalar_lea.vmem %s0, %s294
      %p296 = pneg %p41
      %p297 = pneg %p38
      %p298 = pneg %p62
      %p299 = pneg %p59
      %p300 = pneg %p83
      %p301 = pneg %p80
      %p302 = pneg %p104
      %p303 = pneg %p101
      %p304 = pneg %p125
      %p305 = pneg %p122
      %p306 = pneg %p146
      %p307 = pneg %p143
      %p308 = pneg %p167
      %p309 = pneg %p164
      %p310 = pneg %p188
      %p311 = pneg %p185
      %p312 = pneg %p209
      %p313 = pneg %p206
      %p314 = pneg %p235
      %p315 = pneg %p232
      %p316 = scmp.lt.s32.totalorder %s20, 1
      %s317 = scalar_select %p316, %s20, 1
      %s318 = smul.addr %s317, 8
      %s319 = scalar_lea.vmem %s9, %s318
      %p320 = scmp.lt.s32.totalorder %s20, 1
      %s321 = scalar_select %p320, %s20, 1
      %s322 = smul.addr %s321, 8
      %s323 = scalar_lea.vmem %s0, %s322
      %p324 = scmp.lt.s32.totalorder %s20, 1
      %s325 = scalar_select %p324, %s20, 1
      %s326 = smul.addr %s325, 8
      %s327 = scalar_lea.vmem %s9, %s326
      %v329 = vld [vmem:[%s323] sm:$0xff]
      %v330 = vpack.c.bf16 %v329, %v329
      %v331 = vld [vmem:[%s1] sm:$0xf]
      %v332 = vld [vmem:[%s1 + $0x4] sm:$0xf]
      %v333 = vld [vmem:[%s1 + $0x8] sm:$0xf]
      %v334 = vld [vmem:[%s1 + $0xc] sm:$0xf]
      %v335 = vld [vmem:[%s2] sm:$0x1]
      %v337 = vlaneseq
      %v338 = vshrl.u32 %v337, 7
      %v339 = vsub.s32 0, %v338
      %v340 = vrot.slane %v335, %v339
      %v346 = vunpack.c.l.b16 %v331
      %v347 = vunpack.c.l.b16 %v332
      %v348 = vunpack.c.l.b16 %v333
      %v349 = vunpack.c.l.b16 %v334
      %v350 = vpack.c.b16 %v347, %v346
      %v351 = vpack.c.b16 %v349, %v348
      %vm354 = vcmask 261120
      %v356 = vsel %vm354, %v330, 0
      %358 = vmatprep.subr.bf16.mxu0 0
      %359 = vmatpush1.bf16.msra.mxu0 %v350
      %360 = vmatprep.subr.bf16.mxu0 0
      %361 = vmatpush1.bf16.msra.mxu0 %v351
      %362 = vmatprep.subr.bf16.mxu0 0
      %363 = vmatpush1.bf16.msra.mxu0 0
      %364 = vmatprep.subr.bf16.mxu0 0
      %365 = vmatpush1.bf16.msra.mxu0 0
      %366 = vmatprep.subr.bf16.mxu0 0
      %367 = vmatpush1.bf16.msra.mxu0 0
      %368 = vmatprep.subr.bf16.mxu0 0
      %369 = vmatpush1.bf16.msra.mxu0 0
      %370 = vmatprep.subr.bf16.mxu0 0
      %371 = vmatpush1.bf16.msra.mxu0 0
      %372 = vmatprep.subr.bf16.mxu0 0
      %373 = vmatpush1.bf16.msra.mxu0 0
      %374 = vmatprep.subr.bf16.mxu0 0
      %375 = vmatpush1.bf16.msra.mxu0 0
      %376 = vmatprep.subr.bf16.mxu0 0
      %377 = vmatpush1.bf16.msra.mxu0 0
      %378 = vmatprep.subr.bf16.mxu0 0
      %379 = vmatpush1.bf16.msra.mxu0 0
      %380 = vmatprep.subr.bf16.mxu0 0
      %381 = vmatpush1.bf16.msra.mxu0 0
      %382 = vmatprep.subr.bf16.mxu0 0
      %383 = vmatpush1.bf16.msra.mxu0 0
      %384 = vmatprep.subr.bf16.mxu0 0
      %385 = vmatpush1.bf16.msra.mxu0 0
      %386 = vmatprep.subr.bf16.mxu0 0
      %387 = vmatpush1.bf16.msra.mxu0 0
      %388 = vmatprep.subr.bf16.mxu0 0
      %389 = vmatpush1.bf16.msra.mxu0 0
      %390 = vmatprep.mubr.bf16.mxu0 0
      %391 = vmatmul.mubr.bf16.gmra.mrb[0].mxu0 %v356
      %v392 = vpop.f32.mrb[0].mxu0
      %v393 = vadd.f32 %v340, %v392
      %v394 = vpop.f32.mrb[0].mxu0
      %v395 = vpop.f32.mrb[0].mxu0
      %v396 = vpop.f32.mrb[0].mxu0
      %397 = vdwg.mxu0
      %v398 = vld [vmem:[%s3] sm:$0xf]
      %v399 = vld [vmem:[%s3 + $0x4] sm:$0xf]
      %v400 = vld [vmem:[%s3 + $0x8] sm:$0xf]
      %v401 = vld [vmem:[%s3 + $0xc] sm:$0xf]
      %v402 = vld [vmem:[%s4] sm:$0x1]
      %v404 = vlaneseq
      %v405 = vshrl.u32 %v404, 7
      %v406 = vsub.s32 0, %v405
      %v407 = vrot.slane %v402, %v406
      %v413 = vunpack.c.l.b16 %v398
      %v414 = vunpack.c.l.b16 %v399
      %v415 = vunpack.c.l.b16 %v400
      %v416 = vunpack.c.l.b16 %v401
      %v417 = vpack.c.b16 %v414, %v413
      %v418 = vpack.c.b16 %v416, %v415
      %421 = vmatprep.subr.bf16.mxu0 0
      %422 = vmatpush1.bf16.msra.mxu0 %v417
      %423 = vmatprep.subr.bf16.mxu0 0
      %424 = vmatpush1.bf16.msra.mxu0 %v418
      %425 = vmatprep.subr.bf16.mxu0 0
      %426 = vmatpush1.bf16.msra.mxu0 0
      %427 = vmatprep.subr.bf16.mxu0 0
      %428 = vmatpush1.bf16.msra.mxu0 0
      %429 = vmatprep.subr.bf16.mxu0 0
      %430 = vmatpush1.bf16.msra.mxu0 0
      %431 = vmatprep.subr.bf16.mxu0 0
      %432 = vmatpush1.bf16.msra.mxu0 0
      %433 = vmatprep.subr.bf16.mxu0 0
      %434 = vmatpush1.bf16.msra.mxu0 0
      %435 = vmatprep.subr.bf16.mxu0 0
      %436 = vmatpush1.bf16.msra.mxu0 0
      %437 = vmatprep.subr.bf16.mxu0 0
      %438 = vmatpush1.bf16.msra.mxu0 0
      %439 = vmatprep.subr.bf16.mxu0 0
      %440 = vmatpush1.bf16.msra.mxu0 0
      %441 = vmatprep.subr.bf16.mxu0 0
      %442 = vmatpush1.bf16.msra.mxu0 0
      %443 = vmatprep.subr.bf16.mxu0 0
      %444 = vmatpush1.bf16.msra.mxu0 0
      %445 = vmatprep.subr.bf16.mxu0 0
      %446 = vmatpush1.bf16.msra.mxu0 0
      %447 = vmatprep.subr.bf16.mxu0 0
      %448 = vmatpush1.bf16.msra.mxu0 0
      %449 = vmatprep.subr.bf16.mxu0 0
      %450 = vmatpush1.bf16.msra.mxu0 0
      %451 = vmatprep.subr.bf16.mxu0 0
      %452 = vmatpush1.bf16.msra.mxu0 0
      %453 = vmatprep.mubr.bf16.mxu0 0
      %454 = vmatmul.mubr.bf16.gmra.mrb[0].mxu0 %v356
      %v455 = vpop.f32.mrb[0].mxu0
      %v456 = vadd.f32 %v407, %v455
      %v457 = vpop.f32.mrb[0].mxu0
      %v458 = vpop.f32.mrb[0].mxu0
      %v459 = vpop.f32.mrb[0].mxu0
      %460 = vdwg.mxu0
      %v461 = vpack.c.bf16 %v393, %v393
      %v462 = vpack.c.bf16 %v456, %v456
      %v463 = vlaneseq
      %v464 = vshrl.u32 %v463, 7
      %v465 = vlaneseq
      %v466 = vand.u32 %v465, 127
      %vm467 = vcmp.gt.s32.totalorder %v466, %v464
      %v468 = vsel %vm467, -1e+09, 0.0
      %vm469 = vcmask 64512
      %v471 = vsel %vm469, %v461, 0
      %v474 = vsel %vm469, %v462, 0
      %476 = vmatprep.subr.bf16.mxu0 0
      %477 = vmatpush1.bf16.xpose.msra.mxu0 %v474
      %478 = vmatprep.subr.bf16.mxu0 0
      %479 = vmatpush1.bf16.xpose.msra.mxu0 0
      %480 = vmatprep.subr.bf16.mxu0 0
      %481 = vmatpush1.bf16.xpose.msra.mxu0 0
      %482 = vmatprep.subr.bf16.mxu0 0
      %483 = vmatpush1.bf16.xpose.msra.mxu0 0
      %484 = vmatprep.subr.bf16.mxu0 0
      %485 = vmatpush1.bf16.xpose.msra.mxu0 0
      %486 = vmatprep.subr.bf16.mxu0 0
      %487 = vmatpush1.bf16.xpose.msra.mxu0 0
      %488 = vmatprep.subr.bf16.mxu0 0
      %489 = vmatpush1.bf16.xpose.msra.mxu0 0
      %490 = vmatprep.subr.bf16.mxu0 0
      %491 = vmatpush1.bf16.xpose.msra.mxu0 0
      %492 = vmatprep.subr.bf16.mxu0 0
      %493 = vmatpush1.bf16.xpose.msra.mxu0 0
      %494 = vmatprep.subr.bf16.mxu0 0
      %495 = vmatpush1.bf16.xpose.msra.mxu0 0
      %496 = vmatprep.subr.bf16.mxu0 0
      %497 = vmatpush1.bf16.xpose.msra.mxu0 0
      %498 = vmatprep.subr.bf16.mxu0 0
      %499 = vmatpush1.bf16.xpose.msra.mxu0 0
      %500 = vmatprep.subr.bf16.mxu0 0
      %501 = vmatpush1.bf16.xpose.msra.mxu0 0
      %502 = vmatprep.subr.bf16.mxu0 0
      %503 = vmatpush1.bf16.xpose.msra.mxu0 0
      %504 = vmatprep.subr.bf16.mxu0 0
      %505 = vmatpush1.bf16.xpose.msra.mxu0 0
      %506 = vmatprep.subr.bf16.mxu0 0
      %507 = vmatpush1.bf16.xpose.msra.mxu0 0
      %508 = vmatprep.mubr.bf16.mxu0 0
      %509 = vmatmul.mubr.bf16.gmra.mrb[0].mxu0 %v471
      %v510 = vpop.f32.mrb[0].mxu0
      %v511 = vadd.f32 0.0, %v510
      %v512 = vpop.f32.mrb[0].mxu0
      %v513 = vpop.f32.mrb[0].mxu0
      %v514 = vpop.f32.mrb[0].mxu0
      %515 = vdwg.mxu0
      %v516 = vmul.f32 %v511, 0.35355338
      %v517 = vadd.f32 %v516, %v468
      %v518 = vsel %vm469, %v517, -inf
      %519 = vmax.xlane.f32.xlu0 %v518
      %v520 = vpop.xlane.xlu0 %519
      %v521 = vsub.f32 %v517, %v520
      %v522 = vmul.f32 %v521, 1.442695
      %v523 = vpow.pop %v522
      %v524 = vsel %vm469, %v523, 0.0
      %525 = vadd.xlane.f32.xlu0 %v524
      %v526 = vpop.xlane.xlu0 %525
      %v527 = vrcp.pop %v526
      %v528 = vmul.f32 %v523, %v527
      %v529 = vpack.c.bf16 %v528, %v528
      %531 = vrot.lane.b32.xlu0 %v462, 96
      %v532 = vpop.permute.xlu0 %531
      %v534 = vsel %vm469, %v529, 0
      %vm536 = vcmask 1043456
      %v538 = vsel %vm536, %v532, 0
      %540 = vmatprep.subr.bf16.mxu0 0
      %541 = vmatpush1.bf16.msra.mxu0 %v538
      %542 = vmatprep.subr.bf16.mxu0 0
      %543 = vmatpush1.bf16.msra.mxu0 0
      %544 = vmatprep.subr.bf16.mxu0 0
      %545 = vmatpush1.bf16.msra.mxu0 0
      %546 = vmatprep.subr.bf16.mxu0 0
      %547 = vmatpush1.bf16.msra.mxu0 0
      %548 = vmatprep.subr.bf16.mxu0 0
      %549 = vmatpush1.bf16.msra.mxu0 0
      %550 = vmatprep.subr.bf16.mxu0 0
      %551 = vmatpush1.bf16.msra.mxu0 0
      %552 = vmatprep.subr.bf16.mxu0 0
      %553 = vmatpush1.bf16.msra.mxu0 0
      %554 = vmatprep.subr.bf16.mxu0 0
      %555 = vmatpush1.bf16.msra.mxu0 0
      %556 = vmatprep.subr.bf16.mxu0 0
      %557 = vmatpush1.bf16.msra.mxu0 0
      %558 = vmatprep.subr.bf16.mxu0 0
      %559 = vmatpush1.bf16.msra.mxu0 0
      %560 = vmatprep.subr.bf16.mxu0 0
      %561 = vmatpush1.bf16.msra.mxu0 0
      %562 = vmatprep.subr.bf16.mxu0 0
      %563 = vmatpush1.bf16.msra.mxu0 0
      %564 = vmatprep.subr.bf16.mxu0 0
      %565 = vmatpush1.bf16.msra.mxu0 0
      %566 = vmatprep.subr.bf16.mxu0 0
      %567 = vmatpush1.bf16.msra.mxu0 0
      %568 = vmatprep.subr.bf16.mxu0 0
      %569 = vmatpush1.bf16.msra.mxu0 0
      %570 = vmatprep.subr.bf16.mxu0 0
      %571 = vmatpush1.bf16.msra.mxu0 0
      %572 = vmatprep.mubr.bf16.mxu0 0
      %573 = vmatmul.mubr.bf16.gmra.mrb[0].mxu0 %v534
      %v574 = vpop.f32.mrb[0].mxu0
      %v575 = vadd.f32 0.0, %v574
      %v576 = vpop.f32.mrb[0].mxu0
      %v577 = vpop.f32.mrb[0].mxu0
      %v578 = vpop.f32.mrb[0].mxu0
      %579 = vdwg.mxu0
      %580 = vst.msk [vmem:[#allocation2] sm:$0xff] %vm469, %v575
      %582 = vrot.lane.b32.xlu0 %v461, 120
      %v583 = vpop.permute.xlu0 %582
      %584 = vrot.lane.b32.xlu0 %v462, 120
      %v585 = vpop.permute.xlu0 %584
      %v587 = vsel %vm469, %v583, 0
      %v590 = vsel %vm469, %v585, 0
      %592 = vmatprep.subr.bf16.mxu0 0
      %593 = vmatpush1.bf16.xpose.msra.mxu0 %v590
      %594 = vmatprep.subr.bf16.mxu0 0
      %595 = vmatpush1.bf16.xpose.msra.mxu0 0
      %596 = vmatprep.subr.bf16.mxu0 0
      %597 = vmatpush1.bf16.xpose.msra.mxu0 0
      %598 = vmatprep.subr.bf16.mxu0 0
      %599 = vmatpush1.bf16.xpose.msra.mxu0 0
      %600 = vmatprep.subr.bf16.mxu0 0
      %601 = vmatpush1.bf16.xpose.msra.mxu0 0
      %602 = vmatprep.subr.bf16.mxu0 0
      %603 = vmatpush1.bf16.xpose.msra.mxu0 0
      %604 = vmatprep.subr.bf16.mxu0 0
      %605 = vmatpush1.bf16.xpose.msra.mxu0 0
      %606 = vmatprep.subr.bf16.mxu0 0
      %607 = vmatpush1.bf16.xpose.msra.mxu0 0
      %608 = vmatprep.subr.bf16.mxu0 0
      %609 = vmatpush1.bf16.xpose.msra.mxu0 0
      %610 = vmatprep.subr.bf16.mxu0 0
      %611 = vmatpush1.bf16.xpose.msra.mxu0 0
      %612 = vmatprep.subr.bf16.mxu0 0
      %613 = vmatpush1.bf16.xpose.msra.mxu0 0
      %614 = vmatprep.subr.bf16.mxu0 0
      %615 = vmatpush1.bf16.xpose.msra.mxu0 0
      %616 = vmatprep.subr.bf16.mxu0 0
      %617 = vmatpush1.bf16.xpose.msra.mxu0 0
      %618 = vmatprep.subr.bf16.mxu0 0
      %619 = vmatpush1.bf16.xpose.msra.mxu0 0
      %620 = vmatprep.subr.bf16.mxu0 0
      %621 = vmatpush1.bf16.xpose.msra.mxu0 0
      %622 = vmatprep.subr.bf16.mxu0 0
      %623 = vmatpush1.bf16.xpose.msra.mxu0 0
      %624 = vmatprep.mubr.bf16.mxu0 0
      %625 = vmatmul.mubr.bf16.gmra.mrb[0].mxu0 %v587
      %v626 = vpop.f32.mrb[0].mxu0
      %v627 = vadd.f32 0.0, %v626
      %v628 = vpop.f32.mrb[0].mxu0
      %v629 = vpop.f32.mrb[0].mxu0
      %v630 = vpop.f32.mrb[0].mxu0
      %631 = vdwg.mxu0
      %v632 = vmul.f32 %v627, 0.35355338
      %v633 = vadd.f32 %v632, %v468
      %v634 = vsel %vm469, %v633, -inf
      %635 = vmax.xlane.f32.xlu0 %v634
      %v636 = vpop.xlane.xlu0 %635
      %v637 = vsub.f32 %v633, %v636
      %v638 = vmul.f32 %v637, 1.442695
      %v639 = vpow.pop %v638
      %v640 = vsel %vm469, %v639, 0.0
      %641 = vadd.xlane.f32.xlu0 %v640
      %v642 = vpop.xlane.xlu0 %641
      %v643 = vrcp.pop %v642
      %v644 = vmul.f32 %v639, %v643
      %v645 = vpack.c.bf16 %v644, %v644
      %646 = vrot.lane.b32.xlu0 %v462, 88
      %v647 = vpop.permute.xlu0 %646
      %v649 = vsel %vm469, %v645, 0
      %v652 = vsel %vm536, %v647, 0
      %654 = vmatprep.subr.bf16.mxu0 0
      %655 = vmatpush1.bf16.msra.mxu0 %v652
      %656 = vmatprep.subr.bf16.mxu0 0
      %657 = vmatpush1.bf16.msra.mxu0 0
      %658 = vmatprep.subr.bf16.mxu0 0
      %659 = vmatpush1.bf16.msra.mxu0 0
      %660 = vmatprep.subr.bf16.mxu0 0
      %661 = vmatpush1.bf16.msra.mxu0 0
      %662 = vmatprep.subr.bf16.mxu0 0
      %663 = vmatpush1.bf16.msra.mxu0 0
      %664 = vmatprep.subr.bf16.mxu0 0
      %665 = vmatpush1.bf16.msra.mxu0 0
      %666 = vmatprep.subr.bf16.mxu0 0
      %667 = vmatpush1.bf16.msra.mxu0 0
      %668 = vmatprep.subr.bf16.mxu0 0
      %669 = vmatpush1.bf16.msra.mxu0 0
      %670 = vmatprep.subr.bf16.mxu0 0
      %671 = vmatpush1.bf16.msra.mxu0 0
      %672 = vmatprep.subr.bf16.mxu0 0
      %673 = vmatpush1.bf16.msra.mxu0 0
      %674 = vmatprep.subr.bf16.mxu0 0
      %675 = vmatpush1.bf16.msra.mxu0 0
      %676 = vmatprep.subr.bf16.mxu0 0
      %677 = vmatpush1.bf16.msra.mxu0 0
      %678 = vmatprep.subr.bf16.mxu0 0
      %679 = vmatpush1.bf16.msra.mxu0 0
      %680 = vmatprep.subr.bf16.mxu0 0
      %681 = vmatpush1.bf16.msra.mxu0 0
      %682 = vmatprep.subr.bf16.mxu0 0
      %683 = vmatpush1.bf16.msra.mxu0 0
      %684 = vmatprep.subr.bf16.mxu0 0
      %685 = vmatpush1.bf16.msra.mxu0 0
      %686 = vmatprep.mubr.bf16.mxu0 0
      %687 = vmatmul.mubr.bf16.gmra.mrb[0].mxu0 %v649
      %v688 = vpop.f32.mrb[0].mxu0
      %v689 = vadd.f32 0.0, %v688
      %v690 = vpop.f32.mrb[0].mxu0
      %v691 = vpop.f32.mrb[0].mxu0
      %v692 = vpop.f32.mrb[0].mxu0
      %693 = vdwg.mxu0
      %695 = vrot.lane.b32.xlu0 %v689, 8
      %v696 = vpop.permute.xlu0 %695
      %vm698 = vcmask 130112
      %699 = vst.msk [vmem:[#allocation2] sm:$0xff] %vm698, %v696
      %700 = vrot.lane.b32.xlu0 %v461, 112
      %v701 = vpop.permute.xlu0 %700
      %702 = vrot.lane.b32.xlu0 %v462, 112
      %v703 = vpop.permute.xlu0 %702
      %v705 = vsel %vm469, %v701, 0
      %v708 = vsel %vm469, %v703, 0
      %710 = vmatprep.subr.bf16.mxu0 0
      %711 = vmatpush1.bf16.xpose.msra.mxu0 %v708
      %712 = vmatprep.subr.bf16.mxu0 0
      %713 = vmatpush1.bf16.xpose.msra.mxu0 0
      %714 = vmatprep.subr.bf16.mxu0 0
      %715 = vmatpush1.bf16.xpose.msra.mxu0 0
      %716 = vmatprep.subr.bf16.mxu0 0
      %717 = vmatpush1.bf16.xpose.msra.mxu0 0
      %718 = vmatprep.subr.bf16.mxu0 0
      %719 = vmatpush1.bf16.xpose.msra.mxu0 0
      %720 = vmatprep.subr.bf16.mxu0 0
      %721 = vmatpush1.bf16.xpose.msra.mxu0 0
      %722 = vmatprep.subr.bf16.mxu0 0
      %723 = vmatpush1.bf16.xpose.msra.mxu0 0
      %724 = vmatprep.subr.bf16.mxu0 0
      %725 = vmatpush1.bf16.xpose.msra.mxu0 0
      %726 = vmatprep.subr.bf16.mxu0 0
      %727 = vmatpush1.bf16.xpose.msra.mxu0 0
      %728 = vmatprep.subr.bf16.mxu0 0
      %729 = vmatpush1.bf16.xpose.msra.mxu0 0
      %730 = vmatprep.subr.bf16.mxu0 0
      %731 = vmatpush1.bf16.xpose.msra.mxu0 0
      %732 = vmatprep.subr.bf16.mxu0 0
      %733 = vmatpush1.bf16.xpose.msra.mxu0 0
      %734 = vmatprep.subr.bf16.mxu0 0
      %735 = vmatpush1.bf16.xpose.msra.mxu0 0
      %736 = vmatprep.subr.bf16.mxu0 0
      %737 = vmatpush1.bf16.xpose.msra.mxu0 0
      %738 = vmatprep.subr.bf16.mxu0 0
      %739 = vmatpush1.bf16.xpose.msra.mxu0 0
      %740 = vmatprep.subr.bf16.mxu0 0
      %741 = vmatpush1.bf16.xpose.msra.mxu0 0
      %742 = vmatprep.mubr.bf16.mxu0 0
      %743 = vmatmul.mubr.bf16.gmra.mrb[0].mxu0 %v705
      %v744 = vpop.f32.mrb[0].mxu0
      %v745 = vadd.f32 0.0, %v744
      %v746 = vpop.f32.mrb[0].mxu0
      %v747 = vpop.f32.mrb[0].mxu0
      %v748 = vpop.f32.mrb[0].mxu0
      %749 = vdwg.mxu0
      %v750 = vmul.f32 %v745, 0.35355338
      %v751 = vadd.f32 %v750, %v468
      %v752 = vsel %vm469, %v751, -inf
      %753 = vmax.xlane.f32.xlu0 %v752
      %v754 = vpop.xlane.xlu0 %753
      %v755 = vsub.f32 %v751, %v754
      %v756 = vmul.f32 %v755, 1.442695
      %v757 = vpow.pop %v756
      %v758 = vsel %vm469, %v757, 0.0
      %759 = vadd.xlane.f32.xlu0 %v758
      %v760 = vpop.xlane.xlu0 %759
      %v761 = vrcp.pop %v760
      %v762 = vmul.f32 %v757, %v761
      %v763 = vpack.c.bf16 %v762, %v762
      %764 = vrot.lane.b32.xlu0 %v462, 80
      %v765 = vpop.permute.xlu0 %764
      %v767 = vsel %vm469, %v763, 0
      %v770 = vsel %vm536, %v765, 0
      %772 = vmatprep.subr.bf16.mxu0 0
      %773 = vmatpush1.bf16.msra.mxu0 %v770
      %774 = vmatprep.subr.bf16.mxu0 0
      %775 = vmatpush1.bf16.msra.mxu0 0
      %776 = vmatprep.subr.bf16.mxu0 0
      %777 = vmatpush1.bf16.msra.mxu0 0
      %778 = vmatprep.subr.bf16.mxu0 0
      %779 = vmatpush1.bf16.msra.mxu0 0
      %780 = vmatprep.subr.bf16.mxu0 0
      %781 = vmatpush1.bf16.msra.mxu0 0
      %782 = vmatprep.subr.bf16.mxu0 0
      %783 = vmatpush1.bf16.msra.mxu0 0
      %784 = vmatprep.subr.bf16.mxu0 0
      %785 = vmatpush1.bf16.msra.mxu0 0
      %786 = vmatprep.subr.bf16.mxu0 0
      %787 = vmatpush1.bf16.msra.mxu0 0
      %788 = vmatprep.subr.bf16.mxu0 0
      %789 = vmatpush1.bf16.msra.mxu0 0
      %790 = vmatprep.subr.bf16.mxu0 0
      %791 = vmatpush1.bf16.msra.mxu0 0
      %792 = vmatprep.subr.bf16.mxu0 0
      %793 = vmatpush1.bf16.msra.mxu0 0
      %794 = vmatprep.subr.bf16.mxu0 0
      %795 = vmatpush1.bf16.msra.mxu0 0
      %796 = vmatprep.subr.bf16.mxu0 0
      %797 = vmatpush1.bf16.msra.mxu0 0
      %798 = vmatprep.subr.bf16.mxu0 0
      %799 = vmatpush1.bf16.msra.mxu0 0
      %800 = vmatprep.subr.bf16.mxu0 0
      %801 = vmatpush1.bf16.msra.mxu0 0
      %802 = vmatprep.subr.bf16.mxu0 0
      %803 = vmatpush1.bf16.msra.mxu0 0
      %804 = vmatprep.mubr.bf16.mxu0 0
      %805 = vmatmul.mubr.bf16.gmra.mrb[0].mxu0 %v767
      %v806 = vpop.f32.mrb[0].mxu0
      %v807 = vadd.f32 0.0, %v806
      %v808 = vpop.f32.mrb[0].mxu0
      %v809 = vpop.f32.mrb[0].mxu0
      %v810 = vpop.f32.mrb[0].mxu0
      %811 = vdwg.mxu0
      %813 = vrot.lane.b32.xlu0 %v807, 16
      %v814 = vpop.permute.xlu0 %813
      %vm816 = vcmask 195712
      %817 = vst.msk [vmem:[#allocation2] sm:$0xff] %vm816, %v814
      %818 = vrot.lane.b32.xlu0 %v461, 104
      %v819 = vpop.permute.xlu0 %818
      %820 = vrot.lane.b32.xlu0 %v462, 104
      %v821 = vpop.permute.xlu0 %820
      %v823 = vsel %vm469, %v819, 0
      %v826 = vsel %vm469, %v821, 0
      %828 = vmatprep.subr.bf16.mxu0 0
      %829 = vmatpush1.bf16.xpose.msra.mxu0 %v826
      %830 = vmatprep.subr.bf16.mxu0 0
      %831 = vmatpush1.bf16.xpose.msra.mxu0 0
      %832 = vmatprep.subr.bf16.mxu0 0
      %833 = vmatpush1.bf16.xpose.msra.mxu0 0
      %834 = vmatprep.subr.bf16.mxu0 0
      %835 = vmatpush1.bf16.xpose.msra.mxu0 0
      %836 = vmatprep.subr.bf16.mxu0 0
      %837 = vmatpush1.bf16.xpose.msra.mxu0 0
      %838 = vmatprep.subr.bf16.mxu0 0
      %839 = vmatpush1.bf16.xpose.msra.mxu0 0
      %840 = vmatprep.subr.bf16.mxu0 0
      %841 = vmatpush1.bf16.xpose.msra.mxu0 0
      %842 = vmatprep.subr.bf16.mxu0 0
      %843 = vmatpush1.bf16.xpose.msra.mxu0 0
      %844 = vmatprep.subr.bf16.mxu0 0
      %845 = vmatpush1.bf16.xpose.msra.mxu0 0
      %846 = vmatprep.subr.bf16.mxu0 0
      %847 = vmatpush1.bf16.xpose.msra.mxu0 0
      %848 = vmatprep.subr.bf16.mxu0 0
      %849 = vmatpush1.bf16.xpose.msra.mxu0 0
      %850 = vmatprep.subr.bf16.mxu0 0
      %851 = vmatpush1.bf16.xpose.msra.mxu0 0
      %852 = vmatprep.subr.bf16.mxu0 0
      %853 = vmatpush1.bf16.xpose.msra.mxu0 0
      %854 = vmatprep.subr.bf16.mxu0 0
      %855 = vmatpush1.bf16.xpose.msra.mxu0 0
      %856 = vmatprep.subr.bf16.mxu0 0
      %857 = vmatpush1.bf16.xpose.msra.mxu0 0
      %858 = vmatprep.subr.bf16.mxu0 0
      %859 = vmatpush1.bf16.xpose.msra.mxu0 0
      %860 = vmatprep.mubr.bf16.mxu0 0
      %861 = vmatmul.mubr.bf16.gmra.mrb[0].mxu0 %v823
      %v862 = vpop.f32.mrb[0].mxu0
      %v863 = vadd.f32 0.0, %v862
      %v864 = vpop.f32.mrb[0].mxu0
      %v865 = vpop.f32.mrb[0].mxu0
      %v866 = vpop.f32.mrb[0].mxu0
      %867 = vdwg.mxu0
      %v868 = vmul.f32 %v863, 0.35355338
      %v869 = vadd.f32 %v868, %v468
      %v870 = vsel %vm469, %v869, -inf
      %871 = vmax.xlane.f32.xlu0 %v870
      %v872 = vpop.xlane.xlu0 %871
      %v873 = vsub.f32 %v869, %v872
      %v874 = vmul.f32 %v873, 1.442695
      %v875 = vpow.pop %v874
      %v876 = vsel %vm469, %v875, 0.0
      %877 = vadd.xlane.f32.xlu0 %v876
      %v878 = vpop.xlane.xlu0 %877
      %v879 = vrcp.pop %v878
      %v880 = vmul.f32 %v875, %v879
      %v881 = vpack.c.bf16 %v880, %v880
      %882 = vrot.lane.b32.xlu0 %v462, 72
      %v883 = vpop.permute.xlu0 %882
      %v885 = vsel %vm469, %v881, 0
      %v888 = vsel %vm536, %v883, 0
      %890 = vmatprep.subr.bf16.mxu0 0
      %891 = vmatpush1.bf16.msra.mxu0 %v888
      %892 = vmatprep.subr.bf16.mxu0 0
      %893 = vmatpush1.bf16.msra.mxu0 0
      %894 = vmatprep.subr.bf16.mxu0 0
      %895 = vmatpush1.bf16.msra.mxu0 0
      %896 = vmatprep.subr.bf16.mxu0 0
      %897 = vmatpush1.bf16.msra.mxu0 0
      %898 = vmatprep.subr.bf16.mxu0 0
      %899 = vmatpush1.bf16.msra.mxu0 0
      %900 = vmatprep.subr.bf16.mxu0 0
      %901 = vmatpush1.bf16.msra.mxu0 0
      %902 = vmatprep.subr.bf16.mxu0 0
      %903 = vmatpush1.bf16.msra.mxu0 0
      %904 = vmatprep.subr.bf16.mxu0 0
      %905 = vmatpush1.bf16.msra.mxu0 0
      %906 = vmatprep.subr.bf16.mxu0 0
      %907 = vmatpush1.bf16.msra.mxu0 0
      %908 = vmatprep.subr.bf16.mxu0 0
      %909 = vmatpush1.bf16.msra.mxu0 0
      %910 = vmatprep.subr.bf16.mxu0 0
      %911 = vmatpush1.bf16.msra.mxu0 0
      %912 = vmatprep.subr.bf16.mxu0 0
      %913 = vmatpush1.bf16.msra.mxu0 0
      %914 = vmatprep.subr.bf16.mxu0 0
      %915 = vmatpush1.bf16.msra.mxu0 0
      %916 = vmatprep.subr.bf16.mxu0 0
      %917 = vmatpush1.bf16.msra.mxu0 0
      %918 = vmatprep.subr.bf16.mxu0 0
      %919 = vmatpush1.bf16.msra.mxu0 0
      %920 = vmatprep.subr.bf16.mxu0 0
      %921 = vmatpush1.bf16.msra.mxu0 0
      %922 = vmatprep.mubr.bf16.mxu0 0
      %923 = vmatmul.mubr.bf16.gmra.mrb[0].mxu0 %v885
      %v924 = vpop.f32.mrb[0].mxu0
      %v925 = vadd.f32 0.0, %v924
      %v926 = vpop.f32.mrb[0].mxu0
      %v927 = vpop.f32.mrb[0].mxu0
      %v928 = vpop.f32.mrb[0].mxu0
      %929 = vdwg.mxu0
      %931 = vrot.lane.b32.xlu0 %v925, 24
      %v932 = vpop.permute.xlu0 %931
      %vm934 = vcmask 261312
      %935 = vst.msk [vmem:[#allocation2] sm:$0xff] %vm934, %v932
      %v936 = vld [vmem:[%s6] sm:$0x1]
      %v938 = vlaneseq
      %v939 = vshrl.u32 %v938, 7
      %v940 = vsub.s32 0, %v939
      %v941 = vrot.slane %v936, %v940
      %v943 = vadd.f32 %v329, %v941
      %v944 = vld [vmem:[#allocation2] sm:$0xff]
      %v945 = vpack.c.bf16 %v944, %v944
      %v946 = vld [vmem:[%s5] sm:$0xf]
      %v947 = vld [vmem:[%s5 + $0x4] sm:$0xf]
      %v948 = vld [vmem:[%s5 + $0x8] sm:$0xf]
      %v949 = vld [vmem:[%s5 + $0xc] sm:$0xf]
      %v954 = vunpack.c.l.b16 %v946
      %v955 = vunpack.c.l.b16 %v947
      %v956 = vunpack.c.l.b16 %v948
      %v957 = vunpack.c.l.b16 %v949
      %v958 = vpack.c.b16 %v955, %v954
      %v959 = vpack.c.b16 %v957, %v956
      %v963 = vsel %vm354, %v945, 0
      %965 = vmatprep.subr.bf16.mxu0 0
      %966 = vmatpush1.bf16.msra.mxu0 %v958
      %967 = vmatprep.subr.bf16.mxu0 0
      %968 = vmatpush1.bf16.msra.mxu0 %v959
      %969 = vmatprep.subr.bf16.mxu0 0
      %970 = vmatpush1.bf16.msra.mxu0 0
      %971 = vmatprep.subr.bf16.mxu0 0
      %972 = vmatpush1.bf16.msra.mxu0 0
      %973 = vmatprep.subr.bf16.mxu0 0
      %974 = vmatpush1.bf16.msra.mxu0 0
      %975 = vmatprep.subr.bf16.mxu0 0
      %976 = vmatpush1.bf16.msra.mxu0 0
      %977 = vmatprep.subr.bf16.mxu0 0
      %978 = vmatpush1.bf16.msra.mxu0 0
      %979 = vmatprep.subr.bf16.mxu0 0
      %980 = vmatpush1.bf16.msra.mxu0 0
      %981 = vmatprep.subr.bf16.mxu0 0
      %982 = vmatpush1.bf16.msra.mxu0 0
      %983 = vmatprep.subr.bf16.mxu0 0
      %984 = vmatpush1.bf16.msra.mxu0 0
      %985 = vmatprep.subr.bf16.mxu0 0
      %986 = vmatpush1.bf16.msra.mxu0 0
      %987 = vmatprep.subr.bf16.mxu0 0
      %988 = vmatpush1.bf16.msra.mxu0 0
      %989 = vmatprep.subr.bf16.mxu0 0
      %990 = vmatpush1.bf16.msra.mxu0 0
      %991 = vmatprep.subr.bf16.mxu0 0
      %992 = vmatpush1.bf16.msra.mxu0 0
      %993 = vmatprep.subr.bf16.mxu0 0
      %994 = vmatpush1.bf16.msra.mxu0 0
      %995 = vmatprep.subr.bf16.mxu0 0
      %996 = vmatpush1.bf16.msra.mxu0 0
      %997 = vmatprep.mubr.bf16.mxu0 0
      %998 = vmatmul.mubr.bf16.gmra.mrb[0].mxu0 %v963
      %v999 = vpop.f32.mrb[0].mxu0
      %v1000 = vadd.f32 0.0, %v999
      %v1001 = vpop.f32.mrb[0].mxu0
      %v1002 = vpop.f32.mrb[0].mxu0
      %v1003 = vpop.f32.mrb[0].mxu0
      %1004 = vdwg.mxu0
      %v1005 = vadd.f32 %v943, %v1000
      %v1006 = vld [vmem:[%s7] sm:$0x1]
      %v1007 = vld [vmem:[%s8] sm:$0x1]
      %v1008 = vsel %vm354, %v1005, 0.0
      %1009 = vadd.xlane.f32.xlu0 %v1008
      %v1010 = vpop.xlane.xlu0 %1009
      %v1011 = vrcp.pop 32.0
      %v1012 = vmul.f32 %v1010, %v1011
      %v1013 = vsub.f32 %v1005, %v1012
      %v1014 = vmul.f32 %v1013, %v1013
      %v1015 = vsel %vm354, %v1014, 0.0
      %1016 = vadd.xlane.f32.xlu0 %v1015
      %v1017 = vpop.xlane.xlu0 %1016
      %v1018 = vmul.f32 %v1017, %v1011
      %v1019 = vadd.f32 %v1018, 1e-05
      %v1020 = vrsqrt.pop %v1019
      %v1021 = vmul.f32 %v1013, %v1020
      %v1023 = vlaneseq
      %v1024 = vshrl.u32 %v1023, 7
      %v1025 = vsub.s32 0, %v1024
      %v1026 = vrot.slane %v1006, %v1025
      %v1028 = vmul.f32 %v1021, %v1026
      %v1030 = vlaneseq
      %v1031 = vshrl.u32 %v1030, 7
      %v1032 = vsub.s32 0, %v1031
      %v1033 = vrot.slane %v1007, %v1032
      %v1035 = vadd.f32 %v1028, %v1033
      %1036 = vst.msk [vmem:[%s327] sm:$0xff] %vm354, %v1035
      %p1037 = scmp.lt.s32.totalorder %s20, 1
      %s1038 = scalar_select %p1037, %s20, 1
      %s1039 = smul.addr %s1038, 8
      %s1040 = scalar_lea.vmem %s9, %s1039
      // Predicated region
      $region57: #{transformer_x_forward.19} parent=55 // pred_check
        %p1041 = pneg %p232
      $region58: #{transformer_x_forward.19} parent=55 // pred_check_branch
        %1043 = sbr.rel (%p1041) target = $region60
      $region59: #{transformer_x_forward.19} parent=55 // pred_region
        _
      $region60: #{transformer_x_forward.19} parent=55 // pred_fallthru
        _
    $region56: #{transformer_x_forward.19} parent=5 // pred_fallthru
      _
    %p1044 = scmp.le.s32.totalorder 2, %s15
    // Predicated region
    $region61: #{transformer_x_forward.19} parent=5 // pred_check
      %p1045 = pneg %p1044
    $region62: #{transformer_x_forward.19} parent=5 // pred_check_branch
      %1047 = sbr.rel (%p1045) target = $region64
    $region63: #{transformer_x_forward.19} parent=5 // pred_region
      %s1048 = ssub.s32 %s15, 2
      // Predicated region
      $region65: #{transformer_x_forward.19} parent=63 // pred_check
        %p1049 = pneg %p238
      $region66: #{transformer_x_forward.19} parent=63 // pred_check_branch
        %1051 = sbr.rel (%p1049) target = $region68
      $region67: #{transformer_x_forward.19} parent=63 // pred_region
        %p1052 = scmp.lt.s32.totalorder %s21, 1
        %s1053 = scalar_select %p1052, %s21, 1
        %s1054 = smul.addr %s1053, 8
        %s1055 = scalar_lea.vmem %s9, %s1054
      $region68: #{transformer_x_forward.19} parent=63 // pred_fallthru
        _
    $region64: #{transformer_x_forward.19} parent=5 // pred_fallthru
      _
  $region6: #{transformer_x_forward.19} parent=0 // loop_footer
    %s19 = sadd.s32 1, %s15
  $region7: #{transformer_x_forward.19} parent=0 // loop_footer_branch
    %14 = sbr.rel target = $region3
  $region8: #{transformer_x_forward.19} parent=0 // loop_exit
    _

// kernel: transformer_x_forward.20
$region0: #{transformer_x_forward.20}
  #allocation0 [shape = 'u32[]', space=smem, size = 0x4, offset = 0x4, fixed_abs, tag = 'smem constant byte address 0x4 - core index']
  #allocation1 [shape = 'u32[144,128]{1,0:T(1,128)}', space=vmem, size = 0x12000, scoped, tag = 'internal scratch']
  #allocation2 [shape = 'f32[8,32]{1,0:T(8,128)}', space=vmem, size = 0x1000, scoped, tag = 'scratch operand']
  %s0 = inlined_call_operand.vmem [shape: f32[2,8,32], index: 0, kind: input, shape index: {}]
  %s1 = inlined_call_operand.vmem [shape: f32[2,8,32], index: 1, kind: input, shape index: {}]
  %s2 = inlined_call_operand.vmem [shape: bf16[32,32], index: 2, kind: input, shape index: {}]
  %s3 = inlined_call_operand.vmem [shape: f32[1,32], index: 3, kind: input, shape index: {}]
  %s4 = inlined_call_operand.vmem [shape: bf16[32,64], index: 4, kind: input, shape index: {}]
  %s5 = inlined_call_operand.vmem [shape: f32[1,64], index: 5, kind: input, shape index: {}]
  %s6 = inlined_call_operand.vmem [shape: bf16[32,32], index: 6, kind: input, shape index: {}]
  %s7 = inlined_call_operand.vmem [shape: f32[1,32], index: 7, kind: input, shape index: {}]
  %s8 = inlined_call_operand.vmem [shape: f32[1,32], index: 8, kind: input, shape index: {}]
  %s9 = inlined_call_operand.vmem [shape: f32[1,32], index: 9, kind: input, shape index: {}]
  %s10 = inlined_call_operand.vmem [shape: f32[2,8,32], index: 10, kind: output, shape index: {}]
  %s11 = sld [smem:[#allocation0]]
  $region73: #{transformer_x_forward.20} parent=0
    _
  %s13 = ssub.s32 1, %s11
  %s14 = scalar_select 0, %s13, %s11
  loop: start=0, step=1, limit=4
  $region2: #{transformer_x_forward.20} parent=0 // loop_pre_header
    _
  $region3: #{transformer_x_forward.20} parent=0 // loop_header
    %s16 = sphi 0, %s20
    %p17 = scmp.ge.s32.totalorder %s16, 4
    %s26 = sphi 0, %s28
    %s29 = sphi 0, %s26
    %s30 = sphi 0, %s29
    %s46 = sphi 0, %s30
    %s52 = sphi 0, %s54
    %s55 = sphi 0, %s52
    %s56 = sphi 0, %s55
    %s72 = sphi 0, %s56
    %s76 = sphi 0, %s76
    %s78 = sphi 0, %s76
    %s79 = sphi 0, %s78
    %s93 = sphi 0, %s79
    %s97 = sphi 0, %s97
    %s99 = sphi 0, %s97
    %s100 = sphi 0, %s99
    %s114 = sphi 0, %s100
    %s118 = sphi 0, %s118
    %s120 = sphi 0, %s118
    %s121 = sphi 0, %s120
    %s135 = sphi 0, %s121
    %s139 = sphi 0, %s139
    %s141 = sphi 0, %s139
    %s142 = sphi 0, %s141
    %s156 = sphi 0, %s142
    %s160 = sphi 0, %s160
    %s162 = sphi 0, %s160
    %s163 = sphi 0, %s162
    %s177 = sphi 0, %s163
    %s181 = sphi 0, %s181
    %s183 = sphi 0, %s181
    %s184 = sphi 0, %s183
    %s198 = sphi 0, %s184
    %s202 = sphi 0, %s202
    %s204 = sphi 0, %s202
    %s205 = sphi 0, %s204
    %s219 = sphi 0, %s205
    %s223 = sphi 0, %s223
    %s225 = sphi 0, %s223
    %s226 = sphi 0, %s225
    %s240 = sphi 0, %s226
    %s246 = sphi 0, %s248
    %s249 = sphi 0, %s246
    %s250 = sphi 0, %s249
    %s266 = sphi 0, %s250
  $region4: #{transformer_x_forward.20} parent=0 // loop_header_branch
    %19 = sbr.rel (%p17) target = $region8
  $region5: #{transformer_x_forward.20} parent=0 // loop_body
    %s21 = ssub.s32 %s16, 1
    %s22 = ssub.s32 %s16, 2
    %s23 = sadd.s32 %s16, 1
    %s24 = ssub.s32 %s16, %s23
    %p25 = scmp.eq.s32.totalorder %s24, 0
    %s27 = sadd.s32 %s26, 1
    %s28 = scalar_select %p25, %s26, %s27
    %p31 = pneg %p25
    %p32 = scmp.eq.s32.totalorder %s16, 1
    %p33 = por %p31, %p32
    %p34 = scmp.ne.s32.totalorder %s26, %s29
    %p35 = scmp.eq.s32.totalorder %s16, 0
    %p36 = por %p34, %p35
    %p37 = scmp.ne.s32.totalorder %s26, %s29
    %p38 = scmp.eq.s32.totalorder %s21, 1
    %p39 = por %p37, %p38
    %p40 = scmp.ne.s32.totalorder %s29, %s30
    %p41 = scmp.eq.s32.totalorder %s21, 0
    %p42 = por %p40, %p41
    %p43 = scmp.ne.s32.totalorder %s29, %s30
    %p44 = scmp.eq.s32.totalorder %s22, 1
    %p45 = por %p43, %p44
    %p47 = scmp.ne.s32.totalorder %s30, %s46
    %p48 = scmp.eq.s32.totalorder %s22, 0
    %p49 = por %p47, %p48
    %s50 = ssub.s32 %s16, %s23
    %p51 = scmp.eq.s32.totalorder %s50, 0
    %s53 = sadd.s32 %s52, 1
    %s54 = scalar_select %p51, %s52, %s53
    %p57 = pneg %p51
    %p58 = scmp.eq.s32.totalorder %s16, 1
    %p59 = por %p57, %p58
    %p60 = scmp.ne.s32.totalorder %s52, %s55
    %p61 = scmp.eq.s32.totalorder %s16, 0
    %p62 = por %p60, %p61
    %p63 = scmp.ne.s32.totalorder %s52, %s55
    %p64 = scmp.eq.s32.totalorder %s21, 1
    %p65 = por %p63, %p64
    %p66 = scmp.ne.s32.totalorder %s55, %s56
    %p67 = scmp.eq.s32.totalorder %s21, 0
    %p68 = por %p66, %p67
    %p69 = scmp.ne.s32.totalorder %s55, %s56
    %p70 = scmp.eq.s32.totalorder %s22, 1
    %p71 = por %p69, %p70
    %p73 = scmp.ne.s32.totalorder %s56, %s72
    %p74 = scmp.eq.s32.totalorder %s22, 0
    %p75 = por %p73, %p74
    %s77 = sadd.s32 %s76, 1
    %p80 = scmp.eq.s32.totalorder %s16, 1
    %p81 = scmp.ne.s32.totalorder %s76, %s78
    %p82 = scmp.eq.s32.totalorder %s16, 0
    %p83 = por %p81, %p82
    %p84 = scmp.ne.s32.totalorder %s76, %s78
    %p85 = scmp.eq.s32.totalorder %s21, 1
    %p86 = por %p84, %p85
    %p87 = scmp.ne.s32.totalorder %s78, %s79
    %p88 = scmp.eq.s32.totalorder %s21, 0
    %p89 = por %p87, %p88
    %p90 = scmp.ne.s32.totalorder %s78, %s79
    %p91 = scmp.eq.s32.totalorder %s22, 1
    %p92 = por %p90, %p91
    %p94 = scmp.ne.s32.totalorder %s79, %s93
    %p95 = scmp.eq.s32.totalorder %s22, 0
    %p96 = por %p94, %p95
    %s98 = sadd.s32 %s97, 1
    %p101 = scmp.eq.s32.totalorder %s16, 1
    %p102 = scmp.ne.s32.totalorder %s97, %s99
    %p103 = scmp.eq.s32.totalorder %s16, 0
    %p104 = por %p102, %p103
    %p105 = scmp.ne.s32.totalorder %s97, %s99
    %p106 = scmp.eq.s32.totalorder %s21, 1
    %p107 = por %p105, %p106
    %p108 = scmp.ne.s32.totalorder %s99, %s100
    %p109 = scmp.eq.s32.totalorder %s21, 0
    %p110 = por %p108, %p109
    %p111 = scmp.ne.s32.totalorder %s99, %s100
    %p112 = scmp.eq.s32.totalorder %s22, 1
    %p113 = por %p111, %p112
    %p115 = scmp.ne.s32.totalorder %s100, %s114
    %p116 = scmp.eq.s32.totalorder %s22, 0
    %p117 = por %p115, %p116
    %s119 = sadd.s32 %s118, 1
    %p122 = scmp.eq.s32.totalorder %s16, 1
    %p123 = scmp.ne.s32.totalorder %s118, %s120
    %p124 = scmp.eq.s32.totalorder %s16, 0
    %p125 = por %p123, %p124
    %p126 = scmp.ne.s32.totalorder %s118, %s120
    %p127 = scmp.eq.s32.totalorder %s21, 1
    %p128 = por %p126, %p127
    %p129 = scmp.ne.s32.totalorder %s120, %s121
    %p130 = scmp.eq.s32.totalorder %s21, 0
    %p131 = por %p129, %p130
    %p132 = scmp.ne.s32.totalorder %s120, %s121
    %p133 = scmp.eq.s32.totalorder %s22, 1
    %p134 = por %p132, %p133
    %p136 = scmp.ne.s32.totalorder %s121, %s135
    %p137 = scmp.eq.s32.totalorder %s22, 0
    %p138 = por %p136, %p137
    %s140 = sadd.s32 %s139, 1
    %p143 = scmp.eq.s32.totalorder %s16, 1
    %p144 = scmp.ne.s32.totalorder %s139, %s141
    %p145 = scmp.eq.s32.totalorder %s16, 0
    %p146 = por %p144, %p145
    %p147 = scmp.ne.s32.totalorder %s139, %s141
    %p148 = scmp.eq.s32.totalorder %s21, 1
    %p149 = por %p147, %p148
    %p150 = scmp.ne.s32.totalorder %s141, %s142
    %p151 = scmp.eq.s32.totalorder %s21, 0
    %p152 = por %p150, %p151
    %p153 = scmp.ne.s32.totalorder %s141, %s142
    %p154 = scmp.eq.s32.totalorder %s22, 1
    %p155 = por %p153, %p154
    %p157 = scmp.ne.s32.totalorder %s142, %s156
    %p158 = scmp.eq.s32.totalorder %s22, 0
    %p159 = por %p157, %p158
    %s161 = sadd.s32 %s160, 1
    %p164 = scmp.eq.s32.totalorder %s16, 1
    %p165 = scmp.ne.s32.totalorder %s160, %s162
    %p166 = scmp.eq.s32.totalorder %s16, 0
    %p167 = por %p165, %p166
    %p168 = scmp.ne.s32.totalorder %s160, %s162
    %p169 = scmp.eq.s32.totalorder %s21, 1
    %p170 = por %p168, %p169
    %p171 = scmp.ne.s32.totalorder %s162, %s163
    %p172 = scmp.eq.s32.totalorder %s21, 0
    %p173 = por %p171, %p172
    %p174 = scmp.ne.s32.totalorder %s162, %s163
    %p175 = scmp.eq.s32.totalorder %s22, 1
    %p176 = por %p174, %p175
    %p178 = scmp.ne.s32.totalorder %s163, %s177
    %p179 = scmp.eq.s32.totalorder %s22, 0
    %p180 = por %p178, %p179
    %s182 = sadd.s32 %s181, 1
    %p185 = scmp.eq.s32.totalorder %s16, 1
    %p186 = scmp.ne.s32.totalorder %s181, %s183
    %p187 = scmp.eq.s32.totalorder %s16, 0
    %p188 = por %p186, %p187
    %p189 = scmp.ne.s32.totalorder %s181, %s183
    %p190 = scmp.eq.s32.totalorder %s21, 1
    %p191 = por %p189, %p190
    %p192 = scmp.ne.s32.totalorder %s183, %s184
    %p193 = scmp.eq.s32.totalorder %s21, 0
    %p194 = por %p192, %p193
    %p195 = scmp.ne.s32.totalorder %s183, %s184
    %p196 = scmp.eq.s32.totalorder %s22, 1
    %p197 = por %p195, %p196
    %p199 = scmp.ne.s32.totalorder %s184, %s198
    %p200 = scmp.eq.s32.totalorder %s22, 0
    %p201 = por %p199, %p200
    %s203 = sadd.s32 %s202, 1
    %p206 = scmp.eq.s32.totalorder %s16, 1
    %p207 = scmp.ne.s32.totalorder %s202, %s204
    %p208 = scmp.eq.s32.totalorder %s16, 0
    %p209 = por %p207, %p208
    %p210 = scmp.ne.s32.totalorder %s202, %s204
    %p211 = scmp.eq.s32.totalorder %s21, 1
    %p212 = por %p210, %p211
    %p213 = scmp.ne.s32.totalorder %s204, %s205
    %p214 = scmp.eq.s32.totalorder %s21, 0
    %p215 = por %p213, %p214
    %p216 = scmp.ne.s32.totalorder %s204, %s205
    %p217 = scmp.eq.s32.totalorder %s22, 1
    %p218 = por %p216, %p217
    %p220 = scmp.ne.s32.totalorder %s205, %s219
    %p221 = scmp.eq.s32.totalorder %s22, 0
    %p222 = por %p220, %p221
    %s224 = sadd.s32 %s223, 1
    %p227 = scmp.eq.s32.totalorder %s16, 1
    %p228 = scmp.ne.s32.totalorder %s223, %s225
    %p229 = scmp.eq.s32.totalorder %s16, 0
    %p230 = por %p228, %p229
    %p231 = scmp.ne.s32.totalorder %s223, %s225
    %p232 = scmp.eq.s32.totalorder %s21, 1
    %p233 = por %p231, %p232
    %p234 = scmp.ne.s32.totalorder %s225, %s226
    %p235 = scmp.eq.s32.totalorder %s21, 0
    %p236 = por %p234, %p235
    %p237 = scmp.ne.s32.totalorder %s225, %s226
    %p238 = scmp.eq.s32.totalorder %s22, 1
    %p239 = por %p237, %p238
    %p241 = scmp.ne.s32.totalorder %s226, %s240
    %p242 = scmp.eq.s32.totalorder %s22, 0
    %p243 = por %p241, %p242
    %s244 = ssub.s32 %s16, %s23
    %p245 = scmp.eq.s32.totalorder %s244, 0
    %s247 = sadd.s32 %s246, 1
    %s248 = scalar_select %p245, %s246, %s247
    %p251 = pneg %p245
    %p252 = scmp.eq.s32.totalorder %s16, 1
    %p253 = por %p251, %p252
    %p254 = scmp.ne.s32.totalorder %s246, %s249
    %p255 = scmp.eq.s32.totalorder %s16, 0
    %p256 = por %p254, %p255
    %p257 = scmp.ne.s32.totalorder %s246, %s249
    %p258 = scmp.eq.s32.totalorder %s21, 1
    %p259 = por %p257, %p258
    %p260 = scmp.ne.s32.totalorder %s249, %s250
    %p261 = scmp.eq.s32.totalorder %s21, 0
    %p262 = por %p260, %p261
    %p263 = scmp.ne.s32.totalorder %s249, %s250
    %p264 = scmp.eq.s32.totalorder %s22, 1
    %p265 = por %p263, %p264
    %p267 = scmp.ne.s32.totalorder %s250, %s266
    %p268 = scmp.eq.s32.totalorder %s22, 0
    %p269 = por %p267, %p268
    %p270 = scmp.le.s32.totalorder 1, %s16
    %p271 = scmp.lt.s32.totalorder %s16, 3
    %p272 = pnand %p270, %p271
    %p273 = pneg %p272
    // Predicated region
    $region9: #{transformer_x_forward.20} parent=5 // pred_check
      _
    $region10: #{transformer_x_forward.20} parent=5 // pred_check_branch
      %275 = sbr.rel (%p272) target = $region12
    $region11: #{transformer_x_forward.20} parent=5 // pred_region
      %s276 = ssub.s32 %s16, 1
      // Predicated region
      $region13: #{transformer_x_forward.20} parent=11 // pred_check
        %p277 = pneg %p89
      $region14: #{transformer_x_forward.20} parent=11 // pred_check_branch
        %279 = sbr.rel (%p277) target = $region16
      $region15: #{transformer_x_forward.20} parent=11 // pred_region
        _
      $region16: #{transformer_x_forward.20} parent=11 // pred_fallthru
        _
      // Predicated region
      $region17: #{transformer_x_forward.20} parent=11 // pred_check
        %p280 = pneg %p110
      $region18: #{transformer_x_forward.20} parent=11 // pred_check_branch
        %282 = sbr.rel (%p280) target = $region20
      $region19: #{transformer_x_forward.20} parent=11 // pred_region
        _
      $region20: #{transformer_x_forward.20} parent=11 // pred_fallthru
        _
      // Predicated region
      $region21: #{transformer_x_forward.20} parent=11 // pred_check
        %p283 = pneg %p131
      $region22: #{transformer_x_forward.20} parent=11 // pred_check_branch
        %285 = sbr.rel (%p283) target = $region24
      $region23: #{transformer_x_forward.20} parent=11 // pred_region
        _
      $region24: #{transformer_x_forward.20} parent=11 // pred_fallthru
        _
      // Predicated region
      $region25: #{transformer_x_forward.20} parent=11 // pred_check
        %p286 = pneg %p152
      $region26: #{transformer_x_forward.20} parent=11 // pred_check_branch
        %288 = sbr.rel (%p286) target = $region28
      $region27: #{transformer_x_forward.20} parent=11 // pred_region
        _
      $region28: #{transformer_x_forward.20} parent=11 // pred_fallthru
        _
      // Predicated region
      $region29: #{transformer_x_forward.20} parent=11 // pred_check
        %p289 = pneg %p173
      $region30: #{transformer_x_forward.20} parent=11 // pred_check_branch
        %291 = sbr.rel (%p289) target = $region32
      $region31: #{transformer_x_forward.20} parent=11 // pred_region
        _
      $region32: #{transformer_x_forward.20} parent=11 // pred_fallthru
        _
      // Predicated region
      $region33: #{transformer_x_forward.20} parent=11 // pred_check
        %p292 = pneg %p194
      $region34: #{transformer_x_forward.20} parent=11 // pred_check_branch
        %294 = sbr.rel (%p292) target = $region36
      $region35: #{transformer_x_forward.20} parent=11 // pred_region
        _
      $region36: #{transformer_x_forward.20} parent=11 // pred_fallthru
        _
      // Predicated region
      $region37: #{transformer_x_forward.20} parent=11 // pred_check
        %p295 = pneg %p215
      $region38: #{transformer_x_forward.20} parent=11 // pred_check_branch
        %297 = sbr.rel (%p295) target = $region40
      $region39: #{transformer_x_forward.20} parent=11 // pred_region
        _
      $region40: #{transformer_x_forward.20} parent=11 // pred_fallthru
        _
      // Predicated region
      $region41: #{transformer_x_forward.20} parent=11 // pred_check
        %p298 = pneg %p236
      $region42: #{transformer_x_forward.20} parent=11 // pred_check_branch
        %300 = sbr.rel (%p298) target = $region44
      $region43: #{transformer_x_forward.20} parent=11 // pred_region
        _
      $region44: #{transformer_x_forward.20} parent=11 // pred_fallthru
        _
    $region12: #{transformer_x_forward.20} parent=5 // pred_fallthru
      _
    %p301 = scmp.lt.s32.totalorder %s16, 2
    // Predicated region
    $region45: #{transformer_x_forward.20} parent=5 // pred_check
      %p302 = pneg %p301
    $region46: #{transformer_x_forward.20} parent=5 // pred_check_branch
      %304 = sbr.rel (%p302) target = $region48
    $region47: #{transformer_x_forward.20} parent=5 // pred_region
      // Predicated region
      $region49: #{transformer_x_forward.20} parent=47 // pred_check
        %p305 = pneg %p36
      $region50: #{transformer_x_forward.20} parent=47 // pred_check_branch
        %307 = sbr.rel (%p305) target = $region52
      $region51: #{transformer_x_forward.20} parent=47 // pred_region
        %p308 = scmp.lt.s32.totalorder %s16, 1
        %s309 = scalar_select %p308, %s16, 1
        %s310 = smul.addr %s309, 8
        %s311 = scalar_lea.vmem %s0, %s310
      $region52: #{transformer_x_forward.20} parent=47 // pred_fallthru
        _
      // Predicated region
      $region53: #{transformer_x_forward.20} parent=47 // pred_check
        %p312 = pneg %p62
      $region54: #{transformer_x_forward.20} parent=47 // pred_check_branch
        %314 = sbr.rel (%p312) target = $region56
      $region55: #{transformer_x_forward.20} parent=47 // pred_region
        %p315 = scmp.lt.s32.totalorder %s16, 1
        %s316 = scalar_select %p315, %s16, 1
        %s317 = smul.addr %s316, 8
        %s318 = scalar_lea.vmem %s1, %s317
      $region56: #{transformer_x_forward.20} parent=47 // pred_fallthru
        _
    $region48: #{transformer_x_forward.20} parent=5 // pred_fallthru
      _
    %p319 = scmp.le.s32.totalorder 1, %s16
    %p320 = scmp.lt.s32.totalorder %s16, 3
    %p321 = pnand %p319, %p320
    %p322 = pneg %p321
    // Predicated region
    $region57: #{transformer_x_forward.20} parent=5 // pred_check
      _
    $region58: #{transformer_x_forward.20} parent=5 // pred_check_branch
      %324 = sbr.rel (%p321) target = $region60
    $region59: #{transformer_x_forward.20} parent=5 // pred_region
      %s325 = ssub.s32 %s16, 1
      %p326 = scmp.lt.s32.totalorder %s21, 1
      %s327 = scalar_select %p326, %s21, 1
      %s328 = smul.addr %s327, 8
      %s329 = scalar_lea.vmem %s0, %s328
      %p330 = pneg %p42
      %p331 = pneg %p39
      %p332 = scmp.lt.s32.totalorder %s21, 1
      %s333 = scalar_select %p332, %s21, 1
      %s334 = smul.addr %s333, 8
      %s335 = scalar_lea.vmem %s1, %s334
      %p336 = pneg %p68
      %p337 = pneg %p65
      %p338 = pneg %p89
      %p339 = pneg %p86
      %p340 = pneg %p110
      %p341 = pneg %p107
      %p342 = pneg %p131
      %p343 = pneg %p128
      %p344 = pneg %p152
      %p345 = pneg %p149
      %p346 = pneg %p173
      %p347 = pneg %p170
      %p348 = pneg %p194
      %p349 = pneg %p191
      %p350 = pneg %p215
      %p351 = pneg %p212
      %p352 = pneg %p236
      %p353 = pneg %p233
      %p354 = pneg %p262
      %p355 = pneg %p259
      %p356 = scmp.lt.s32.totalorder %s21, 1
      %s357 = scalar_select %p356, %s21, 1
      %s358 = smul.addr %s357, 8
      %s359 = scalar_lea.vmem %s10, %s358
      %p360 = scmp.lt.s32.totalorder %s21, 1
      %s361 = scalar_select %p360, %s21, 1
      %s362 = smul.addr %s361, 8
      %s363 = scalar_lea.vmem %s0, %s362
      %p364 = scmp.lt.s32.totalorder %s21, 1
      %s365 = scalar_select %p364, %s21, 1
      %s366 = smul.addr %s365, 8
      %s367 = scalar_lea.vmem %s1, %s366
      %p368 = scmp.lt.s32.totalorder %s21, 1
      %s369 = scalar_select %p368, %s21, 1
      %s370 = smul.addr %s369, 8
      %s371 = scalar_lea.vmem %s10, %s370
      %v373 = vld [vmem:[%s363] sm:$0xff]
      %v374 = vld [vmem:[%s367] sm:$0xff]
      %v375 = vpack.c.bf16 %v373, %v373
      %v376 = vld [vmem:[%s2] sm:$0xf]
      %v377 = vld [vmem:[%s2 + $0x4] sm:$0xf]
      %v378 = vld [vmem:[%s2 + $0x8] sm:$0xf]
      %v379 = vld [vmem:[%s2 + $0xc] sm:$0xf]
      %v380 = vld [vmem:[%s3] sm:$0x1]
      %v382 = vlaneseq
      %v383 = vshrl.u32 %v382, 7
      %v384 = vsub.s32 0, %v383
      %v385 = vrot.slane %v380, %v384
      %v391 = vunpack.c.l.b16 %v376
      %v392 = vunpack.c.l.b16 %v377
      %v393 = vunpack.c.l.b16 %v378
      %v394 = vunpack.c.l.b16 %v379
      %v395 = vpack.c.b16 %v392, %v391
      %v396 = vpack.c.b16 %v394, %v393
      %vm399 = vcmask 261120
      %v401 = vsel %vm399, %v375, 0
      %403 = vmatprep.subr.bf16.mxu0 0
      %404 = vmatpush1.bf16.msra.mxu0 %v395
      %405 = vmatprep.subr.bf16.mxu0 0
      %406 = vmatpush1.bf16.msra.mxu0 %v396
      %407 = vmatprep.subr.bf16.mxu0 0
      %408 = vmatpush1.bf16.msra.mxu0 0
      %409 = vmatprep.subr.bf16.mxu0 0
      %410 = vmatpush1.bf16.msra.mxu0 0
      %411 = vmatprep.subr.bf16.mxu0 0
      %412 = vmatpush1.bf16.msra.mxu0 0
      %413 = vmatprep.subr.bf16.mxu0 0
      %414 = vmatpush1.bf16.msra.mxu0 0
      %415 = vmatprep.subr.bf16.mxu0 0
      %416 = vmatpush1.bf16.msra.mxu0 0
      %417 = vmatprep.subr.bf16.mxu0 0
      %418 = vmatpush1.bf16.msra.mxu0 0
      %419 = vmatprep.subr.bf16.mxu0 0
      %420 = vmatpush1.bf16.msra.mxu0 0
      %421 = vmatprep.subr.bf16.mxu0 0
      %422 = vmatpush1.bf16.msra.mxu0 0
      %423 = vmatprep.subr.bf16.mxu0 0
      %424 = vmatpush1.bf16.msra.mxu0 0
      %425 = vmatprep.subr.bf16.mxu0 0
      %426 = vmatpush1.bf16.msra.mxu0 0
      %427 = vmatprep.subr.bf16.mxu0 0
      %428 = vmatpush1.bf16.msra.mxu0 0
      %429 = vmatprep.subr.bf16.mxu0 0
      %430 = vmatpush1.bf16.msra.mxu0 0
      %431 = vmatprep.subr.bf16.mxu0 0
      %432 = vmatpush1.bf16.msra.mxu0 0
      %433 = vmatprep.subr.bf16.mxu0 0
      %434 = vmatpush1.bf16.msra.mxu0 0
      %435 = vmatprep.mubr.bf16.mxu0 0
      %436 = vmatmul.mubr.bf16.gmra.mrb[0].mxu0 %v401
      %v437 = vpop.f32.mrb[0].mxu0
      %v438 = vadd.f32 %v385, %v437
      %v439 = vpop.f32.mrb[0].mxu0
      %v440 = vpop.f32.mrb[0].mxu0
      %v441 = vpop.f32.mrb[0].mxu0
      %442 = vdwg.mxu0
      %v443 = vpack.c.bf16 %v374, %v374
      %v444 = vld [vmem:[%s4] sm:$0xf]
      %v445 = vld [vmem:[%s4 + $0x4] sm:$0xf]
      %v446 = vld [vmem:[%s4 + $0x8] sm:$0xf]
      %v447 = vld [vmem:[%s4 + $0xc] sm:$0xf]
      %v448 = vld [vmem:[%s5] sm:$0x1]
      %v450 = vlaneseq
      %v451 = vshrl.u32 %v450, 7
      %v452 = vsub.s32 0, %v451
      %v453 = vrot.slane %v448, %v452
      %v459 = vunpack.c.l.b16 %v444
      %v460 = vunpack.c.l.b16 %v445
      %v461 = vunpack.c.l.b16 %v446
      %v462 = vunpack.c.l.b16 %v447
      %v463 = vpack.c.b16 %v460, %v459
      %v464 = vpack.c.b16 %v462, %v461
      %v468 = vsel %vm399, %v443, 0
      %470 = vmatprep.subr.bf16.mxu0 0
      %471 = vmatpush1.bf16.msra.mxu0 %v463
      %472 = vmatprep.subr.bf16.mxu0 0
      %473 = vmatpush1.bf16.msra.mxu0 %v464
      %474 = vmatprep.subr.bf16.mxu0 0
      %475 = vmatpush1.bf16.msra.mxu0 0
      %476 = vmatprep.subr.bf16.mxu0 0
      %477 = vmatpush1.bf16.msra.mxu0 0
      %478 = vmatprep.subr.bf16.mxu0 0
      %479 = vmatpush1.bf16.msra.mxu0 0
      %480 = vmatprep.subr.bf16.mxu0 0
      %481 = vmatpush1.bf16.msra.mxu0 0
      %482 = vmatprep.subr.bf16.mxu0 0
      %483 = vmatpush1.bf16.msra.mxu0 0
      %484 = vmatprep.subr.bf16.mxu0 0
      %485 = vmatpush1.bf16.msra.mxu0 0
      %486 = vmatprep.subr.bf16.mxu0 0
      %487 = vmatpush1.bf16.msra.mxu0 0
      %488 = vmatprep.subr.bf16.mxu0 0
      %489 = vmatpush1.bf16.msra.mxu0 0
      %490 = vmatprep.subr.bf16.mxu0 0
      %491 = vmatpush1.bf16.msra.mxu0 0
      %492 = vmatprep.subr.bf16.mxu0 0
      %493 = vmatpush1.bf16.msra.mxu0 0
      %494 = vmatprep.subr.bf16.mxu0 0
      %495 = vmatpush1.bf16.msra.mxu0 0
      %496 = vmatprep.subr.bf16.mxu0 0
      %497 = vmatpush1.bf16.msra.mxu0 0
      %498 = vmatprep.subr.bf16.mxu0 0
      %499 = vmatpush1.bf16.msra.mxu0 0
      %500 = vmatprep.subr.bf16.mxu0 0
      %501 = vmatpush1.bf16.msra.mxu0 0
      %502 = vmatprep.mubr.bf16.mxu0 0
      %503 = vmatmul.mubr.bf16.gmra.mrb[0].mxu0 %v468
      %v504 = vpop.f32.mrb[0].mxu0
      %v505 = vadd.f32 %v453, %v504
      %v506 = vpop.f32.mrb[0].mxu0
      %v507 = vpop.f32.mrb[0].mxu0
      %v508 = vpop.f32.mrb[0].mxu0
      %509 = vdwg.mxu0
      %v510 = vpack.c.bf16 %v438, %v438
      %v511 = vpack.c.bf16 %v505, %v505
      %vm512 = vcmask 64512
      %v514 = vsel %vm512, %v510, 0
      %v517 = vsel %vm512, %v511, 0
      %519 = vmatprep.subr.bf16.mxu0 0
      %520 = vmatpush1.bf16.xpose.msra.mxu0 %v517
      %521 = vmatprep.subr.bf16.mxu0 0
      %522 = vmatpush1.bf16.xpose.msra.mxu0 0
      %523 = vmatprep.subr.bf16.mxu0 0
      %524 = vmatpush1.bf16.xpose.msra.mxu0 0
      %525 = vmatprep.subr.bf16.mxu0 0
      %526 = vmatpush1.bf16.xpose.msra.mxu0 0
      %527 = vmatprep.subr.bf16.mxu0 0
      %528 = vmatpush1.bf16.xpose.msra.mxu0 0
      %529 = vmatprep.subr.bf16.mxu0 0
      %530 = vmatpush1.bf16.xpose.msra.mxu0 0
      %531 = vmatprep.subr.bf16.mxu0 0
      %532 = vmatpush1.bf16.xpose.msra.mxu0 0
      %533 = vmatprep.subr.bf16.mxu0 0
      %534 = vmatpush1.bf16.xpose.msra.mxu0 0
      %535 = vmatprep.subr.bf16.mxu0 0
      %536 = vmatpush1.bf16.xpose.msra.mxu0 0
      %537 = vmatprep.subr.bf16.mxu0 0
      %538 = vmatpush1.bf16.xpose.msra.mxu0 0
      %539 = vmatprep.subr.bf16.mxu0 0
      %540 = vmatpush1.bf16.xpose.msra.mxu0 0
      %541 = vmatprep.subr.bf16.mxu0 0
      %542 = vmatpush1.bf16.xpose.msra.mxu0 0
      %543 = vmatprep.subr.bf16.mxu0 0
      %544 = vmatpush1.bf16.xpose.msra.mxu0 0
      %545 = vmatprep.subr.bf16.mxu0 0
      %546 = vmatpush1.bf16.xpose.msra.mxu0 0
      %547 = vmatprep.subr.bf16.mxu0 0
      %548 = vmatpush1.bf16.xpose.msra.mxu0 0
      %549 = vmatprep.subr.bf16.mxu0 0
      %550 = vmatpush1.bf16.xpose.msra.mxu0 0
      %551 = vmatprep.mubr.bf16.mxu0 0
      %552 = vmatmul.mubr.bf16.gmra.mrb[0].mxu0 %v514
      %v553 = vpop.f32.mrb[0].mxu0
      %v554 = vadd.f32 0.0, %v553
      %v555 = vpop.f32.mrb[0].mxu0
      %v556 = vpop.f32.mrb[0].mxu0
      %v557 = vpop.f32.mrb[0].mxu0
      %558 = vdwg.mxu0
      %v559 = vmul.f32 %v554, 0.35355338
      %v560 = vsel %vm512, %v559, -inf
      %561 = vmax.xlane.f32.xlu0 %v560
      %v562 = vpop.xlane.xlu0 %561
      %v563 = vsub.f32 %v559, %v562
      %v564 = vmul.f32 %v563, 1.442695
      %v565 = vpow.pop %v564
      %v566 = vsel %vm512, %v565, 0.0
      %567 = vadd.xlane.f32.xlu0 %v566
      %v568 = vpop.xlane.xlu0 %567
      %v569 = vrcp.pop %v568
      %v570 = vmul.f32 %v565, %v569
      %v571 = vpack.c.bf16 %v570, %v570
      %573 = vrot.lane.b32.xlu0 %v511, 96
      %v574 = vpop.permute.xlu0 %573
      %v576 = vsel %vm512, %v571, 0
      %vm578 = vcmask 1043456
      %v580 = vsel %vm578, %v574, 0
      %582 = vmatprep.subr.bf16.mxu0 0
      %583 = vmatpush1.bf16.msra.mxu0 %v580
      %584 = vmatprep.subr.bf16.mxu0 0
      %585 = vmatpush1.bf16.msra.mxu0 0
      %586 = vmatprep.subr.bf16.mxu0 0
      %587 = vmatpush1.bf16.msra.mxu0 0
      %588 = vmatprep.subr.bf16.mxu0 0
      %589 = vmatpush1.bf16.msra.mxu0 0
      %590 = vmatprep.subr.bf16.mxu0 0
      %591 = vmatpush1.bf16.msra.mxu0 0
      %592 = vmatprep.subr.bf16.mxu0 0
      %593 = vmatpush1.bf16.msra.mxu0 0
      %594 = vmatprep.subr.bf16.mxu0 0
      %595 = vmatpush1.bf16.msra.mxu0 0
      %596 = vmatprep.subr.bf16.mxu0 0
      %597 = vmatpush1.bf16.msra.mxu0 0
      %598 = vmatprep.subr.bf16.mxu0 0
      %599 = vmatpush1.bf16.msra.mxu0 0
      %600 = vmatprep.subr.bf16.mxu0 0
      %601 = vmatpush1.bf16.msra.mxu0 0
      %602 = vmatprep.subr.bf16.mxu0 0
      %603 = vmatpush1.bf16.msra.mxu0 0
      %604 = vmatprep.subr.bf16.mxu0 0
      %605 = vmatpush1.bf16.msra.mxu0 0
      %606 = vmatprep.subr.bf16.mxu0 0
      %607 = vmatpush1.bf16.msra.mxu0 0
      %608 = vmatprep.subr.bf16.mxu0 0
      %609 = vmatpush1.bf16.msra.mxu0 0
      %610 = vmatprep.subr.bf16.mxu0 0
      %611 = vmatpush1.bf16.msra.mxu0 0
      %612 = vmatprep.subr.bf16.mxu0 0
      %613 = vmatpush1.bf16.msra.mxu0 0
      %614 = vmatprep.mubr.bf16.mxu0 0
      %615 = vmatmul.mubr.bf16.gmra.mrb[0].mxu0 %v576
      %v616 = vpop.f32.mrb[0].mxu0
      %v617 = vadd.f32 0.0, %v616
      %v618 = vpop.f32.mrb[0].mxu0
      %v619 = vpop.f32.mrb[0].mxu0
      %v620 = vpop.f32.mrb[0].mxu0
      %621 = vdwg.mxu0
      %622 = vst.msk [vmem:[#allocation2] sm:$0xff] %vm512, %v617
      %624 = vrot.lane.b32.xlu0 %v510, 120
      %v625 = vpop.permute.xlu0 %624
      %626 = vrot.lane.b32.xlu0 %v511, 120
      %v627 = vpop.permute.xlu0 %626
      %v629 = vsel %vm512, %v625, 0
      %v632 = vsel %vm512, %v627, 0
      %634 = vmatprep.subr.bf16.mxu0 0
      %635 = vmatpush1.bf16.xpose.msra.mxu0 %v632
      %636 = vmatprep.subr.bf16.mxu0 0
      %637 = vmatpush1.bf16.xpose.msra.mxu0 0
      %638 = vmatprep.subr.bf16.mxu0 0
      %639 = vmatpush1.bf16.xpose.msra.mxu0 0
      %640 = vmatprep.subr.bf16.mxu0 0
      %641 = vmatpush1.bf16.xpose.msra.mxu0 0
      %642 = vmatprep.subr.bf16.mxu0 0
      %643 = vmatpush1.bf16.xpose.msra.mxu0 0
      %644 = vmatprep.subr.bf16.mxu0 0
      %645 = vmatpush1.bf16.xpose.msra.mxu0 0
      %646 = vmatprep.subr.bf16.mxu0 0
      %647 = vmatpush1.bf16.xpose.msra.mxu0 0
      %648 = vmatprep.subr.bf16.mxu0 0
      %649 = vmatpush1.bf16.xpose.msra.mxu0 0
      %650 = vmatprep.subr.bf16.mxu0 0
      %651 = vmatpush1.bf16.xpose.msra.mxu0 0
      %652 = vmatprep.subr.bf16.mxu0 0
      %653 = vmatpush1.bf16.xpose.msra.mxu0 0
      %654 = vmatprep.subr.bf16.mxu0 0
      %655 = vmatpush1.bf16.xpose.msra.mxu0 0
      %656 = vmatprep.subr.bf16.mxu0 0
      %657 = vmatpush1.bf16.xpose.msra.mxu0 0
      %658 = vmatprep.subr.bf16.mxu0 0
      %659 = vmatpush1.bf16.xpose.msra.mxu0 0
      %660 = vmatprep.subr.bf16.mxu0 0
      %661 = vmatpush1.bf16.xpose.msra.mxu0 0
      %662 = vmatprep.subr.bf16.mxu0 0
      %663 = vmatpush1.bf16.xpose.msra.mxu0 0
      %664 = vmatprep.subr.bf16.mxu0 0
      %665 = vmatpush1.bf16.xpose.msra.mxu0 0
      %666 = vmatprep.mubr.bf16.mxu0 0
      %667 = vmatmul.mubr.bf16.gmra.mrb[0].mxu0 %v629
      %v668 = vpop.f32.mrb[0].mxu0
      %v669 = vadd.f32 0.0, %v668
      %v670 = vpop.f32.mrb[0].mxu0
      %v671 = vpop.f32.mrb[0].mxu0
      %v672 = vpop.f32.mrb[0].mxu0
      %673 = vdwg.mxu0
      %v674 = vmul.f32 %v669, 0.35355338
      %v675 = vsel %vm512, %v674, -inf
      %676 = vmax.xlane.f32.xlu0 %v675
      %v677 = vpop.xlane.xlu0 %676
      %v678 = vsub.f32 %v674, %v677
      %v679 = vmul.f32 %v678, 1.442695
      %v680 = vpow.pop %v679
      %v681 = vsel %vm512, %v680, 0.0
      %682 = vadd.xlane.f32.xlu0 %v681
      %v683 = vpop.xlane.xlu0 %682
      %v684 = vrcp.pop %v683
      %v685 = vmul.f32 %v680, %v684
      %v686 = vpack.c.bf16 %v685, %v685
      %687 = vrot.lane.b32.xlu0 %v511, 88
      %v688 = vpop.permute.xlu0 %687
      %v690 = vsel %vm512, %v686, 0
      %v693 = vsel %vm578, %v688, 0
      %695 = vmatprep.subr.bf16.mxu0 0
      %696 = vmatpush1.bf16.msra.mxu0 %v693
      %697 = vmatprep.subr.bf16.mxu0 0
      %698 = vmatpush1.bf16.msra.mxu0 0
      %699 = vmatprep.subr.bf16.mxu0 0
      %700 = vmatpush1.bf16.msra.mxu0 0
      %701 = vmatprep.subr.bf16.mxu0 0
      %702 = vmatpush1.bf16.msra.mxu0 0
      %703 = vmatprep.subr.bf16.mxu0 0
      %704 = vmatpush1.bf16.msra.mxu0 0
      %705 = vmatprep.subr.bf16.mxu0 0
      %706 = vmatpush1.bf16.msra.mxu0 0
      %707 = vmatprep.subr.bf16.mxu0 0
      %708 = vmatpush1.bf16.msra.mxu0 0
      %709 = vmatprep.subr.bf16.mxu0 0
      %710 = vmatpush1.bf16.msra.mxu0 0
      %711 = vmatprep.subr.bf16.mxu0 0
      %712 = vmatpush1.bf16.msra.mxu0 0
      %713 = vmatprep.subr.bf16.mxu0 0
      %714 = vmatpush1.bf16.msra.mxu0 0
      %715 = vmatprep.subr.bf16.mxu0 0
      %716 = vmatpush1.bf16.msra.mxu0 0
      %717 = vmatprep.subr.bf16.mxu0 0
      %718 = vmatpush1.bf16.msra.mxu0 0
      %719 = vmatprep.subr.bf16.mxu0 0
      %720 = vmatpush1.bf16.msra.mxu0 0
      %721 = vmatprep.subr.bf16.mxu0 0
      %722 = vmatpush1.bf16.msra.mxu0 0
      %723 = vmatprep.subr.bf16.mxu0 0
      %724 = vmatpush1.bf16.msra.mxu0 0
      %725 = vmatprep.subr.bf16.mxu0 0
      %726 = vmatpush1.bf16.msra.mxu0 0
      %727 = vmatprep.mubr.bf16.mxu0 0
      %728 = vmatmul.mubr.bf16.gmra.mrb[0].mxu0 %v690
      %v729 = vpop.f32.mrb[0].mxu0
      %v730 = vadd.f32 0.0, %v729
      %v731 = vpop.f32.mrb[0].mxu0
      %v732 = vpop.f32.mrb[0].mxu0
      %v733 = vpop.f32.mrb[0].mxu0
      %734 = vdwg.mxu0
      %736 = vrot.lane.b32.xlu0 %v730, 8
      %v737 = vpop.permute.xlu0 %736
      %vm739 = vcmask 130112
      %740 = vst.msk [vmem:[#allocation2] sm:$0xff] %vm739, %v737
      %741 = vrot.lane.b32.xlu0 %v510, 112
      %v742 = vpop.permute.xlu0 %741
      %743 = vrot.lane.b32.xlu0 %v511, 112
      %v744 = vpop.permute.xlu0 %743
      %v746 = vsel %vm512, %v742, 0
      %v749 = vsel %vm512, %v744, 0
      %751 = vmatprep.subr.bf16.mxu0 0
      %752 = vmatpush1.bf16.xpose.msra.mxu0 %v749
      %753 = vmatprep.subr.bf16.mxu0 0
      %754 = vmatpush1.bf16.xpose.msra.mxu0 0
      %755 = vmatprep.subr.bf16.mxu0 0
      %756 = vmatpush1.bf16.xpose.msra.mxu0 0
      %757 = vmatprep.subr.bf16.mxu0 0
      %758 = vmatpush1.bf16.xpose.msra.mxu0 0
      %759 = vmatprep.subr.bf16.mxu0 0
      %760 = vmatpush1.bf16.xpose.msra.mxu0 0
      %761 = vmatprep.subr.bf16.mxu0 0
      %762 = vmatpush1.bf16.xpose.msra.mxu0 0
      %763 = vmatprep.subr.bf16.mxu0 0
      %764 = vmatpush1.bf16.xpose.msra.mxu0 0
      %765 = vmatprep.subr.bf16.mxu0 0
      %766 = vmatpush1.bf16.xpose.msra.mxu0 0
      %767 = vmatprep.subr.bf16.mxu0 0
      %768 = vmatpush1.bf16.xpose.msra.mxu0 0
      %769 = vmatprep.subr.bf16.mxu0 0
      %770 = vmatpush1.bf16.xpose.msra.mxu0 0
      %771 = vmatprep.subr.bf16.mxu0 0
      %772 = vmatpush1.bf16.xpose.msra.mxu0 0
      %773 = vmatprep.subr.bf16.mxu0 0
      %774 = vmatpush1.bf16.xpose.msra.mxu0 0
      %775 = vmatprep.subr.bf16.mxu0 0
      %776 = vmatpush1.bf16.xpose.msra.mxu0 0
      %777 = vmatprep.subr.bf16.mxu0 0
      %778 = vmatpush1.bf16.xpose.msra.mxu0 0
      %779 = vmatprep.subr.bf16.mxu0 0
      %780 = vmatpush1.bf16.xpose.msra.mxu0 0
      %781 = vmatprep.subr.bf16.mxu0 0
      %782 = vmatpush1.bf16.xpose.msra.mxu0 0
      %783 = vmatprep.mubr.bf16.mxu0 0
      %784 = vmatmul.mubr.bf16.gmra.mrb[0].mxu0 %v746
      %v785 = vpop.f32.mrb[0].mxu0
      %v786 = vadd.f32 0.0, %v785
      %v787 = vpop.f32.mrb[0].mxu0
      %v788 = vpop.f32.mrb[0].mxu0
      %v789 = vpop.f32.mrb[0].mxu0
      %790 = vdwg.mxu0
      %v791 = vmul.f32 %v786, 0.35355338
      %v792 = vsel %vm512, %v791, -inf
      %793 = vmax.xlane.f32.xlu0 %v792
      %v794 = vpop.xlane.xlu0 %793
      %v795 = vsub.f32 %v791, %v794
      %v796 = vmul.f32 %v795, 1.442695
      %v797 = vpow.pop %v796
      %v798 = vsel %vm512, %v797, 0.0
      %799 = vadd.xlane.f32.xlu0 %v798
      %v800 = vpop.xlane.xlu0 %799
      %v801 = vrcp.pop %v800
      %v802 = vmul.f32 %v797, %v801
      %v803 = vpack.c.bf16 %v802, %v802
      %804 = vrot.lane.b32.xlu0 %v511, 80
      %v805 = vpop.permute.xlu0 %804
      %v807 = vsel %vm512, %v803, 0
      %v810 = vsel %vm578, %v805, 0
      %812 = vmatprep.subr.bf16.mxu0 0
      %813 = vmatpush1.bf16.msra.mxu0 %v810
      %814 = vmatprep.subr.bf16.mxu0 0
      %815 = vmatpush1.bf16.msra.mxu0 0
      %816 = vmatprep.subr.bf16.mxu0 0
      %817 = vmatpush1.bf16.msra.mxu0 0
      %818 = vmatprep.subr.bf16.mxu0 0
      %819 = vmatpush1.bf16.msra.mxu0 0
      %820 = vmatprep.subr.bf16.mxu0 0
      %821 = vmatpush1.bf16.msra.mxu0 0
      %822 = vmatprep.subr.bf16.mxu0 0
      %823 = vmatpush1.bf16.msra.mxu0 0
      %824 = vmatprep.subr.bf16.mxu0 0
      %825 = vmatpush1.bf16.msra.mxu0 0
      %826 = vmatprep.subr.bf16.mxu0 0
      %827 = vmatpush1.bf16.msra.mxu0 0
      %828 = vmatprep.subr.bf16.mxu0 0
      %829 = vmatpush1.bf16.msra.mxu0 0
      %830 = vmatprep.subr.bf16.mxu0 0
      %831 = vmatpush1.bf16.msra.mxu0 0
      %832 = vmatprep.subr.bf16.mxu0 0
      %833 = vmatpush1.bf16.msra.mxu0 0
      %834 = vmatprep.subr.bf16.mxu0 0
      %835 = vmatpush1.bf16.msra.mxu0 0
      %836 = vmatprep.subr.bf16.mxu0 0
      %837 = vmatpush1.bf16.msra.mxu0 0
      %838 = vmatprep.subr.bf16.mxu0 0
      %839 = vmatpush1.bf16.msra.mxu0 0
      %840 = vmatprep.subr.bf16.mxu0 0
      %841 = vmatpush1.bf16.msra.mxu0 0
      %842 = vmatprep.subr.bf16.mxu0 0
      %843 = vmatpush1.bf16.msra.mxu0 0
      %844 = vmatprep.mubr.bf16.mxu0 0
      %845 = vmatmul.mubr.bf16.gmra.mrb[0].mxu0 %v807
      %v846 = vpop.f32.mrb[0].mxu0
      %v847 = vadd.f32 0.0, %v846
      %v848 = vpop.f32.mrb[0].mxu0
      %v849 = vpop.f32.mrb[0].mxu0
      %v850 = vpop.f32.mrb[0].mxu0
      %851 = vdwg.mxu0
      %853 = vrot.lane.b32.xlu0 %v847, 16
      %v854 = vpop.permute.xlu0 %853
      %vm856 = vcmask 195712
      %857 = vst.msk [vmem:[#allocation2] sm:$0xff] %vm856, %v854
      %858 = vrot.lane.b32.xlu0 %v510, 104
      %v859 = vpop.permute.xlu0 %858
      %860 = vrot.lane.b32.xlu0 %v511, 104
      %v861 = vpop.permute.xlu0 %860
      %v863 = vsel %vm512, %v859, 0
      %v866 = vsel %vm512, %v861, 0
      %868 = vmatprep.subr.bf16.mxu0 0
      %869 = vmatpush1.bf16.xpose.msra.mxu0 %v866
      %870 = vmatprep.subr.bf16.mxu0 0
      %871 = vmatpush1.bf16.xpose.msra.mxu0 0
      %872 = vmatprep.subr.bf16.mxu0 0
      %873 = vmatpush1.bf16.xpose.msra.mxu0 0
      %874 = vmatprep.subr.bf16.mxu0 0
      %875 = vmatpush1.bf16.xpose.msra.mxu0 0
      %876 = vmatprep.subr.bf16.mxu0 0
      %877 = vmatpush1.bf16.xpose.msra.mxu0 0
      %878 = vmatprep.subr.bf16.mxu0 0
      %879 = vmatpush1.bf16.xpose.msra.mxu0 0
      %880 = vmatprep.subr.bf16.mxu0 0
      %881 = vmatpush1.bf16.xpose.msra.mxu0 0
      %882 = vmatprep.subr.bf16.mxu0 0
      %883 = vmatpush1.bf16.xpose.msra.mxu0 0
      %884 = vmatprep.subr.bf16.mxu0 0
      %885 = vmatpush1.bf16.xpose.msra.mxu0 0
      %886 = vmatprep.subr.bf16.mxu0 0
      %887 = vmatpush1.bf16.xpose.msra.mxu0 0
      %888 = vmatprep.subr.bf16.mxu0 0
      %889 = vmatpush1.bf16.xpose.msra.mxu0 0
      %890 = vmatprep.subr.bf16.mxu0 0
      %891 = vmatpush1.bf16.xpose.msra.mxu0 0
      %892 = vmatprep.subr.bf16.mxu0 0
      %893 = vmatpush1.bf16.xpose.msra.mxu0 0
      %894 = vmatprep.subr.bf16.mxu0 0
      %895 = vmatpush1.bf16.xpose.msra.mxu0 0
      %896 = vmatprep.subr.bf16.mxu0 0
      %897 = vmatpush1.bf16.xpose.msra.mxu0 0
      %898 = vmatprep.subr.bf16.mxu0 0
      %899 = vmatpush1.bf16.xpose.msra.mxu0 0
      %900 = vmatprep.mubr.bf16.mxu0 0
      %901 = vmatmul.mubr.bf16.gmra.mrb[0].mxu0 %v863
      %v902 = vpop.f32.mrb[0].mxu0
      %v903 = vadd.f32 0.0, %v902
      %v904 = vpop.f32.mrb[0].mxu0
      %v905 = vpop.f32.mrb[0].mxu0
      %v906 = vpop.f32.mrb[0].mxu0
      %907 = vdwg.mxu0
      %v908 = vmul.f32 %v903, 0.35355338
      %v909 = vsel %vm512, %v908, -inf
      %910 = vmax.xlane.f32.xlu0 %v909
      %v911 = vpop.xlane.xlu0 %910
      %v912 = vsub.f32 %v908, %v911
      %v913 = vmul.f32 %v912, 1.442695
      %v914 = vpow.pop %v913
      %v915 = vsel %vm512, %v914, 0.0
      %916 = vadd.xlane.f32.xlu0 %v915
      %v917 = vpop.xlane.xlu0 %916
      %v918 = vrcp.pop %v917
      %v919 = vmul.f32 %v914, %v918
      %v920 = vpack.c.bf16 %v919, %v919
      %921 = vrot.lane.b32.xlu0 %v511, 72
      %v922 = vpop.permute.xlu0 %921
      %v924 = vsel %vm512, %v920, 0
      %v927 = vsel %vm578, %v922, 0
      %929 = vmatprep.subr.bf16.mxu0 0
      %930 = vmatpush1.bf16.msra.mxu0 %v927
      %931 = vmatprep.subr.bf16.mxu0 0
      %932 = vmatpush1.bf16.msra.mxu0 0
      %933 = vmatprep.subr.bf16.mxu0 0
      %934 = vmatpush1.bf16.msra.mxu0 0
      %935 = vmatprep.subr.bf16.mxu0 0
      %936 = vmatpush1.bf16.msra.mxu0 0
      %937 = vmatprep.subr.bf16.mxu0 0
      %938 = vmatpush1.bf16.msra.mxu0 0
      %939 = vmatprep.subr.bf16.mxu0 0
      %940 = vmatpush1.bf16.msra.mxu0 0
      %941 = vmatprep.subr.bf16.mxu0 0
      %942 = vmatpush1.bf16.msra.mxu0 0
      %943 = vmatprep.subr.bf16.mxu0 0
      %944 = vmatpush1.bf16.msra.mxu0 0
      %945 = vmatprep.subr.bf16.mxu0 0
      %946 = vmatpush1.bf16.msra.mxu0 0
      %947 = vmatprep.subr.bf16.mxu0 0
      %948 = vmatpush1.bf16.msra.mxu0 0
      %949 = vmatprep.subr.bf16.mxu0 0
      %950 = vmatpush1.bf16.msra.mxu0 0
      %951 = vmatprep.subr.bf16.mxu0 0
      %952 = vmatpush1.bf16.msra.mxu0 0
      %953 = vmatprep.subr.bf16.mxu0 0
      %954 = vmatpush1.bf16.msra.mxu0 0
      %955 = vmatprep.subr.bf16.mxu0 0
      %956 = vmatpush1.bf16.msra.mxu0 0
      %957 = vmatprep.subr.bf16.mxu0 0
      %958 = vmatpush1.bf16.msra.mxu0 0
      %959 = vmatprep.subr.bf16.mxu0 0
      %960 = vmatpush1.bf16.msra.mxu0 0
      %961 = vmatprep.mubr.bf16.mxu0 0
      %962 = vmatmul.mubr.bf16.gmra.mrb[0].mxu0 %v924
      %v963 = vpop.f32.mrb[0].mxu0
      %v964 = vadd.f32 0.0, %v963
      %v965 = vpop.f32.mrb[0].mxu0
      %v966 = vpop.f32.mrb[0].mxu0
      %v967 = vpop.f32.mrb[0].mxu0
      %968 = vdwg.mxu0
      %970 = vrot.lane.b32.xlu0 %v964, 24
      %v971 = vpop.permute.xlu0 %970
      %vm973 = vcmask 261312
      %974 = vst.msk [vmem:[#allocation2] sm:$0xff] %vm973, %v971
      %v975 = vld [vmem:[%s7] sm:$0x1]
      %v977 = vlaneseq
      %v978 = vshrl.u32 %v977, 7
      %v979 = vsub.s32 0, %v978
      %v980 = vrot.slane %v975, %v979
      %v982 = vadd.f32 %v373, %v980
      %v983 = vld [vmem:[#allocation2] sm:$0xff]
      %v984 = vpack.c.bf16 %v983, %v983
      %v985 = vld [vmem:[%s6] sm:$0xf]
      %v986 = vld [vmem:[%s6 + $0x4] sm:$0xf]
      %v987 = vld [vmem:[%s6 + $0x8] sm:$0xf]
      %v988 = vld [vmem:[%s6 + $0xc] sm:$0xf]
      %v993 = vunpack.c.l.b16 %v985
      %v994 = vunpack.c.l.b16 %v986
      %v995 = vunpack.c.l.b16 %v987
      %v996 = vunpack.c.l.b16 %v988
      %v997 = vpack.c.b16 %v994, %v993
      %v998 = vpack.c.b16 %v996, %v995
      %v1002 = vsel %vm399, %v984, 0
      %1004 = vmatprep.subr.bf16.mxu0 0
      %1005 = vmatpush1.bf16.msra.mxu0 %v997
      %1006 = vmatprep.subr.bf16.mxu0 0
      %1007 = vmatpush1.bf16.msra.mxu0 %v998
      %1008 = vmatprep.subr.bf16.mxu0 0
      %1009 = vmatpush1.bf16.msra.mxu0 0
      %1010 = vmatprep.subr.bf16.mxu0 0
      %1011 = vmatpush1.bf16.msra.mxu0 0
      %1012 = vmatprep.subr.bf16.mxu0 0
      %1013 = vmatpush1.bf16.msra.mxu0 0
      %1014 = vmatprep.subr.bf16.mxu0 0
      %1015 = vmatpush1.bf16.msra.mxu0 0
      %1016 = vmatprep.subr.bf16.mxu0 0
      %1017 = vmatpush1.bf16.msra.mxu0 0
      %1018 = vmatprep.subr.bf16.mxu0 0
      %1019 = vmatpush1.bf16.msra.mxu0 0
      %1020 = vmatprep.subr.bf16.mxu0 0
      %1021 = vmatpush1.bf16.msra.mxu0 0
      %1022 = vmatprep.subr.bf16.mxu0 0
      %1023 = vmatpush1.bf16.msra.mxu0 0
      %1024 = vmatprep.subr.bf16.mxu0 0
      %1025 = vmatpush1.bf16.msra.mxu0 0
      %1026 = vmatprep.subr.bf16.mxu0 0
      %1027 = vmatpush1.bf16.msra.mxu0 0
      %1028 = vmatprep.subr.bf16.mxu0 0
      %1029 = vmatpush1.bf16.msra.mxu0 0
      %1030 = vmatprep.subr.bf16.mxu0 0
      %1031 = vmatpush1.bf16.msra.mxu0 0
      %1032 = vmatprep.subr.bf16.mxu0 0
      %1033 = vmatpush1.bf16.msra.mxu0 0
      %1034 = vmatprep.subr.bf16.mxu0 0
      %1035 = vmatpush1.bf16.msra.mxu0 0
      %1036 = vmatprep.mubr.bf16.mxu0 0
      %1037 = vmatmul.mubr.bf16.gmra.mrb[0].mxu0 %v1002
      %v1038 = vpop.f32.mrb[0].mxu0
      %v1039 = vadd.f32 0.0, %v1038
      %v1040 = vpop.f32.mrb[0].mxu0
      %v1041 = vpop.f32.mrb[0].mxu0
      %v1042 = vpop.f32.mrb[0].mxu0
      %1043 = vdwg.mxu0
      %v1044 = vadd.f32 %v982, %v1039
      %v1045 = vld [vmem:[%s8] sm:$0x1]
      %v1046 = vld [vmem:[%s9] sm:$0x1]
      %v1047 = vsel %vm399, %v1044, 0.0
      %1048 = vadd.xlane.f32.xlu0 %v1047
      %v1049 = vpop.xlane.xlu0 %1048
      %v1050 = vrcp.pop 32.0
      %v1051 = vmul.f32 %v1049, %v1050
      %v1052 = vsub.f32 %v1044, %v1051
      %v1053 = vmul.f32 %v1052, %v1052
      %v1054 = vsel %vm399, %v1053, 0.0
      %1055 = vadd.xlane.f32.xlu0 %v1054
      %v1056 = vpop.xlane.xlu0 %1055
      %v1057 = vmul.f32 %v1056, %v1050
      %v1058 = vadd.f32 %v1057, 1e-05
      %v1059 = vrsqrt.pop %v1058
      %v1060 = vmul.f32 %v1052, %v1059
      %v1062 = vlaneseq
      %v1063 = vshrl.u32 %v1062, 7
      %v1064 = vsub.s32 0, %v1063
      %v1065 = vrot.slane %v1045, %v1064
      %v1067 = vmul.f32 %v1060, %v1065
      %v1069 = vlaneseq
      %v1070 = vshrl.u32 %v1069, 7
      %v1071 = vsub.s32 0, %v1070
      %v1072 = vrot.slane %v1046, %v1071
      %v1074 = vadd.f32 %v1067, %v1072
      %1075 = vst.msk [vmem:[%s371] sm:$0xff] %vm399, %v1074
      %p1076 = scmp.lt.s32.totalorder %s21, 1
      %s1077 = scalar_select %p1076, %s21, 1
      %s1078 = smul.addr %s1077, 8
      %s1079 = scalar_lea.vmem %s10, %s1078
      // Predicated region
      $region61: #{transformer_x_forward.20} parent=59 // pred_check
        %p1080 = pneg %p259
      $region62: #{transformer_x_forward.20} parent=59 // pred_check_branch
        %1082 = sbr.rel (%p1080) target = $region64
      $region63: #{transformer_x_forward.20} parent=59 // pred_region
        _
      $region64: #{transformer_x_forward.20} parent=59 // pred_fallthru
        _
    $region60: #{transformer_x_forward.20} parent=5 // pred_fallthru
      _
    %p1083 = scmp.le.s32.totalorder 2, %s16
    // Predicated region
    $region65: #{transformer_x_forward.20} parent=5 // pred_check
      %p1084 = pneg %p1083
    $region66: #{transformer_x_forward.20} parent=5 // pred_check_branch
      %1086 = sbr.rel (%p1084) target = $region68
    $region67: #{transformer_x_forward.20} parent=5 // pred_region
      %s1087 = ssub.s32 %s16, 2
      // Predicated region
      $region69: #{transformer_x_forward.20} parent=67 // pred_check
        %p1088 = pneg %p265
      $region70: #{transformer_x_forward.20} parent=67 // pred_check_branch
        %1090 = sbr.rel (%p1088) target = $region72
      $region71: #{transformer_x_forward.20} parent=67 // pred_region
        %p1091 = scmp.lt.s32.totalorder %s22, 1
        %s1092 = scalar_select %p1091, %s22, 1
        %s1093 = smul.addr %s1092, 8
        %s1094 = scalar_lea.vmem %s10, %s1093
      $region72: #{transformer_x_forward.20} parent=67 // pred_fallthru
        _
    $region68: #{transformer_x_forward.20} parent=5 // pred_fallthru
      _
  $region6: #{transformer_x_forward.20} parent=0 // loop_footer
    %s20 = sadd.s32 1, %s16
  $region7: #{transformer_x_forward.20} parent=0 // loop_footer_branch
    %15 = sbr.rel target = $region3
  $region8: #{transformer_x_forward.20} parent=0 // loop_exit
    _

// kernel: transformer_x_forward.25
$region0: #{transformer_x_forward.25}
  #allocation0 [shape = 'u32[]', space=smem, size = 0x4, offset = 0x4, fixed_abs, tag = 'smem constant byte address 0x4 - core index']
  #allocation1 [shape = 'u32[144,128]{1,0:T(1,128)}', space=vmem, size = 0x12000, scoped, tag = 'internal scratch']
  #allocation2 [shape = 'bf16[16,16]{1,0:T(16,128)(2,1)}', space=vmem, size = 0x1000, scoped, tag = 'scratch operand']
  #allocation3 [shape = 'f32[16,1]{1,0:T(8,128)}', space=vmem, size = 0x2000, scoped, tag = 'scratch operand']
  #allocation4 [shape = 'f32[16,1]{1,0:T(8,128)}', space=vmem, size = 0x2000, scoped, tag = 'scratch operand']
  #allocation5 [shape = 'f32[16,1]{1,0:T(8,128)}', space=vmem, size = 0x2000, scoped, tag = 'scratch operand']
  %s0 = inlined_call_operand.vmem [shape: f32[16,32], index: 0, kind: input, shape index: {}]
  %s1 = inlined_call_operand.vmem [shape: s32[16,1], index: 1, kind: input, shape index: {}]
  %s2 = inlined_call_operand.vmem [shape: f32[1,32], index: 2, kind: input, shape index: {}]
  %s3 = inlined_call_operand.vmem [shape: f32[1,32], index: 3, kind: input, shape index: {}]
  %s4 = inlined_call_operand.vmem [shape: bf16[32,16], index: 4, kind: input, shape index: {}]
  %s5 = inlined_call_operand.vmem [shape: f32[1,16], index: 5, kind: input, shape index: {}]
  %s6 = inlined_call_operand.vmem [shape: f32[1,16], index: 6, kind: input, shape index: {}]
  %s7 = inlined_call_operand.vmem [shape: f32[1,16], index: 7, kind: input, shape index: {}]
  %s8 = inlined_call_operand.vmem [shape: bf16[72,16], index: 8, kind: input, shape index: {}]
  %s9 = inlined_call_operand.vmem [shape: f32[16,1], index: 9, kind: output, shape index: {}]
  %s10 = sld [smem:[#allocation0]]
  $region54: #{transformer_x_forward.25} parent=0
    _
  %s12 = ssub.s32 1, %s10
  %s13 = scalar_select 0, %s12, %s10
  // Predicated region
  $region2: #{transformer_x_forward.25} parent=0 // pred_check
    _
  $region3: #{transformer_x_forward.25} parent=0 // pred_check_branch
    %15 = sbr.rel (0) target = $region5
  $region4: #{transformer_x_forward.25} parent=0 // pred_region
    _
  $region5: #{transformer_x_forward.25} parent=0 // pred_fallthru
    _
  // Predicated region
  $region6: #{transformer_x_forward.25} parent=0 // pred_check
    _
  $region7: #{transformer_x_forward.25} parent=0 // pred_check_branch
    %17 = sbr.rel (0) target = $region9
  $region8: #{transformer_x_forward.25} parent=0 // pred_region
    _
  $region9: #{transformer_x_forward.25} parent=0 // pred_fallthru
    _
  // Predicated region
  $region10: #{transformer_x_forward.25} parent=0 // pred_check
    _
  $region11: #{transformer_x_forward.25} parent=0 // pred_check_branch
    %19 = sbr.rel (0) target = $region13
  $region12: #{transformer_x_forward.25} parent=0 // pred_region
    _
  $region13: #{transformer_x_forward.25} parent=0 // pred_fallthru
    _
  // Predicated region
  $region14: #{transformer_x_forward.25} parent=0 // pred_check
    _
  $region15: #{transformer_x_forward.25} parent=0 // pred_check_branch
    %21 = sbr.rel (0) target = $region17
  $region16: #{transformer_x_forward.25} parent=0 // pred_region
    _
  $region17: #{transformer_x_forward.25} parent=0 // pred_fallthru
    _
  // Predicated region
  $region18: #{transformer_x_forward.25} parent=0 // pred_check
    _
  $region19: #{transformer_x_forward.25} parent=0 // pred_check_branch
    %23 = sbr.rel (0) target = $region21
  $region20: #{transformer_x_forward.25} parent=0 // pred_region
    _
  $region21: #{transformer_x_forward.25} parent=0 // pred_fallthru
    _
  // Predicated region
  $region22: #{transformer_x_forward.25} parent=0 // pred_check
    _
  $region23: #{transformer_x_forward.25} parent=0 // pred_check_branch
    %25 = sbr.rel (0) target = $region25
  $region24: #{transformer_x_forward.25} parent=0 // pred_region
    _
  $region25: #{transformer_x_forward.25} parent=0 // pred_fallthru
    _
  // Predicated region
  $region26: #{transformer_x_forward.25} parent=0 // pred_check
    _
  $region27: #{transformer_x_forward.25} parent=0 // pred_check_branch
    %27 = sbr.rel (0) target = $region29
  $region28: #{transformer_x_forward.25} parent=0 // pred_region
    _
  $region29: #{transformer_x_forward.25} parent=0 // pred_fallthru
    _
  // Predicated region
  $region30: #{transformer_x_forward.25} parent=0 // pred_check
    _
  $region31: #{transformer_x_forward.25} parent=0 // pred_check_branch
    %29 = sbr.rel (0) target = $region33
  $region32: #{transformer_x_forward.25} parent=0 // pred_region
    _
  $region33: #{transformer_x_forward.25} parent=0 // pred_fallthru
    _
  // Predicated region
  $region34: #{transformer_x_forward.25} parent=0 // pred_check
    _
  $region35: #{transformer_x_forward.25} parent=0 // pred_check_branch
    %31 = sbr.rel (0) target = $region37
  $region36: #{transformer_x_forward.25} parent=0 // pred_region
    _
  $region37: #{transformer_x_forward.25} parent=0 // pred_fallthru
    _
  %p33 = scmp.eq.s32.totalorder 0, 0
  // Predicated region
  $region38: #{transformer_x_forward.25} parent=0 // pred_check
    %p34 = pneg %p33
  $region39: #{transformer_x_forward.25} parent=0 // pred_check_branch
    %36 = sbr.rel (%p34) target = $region41
  $region40: #{transformer_x_forward.25} parent=0 // pred_region
    %v37 = vld [vmem:[%s0] sm:$0xff]
    %v38 = vld [vmem:[%s0 + $0x8] sm:$0xff]
    %v39 = vld [vmem:[%s2] sm:$0x1]
    %v40 = vld [vmem:[%s3] sm:$0x1]
    %vm41 = vcmask 261120
    %v42 = vsel %vm41, %v37, 0.0
    %43 = vadd.xlane.f32.xlu0 %v42
    %v44 = vpop.xlane.xlu0 %43
    %v45 = vsel %vm41, %v38, 0.0
    %46 = vadd.xlane.f32.xlu0 %v45
    %v47 = vpop.xlane.xlu0 %46
    %v48 = vrcp.pop 32.0
    %v49 = vmul.f32 %v44, %v48
    %v50 = vmul.f32 %v47, %v48
    %v51 = vsub.f32 %v37, %v49
    %v52 = vsub.f32 %v38, %v50
    %v53 = vmul.f32 %v51, %v51
    %v54 = vmul.f32 %v52, %v52
    %v55 = vsel %vm41, %v53, 0.0
    %56 = vadd.xlane.f32.xlu0 %v55
    %v57 = vpop.xlane.xlu0 %56
    %v58 = vsel %vm41, %v54, 0.0
    %59 = vadd.xlane.f32.xlu0 %v58
    %v60 = vpop.xlane.xlu0 %59
    %v61 = vmul.f32 %v57, %v48
    %v62 = vmul.f32 %v60, %v48
    %v63 = vadd.f32 %v61, 1e-05
    %v64 = vadd.f32 %v62, 1e-05
    %v65 = vrsqrt.pop %v63
    %v66 = vrsqrt.pop %v64
    %v67 = vmul.f32 %v51, %v65
    %v68 = vmul.f32 %v52, %v66
    %v70 = vlaneseq
    %v71 = vshrl.u32 %v70, 7
    %v72 = vsub.s32 0, %v71
    %v73 = vrot.slane %v39, %v72
    %v75 = vmul.f32 %v67, %v73
    %v76 = vmul.f32 %v68, %v73
    %v78 = vlaneseq
    %v79 = vshrl.u32 %v78, 7
    %v80 = vsub.s32 0, %v79
    %v81 = vrot.slane %v40, %v80
    %v83 = vadd.f32 %v75, %v81
    %v84 = vadd.f32 %v76, %v81
    %v85 = vpack.c.bf16 %v84, %v83
    %v86 = vld [vmem:[%s4] sm:$0xf]
    %v87 = vld [vmem:[%s4 + $0x4] sm:$0xf]
    %v88 = vld [vmem:[%s4 + $0x8] sm:$0xf]
    %v89 = vld [vmem:[%s4 + $0xc] sm:$0xf]
    %v90 = vld [vmem:[%s5] sm:$0x1]
    %v92 = vlaneseq
    %v93 = vshrl.u32 %v92, 7
    %v94 = vsub.s32 0, %v93
    %v95 = vrot.slane %v90, %v94
    %v101 = vunpack.c.l.b16 %v86
    %v102 = vunpack.c.l.b16 %v87
    %v103 = vunpack.c.l.b16 %v88
    %v104 = vunpack.c.l.b16 %v89
    %v105 = vpack.c.b16 %v102, %v101
    %v106 = vpack.c.b16 %v104, %v103
    %v110 = vsel %vm41, %v85, 0
    %112 = vmatprep.subr.bf16.mxu0 0
    %113 = vmatpush1.bf16.msra.mxu0 %v105
    %114 = vmatprep.subr.bf16.mxu0 0
    %115 = vmatpush1.bf16.msra.mxu0 %v106
    %116 = vmatprep.subr.bf16.mxu0 0
    %117 = vmatpush1.bf16.msra.mxu0 0
    %118 = vmatprep.subr.bf16.mxu0 0
    %119 = vmatpush1.bf16.msra.mxu0 0
    %120 = vmatprep.subr.bf16.mxu0 0
    %121 = vmatpush1.bf16.msra.mxu0 0
    %122 = vmatprep.subr.bf16.mxu0 0
    %123 = vmatpush1.bf16.msra.mxu0 0
    %124 = vmatprep.subr.bf16.mxu0 0
    %125 = vmatpush1.bf16.msra.mxu0 0
    %126 = vmatprep.subr.bf16.mxu0 0
    %127 = vmatpush1.bf16.msra.mxu0 0
    %128 = vmatprep.subr.bf16.mxu0 0
    %129 = vmatpush1.bf16.msra.mxu0 0
    %130 = vmatprep.subr.bf16.mxu0 0
    %131 = vmatpush1.bf16.msra.mxu0 0
    %132 = vmatprep.subr.bf16.mxu0 0
    %133 = vmatpush1.bf16.msra.mxu0 0
    %134 = vmatprep.subr.bf16.mxu0 0
    %135 = vmatpush1.bf16.msra.mxu0 0
    %136 = vmatprep.subr.bf16.mxu0 0
    %137 = vmatpush1.bf16.msra.mxu0 0
    %138 = vmatprep.subr.bf16.mxu0 0
    %139 = vmatpush1.bf16.msra.mxu0 0
    %140 = vmatprep.subr.bf16.mxu0 0
    %141 = vmatpush1.bf16.msra.mxu0 0
    %142 = vmatprep.subr.bf16.mxu0 0
    %143 = vmatpush1.bf16.msra.mxu0 0
    %144 = vmatprep.mubr.bf16.mxu0 0
    %145 = vmatmul.mubr.bf16.gmra.mrb[0].mxu0 %v110
    %v146 = vpop.f32.mrb[0].mxu0
    %v147 = vadd.f32 %v95, %v146
    %v148 = vpop.f32.mrb[0].mxu0
    %v149 = vpop.f32.mrb[0].mxu0
    %v150 = vadd.f32 %v95, %v149
    %v151 = vpop.f32.mrb[0].mxu0
    %152 = vdwg.mxu0
    %vm153 = vcmp.gt.f32.partialorder %v147, 0.0
    %vm154 = vcmp.gt.f32.partialorder %v150, 0.0
    %v155 = vmul.f32 %v147, 0.01
    %v156 = vmul.f32 %v150, 0.01
    %v157 = vsel %vm153, %v147, %v155
    %v158 = vsel %vm154, %v150, %v156
    %v159 = vld [vmem:[%s6] sm:$0x1]
    %v160 = vld [vmem:[%s7] sm:$0x1]
    %vm161 = vcmask 130048
    %v162 = vsel %vm161, %v157, 0.0
    %163 = vadd.xlane.f32.xlu0 %v162
    %v164 = vpop.xlane.xlu0 %163
    %v165 = vsel %vm161, %v158, 0.0
    %166 = vadd.xlane.f32.xlu0 %v165
    %v167 = vpop.xlane.xlu0 %166
    %v168 = vrcp.pop 16.0
    %v169 = vmul.f32 %v164, %v168
    %v170 = vmul.f32 %v167, %v168
    %v171 = vsub.f32 %v157, %v169
    %v172 = vsub.f32 %v158, %v170
    %v173 = vmul.f32 %v171, %v171
    %v174 = vmul.f32 %v172, %v172
    %v175 = vsel %vm161, %v173, 0.0
    %176 = vadd.xlane.f32.xlu0 %v175
    %v177 = vpop.xlane.xlu0 %176
    %v178 = vsel %vm161, %v174, 0.0
    %179 = vadd.xlane.f32.xlu0 %v178
    %v180 = vpop.xlane.xlu0 %179
    %v181 = vmul.f32 %v177, %v168
    %v182 = vmul.f32 %v180, %v168
    %v183 = vadd.f32 %v181, 1e-05
    %v184 = vadd.f32 %v182, 1e-05
    %v185 = vrsqrt.pop %v183
    %v186 = vrsqrt.pop %v184
    %v187 = vmul.f32 %v171, %v185
    %v188 = vmul.f32 %v172, %v186
    %v190 = vlaneseq
    %v191 = vshrl.u32 %v190, 7
    %v192 = vsub.s32 0, %v191
    %v193 = vrot.slane %v159, %v192
    %v195 = vmul.f32 %v187, %v193
    %v196 = vmul.f32 %v188, %v193
    %v198 = vlaneseq
    %v199 = vshrl.u32 %v198, 7
    %v200 = vsub.s32 0, %v199
    %v201 = vrot.slane %v160, %v200
    %v203 = vadd.f32 %v195, %v201
    %v204 = vadd.f32 %v196, %v201
    %v205 = vpack.c.bf16 %v204, %v203
    %206 = vst.msk [vmem:[#allocation2] sm:$0xff] %vm161, %v205
    %vm207 = vcmask 7168
    %208 = vst.msk [vmem:[#allocation3] sm:$0xff] %vm207, -1e+30
    %209 = vst.msk [vmem:[#allocation3 + $0x8] sm:$0xff] %vm207, -1e+30
    %210 = vst.msk [vmem:[#allocation4] sm:$0xff] %vm207, 0.0
    %211 = vst.msk [vmem:[#allocation4 + $0x8] sm:$0xff] %vm207, 0.0
    %212 = vst.msk [vmem:[#allocation5] sm:$0xff] %vm207, 0.0
    %213 = vst.msk [vmem:[#allocation5 + $0x8] sm:$0xff] %vm207, 0.0
  $region41: #{transformer_x_forward.25} parent=0 // pred_fallthru
    _
  %v214 = vld [vmem:[#allocation2] sm:$0xff]
  %v215 = vld [vmem:[%s8] sm:$0xf]
  %v216 = vld [vmem:[%s8 + $0x4] sm:$0xf]
  %v217 = vld [vmem:[%s8 + $0x8] sm:$0xf]
  %v218 = vld [vmem:[%s8 + $0xc] sm:$0xf]
  %v219 = vld [vmem:[%s8 + $0x10] sm:$0xf]
  %v220 = vld [vmem:[%s8 + $0x14] sm:$0xf]
  %v221 = vld [vmem:[%s8 + $0x18] sm:$0xf]
  %v222 = vld [vmem:[%s8 + $0x1c] sm:$0xf]
  %v223 = vld [vmem:[%s8 + $0x20] sm:$0xf]
  %v233 = vunpack.c.l.b16 %v215
  %v234 = vunpack.c.l.b16 %v216
  %v235 = vunpack.c.l.b16 %v217
  %v236 = vunpack.c.l.b16 %v218
  %v237 = vunpack.c.l.b16 %v219
  %v238 = vunpack.c.l.b16 %v220
  %v239 = vunpack.c.l.b16 %v221
  %v240 = vunpack.c.l.b16 %v222
  %v241 = vunpack.c.l.b16 %v223
  %v242 = vpack.c.b16 %v234, %v233
  %v243 = vpack.c.b16 %v236, %v235
  %v244 = vpack.c.b16 %v238, %v237
  %v245 = vpack.c.b16 %v240, %v239
  %v246 = vpack.c.b16 %v241, %v241
  %vm247 = vcmask 130048
  %v249 = vsel %vm247, %v214, 0
  %v252 = vsel %vm247, %v242, 0
  %v255 = vsel %vm247, %v243, 0
  %v258 = vsel %vm247, %v244, 0
  %v261 = vsel %vm247, %v245, 0
  %v264 = vsel %vm247, %v246, 0
  %266 = vmatprep.subr.bf16.mxu0 0
  %267 = vmatpush1.bf16.xpose.msra.mxu0 %v252
  %268 = vmatprep.subr.bf16.mxu0 0
  %269 = vmatpush1.bf16.xpose.msra.mxu0 %v255
  %270 = vmatprep.subr.bf16.mxu0 0
  %271 = vmatpush1.bf16.xpose.msra.mxu0 %v258
  %272 = vmatprep.subr.bf16.mxu0 0
  %273 = vmatpush1.bf16.xpose.msra.mxu0 %v261
  %274 = vmatprep.subr.bf16.mxu0 0
  %275 = vmatpush1.bf16.xpose.msra.mxu0 %v264
  %276 = vmatprep.subr.bf16.mxu0 0
  %277 = vmatpush1.bf16.xpose.msra.mxu0 0
  %278 = vmatprep.subr.bf16.mxu0 0
  %279 = vmatpush1.bf16.xpose.msra.mxu0 0
  %280 = vmatprep.subr.bf16.mxu0 0
  %281 = vmatpush1.bf16.xpose.msra.mxu0 0
  %282 = vmatprep.subr.bf16.mxu0 0
  %283 = vmatpush1.bf16.xpose.msra.mxu0 0
  %284 = vmatprep.subr.bf16.mxu0 0
  %285 = vmatpush1.bf16.xpose.msra.mxu0 0
  %286 = vmatprep.subr.bf16.mxu0 0
  %287 = vmatpush1.bf16.xpose.msra.mxu0 0
  %288 = vmatprep.subr.bf16.mxu0 0
  %289 = vmatpush1.bf16.xpose.msra.mxu0 0
  %290 = vmatprep.subr.bf16.mxu0 0
  %291 = vmatpush1.bf16.xpose.msra.mxu0 0
  %292 = vmatprep.subr.bf16.mxu0 0
  %293 = vmatpush1.bf16.xpose.msra.mxu0 0
  %294 = vmatprep.subr.bf16.mxu0 0
  %295 = vmatpush1.bf16.xpose.msra.mxu0 0
  %296 = vmatprep.subr.bf16.mxu0 0
  %297 = vmatpush1.bf16.xpose.msra.mxu0 0
  %298 = vmatprep.mubr.bf16.mxu0 0
  %299 = vmatmul.mubr.bf16.gmra.mrb[0].mxu0 %v249
  %v300 = vpop.f32.mrb[0].mxu0
  %v301 = vadd.f32 0.0, %v300
  %v302 = vpop.f32.mrb[0].mxu0
  %v303 = vpop.f32.mrb[0].mxu0
  %v304 = vadd.f32 0.0, %v303
  %v305 = vpop.f32.mrb[0].mxu0
  %306 = vdwg.mxu0
  %v307 = vld [vmem:[#allocation3] sm:$0xff]
  %v308 = vld [vmem:[#allocation3 + $0x8] sm:$0xff]
  %vm309 = vcmask 588800
  %v310 = vsel %vm309, %v301, -inf
  %311 = vmax.xlane.f32.xlu0 %v310
  %v312 = vpop.xlane.xlu0 %311
  %v313 = vsel %vm309, %v304, -inf
  %314 = vmax.xlane.f32.xlu0 %v313
  %v315 = vpop.xlane.xlu0 %314
  %v316 = vmax.f32 %v307, %v312
  %v317 = vmax.f32 %v308, %v315
  %v318 = vld [vmem:[#allocation4] sm:$0xff]
  %v319 = vld [vmem:[#allocation4 + $0x8] sm:$0xff]
  %v320 = vsub.f32 %v307, %v316
  %v321 = vsub.f32 %v308, %v317
  %v322 = vmul.f32 %v320, 1.442695
  %v323 = vpow.pop %v322
  %v324 = vmul.f32 %v321, 1.442695
  %v325 = vpow.pop %v324
  %v326 = vmul.f32 %v318, %v323
  %v327 = vmul.f32 %v319, %v325
  %329 = vset.pattern.permute.xlu0 0
  %330 = vperm.xlu0 %329, %v316
  %v331 = vpop.permute.xlu0 %330
  %334 = vset.pattern.permute.xlu0 0
  %335 = vperm.xlu0 %334, %v317
  %v336 = vpop.permute.xlu0 %335
  %v338 = vsub.f32 %v301, %v331
  %v339 = vsub.f32 %v304, %v336
  %v340 = vmul.f32 %v338, 1.442695
  %v341 = vpow.pop %v340
  %v342 = vmul.f32 %v339, 1.442695
  %v343 = vpow.pop %v342
  %v344 = vsel %vm309, %v341, 0.0
  %345 = vadd.xlane.f32.xlu0 %v344
  %v346 = vpop.xlane.xlu0 %345
  %v347 = vsel %vm309, %v343, 0.0
  %348 = vadd.xlane.f32.xlu0 %v347
  %v349 = vpop.xlane.xlu0 %348
  %v350 = vadd.f32 %v326, %v346
  %v351 = vadd.f32 %v327, %v349
  %vm352 = vcmask 7168
  %353 = vst.msk [vmem:[#allocation4] sm:$0xff] %vm352, %v350
  %354 = vst.msk [vmem:[#allocation4 + $0x8] sm:$0xff] %vm352, %v351
  %355 = vst.msk [vmem:[#allocation3] sm:$0xff] %vm352, %v316
  %356 = vst.msk [vmem:[#allocation3 + $0x8] sm:$0xff] %vm352, %v317
  %s357 = smul.u32 0, 72
  %v358 = vlaneseq
  %v359 = vand.u32 %v358, 127
  %v360 = vstv %s357
  %v361 = vadd.s32 %v360, %v359
  %v362 = vld [vmem:[#allocation5] sm:$0xff]
  %v363 = vld [vmem:[#allocation5 + $0x8] sm:$0xff]
  %v364 = vld [vmem:[%s1] sm:$0xff]
  %v365 = vld [vmem:[%s1 + $0x8] sm:$0xff]
  %366 = vset.pattern.permute.xlu0 0
  %367 = vperm.xlu0 %366, %v364
  %v368 = vpop.permute.xlu0 %367
  %369 = vset.pattern.permute.xlu0 0
  %370 = vperm.xlu0 %369, %v365
  %v371 = vpop.permute.xlu0 %370
  %vm372 = vcmp.eq.s32.totalorder %v361, %v368
  %vm373 = vcmp.eq.s32.totalorder %v361, %v371
  %v374 = vsel %vm372, %v301, 0.0
  %v375 = vsel %vm373, %v304, 0.0
  %v376 = vsel %vm309, %v374, 0.0
  %377 = vadd.xlane.f32.xlu0 %v376
  %v378 = vpop.xlane.xlu0 %377
  %v379 = vsel %vm309, %v375, 0.0
  %380 = vadd.xlane.f32.xlu0 %v379
  %v381 = vpop.xlane.xlu0 %380
  %v382 = vadd.f32 %v362, %v378
  %v383 = vadd.f32 %v363, %v381
  %384 = vst.msk [vmem:[#allocation5] sm:$0xff] %vm352, %v382
  %385 = vst.msk [vmem:[#allocation5 + $0x8] sm:$0xff] %vm352, %v383
  // Predicated region
  $region42: #{transformer_x_forward.25} parent=0 // pred_check
    %p386 = pneg %p33
  $region43: #{transformer_x_forward.25} parent=0 // pred_check_branch
    %388 = sbr.rel (%p386) target = $region45
  $region44: #{transformer_x_forward.25} parent=0 // pred_region
    %v389 = vld [vmem:[#allocation3] sm:$0xff]
    %v390 = vld [vmem:[#allocation3 + $0x8] sm:$0xff]
    %v391 = vld [vmem:[#allocation4] sm:$0xff]
    %v392 = vld [vmem:[#allocation4 + $0x8] sm:$0xff]
    %v393 = vlog2.pop %v391
    %v394 = vmul.f32 %v393, 0.6931472
    %v395 = vlog2.pop %v392
    %v396 = vmul.f32 %v395, 0.6931472
    %v397 = vadd.f32 %v389, %v394
    %v398 = vadd.f32 %v390, %v396
    %v399 = vld [vmem:[#allocation5] sm:$0xff]
    %v400 = vld [vmem:[#allocation5 + $0x8] sm:$0xff]
    %v401 = vsub.f32 %v397, %v399
    %v402 = vsub.f32 %v398, %v400
    %403 = vst.msk [vmem:[%s9] sm:$0xff] %vm352, %v401
    %404 = vst.msk [vmem:[%s9 + $0x8] sm:$0xff] %vm352, %v402
  $region45: #{transformer_x_forward.25} parent=0 // pred_fallthru
    _
  // Predicated region
  $region46: #{transformer_x_forward.25} parent=0 // pred_check
    _
  $region47: #{transformer_x_forward.25} parent=0 // pred_check_branch
    %406 = sbr.rel (0) target = $region49
  $region48: #{transformer_x_forward.25} parent=0 // pred_region
    _
  $region49: #{transformer_x_forward.25} parent=0 // pred_fallthru
    _
  // Predicated region
  $region50: #{transformer_x_forward.25} parent=0 // pred_check
    _
  $region51: #{transformer_x_forward.25} parent=0 // pred_check_branch
    %408 = sbr.rel (0) target = $region53
  $region52: #{transformer_x_forward.25} parent=0 // pred_region
    _
  $region53: #{transformer_x_forward.25} parent=0 // pred_fallthru
    _

</llo_original>
